<compile_context>
chip_gen: v7x
topology: tpu7x:2x2x1
jax: 0.10.0
libtpu: 0.0.40
codegen_flags: <defaults>
</compile_context>

<pallas_src>
import functools

import jax
import jax.numpy as jnp
from jax import lax
from jax.experimental import pallas as pl
from jax.experimental.pallas import tpu as pltpu


def _round_up(x, m):
    return ((x + m - 1) // m) * m


@functools.lru_cache(maxsize=None)
def _vmem_limit_bytes():
    cap = 128 * 1024 * 1024
    try:
        info = pltpu.get_tpu_info()
        cap = int(getattr(info, "vmem_capacity_bytes", cap))
    except Exception:
        pass
    # ~8 MiB headroom, never below 32 MiB, never above 100 MiB (review rec).
    return int(min(max(cap - 8 * 1024 * 1024, 32 * 1024 * 1024),
                   100 * 1024 * 1024))


# ----------------------------------------------------------------------------
# GRU stack kernel: one grid step covers all layers x all timesteps for one
# batch block. Gate weights are fused per layer: w_i (K, 3Hp), w_h (Hp, 3Hp),
# column order [r | z | n], each gate padded to a full 128-lane tile.
# ----------------------------------------------------------------------------
def make_gru_kernel(n_layers, seq_len, hp):
    n_w = 2 * n_layers  # (w_i, w_h) per layer

    def kernel(x_ref, h0_ref, *rest):
        w_refs = rest[:n_w]
        seq_ref = rest[n_w]          # (T, bb, Hp) output block, VMEM-resident
        hT_ref = rest[n_w + 1]       # (L, bb, Hp) output block
        gates_ref = rest[n_w + 2]    # (T, bb, 3Hp) VMEM scratch

        T = seq_len
        Hp = hp
        bb = seq_ref.shape[1]

        for layer in range(n_layers):
            w_i_ref = w_refs[2 * layer]
            w_h_ref = w_refs[2 * layer + 1]

            # Hoisted, non-recurrent input projection for the whole layer:
            # one (T*bb, K) @ (K, 3Hp) MXU matmul (off the serial h-chain).
            if layer == 0:
                src = x_ref[...].reshape(T * bb, x_ref.shape[-1])
            else:
                src = seq_ref[...].reshape(T * bb, Hp)
            gates_ref[...] = jnp.dot(
                src, w_i_ref[...], preferred_element_type=jnp.float32
            ).reshape(T, bb, 3 * Hp)

            def step(t, h, w_h_ref=w_h_ref):
                xg = gates_ref[t]                            # (bb, 3Hp)
                hg = jnp.dot(h, w_h_ref[...],
                             preferred_element_type=jnp.float32)
                r = jax.nn.sigmoid(xg[:, 0:Hp] + hg[:, 0:Hp])
                z = jax.nn.sigmoid(xg[:, Hp:2 * Hp] + hg[:, Hp:2 * Hp])
                n = jnp.tanh(xg[:, 2 * Hp:3 * Hp] + r * hg[:, 2 * Hp:3 * Hp])
                h_new = (1.0 - z) * n + z * h
                seq_ref[t] = h_new                           # lane-dense store
                return h_new

            h_final = lax.fori_loop(0, T, step, h0_ref[layer],
                                    unroll=min(T, 8))
            hT_ref[layer] = h_final

    return kernel


def gru_stack(x_tm, h0, gru_weights):
    """x_tm: (T, Bp, D) time-major; h0: (L, Bp, Hp); weights padded/fused.

    Returns seq (T, Bp, Hp) and hT (L, Bp, Hp)."""
    T, Bp, D = x_tm.shape
    L, _, Hp = h0.shape

    # Batch-split grid axis (parallel) for v7x megacore when batch is large.
    if Bp >= 16 and (Bp // 2) % 8 == 0:
        bb = Bp // 2
    else:
        bb = Bp
    nb = Bp // bb

    weights = []
    for p in gru_weights:
        weights += [p["w_i"], p["w_h"]]

    def rep(shape):
        return pl.BlockSpec(shape, lambda i, s=shape: (0,) * len(s))

    def bsplit(shape):
        return pl.BlockSpec(shape, lambda i: (0, i, 0))

    in_specs = [bsplit((T, bb, D)), bsplit((L, bb, Hp))]
    in_specs += [rep(tuple(w.shape)) for w in weights]

    seq, hT = pl.pallas_call(
        make_gru_kernel(L, T, Hp),
        out_shape=(jax.ShapeDtypeStruct((T, Bp, Hp), jnp.float32),
                   jax.ShapeDtypeStruct((L, Bp, Hp), jnp.float32)),
        grid_spec=pltpu.PrefetchScalarGridSpec(
            num_scalar_prefetch=0,
            grid=(nb,),
            in_specs=in_specs,
            out_specs=(bsplit((T, bb, Hp)), bsplit((L, bb, Hp))),
            scratch_shapes=[pltpu.VMEM((T, bb, 3 * Hp), jnp.float32)]),
        compiler_params=pltpu.CompilerParams(
            dimension_semantics=("parallel",),
            vmem_limit_bytes=_vmem_limit_bytes()),
    )(x_tm, h0, *weights)
    return seq, hT


# ----------------------------------------------------------------------------
# Fused MLP head: [out | cor] @ W1 as a split matmul (no concat materialized)
# -> ReLU -> W2 (output columns padded to 128 lanes). Row-tiled, "parallel".
# ----------------------------------------------------------------------------
def mlp_kernel(hf_ref, cor_ref, w1h_ref, w1c_ref, b1_ref, w2_ref, b2_ref,
               o_ref):
    a = jnp.dot(hf_ref[...], w1h_ref[...], preferred_element_type=jnp.float32)
    a = a + jnp.dot(cor_ref[...], w1c_ref[...],
                    preferred_element_type=jnp.float32)
    a = jnp.maximum(a + b1_ref[...], 0.0)
    o = jnp.dot(a, w2_ref[...], preferred_element_type=jnp.float32) + b2_ref[...]
    o_ref[...] = o.astype(o_ref.dtype)


def mlp_head(hfeat, cor, w1h, w1c, b1, w2, b2, *, row_block=512):
    N, Hp = hfeat.shape
    C = cor.shape[1]
    Hd = w1h.shape[1]
    Op = w2.shape[1]

    if N <= row_block:
        rb, Np = N, N                       # single block (N is multiple of 8)
    else:
        rb = row_block
        Np = _round_up(N, rb)               # pad rows instead of one huge block
        if Np != N:
            hfeat = jnp.pad(hfeat, ((0, Np - N), (0, 0)))
            cor = jnp.pad(cor, ((0, Np - N), (0, 0)))
    grid = (Np // rb,)

    def rows(shape):
        return pl.BlockSpec(shape, lambda i: (i,) + (0,) * (len(shape) - 1))

    def rep(shape):
        return pl.BlockSpec(shape, lambda i, s=shape: (0,) * len(s))

    return pl.pallas_call(
        mlp_kernel,
        out_shape=jax.ShapeDtypeStruct((Np, Op), jnp.float32),
        grid_spec=pltpu.PrefetchScalarGridSpec(
            num_scalar_prefetch=0,
            grid=grid,
            in_specs=[rows((rb, Hp)), rows((rb, C)),
                      rep((Hp, Hd)), rep((C, Hd)), rep((1, Hd)),
                      rep((Hd, Op)), rep((1, Op))],
            out_specs=rows((rb, Op))),
        compiler_params=pltpu.CompilerParams(
            dimension_semantics=("parallel",),
            vmem_limit_bytes=_vmem_limit_bytes()),
    )(hfeat, cor, w1h, w1c, b1, w2, b2)


# ----------------------------------------------------------------------------
# Parameter construction (deterministic synthetic; mirrors the module's init:
# kaiming_normal_ on weight_ih, orthogonal_ on weight_hh, zero GRU biases,
# default Linear init for dense1/dense2). Gate weights stored fused &
# transposed: w_i (d_in, 3H), w_h (H, 3H), column order [r | z | n].
# ----------------------------------------------------------------------------
def init_params(key, input_dim, hidden_dim, output_dim, n_layers,
                output_cor_dim, mlp_hidden=256):
    H = hidden_dim
    params = {"gru": []}
    for layer in range(n_layers):
        d_in = input_dim if layer == 0 else H
        key, k_ih, k_hh = jax.random.split(key, 3)
        w_ih = jax.random.normal(k_ih, (3 * H, d_in),
                                 jnp.float32) * jnp.sqrt(2.0 / d_in)
        a = jax.random.normal(k_hh, (3 * H, H), jnp.float32)
        q, _ = jnp.linalg.qr(a)
        params["gru"].append(dict(w_i=w_ih.T, w_h=q.T))

    key, k1, k2, k3, k4 = jax.random.split(key, 5)
    f1 = H + output_cor_dim
    lim1 = 1.0 / jnp.sqrt(f1)
    lim2 = 1.0 / jnp.sqrt(mlp_hidden)
    params["w1"] = jax.random.uniform(k1, (f1, mlp_hidden), jnp.float32,
                                      -lim1, lim1)
    params["b1"] = jax.random.uniform(k2, (1, mlp_hidden), jnp.float32,
                                      -lim1, lim1)
    params["w2"] = jax.random.uniform(k3, (mlp_hidden, output_dim),
                                      jnp.float32, -lim2, lim2)
    params["b2"] = jax.random.uniform(k4, (1, output_dim), jnp.float32,
                                      -lim2, lim2)
    return params


def _pad_gate_cols(w, Hp):
    """(d_in, 3H) -> (d_in, 3Hp): zero-pad each gate block to Hp columns."""
    din, three_h = w.shape
    H = three_h // 3
    if H == Hp:
        return w
    w = w.reshape(din, 3, H)
    w = jnp.pad(w, ((0, 0), (0, 0), (0, Hp - H)))
    return w.reshape(din, 3 * Hp)


# ----------------------------------------------------------------------------
# GRUNet forward (Pallas kernels: single-call GRU stack + fused MLP head).
# ----------------------------------------------------------------------------
@jax.jit
def grunet_forward(params, x, h, output_cor):
    B, T, D = x.shape
    L, _, H = h.shape
    C = output_cor.shape[-1]
    O = params["w2"].shape[1]

    Hp = _round_up(H, 128)                 # lane-dense gates / stores
    Bp = _round_up(max(B, 8), 8)           # sublane-aligned batch
    Op = _round_up(O, 128)                 # lane-dense head output

    # ---- zero-padded GRU operands (numerically exact on real lanes) --------
    x_tm = jnp.transpose(x, (1, 0, 2))                       # (T, B, D) small
    x_tm = jnp.pad(x_tm, ((0, 0), (0, Bp - B), (0, 0)))      # (T, Bp, D)
    h0 = jnp.pad(h, ((0, 0), (0, Bp - B), (0, Hp - H)))      # (L, Bp, Hp)

    gru_w = []
    for l, p in enumerate(params["gru"]):
        w_i = _pad_gate_cols(p["w_i"], Hp)                   # (d_in, 3Hp)
        w_h = _pad_gate_cols(p["w_h"], Hp)                   # (H, 3Hp)
        w_h = jnp.pad(w_h, ((0, Hp - H), (0, 0)))            # (Hp, 3Hp)
        if l > 0:
            w_i = jnp.pad(w_i, ((0, Hp - H), (0, 0)))        # (Hp, 3Hp)
        gru_w.append(dict(w_i=w_i, w_h=w_h))

    seq, hT = gru_stack(x_tm, h0, gru_w)          # (T,Bp,Hp), (L,Bp,Hp)

    # ---- MLP head over time-major rows (no big (T,B,H) transpose) ----------
    hfeat = seq.reshape(T * Bp, Hp)                           # free reshape
    cor_tm = jnp.transpose(output_cor, (1, 0, 2))             # (T, B, C) tiny
    cor_tm = jnp.pad(cor_tm, ((0, 0), (0, Bp - B), (0, 0)))
    cor = cor_tm.reshape(T * Bp, C)

    w1h = jnp.pad(params["w1"][:H], ((0, Hp - H), (0, 0)))    # (Hp, Hd)
    w1c = params["w1"][H:]                                    # (C, Hd)
    w2 = jnp.pad(params["w2"], ((0, 0), (0, Op - O)))         # (Hd, Op)
    b2 = jnp.pad(params["b2"], ((0, 0), (0, Op - O)))         # (1, Op)

    out_p = mlp_head(hfeat, cor, w1h, w1c, params["b1"], w2, b2)   # (Np, Op)

    # unpack_sequence + cat(dim=-2) == batch-major flatten (done on the tiny
    # O-wide output instead of the H-wide activation).
    out = out_p[:T * Bp].reshape(T, Bp, Op)[:, :B, :O]
    out = jnp.transpose(out, (1, 0, 2)).reshape(B * T, O)
    h_out = hT[:, :B, :H]
    return out, h_out


# ----------------------------------------------------------------------------
# Pure-JAX reference for correctness checking (unpadded math).
# ----------------------------------------------------------------------------
def grunet_reference(params, x, h, output_cor):
    B, T, _ = x.shape
    H = h.shape[-1]
    seq = jnp.transpose(x, (1, 0, 2))
    h_finals = []
    for layer_idx, p in enumerate(params["gru"]):
        def step(hc, x_t, p=p):
            xg = x_t @ p["w_i"]
            hg = hc @ p["w_h"]
            r = jax.nn.sigmoid(xg[:, :H] + hg[:, :H])
            z = jax.nn.sigmoid(xg[:, H:2 * H] + hg[:, H:2 * H])
            n = jnp.tanh(xg[:, 2 * H:] + r * hg[:, 2 * H:])
            hn = (1.0 - z) * n + z * hc
            return hn, hn
        hT, outs = lax.scan(step, h[layer_idx], seq)
        seq = outs
        h_finals.append(hT)
    h_out = jnp.stack(h_finals, axis=0)
    out_flat = jnp.transpose(seq, (1, 0, 2)).reshape(B * T, -1)
    cor_flat = output_cor.reshape(B * T, -1)
    feat = jnp.concatenate([out_flat, cor_flat], axis=-1)
    hdn = jnp.maximum(feat @ params["w1"] + params["b1"], 0.0)
    out = hdn @ params["w2"] + params["b2"]
    return out, h_out


if __name__ == "__main__":
    # small shapes consistent with the module's forward
    B, T = 2, 8
    input_dim, hidden_dim, output_dim = 4, 32, 8
    n_layers, output_cor_dim = 2, 4

    key = jax.random.PRNGKey(0)
    key, kp, kx, kh, kc = jax.random.split(key, 5)
    params = init_params(kp, input_dim, hidden_dim, output_dim,
                         n_layers, output_cor_dim)

    x = jax.random.normal(kx, (B, T, input_dim), jnp.float32)
    h0 = jax.random.normal(kh, (n_layers, B, hidden_dim), jnp.float32)
    output_cor = jax.random.normal(kc, (B, T, output_cor_dim), jnp.float32)

    out, h_out = grunet_forward(params, x, h0, output_cor)
    jax.block_until_ready((out, h_out))

    out_ref, h_ref = grunet_reference(params, x, h0, output_cor)
    assert out.shape == (B * T, output_dim)
    assert h_out.shape == (n_layers, B, hidden_dim)
    assert jnp.allclose(out, out_ref, atol=1e-4, rtol=1e-4)
    assert jnp.allclose(h_out, h_ref, atol=1e-4, rtol=1e-4)

    print("KERNEL_OK")
</pallas_src>

<mosaic_0001>
module attributes {stable_mosaic.version = 11 : i64} {
  func.func @kernel(%arg0: i32, %arg1: memref<8x8x4xf32, #tpu.memory_space<vmem>>, %arg2: memref<2x8x128xf32, #tpu.memory_space<vmem>>, %arg3: memref<4x384xf32, #tpu.memory_space<vmem>>, %arg4: memref<128x384xf32, #tpu.memory_space<vmem>>, %arg5: memref<128x384xf32, #tpu.memory_space<vmem>>, %arg6: memref<128x384xf32, #tpu.memory_space<vmem>>, %arg7: memref<8x8x128xf32, #tpu.memory_space<vmem>>, %arg8: memref<2x8x128xf32, #tpu.memory_space<vmem>>, %arg9: memref<8x8x384xf32, #tpu.memory_space<vmem>>) attributes {dimension_semantics = [#tpu.dimension_semantics<parallel>], iteration_bounds = array<i64: 1>, scalar_prefetch = 0 : i64, scratch_operands = 1 : i64, tpu.core_type = #tpu.core_type<tc>, window_params = [{transform_indices = @transform_0, window_bounds = array<i64: 8, 8, 4>}, {transform_indices = @transform_1, window_bounds = array<i64: 2, 8, 128>}, {pipeline_mode = #tpu.pipeline_mode<synchronous>, transform_indices = @transform_2, window_bounds = array<i64: 4, 384>}, {pipeline_mode = #tpu.pipeline_mode<synchronous>, transform_indices = @transform_3, window_bounds = array<i64: 128, 384>}, {pipeline_mode = #tpu.pipeline_mode<synchronous>, transform_indices = @transform_4, window_bounds = array<i64: 128, 384>}, {pipeline_mode = #tpu.pipeline_mode<synchronous>, transform_indices = @transform_5, window_bounds = array<i64: 128, 384>}, {transform_indices = @transform_6, window_bounds = array<i64: 8, 8, 128>}, {transform_indices = @transform_7, window_bounds = array<i64: 2, 8, 128>}]} {
    %c0 = arith.constant 0 : index
    %c0_0 = arith.constant 0 : index
    %c0_1 = arith.constant 0 : index
    %0 = vector.load %arg1[%c0, %c0_0, %c0_1] : memref<8x8x4xf32, #tpu.memory_space<vmem>>, vector<8x8x4xf32>
    %1 = vector.shape_cast %0 : vector<8x8x4xf32> to vector<64x4xf32>
    %c0_2 = arith.constant 0 : index
    %c0_3 = arith.constant 0 : index
    %2 = vector.load %arg3[%c0_2, %c0_3] : memref<4x384xf32, #tpu.memory_space<vmem>>, vector<4x384xf32>
    %cst = arith.constant dense<0.000000e+00> : vector<64x384xf32>
    %3 = tpu.matmul %1, %2, %cst {dimension_numbers = #tpu.dot_dimension_numbers<[1], [0], [0], [1], [0, 0, 1, 1], [], []>} : vector<64x4xf32>, vector<4x384xf32>, vector<64x384xf32> -> vector<64x384xf32>
    %4 = vector.shape_cast %3 : vector<64x384xf32> to vector<8x8x384xf32>
    %c0_4 = arith.constant 0 : index
    %c0_5 = arith.constant 0 : index
    %c0_6 = arith.constant 0 : index
    %5 = vector.load %arg9[%c0_4, %c0_5, %c0_6] : memref<8x8x384xf32, #tpu.memory_space<vmem>>, vector<8x8x384xf32>
    tpu.vector_store %arg9[%c0_4, %c0_5, %c0_6], %4 {strides = array<i32>} : memref<8x8x384xf32, #tpu.memory_space<vmem>>, vector<8x8x384xf32>,
    %c0_7 = arith.constant 0 : index
    %c0_8 = arith.constant 0 : index
    %c0_9 = arith.constant 0 : index
    %6 = vector.load %arg2[%c0_7, %c0_8, %c0_9] : memref<2x8x128xf32, #tpu.memory_space<vmem>>, vector<1x8x128xf32>
    %7 = vector.shape_cast %6 : vector<1x8x128xf32> to vector<8x128xf32>
    %c0_i32 = arith.constant 0 : i32
    %8 = arith.index_cast %c0_i32 : i32 to index
    %c0_10 = arith.constant 0 : index
    %c0_11 = arith.constant 0 : index
    %9 = vector.load %arg9[%8, %c0_10, %c0_11] : memref<8x8x384xf32, #tpu.memory_space<vmem>>, vector<1x8x384xf32>
    %10 = vector.shape_cast %9 : vector<1x8x384xf32> to vector<8x384xf32>
    %c0_12 = arith.constant 0 : index
    %c0_13 = arith.constant 0 : index
    %11 = vector.load %arg4[%c0_12, %c0_13] : memref<128x384xf32, #tpu.memory_space<vmem>>, vector<128x384xf32>
    %cst_14 = arith.constant dense<0.000000e+00> : vector<8x384xf32>
    %12 = tpu.matmul %7, %11, %cst_14 {dimension_numbers = #tpu.dot_dimension_numbers<[1], [0], [0], [1], [0, 0, 1, 1], [], []>} : vector<8x128xf32>, vector<128x384xf32>, vector<8x384xf32> -> vector<8x384xf32>
    %13 = vector.extract_strided_slice %10 {offsets = [0, 0], sizes = [8, 128], strides = [1, 1]} : vector<8x384xf32> to vector<8x128xf32>
    %14 = vector.extract_strided_slice %12 {offsets = [0, 0], sizes = [8, 128], strides = [1, 1]} : vector<8x384xf32> to vector<8x128xf32>
    %15 = arith.addf %13, %14 : vector<8x128xf32>
    %16 = arith.negf %15 : vector<8x128xf32>
    %17 = math.exp %16 : vector<8x128xf32>
    %cst_15 = arith.constant 1.000000e+00 : f32
    %18 = vector.broadcast %cst_15 : f32 to vector<8x128xf32>
    %19 = arith.addf %18, %17 : vector<8x128xf32>
    %20 = arith.divf %18, %19 : vector<8x128xf32>
    %21 = vector.extract_strided_slice %10 {offsets = [0, 128], sizes = [8, 128], strides = [1, 1]} : vector<8x384xf32> to vector<8x128xf32>
    %22 = vector.extract_strided_slice %12 {offsets = [0, 128], sizes = [8, 128], strides = [1, 1]} : vector<8x384xf32> to vector<8x128xf32>
    %23 = arith.addf %21, %22 : vector<8x128xf32>
    %24 = arith.negf %23 : vector<8x128xf32>
    %25 = math.exp %24 : vector<8x128xf32>
    %cst_16 = arith.constant 1.000000e+00 : f32
    %26 = vector.broadcast %cst_16 : f32 to vector<8x128xf32>
    %27 = arith.addf %26, %25 : vector<8x128xf32>
    %28 = arith.divf %26, %27 : vector<8x128xf32>
    %29 = vector.extract_strided_slice %10 {offsets = [0, 256], sizes = [8, 128], strides = [1, 1]} : vector<8x384xf32> to vector<8x128xf32>
    %30 = vector.extract_strided_slice %12 {offsets = [0, 256], sizes = [8, 128], strides = [1, 1]} : vector<8x384xf32> to vector<8x128xf32>
    %31 = arith.mulf %20, %30 : vector<8x128xf32>
    %32 = arith.addf %29, %31 : vector<8x128xf32>
    %33 = math.tanh %32 : vector<8x128xf32>
    %cst_17 = arith.constant 1.000000e+00 : f32
    %34 = vector.broadcast %cst_17 : f32 to vector<8x128xf32>
    %35 = arith.subf %34, %28 : vector<8x128xf32>
    %36 = arith.mulf %35, %33 : vector<8x128xf32>
    %37 = arith.mulf %28, %7 : vector<8x128xf32>
    %38 = arith.addf %36, %37 : vector<8x128xf32>
    %39 = arith.index_cast %c0_i32 : i32 to index
    %c0_18 = arith.constant 0 : index
    %c0_19 = arith.constant 0 : index
    %40 = vector.load %arg7[%39, %c0_18, %c0_19] : memref<8x8x128xf32, #tpu.memory_space<vmem>>, vector<1x8x128xf32>
    %41 = vector.shape_cast %40 : vector<1x8x128xf32> to vector<8x128xf32>
    %42 = vector.shape_cast %38 : vector<8x128xf32> to vector<1x8x128xf32>
    tpu.vector_store %arg7[%39, %c0_18, %c0_19], %42 {strides = array<i32>} : memref<8x8x128xf32, #tpu.memory_space<vmem>>, vector<1x8x128xf32>,
    %c1_i32 = arith.constant 1 : i32
    %43 = arith.index_cast %c1_i32 : i32 to index
    %c0_20 = arith.constant 0 : index
    %c0_21 = arith.constant 0 : index
    %44 = vector.load %arg9[%43, %c0_20, %c0_21] : memref<8x8x384xf32, #tpu.memory_space<vmem>>, vector<1x8x384xf32>
    %45 = vector.shape_cast %44 : vector<1x8x384xf32> to vector<8x384xf32>
    %c0_22 = arith.constant 0 : index
    %c0_23 = arith.constant 0 : index
    %46 = vector.load %arg4[%c0_22, %c0_23] : memref<128x384xf32, #tpu.memory_space<vmem>>, vector<128x384xf32>
    %cst_24 = arith.constant dense<0.000000e+00> : vector<8x384xf32>
    %47 = tpu.matmul %38, %46, %cst_24 {dimension_numbers = #tpu.dot_dimension_numbers<[1], [0], [0], [1], [0, 0, 1, 1], [], []>} : vector<8x128xf32>, vector<128x384xf32>, vector<8x384xf32> -> vector<8x384xf32>
    %48 = vector.extract_strided_slice %45 {offsets = [0, 0], sizes = [8, 128], strides = [1, 1]} : vector<8x384xf32> to vector<8x128xf32>
    %49 = vector.extract_strided_slice %47 {offsets = [0, 0], sizes = [8, 128], strides = [1, 1]} : vector<8x384xf32> to vector<8x128xf32>
    %50 = arith.addf %48, %49 : vector<8x128xf32>
    %51 = arith.negf %50 : vector<8x128xf32>
    %52 = math.exp %51 : vector<8x128xf32>
    %cst_25 = arith.constant 1.000000e+00 : f32
    %53 = vector.broadcast %cst_25 : f32 to vector<8x128xf32>
    %54 = arith.addf %53, %52 : vector<8x128xf32>
    %55 = arith.divf %53, %54 : vector<8x128xf32>
    %56 = vector.extract_strided_slice %45 {offsets = [0, 128], sizes = [8, 128], strides = [1, 1]} : vector<8x384xf32> to vector<8x128xf32>
    %57 = vector.extract_strided_slice %47 {offsets = [0, 128], sizes = [8, 128], strides = [1, 1]} : vector<8x384xf32> to vector<8x128xf32>
    %58 = arith.addf %56, %57 : vector<8x128xf32>
    %59 = arith.negf %58 : vector<8x128xf32>
    %60 = math.exp %59 : vector<8x128xf32>
    %cst_26 = arith.constant 1.000000e+00 : f32
    %61 = vector.broadcast %cst_26 : f32 to vector<8x128xf32>
    %62 = arith.addf %61, %60 : vector<8x128xf32>
    %63 = arith.divf %61, %62 : vector<8x128xf32>
    %64 = vector.extract_strided_slice %45 {offsets = [0, 256], sizes = [8, 128], strides = [1, 1]} : vector<8x384xf32> to vector<8x128xf32>
    %65 = vector.extract_strided_slice %47 {offsets = [0, 256], sizes = [8, 128], strides = [1, 1]} : vector<8x384xf32> to vector<8x128xf32>
    %66 = arith.mulf %55, %65 : vector<8x128xf32>
    %67 = arith.addf %64, %66 : vector<8x128xf32>
    %68 = math.tanh %67 : vector<8x128xf32>
    %cst_27 = arith.constant 1.000000e+00 : f32
    %69 = vector.broadcast %cst_27 : f32 to vector<8x128xf32>
    %70 = arith.subf %69, %63 : vector<8x128xf32>
    %71 = arith.mulf %70, %68 : vector<8x128xf32>
    %72 = arith.mulf %63, %38 : vector<8x128xf32>
    %73 = arith.addf %71, %72 : vector<8x128xf32>
    %74 = arith.index_cast %c1_i32 : i32 to index
    %c0_28 = arith.constant 0 : index
    %c0_29 = arith.constant 0 : index
    %75 = vector.load %arg7[%74, %c0_28, %c0_29] : memref<8x8x128xf32, #tpu.memory_space<vmem>>, vector<1x8x128xf32>
    %76 = vector.shape_cast %75 : vector<1x8x128xf32> to vector<8x128xf32>
    %77 = vector.shape_cast %73 : vector<8x128xf32> to vector<1x8x128xf32>
    tpu.vector_store %arg7[%74, %c0_28, %c0_29], %77 {strides = array<i32>} : memref<8x8x128xf32, #tpu.memory_space<vmem>>, vector<1x8x128xf32>,
    %c2_i32 = arith.constant 2 : i32
    %78 = arith.index_cast %c2_i32 : i32 to index
    %c0_30 = arith.constant 0 : index
    %c0_31 = arith.constant 0 : index
    %79 = vector.load %arg9[%78, %c0_30, %c0_31] : memref<8x8x384xf32, #tpu.memory_space<vmem>>, vector<1x8x384xf32>
    %80 = vector.shape_cast %79 : vector<1x8x384xf32> to vector<8x384xf32>
    %c0_32 = arith.constant 0 : index
    %c0_33 = arith.constant 0 : index
    %81 = vector.load %arg4[%c0_32, %c0_33] : memref<128x384xf32, #tpu.memory_space<vmem>>, vector<128x384xf32>
    %cst_34 = arith.constant dense<0.000000e+00> : vector<8x384xf32>
    %82 = tpu.matmul %73, %81, %cst_34 {dimension_numbers = #tpu.dot_dimension_numbers<[1], [0], [0], [1], [0, 0, 1, 1], [], []>} : vector<8x128xf32>, vector<128x384xf32>, vector<8x384xf32> -> vector<8x384xf32>
    %83 = vector.extract_strided_slice %80 {offsets = [0, 0], sizes = [8, 128], strides = [1, 1]} : vector<8x384xf32> to vector<8x128xf32>
    %84 = vector.extract_strided_slice %82 {offsets = [0, 0], sizes = [8, 128], strides = [1, 1]} : vector<8x384xf32> to vector<8x128xf32>
    %85 = arith.addf %83, %84 : vector<8x128xf32>
    %86 = arith.negf %85 : vector<8x128xf32>
    %87 = math.exp %86 : vector<8x128xf32>
    %cst_35 = arith.constant 1.000000e+00 : f32
    %88 = vector.broadcast %cst_35 : f32 to vector<8x128xf32>
    %89 = arith.addf %88, %87 : vector<8x128xf32>
    %90 = arith.divf %88, %89 : vector<8x128xf32>
    %91 = vector.extract_strided_slice %80 {offsets = [0, 128], sizes = [8, 128], strides = [1, 1]} : vector<8x384xf32> to vector<8x128xf32>
    %92 = vector.extract_strided_slice %82 {offsets = [0, 128], sizes = [8, 128], strides = [1, 1]} : vector<8x384xf32> to vector<8x128xf32>
    %93 = arith.addf %91, %92 : vector<8x128xf32>
    %94 = arith.negf %93 : vector<8x128xf32>
    %95 = math.exp %94 : vector<8x128xf32>
    %cst_36 = arith.constant 1.000000e+00 : f32
    %96 = vector.broadcast %cst_36 : f32 to vector<8x128xf32>
    %97 = arith.addf %96, %95 : vector<8x128xf32>
    %98 = arith.divf %96, %97 : vector<8x128xf32>
    %99 = vector.extract_strided_slice %80 {offsets = [0, 256], sizes = [8, 128], strides = [1, 1]} : vector<8x384xf32> to vector<8x128xf32>
    %100 = vector.extract_strided_slice %82 {offsets = [0, 256], sizes = [8, 128], strides = [1, 1]} : vector<8x384xf32> to vector<8x128xf32>
    %101 = arith.mulf %90, %100 : vector<8x128xf32>
    %102 = arith.addf %99, %101 : vector<8x128xf32>
    %103 = math.tanh %102 : vector<8x128xf32>
    %cst_37 = arith.constant 1.000000e+00 : f32
    %104 = vector.broadcast %cst_37 : f32 to vector<8x128xf32>
    %105 = arith.subf %104, %98 : vector<8x128xf32>
    %106 = arith.mulf %105, %103 : vector<8x128xf32>
    %107 = arith.mulf %98, %73 : vector<8x128xf32>
    %108 = arith.addf %106, %107 : vector<8x128xf32>
    %109 = arith.index_cast %c2_i32 : i32 to index
    %c0_38 = arith.constant 0 : index
    %c0_39 = arith.constant 0 : index
    %110 = vector.load %arg7[%109, %c0_38, %c0_39] : memref<8x8x128xf32, #tpu.memory_space<vmem>>, vector<1x8x128xf32>
    %111 = vector.shape_cast %110 : vector<1x8x128xf32> to vector<8x128xf32>
    %112 = vector.shape_cast %108 : vector<8x128xf32> to vector<1x8x128xf32>
    tpu.vector_store %arg7[%109, %c0_38, %c0_39], %112 {strides = array<i32>} : memref<8x8x128xf32, #tpu.memory_space<vmem>>, vector<1x8x128xf32>,
    %c3_i32 = arith.constant 3 : i32
    %113 = arith.index_cast %c3_i32 : i32 to index
    %c0_40 = arith.constant 0 : index
    %c0_41 = arith.constant 0 : index
    %114 = vector.load %arg9[%113, %c0_40, %c0_41] : memref<8x8x384xf32, #tpu.memory_space<vmem>>, vector<1x8x384xf32>
    %115 = vector.shape_cast %114 : vector<1x8x384xf32> to vector<8x384xf32>
    %c0_42 = arith.constant 0 : index
    %c0_43 = arith.constant 0 : index
    %116 = vector.load %arg4[%c0_42, %c0_43] : memref<128x384xf32, #tpu.memory_space<vmem>>, vector<128x384xf32>
    %cst_44 = arith.constant dense<0.000000e+00> : vector<8x384xf32>
    %117 = tpu.matmul %108, %116, %cst_44 {dimension_numbers = #tpu.dot_dimension_numbers<[1], [0], [0], [1], [0, 0, 1, 1], [], []>} : vector<8x128xf32>, vector<128x384xf32>, vector<8x384xf32> -> vector<8x384xf32>
    %118 = vector.extract_strided_slice %115 {offsets = [0, 0], sizes = [8, 128], strides = [1, 1]} : vector<8x384xf32> to vector<8x128xf32>
    %119 = vector.extract_strided_slice %117 {offsets = [0, 0], sizes = [8, 128], strides = [1, 1]} : vector<8x384xf32> to vector<8x128xf32>
    %120 = arith.addf %118, %119 : vector<8x128xf32>
    %121 = arith.negf %120 : vector<8x128xf32>
    %122 = math.exp %121 : vector<8x128xf32>
    %cst_45 = arith.constant 1.000000e+00 : f32
    %123 = vector.broadcast %cst_45 : f32 to vector<8x128xf32>
    %124 = arith.addf %123, %122 : vector<8x128xf32>
    %125 = arith.divf %123, %124 : vector<8x128xf32>
    %126 = vector.extract_strided_slice %115 {offsets = [0, 128], sizes = [8, 128], strides = [1, 1]} : vector<8x384xf32> to vector<8x128xf32>
    %127 = vector.extract_strided_slice %117 {offsets = [0, 128], sizes = [8, 128], strides = [1, 1]} : vector<8x384xf32> to vector<8x128xf32>
    %128 = arith.addf %126, %127 : vector<8x128xf32>
    %129 = arith.negf %128 : vector<8x128xf32>
    %130 = math.exp %129 : vector<8x128xf32>
    %cst_46 = arith.constant 1.000000e+00 : f32
    %131 = vector.broadcast %cst_46 : f32 to vector<8x128xf32>
    %132 = arith.addf %131, %130 : vector<8x128xf32>
    %133 = arith.divf %131, %132 : vector<8x128xf32>
    %134 = vector.extract_strided_slice %115 {offsets = [0, 256], sizes = [8, 128], strides = [1, 1]} : vector<8x384xf32> to vector<8x128xf32>
    %135 = vector.extract_strided_slice %117 {offsets = [0, 256], sizes = [8, 128], strides = [1, 1]} : vector<8x384xf32> to vector<8x128xf32>
    %136 = arith.mulf %125, %135 : vector<8x128xf32>
    %137 = arith.addf %134, %136 : vector<8x128xf32>
    %138 = math.tanh %137 : vector<8x128xf32>
    %cst_47 = arith.constant 1.000000e+00 : f32
    %139 = vector.broadcast %cst_47 : f32 to vector<8x128xf32>
    %140 = arith.subf %139, %133 : vector<8x128xf32>
    %141 = arith.mulf %140, %138 : vector<8x128xf32>
    %142 = arith.mulf %133, %108 : vector<8x128xf32>
    %143 = arith.addf %141, %142 : vector<8x128xf32>
    %144 = arith.index_cast %c3_i32 : i32 to index
    %c0_48 = arith.constant 0 : index
    %c0_49 = arith.constant 0 : index
    %145 = vector.load %arg7[%144, %c0_48, %c0_49] : memref<8x8x128xf32, #tpu.memory_space<vmem>>, vector<1x8x128xf32>
    %146 = vector.shape_cast %145 : vector<1x8x128xf32> to vector<8x128xf32>
    %147 = vector.shape_cast %143 : vector<8x128xf32> to vector<1x8x128xf32>
    tpu.vector_store %arg7[%144, %c0_48, %c0_49], %147 {strides = array<i32>} : memref<8x8x128xf32, #tpu.memory_space<vmem>>, vector<1x8x128xf32>,
    %c4_i32 = arith.constant 4 : i32
    %148 = arith.index_cast %c4_i32 : i32 to index
    %c0_50 = arith.constant 0 : index
    %c0_51 = arith.constant 0 : index
    %149 = vector.load %arg9[%148, %c0_50, %c0_51] : memref<8x8x384xf32, #tpu.memory_space<vmem>>, vector<1x8x384xf32>
    %150 = vector.shape_cast %149 : vector<1x8x384xf32> to vector<8x384xf32>
    %c0_52 = arith.constant 0 : index
    %c0_53 = arith.constant 0 : index
    %151 = vector.load %arg4[%c0_52, %c0_53] : memref<128x384xf32, #tpu.memory_space<vmem>>, vector<128x384xf32>
    %cst_54 = arith.constant dense<0.000000e+00> : vector<8x384xf32>
    %152 = tpu.matmul %143, %151, %cst_54 {dimension_numbers = #tpu.dot_dimension_numbers<[1], [0], [0], [1], [0, 0, 1, 1], [], []>} : vector<8x128xf32>, vector<128x384xf32>, vector<8x384xf32> -> vector<8x384xf32>
    %153 = vector.extract_strided_slice %150 {offsets = [0, 0], sizes = [8, 128], strides = [1, 1]} : vector<8x384xf32> to vector<8x128xf32>
    %154 = vector.extract_strided_slice %152 {offsets = [0, 0], sizes = [8, 128], strides = [1, 1]} : vector<8x384xf32> to vector<8x128xf32>
    %155 = arith.addf %153, %154 : vector<8x128xf32>
    %156 = arith.negf %155 : vector<8x128xf32>
    %157 = math.exp %156 : vector<8x128xf32>
    %cst_55 = arith.constant 1.000000e+00 : f32
    %158 = vector.broadcast %cst_55 : f32 to vector<8x128xf32>
    %159 = arith.addf %158, %157 : vector<8x128xf32>
    %160 = arith.divf %158, %159 : vector<8x128xf32>
    %161 = vector.extract_strided_slice %150 {offsets = [0, 128], sizes = [8, 128], strides = [1, 1]} : vector<8x384xf32> to vector<8x128xf32>
    %162 = vector.extract_strided_slice %152 {offsets = [0, 128], sizes = [8, 128], strides = [1, 1]} : vector<8x384xf32> to vector<8x128xf32>
    %163 = arith.addf %161, %162 : vector<8x128xf32>
    %164 = arith.negf %163 : vector<8x128xf32>
    %165 = math.exp %164 : vector<8x128xf32>
    %cst_56 = arith.constant 1.000000e+00 : f32
    %166 = vector.broadcast %cst_56 : f32 to vector<8x128xf32>
    %167 = arith.addf %166, %165 : vector<8x128xf32>
    %168 = arith.divf %166, %167 : vector<8x128xf32>
    %169 = vector.extract_strided_slice %150 {offsets = [0, 256], sizes = [8, 128], strides = [1, 1]} : vector<8x384xf32> to vector<8x128xf32>
    %170 = vector.extract_strided_slice %152 {offsets = [0, 256], sizes = [8, 128], strides = [1, 1]} : vector<8x384xf32> to vector<8x128xf32>
    %171 = arith.mulf %160, %170 : vector<8x128xf32>
    %172 = arith.addf %169, %171 : vector<8x128xf32>
    %173 = math.tanh %172 : vector<8x128xf32>
    %cst_57 = arith.constant 1.000000e+00 : f32
    %174 = vector.broadcast %cst_57 : f32 to vector<8x128xf32>
    %175 = arith.subf %174, %168 : vector<8x128xf32>
    %176 = arith.mulf %175, %173 : vector<8x128xf32>
    %177 = arith.mulf %168, %143 : vector<8x128xf32>
    %178 = arith.addf %176, %177 : vector<8x128xf32>
    %179 = arith.index_cast %c4_i32 : i32 to index
    %c0_58 = arith.constant 0 : index
    %c0_59 = arith.constant 0 : index
    %180 = vector.load %arg7[%179, %c0_58, %c0_59] : memref<8x8x128xf32, #tpu.memory_space<vmem>>, vector<1x8x128xf32>
    %181 = vector.shape_cast %180 : vector<1x8x128xf32> to vector<8x128xf32>
    %182 = vector.shape_cast %178 : vector<8x128xf32> to vector<1x8x128xf32>
    tpu.vector_store %arg7[%179, %c0_58, %c0_59], %182 {strides = array<i32>} : memref<8x8x128xf32, #tpu.memory_space<vmem>>, vector<1x8x128xf32>,
    %c5_i32 = arith.constant 5 : i32
    %183 = arith.index_cast %c5_i32 : i32 to index
    %c0_60 = arith.constant 0 : index
    %c0_61 = arith.constant 0 : index
    %184 = vector.load %arg9[%183, %c0_60, %c0_61] : memref<8x8x384xf32, #tpu.memory_space<vmem>>, vector<1x8x384xf32>
    %185 = vector.shape_cast %184 : vector<1x8x384xf32> to vector<8x384xf32>
    %c0_62 = arith.constant 0 : index
    %c0_63 = arith.constant 0 : index
    %186 = vector.load %arg4[%c0_62, %c0_63] : memref<128x384xf32, #tpu.memory_space<vmem>>, vector<128x384xf32>
    %cst_64 = arith.constant dense<0.000000e+00> : vector<8x384xf32>
    %187 = tpu.matmul %178, %186, %cst_64 {dimension_numbers = #tpu.dot_dimension_numbers<[1], [0], [0], [1], [0, 0, 1, 1], [], []>} : vector<8x128xf32>, vector<128x384xf32>, vector<8x384xf32> -> vector<8x384xf32>
    %188 = vector.extract_strided_slice %185 {offsets = [0, 0], sizes = [8, 128], strides = [1, 1]} : vector<8x384xf32> to vector<8x128xf32>
    %189 = vector.extract_strided_slice %187 {offsets = [0, 0], sizes = [8, 128], strides = [1, 1]} : vector<8x384xf32> to vector<8x128xf32>
    %190 = arith.addf %188, %189 : vector<8x128xf32>
    %191 = arith.negf %190 : vector<8x128xf32>
    %192 = math.exp %191 : vector<8x128xf32>
    %cst_65 = arith.constant 1.000000e+00 : f32
    %193 = vector.broadcast %cst_65 : f32 to vector<8x128xf32>
    %194 = arith.addf %193, %192 : vector<8x128xf32>
    %195 = arith.divf %193, %194 : vector<8x128xf32>
    %196 = vector.extract_strided_slice %185 {offsets = [0, 128], sizes = [8, 128], strides = [1, 1]} : vector<8x384xf32> to vector<8x128xf32>
    %197 = vector.extract_strided_slice %187 {offsets = [0, 128], sizes = [8, 128], strides = [1, 1]} : vector<8x384xf32> to vector<8x128xf32>
    %198 = arith.addf %196, %197 : vector<8x128xf32>
    %199 = arith.negf %198 : vector<8x128xf32>
    %200 = math.exp %199 : vector<8x128xf32>
    %cst_66 = arith.constant 1.000000e+00 : f32
    %201 = vector.broadcast %cst_66 : f32 to vector<8x128xf32>
    %202 = arith.addf %201, %200 : vector<8x128xf32>
    %203 = arith.divf %201, %202 : vector<8x128xf32>
    %204 = vector.extract_strided_slice %185 {offsets = [0, 256], sizes = [8, 128], strides = [1, 1]} : vector<8x384xf32> to vector<8x128xf32>
    %205 = vector.extract_strided_slice %187 {offsets = [0, 256], sizes = [8, 128], strides = [1, 1]} : vector<8x384xf32> to vector<8x128xf32>
    %206 = arith.mulf %195, %205 : vector<8x128xf32>
    %207 = arith.addf %204, %206 : vector<8x128xf32>
    %208 = math.tanh %207 : vector<8x128xf32>
    %cst_67 = arith.constant 1.000000e+00 : f32
    %209 = vector.broadcast %cst_67 : f32 to vector<8x128xf32>
    %210 = arith.subf %209, %203 : vector<8x128xf32>
    %211 = arith.mulf %210, %208 : vector<8x128xf32>
    %212 = arith.mulf %203, %178 : vector<8x128xf32>
    %213 = arith.addf %211, %212 : vector<8x128xf32>
    %214 = arith.index_cast %c5_i32 : i32 to index
    %c0_68 = arith.constant 0 : index
    %c0_69 = arith.constant 0 : index
    %215 = vector.load %arg7[%214, %c0_68, %c0_69] : memref<8x8x128xf32, #tpu.memory_space<vmem>>, vector<1x8x128xf32>
    %216 = vector.shape_cast %215 : vector<1x8x128xf32> to vector<8x128xf32>
    %217 = vector.shape_cast %213 : vector<8x128xf32> to vector<1x8x128xf32>
    tpu.vector_store %arg7[%214, %c0_68, %c0_69], %217 {strides = array<i32>} : memref<8x8x128xf32, #tpu.memory_space<vmem>>, vector<1x8x128xf32>,
    %c6_i32 = arith.constant 6 : i32
    %218 = arith.index_cast %c6_i32 : i32 to index
    %c0_70 = arith.constant 0 : index
    %c0_71 = arith.constant 0 : index
    %219 = vector.load %arg9[%218, %c0_70, %c0_71] : memref<8x8x384xf32, #tpu.memory_space<vmem>>, vector<1x8x384xf32>
    %220 = vector.shape_cast %219 : vector<1x8x384xf32> to vector<8x384xf32>
    %c0_72 = arith.constant 0 : index
    %c0_73 = arith.constant 0 : index
    %221 = vector.load %arg4[%c0_72, %c0_73] : memref<128x384xf32, #tpu.memory_space<vmem>>, vector<128x384xf32>
    %cst_74 = arith.constant dense<0.000000e+00> : vector<8x384xf32>
    %222 = tpu.matmul %213, %221, %cst_74 {dimension_numbers = #tpu.dot_dimension_numbers<[1], [0], [0], [1], [0, 0, 1, 1], [], []>} : vector<8x128xf32>, vector<128x384xf32>, vector<8x384xf32> -> vector<8x384xf32>
    %223 = vector.extract_strided_slice %220 {offsets = [0, 0], sizes = [8, 128], strides = [1, 1]} : vector<8x384xf32> to vector<8x128xf32>
    %224 = vector.extract_strided_slice %222 {offsets = [0, 0], sizes = [8, 128], strides = [1, 1]} : vector<8x384xf32> to vector<8x128xf32>
    %225 = arith.addf %223, %224 : vector<8x128xf32>
    %226 = arith.negf %225 : vector<8x128xf32>
    %227 = math.exp %226 : vector<8x128xf32>
    %cst_75 = arith.constant 1.000000e+00 : f32
    %228 = vector.broadcast %cst_75 : f32 to vector<8x128xf32>
    %229 = arith.addf %228, %227 : vector<8x128xf32>
    %230 = arith.divf %228, %229 : vector<8x128xf32>
    %231 = vector.extract_strided_slice %220 {offsets = [0, 128], sizes = [8, 128], strides = [1, 1]} : vector<8x384xf32> to vector<8x128xf32>
    %232 = vector.extract_strided_slice %222 {offsets = [0, 128], sizes = [8, 128], strides = [1, 1]} : vector<8x384xf32> to vector<8x128xf32>
    %233 = arith.addf %231, %232 : vector<8x128xf32>
    %234 = arith.negf %233 : vector<8x128xf32>
    %235 = math.exp %234 : vector<8x128xf32>
    %cst_76 = arith.constant 1.000000e+00 : f32
    %236 = vector.broadcast %cst_76 : f32 to vector<8x128xf32>
    %237 = arith.addf %236, %235 : vector<8x128xf32>
    %238 = arith.divf %236, %237 : vector<8x128xf32>
    %239 = vector.extract_strided_slice %220 {offsets = [0, 256], sizes = [8, 128], strides = [1, 1]} : vector<8x384xf32> to vector<8x128xf32>
    %240 = vector.extract_strided_slice %222 {offsets = [0, 256], sizes = [8, 128], strides = [1, 1]} : vector<8x384xf32> to vector<8x128xf32>
    %241 = arith.mulf %230, %240 : vector<8x128xf32>
    %242 = arith.addf %239, %241 : vector<8x128xf32>
    %243 = math.tanh %242 : vector<8x128xf32>
    %cst_77 = arith.constant 1.000000e+00 : f32
    %244 = vector.broadcast %cst_77 : f32 to vector<8x128xf32>
    %245 = arith.subf %244, %238 : vector<8x128xf32>
    %246 = arith.mulf %245, %243 : vector<8x128xf32>
    %247 = arith.mulf %238, %213 : vector<8x128xf32>
    %248 = arith.addf %246, %247 : vector<8x128xf32>
    %249 = arith.index_cast %c6_i32 : i32 to index
    %c0_78 = arith.constant 0 : index
    %c0_79 = arith.constant 0 : index
    %250 = vector.load %arg7[%249, %c0_78, %c0_79] : memref<8x8x128xf32, #tpu.memory_space<vmem>>, vector<1x8x128xf32>
    %251 = vector.shape_cast %250 : vector<1x8x128xf32> to vector<8x128xf32>
    %252 = vector.shape_cast %248 : vector<8x128xf32> to vector<1x8x128xf32>
    tpu.vector_store %arg7[%249, %c0_78, %c0_79], %252 {strides = array<i32>} : memref<8x8x128xf32, #tpu.memory_space<vmem>>, vector<1x8x128xf32>,
    %c7_i32 = arith.constant 7 : i32
    %253 = arith.index_cast %c7_i32 : i32 to index
    %c0_80 = arith.constant 0 : index
    %c0_81 = arith.constant 0 : index
    %254 = vector.load %arg9[%253, %c0_80, %c0_81] : memref<8x8x384xf32, #tpu.memory_space<vmem>>, vector<1x8x384xf32>
    %255 = vector.shape_cast %254 : vector<1x8x384xf32> to vector<8x384xf32>
    %c0_82 = arith.constant 0 : index
    %c0_83 = arith.constant 0 : index
    %256 = vector.load %arg4[%c0_82, %c0_83] : memref<128x384xf32, #tpu.memory_space<vmem>>, vector<128x384xf32>
    %cst_84 = arith.constant dense<0.000000e+00> : vector<8x384xf32>
    %257 = tpu.matmul %248, %256, %cst_84 {dimension_numbers = #tpu.dot_dimension_numbers<[1], [0], [0], [1], [0, 0, 1, 1], [], []>} : vector<8x128xf32>, vector<128x384xf32>, vector<8x384xf32> -> vector<8x384xf32>
    %258 = vector.extract_strided_slice %255 {offsets = [0, 0], sizes = [8, 128], strides = [1, 1]} : vector<8x384xf32> to vector<8x128xf32>
    %259 = vector.extract_strided_slice %257 {offsets = [0, 0], sizes = [8, 128], strides = [1, 1]} : vector<8x384xf32> to vector<8x128xf32>
    %260 = arith.addf %258, %259 : vector<8x128xf32>
    %261 = arith.negf %260 : vector<8x128xf32>
    %262 = math.exp %261 : vector<8x128xf32>
    %cst_85 = arith.constant 1.000000e+00 : f32
    %263 = vector.broadcast %cst_85 : f32 to vector<8x128xf32>
    %264 = arith.addf %263, %262 : vector<8x128xf32>
    %265 = arith.divf %263, %264 : vector<8x128xf32>
    %266 = vector.extract_strided_slice %255 {offsets = [0, 128], sizes = [8, 128], strides = [1, 1]} : vector<8x384xf32> to vector<8x128xf32>
    %267 = vector.extract_strided_slice %257 {offsets = [0, 128], sizes = [8, 128], strides = [1, 1]} : vector<8x384xf32> to vector<8x128xf32>
    %268 = arith.addf %266, %267 : vector<8x128xf32>
    %269 = arith.negf %268 : vector<8x128xf32>
    %270 = math.exp %269 : vector<8x128xf32>
    %cst_86 = arith.constant 1.000000e+00 : f32
    %271 = vector.broadcast %cst_86 : f32 to vector<8x128xf32>
    %272 = arith.addf %271, %270 : vector<8x128xf32>
    %273 = arith.divf %271, %272 : vector<8x128xf32>
    %274 = vector.extract_strided_slice %255 {offsets = [0, 256], sizes = [8, 128], strides = [1, 1]} : vector<8x384xf32> to vector<8x128xf32>
    %275 = vector.extract_strided_slice %257 {offsets = [0, 256], sizes = [8, 128], strides = [1, 1]} : vector<8x384xf32> to vector<8x128xf32>
    %276 = arith.mulf %265, %275 : vector<8x128xf32>
    %277 = arith.addf %274, %276 : vector<8x128xf32>
    %278 = math.tanh %277 : vector<8x128xf32>
    %cst_87 = arith.constant 1.000000e+00 : f32
    %279 = vector.broadcast %cst_87 : f32 to vector<8x128xf32>
    %280 = arith.subf %279, %273 : vector<8x128xf32>
    %281 = arith.mulf %280, %278 : vector<8x128xf32>
    %282 = arith.mulf %273, %248 : vector<8x128xf32>
    %283 = arith.addf %281, %282 : vector<8x128xf32>
    %284 = arith.index_cast %c7_i32 : i32 to index
    %c0_88 = arith.constant 0 : index
    %c0_89 = arith.constant 0 : index
    %285 = vector.load %arg7[%284, %c0_88, %c0_89] : memref<8x8x128xf32, #tpu.memory_space<vmem>>, vector<1x8x128xf32>
    %286 = vector.shape_cast %285 : vector<1x8x128xf32> to vector<8x128xf32>
    %287 = vector.shape_cast %283 : vector<8x128xf32> to vector<1x8x128xf32>
    tpu.vector_store %arg7[%284, %c0_88, %c0_89], %287 {strides = array<i32>} : memref<8x8x128xf32, #tpu.memory_space<vmem>>, vector<1x8x128xf32>,
    %c8_i32 = arith.constant 8 : i32
    %c0_90 = arith.constant 0 : index
    %c0_91 = arith.constant 0 : index
    %c0_92 = arith.constant 0 : index
    %288 = vector.load %arg8[%c0_90, %c0_91, %c0_92] : memref<2x8x128xf32, #tpu.memory_space<vmem>>, vector<1x8x128xf32>
    %289 = vector.shape_cast %288 : vector<1x8x128xf32> to vector<8x128xf32>
    %290 = vector.shape_cast %283 : vector<8x128xf32> to vector<1x8x128xf32>
    tpu.vector_store %arg8[%c0_90, %c0_91, %c0_92], %290 {strides = array<i32>} : memref<2x8x128xf32, #tpu.memory_space<vmem>>, vector<1x8x128xf32>,
    %c0_93 = arith.constant 0 : index
    %c0_94 = arith.constant 0 : index
    %c0_95 = arith.constant 0 : index
    %291 = vector.load %arg7[%c0_93, %c0_94, %c0_95] : memref<8x8x128xf32, #tpu.memory_space<vmem>>, vector<8x8x128xf32>
    %292 = vector.shape_cast %291 : vector<8x8x128xf32> to vector<64x128xf32>
    %c0_96 = arith.constant 0 : index
    %c0_97 = arith.constant 0 : index
    %293 = vector.load %arg5[%c0_96, %c0_97] : memref<128x384xf32, #tpu.memory_space<vmem>>, vector<128x384xf32>
    %cst_98 = arith.constant dense<0.000000e+00> : vector<64x384xf32>
    %294 = tpu.matmul %292, %293, %cst_98 {dimension_numbers = #tpu.dot_dimension_numbers<[1], [0], [0], [1], [0, 0, 1, 1], [], []>} : vector<64x128xf32>, vector<128x384xf32>, vector<64x384xf32> -> vector<64x384xf32>
    %295 = vector.shape_cast %294 : vector<64x384xf32> to vector<8x8x384xf32>
    %c0_99 = arith.constant 0 : index
    %c0_100 = arith.constant 0 : index
    %c0_101 = arith.constant 0 : index
    %296 = vector.load %arg9[%c0_99, %c0_100, %c0_101] : memref<8x8x384xf32, #tpu.memory_space<vmem>>, vector<8x8x384xf32>
    tpu.vector_store %arg9[%c0_99, %c0_100, %c0_101], %295 {strides = array<i32>} : memref<8x8x384xf32, #tpu.memory_space<vmem>>, vector<8x8x384xf32>,
    %c1 = arith.constant 1 : index
    %c0_102 = arith.constant 0 : index
    %c0_103 = arith.constant 0 : index
    %297 = vector.load %arg2[%c1, %c0_102, %c0_103] : memref<2x8x128xf32, #tpu.memory_space<vmem>>, vector<1x8x128xf32>
    %298 = vector.shape_cast %297 : vector<1x8x128xf32> to vector<8x128xf32>
    %c0_i32_104 = arith.constant 0 : i32
    %299 = arith.index_cast %c0_i32_104 : i32 to index
    %c0_105 = arith.constant 0 : index
    %c0_106 = arith.constant 0 : index
    %300 = vector.load %arg9[%299, %c0_105, %c0_106] : memref<8x8x384xf32, #tpu.memory_space<vmem>>, vector<1x8x384xf32>
    %301 = vector.shape_cast %300 : vector<1x8x384xf32> to vector<8x384xf32>
    %c0_107 = arith.constant 0 : index
    %c0_108 = arith.constant 0 : index
    %302 = vector.load %arg6[%c0_107, %c0_108] : memref<128x384xf32, #tpu.memory_space<vmem>>, vector<128x384xf32>
    %cst_109 = arith.constant dense<0.000000e+00> : vector<8x384xf32>
    %303 = tpu.matmul %298, %302, %cst_109 {dimension_numbers = #tpu.dot_dimension_numbers<[1], [0], [0], [1], [0, 0, 1, 1], [], []>} : vector<8x128xf32>, vector<128x384xf32>, vector<8x384xf32> -> vector<8x384xf32>
    %304 = vector.extract_strided_slice %301 {offsets = [0, 0], sizes = [8, 128], strides = [1, 1]} : vector<8x384xf32> to vector<8x128xf32>
    %305 = vector.extract_strided_slice %303 {offsets = [0, 0], sizes = [8, 128], strides = [1, 1]} : vector<8x384xf32> to vector<8x128xf32>
    %306 = arith.addf %304, %305 : vector<8x128xf32>
    %307 = arith.negf %306 : vector<8x128xf32>
    %308 = math.exp %307 : vector<8x128xf32>
    %cst_110 = arith.constant 1.000000e+00 : f32
    %309 = vector.broadcast %cst_110 : f32 to vector<8x128xf32>
    %310 = arith.addf %309, %308 : vector<8x128xf32>
    %311 = arith.divf %309, %310 : vector<8x128xf32>
    %312 = vector.extract_strided_slice %301 {offsets = [0, 128], sizes = [8, 128], strides = [1, 1]} : vector<8x384xf32> to vector<8x128xf32>
    %313 = vector.extract_strided_slice %303 {offsets = [0, 128], sizes = [8, 128], strides = [1, 1]} : vector<8x384xf32> to vector<8x128xf32>
    %314 = arith.addf %312, %313 : vector<8x128xf32>
    %315 = arith.negf %314 : vector<8x128xf32>
    %316 = math.exp %315 : vector<8x128xf32>
    %cst_111 = arith.constant 1.000000e+00 : f32
    %317 = vector.broadcast %cst_111 : f32 to vector<8x128xf32>
    %318 = arith.addf %317, %316 : vector<8x128xf32>
    %319 = arith.divf %317, %318 : vector<8x128xf32>
    %320 = vector.extract_strided_slice %301 {offsets = [0, 256], sizes = [8, 128], strides = [1, 1]} : vector<8x384xf32> to vector<8x128xf32>
    %321 = vector.extract_strided_slice %303 {offsets = [0, 256], sizes = [8, 128], strides = [1, 1]} : vector<8x384xf32> to vector<8x128xf32>
    %322 = arith.mulf %311, %321 : vector<8x128xf32>
    %323 = arith.addf %320, %322 : vector<8x128xf32>
    %324 = math.tanh %323 : vector<8x128xf32>
    %cst_112 = arith.constant 1.000000e+00 : f32
    %325 = vector.broadcast %cst_112 : f32 to vector<8x128xf32>
    %326 = arith.subf %325, %319 : vector<8x128xf32>
    %327 = arith.mulf %326, %324 : vector<8x128xf32>
    %328 = arith.mulf %319, %298 : vector<8x128xf32>
    %329 = arith.addf %327, %328 : vector<8x128xf32>
    %330 = arith.index_cast %c0_i32_104 : i32 to index
    %c0_113 = arith.constant 0 : index
    %c0_114 = arith.constant 0 : index
    %331 = vector.load %arg7[%330, %c0_113, %c0_114] : memref<8x8x128xf32, #tpu.memory_space<vmem>>, vector<1x8x128xf32>
    %332 = vector.shape_cast %331 : vector<1x8x128xf32> to vector<8x128xf32>
    %333 = vector.shape_cast %329 : vector<8x128xf32> to vector<1x8x128xf32>
    tpu.vector_store %arg7[%330, %c0_113, %c0_114], %333 {strides = array<i32>} : memref<8x8x128xf32, #tpu.memory_space<vmem>>, vector<1x8x128xf32>,
    %c1_i32_115 = arith.constant 1 : i32
    %334 = arith.index_cast %c1_i32_115 : i32 to index
    %c0_116 = arith.constant 0 : index
    %c0_117 = arith.constant 0 : index
    %335 = vector.load %arg9[%334, %c0_116, %c0_117] : memref<8x8x384xf32, #tpu.memory_space<vmem>>, vector<1x8x384xf32>
    %336 = vector.shape_cast %335 : vector<1x8x384xf32> to vector<8x384xf32>
    %c0_118 = arith.constant 0 : index
    %c0_119 = arith.constant 0 : index
    %337 = vector.load %arg6[%c0_118, %c0_119] : memref<128x384xf32, #tpu.memory_space<vmem>>, vector<128x384xf32>
    %cst_120 = arith.constant dense<0.000000e+00> : vector<8x384xf32>
    %338 = tpu.matmul %329, %337, %cst_120 {dimension_numbers = #tpu.dot_dimension_numbers<[1], [0], [0], [1], [0, 0, 1, 1], [], []>} : vector<8x128xf32>, vector<128x384xf32>, vector<8x384xf32> -> vector<8x384xf32>
    %339 = vector.extract_strided_slice %336 {offsets = [0, 0], sizes = [8, 128], strides = [1, 1]} : vector<8x384xf32> to vector<8x128xf32>
    %340 = vector.extract_strided_slice %338 {offsets = [0, 0], sizes = [8, 128], strides = [1, 1]} : vector<8x384xf32> to vector<8x128xf32>
    %341 = arith.addf %339, %340 : vector<8x128xf32>
    %342 = arith.negf %341 : vector<8x128xf32>
    %343 = math.exp %342 : vector<8x128xf32>
    %cst_121 = arith.constant 1.000000e+00 : f32
    %344 = vector.broadcast %cst_121 : f32 to vector<8x128xf32>
    %345 = arith.addf %344, %343 : vector<8x128xf32>
    %346 = arith.divf %344, %345 : vector<8x128xf32>
    %347 = vector.extract_strided_slice %336 {offsets = [0, 128], sizes = [8, 128], strides = [1, 1]} : vector<8x384xf32> to vector<8x128xf32>
    %348 = vector.extract_strided_slice %338 {offsets = [0, 128], sizes = [8, 128], strides = [1, 1]} : vector<8x384xf32> to vector<8x128xf32>
    %349 = arith.addf %347, %348 : vector<8x128xf32>
    %350 = arith.negf %349 : vector<8x128xf32>
    %351 = math.exp %350 : vector<8x128xf32>
    %cst_122 = arith.constant 1.000000e+00 : f32
    %352 = vector.broadcast %cst_122 : f32 to vector<8x128xf32>
    %353 = arith.addf %352, %351 : vector<8x128xf32>
    %354 = arith.divf %352, %353 : vector<8x128xf32>
    %355 = vector.extract_strided_slice %336 {offsets = [0, 256], sizes = [8, 128], strides = [1, 1]} : vector<8x384xf32> to vector<8x128xf32>
    %356 = vector.extract_strided_slice %338 {offsets = [0, 256], sizes = [8, 128], strides = [1, 1]} : vector<8x384xf32> to vector<8x128xf32>
    %357 = arith.mulf %346, %356 : vector<8x128xf32>
    %358 = arith.addf %355, %357 : vector<8x128xf32>
    %359 = math.tanh %358 : vector<8x128xf32>
    %cst_123 = arith.constant 1.000000e+00 : f32
    %360 = vector.broadcast %cst_123 : f32 to vector<8x128xf32>
    %361 = arith.subf %360, %354 : vector<8x128xf32>
    %362 = arith.mulf %361, %359 : vector<8x128xf32>
    %363 = arith.mulf %354, %329 : vector<8x128xf32>
    %364 = arith.addf %362, %363 : vector<8x128xf32>
    %365 = arith.index_cast %c1_i32_115 : i32 to index
    %c0_124 = arith.constant 0 : index
    %c0_125 = arith.constant 0 : index
    %366 = vector.load %arg7[%365, %c0_124, %c0_125] : memref<8x8x128xf32, #tpu.memory_space<vmem>>, vector<1x8x128xf32>
    %367 = vector.shape_cast %366 : vector<1x8x128xf32> to vector<8x128xf32>
    %368 = vector.shape_cast %364 : vector<8x128xf32> to vector<1x8x128xf32>
    tpu.vector_store %arg7[%365, %c0_124, %c0_125], %368 {strides = array<i32>} : memref<8x8x128xf32, #tpu.memory_space<vmem>>, vector<1x8x128xf32>,
    %c2_i32_126 = arith.constant 2 : i32
    %369 = arith.index_cast %c2_i32_126 : i32 to index
    %c0_127 = arith.constant 0 : index
    %c0_128 = arith.constant 0 : index
    %370 = vector.load %arg9[%369, %c0_127, %c0_128] : memref<8x8x384xf32, #tpu.memory_space<vmem>>, vector<1x8x384xf32>
    %371 = vector.shape_cast %370 : vector<1x8x384xf32> to vector<8x384xf32>
    %c0_129 = arith.constant 0 : index
    %c0_130 = arith.constant 0 : index
    %372 = vector.load %arg6[%c0_129, %c0_130] : memref<128x384xf32, #tpu.memory_space<vmem>>, vector<128x384xf32>
    %cst_131 = arith.constant dense<0.000000e+00> : vector<8x384xf32>
    %373 = tpu.matmul %364, %372, %cst_131 {dimension_numbers = #tpu.dot_dimension_numbers<[1], [0], [0], [1], [0, 0, 1, 1], [], []>} : vector<8x128xf32>, vector<128x384xf32>, vector<8x384xf32> -> vector<8x384xf32>
    %374 = vector.extract_strided_slice %371 {offsets = [0, 0], sizes = [8, 128], strides = [1, 1]} : vector<8x384xf32> to vector<8x128xf32>
    %375 = vector.extract_strided_slice %373 {offsets = [0, 0], sizes = [8, 128], strides = [1, 1]} : vector<8x384xf32> to vector<8x128xf32>
    %376 = arith.addf %374, %375 : vector<8x128xf32>
    %377 = arith.negf %376 : vector<8x128xf32>
    %378 = math.exp %377 : vector<8x128xf32>
    %cst_132 = arith.constant 1.000000e+00 : f32
    %379 = vector.broadcast %cst_132 : f32 to vector<8x128xf32>
    %380 = arith.addf %379, %378 : vector<8x128xf32>
    %381 = arith.divf %379, %380 : vector<8x128xf32>
    %382 = vector.extract_strided_slice %371 {offsets = [0, 128], sizes = [8, 128], strides = [1, 1]} : vector<8x384xf32> to vector<8x128xf32>
    %383 = vector.extract_strided_slice %373 {offsets = [0, 128], sizes = [8, 128], strides = [1, 1]} : vector<8x384xf32> to vector<8x128xf32>
    %384 = arith.addf %382, %383 : vector<8x128xf32>
    %385 = arith.negf %384 : vector<8x128xf32>
    %386 = math.exp %385 : vector<8x128xf32>
    %cst_133 = arith.constant 1.000000e+00 : f32
    %387 = vector.broadcast %cst_133 : f32 to vector<8x128xf32>
    %388 = arith.addf %387, %386 : vector<8x128xf32>
    %389 = arith.divf %387, %388 : vector<8x128xf32>
    %390 = vector.extract_strided_slice %371 {offsets = [0, 256], sizes = [8, 128], strides = [1, 1]} : vector<8x384xf32> to vector<8x128xf32>
    %391 = vector.extract_strided_slice %373 {offsets = [0, 256], sizes = [8, 128], strides = [1, 1]} : vector<8x384xf32> to vector<8x128xf32>
    %392 = arith.mulf %381, %391 : vector<8x128xf32>
    %393 = arith.addf %390, %392 : vector<8x128xf32>
    %394 = math.tanh %393 : vector<8x128xf32>
    %cst_134 = arith.constant 1.000000e+00 : f32
    %395 = vector.broadcast %cst_134 : f32 to vector<8x128xf32>
    %396 = arith.subf %395, %389 : vector<8x128xf32>
    %397 = arith.mulf %396, %394 : vector<8x128xf32>
    %398 = arith.mulf %389, %364 : vector<8x128xf32>
    %399 = arith.addf %397, %398 : vector<8x128xf32>
    %400 = arith.index_cast %c2_i32_126 : i32 to index
    %c0_135 = arith.constant 0 : index
    %c0_136 = arith.constant 0 : index
    %401 = vector.load %arg7[%400, %c0_135, %c0_136] : memref<8x8x128xf32, #tpu.memory_space<vmem>>, vector<1x8x128xf32>
    %402 = vector.shape_cast %401 : vector<1x8x128xf32> to vector<8x128xf32>
    %403 = vector.shape_cast %399 : vector<8x128xf32> to vector<1x8x128xf32>
    tpu.vector_store %arg7[%400, %c0_135, %c0_136], %403 {strides = array<i32>} : memref<8x8x128xf32, #tpu.memory_space<vmem>>, vector<1x8x128xf32>,
    %c3_i32_137 = arith.constant 3 : i32
    %404 = arith.index_cast %c3_i32_137 : i32 to index
    %c0_138 = arith.constant 0 : index
    %c0_139 = arith.constant 0 : index
    %405 = vector.load %arg9[%404, %c0_138, %c0_139] : memref<8x8x384xf32, #tpu.memory_space<vmem>>, vector<1x8x384xf32>
    %406 = vector.shape_cast %405 : vector<1x8x384xf32> to vector<8x384xf32>
    %c0_140 = arith.constant 0 : index
    %c0_141 = arith.constant 0 : index
    %407 = vector.load %arg6[%c0_140, %c0_141] : memref<128x384xf32, #tpu.memory_space<vmem>>, vector<128x384xf32>
    %cst_142 = arith.constant dense<0.000000e+00> : vector<8x384xf32>
    %408 = tpu.matmul %399, %407, %cst_142 {dimension_numbers = #tpu.dot_dimension_numbers<[1], [0], [0], [1], [0, 0, 1, 1], [], []>} : vector<8x128xf32>, vector<128x384xf32>, vector<8x384xf32> -> vector<8x384xf32>
    %409 = vector.extract_strided_slice %406 {offsets = [0, 0], sizes = [8, 128], strides = [1, 1]} : vector<8x384xf32> to vector<8x128xf32>
    %410 = vector.extract_strided_slice %408 {offsets = [0, 0], sizes = [8, 128], strides = [1, 1]} : vector<8x384xf32> to vector<8x128xf32>
    %411 = arith.addf %409, %410 : vector<8x128xf32>
    %412 = arith.negf %411 : vector<8x128xf32>
    %413 = math.exp %412 : vector<8x128xf32>
    %cst_143 = arith.constant 1.000000e+00 : f32
    %414 = vector.broadcast %cst_143 : f32 to vector<8x128xf32>
    %415 = arith.addf %414, %413 : vector<8x128xf32>
    %416 = arith.divf %414, %415 : vector<8x128xf32>
    %417 = vector.extract_strided_slice %406 {offsets = [0, 128], sizes = [8, 128], strides = [1, 1]} : vector<8x384xf32> to vector<8x128xf32>
    %418 = vector.extract_strided_slice %408 {offsets = [0, 128], sizes = [8, 128], strides = [1, 1]} : vector<8x384xf32> to vector<8x128xf32>
    %419 = arith.addf %417, %418 : vector<8x128xf32>
    %420 = arith.negf %419 : vector<8x128xf32>
    %421 = math.exp %420 : vector<8x128xf32>
    %cst_144 = arith.constant 1.000000e+00 : f32
    %422 = vector.broadcast %cst_144 : f32 to vector<8x128xf32>
    %423 = arith.addf %422, %421 : vector<8x128xf32>
    %424 = arith.divf %422, %423 : vector<8x128xf32>
    %425 = vector.extract_strided_slice %406 {offsets = [0, 256], sizes = [8, 128], strides = [1, 1]} : vector<8x384xf32> to vector<8x128xf32>
    %426 = vector.extract_strided_slice %408 {offsets = [0, 256], sizes = [8, 128], strides = [1, 1]} : vector<8x384xf32> to vector<8x128xf32>
    %427 = arith.mulf %416, %426 : vector<8x128xf32>
    %428 = arith.addf %425, %427 : vector<8x128xf32>
    %429 = math.tanh %428 : vector<8x128xf32>
    %cst_145 = arith.constant 1.000000e+00 : f32
    %430 = vector.broadcast %cst_145 : f32 to vector<8x128xf32>
    %431 = arith.subf %430, %424 : vector<8x128xf32>
    %432 = arith.mulf %431, %429 : vector<8x128xf32>
    %433 = arith.mulf %424, %399 : vector<8x128xf32>
    %434 = arith.addf %432, %433 : vector<8x128xf32>
    %435 = arith.index_cast %c3_i32_137 : i32 to index
    %c0_146 = arith.constant 0 : index
    %c0_147 = arith.constant 0 : index
    %436 = vector.load %arg7[%435, %c0_146, %c0_147] : memref<8x8x128xf32, #tpu.memory_space<vmem>>, vector<1x8x128xf32>
    %437 = vector.shape_cast %436 : vector<1x8x128xf32> to vector<8x128xf32>
    %438 = vector.shape_cast %434 : vector<8x128xf32> to vector<1x8x128xf32>
    tpu.vector_store %arg7[%435, %c0_146, %c0_147], %438 {strides = array<i32>} : memref<8x8x128xf32, #tpu.memory_space<vmem>>, vector<1x8x128xf32>,
    %c4_i32_148 = arith.constant 4 : i32
    %439 = arith.index_cast %c4_i32_148 : i32 to index
    %c0_149 = arith.constant 0 : index
    %c0_150 = arith.constant 0 : index
    %440 = vector.load %arg9[%439, %c0_149, %c0_150] : memref<8x8x384xf32, #tpu.memory_space<vmem>>, vector<1x8x384xf32>
    %441 = vector.shape_cast %440 : vector<1x8x384xf32> to vector<8x384xf32>
    %c0_151 = arith.constant 0 : index
    %c0_152 = arith.constant 0 : index
    %442 = vector.load %arg6[%c0_151, %c0_152] : memref<128x384xf32, #tpu.memory_space<vmem>>, vector<128x384xf32>
    %cst_153 = arith.constant dense<0.000000e+00> : vector<8x384xf32>
    %443 = tpu.matmul %434, %442, %cst_153 {dimension_numbers = #tpu.dot_dimension_numbers<[1], [0], [0], [1], [0, 0, 1, 1], [], []>} : vector<8x128xf32>, vector<128x384xf32>, vector<8x384xf32> -> vector<8x384xf32>
    %444 = vector.extract_strided_slice %441 {offsets = [0, 0], sizes = [8, 128], strides = [1, 1]} : vector<8x384xf32> to vector<8x128xf32>
    %445 = vector.extract_strided_slice %443 {offsets = [0, 0], sizes = [8, 128], strides = [1, 1]} : vector<8x384xf32> to vector<8x128xf32>
    %446 = arith.addf %444, %445 : vector<8x128xf32>
    %447 = arith.negf %446 : vector<8x128xf32>
    %448 = math.exp %447 : vector<8x128xf32>
    %cst_154 = arith.constant 1.000000e+00 : f32
    %449 = vector.broadcast %cst_154 : f32 to vector<8x128xf32>
    %450 = arith.addf %449, %448 : vector<8x128xf32>
    %451 = arith.divf %449, %450 : vector<8x128xf32>
    %452 = vector.extract_strided_slice %441 {offsets = [0, 128], sizes = [8, 128], strides = [1, 1]} : vector<8x384xf32> to vector<8x128xf32>
    %453 = vector.extract_strided_slice %443 {offsets = [0, 128], sizes = [8, 128], strides = [1, 1]} : vector<8x384xf32> to vector<8x128xf32>
    %454 = arith.addf %452, %453 : vector<8x128xf32>
    %455 = arith.negf %454 : vector<8x128xf32>
    %456 = math.exp %455 : vector<8x128xf32>
    %cst_155 = arith.constant 1.000000e+00 : f32
    %457 = vector.broadcast %cst_155 : f32 to vector<8x128xf32>
    %458 = arith.addf %457, %456 : vector<8x128xf32>
    %459 = arith.divf %457, %458 : vector<8x128xf32>
    %460 = vector.extract_strided_slice %441 {offsets = [0, 256], sizes = [8, 128], strides = [1, 1]} : vector<8x384xf32> to vector<8x128xf32>
    %461 = vector.extract_strided_slice %443 {offsets = [0, 256], sizes = [8, 128], strides = [1, 1]} : vector<8x384xf32> to vector<8x128xf32>
    %462 = arith.mulf %451, %461 : vector<8x128xf32>
    %463 = arith.addf %460, %462 : vector<8x128xf32>
    %464 = math.tanh %463 : vector<8x128xf32>
    %cst_156 = arith.constant 1.000000e+00 : f32
    %465 = vector.broadcast %cst_156 : f32 to vector<8x128xf32>
    %466 = arith.subf %465, %459 : vector<8x128xf32>
    %467 = arith.mulf %466, %464 : vector<8x128xf32>
    %468 = arith.mulf %459, %434 : vector<8x128xf32>
    %469 = arith.addf %467, %468 : vector<8x128xf32>
    %470 = arith.index_cast %c4_i32_148 : i32 to index
    %c0_157 = arith.constant 0 : index
    %c0_158 = arith.constant 0 : index
    %471 = vector.load %arg7[%470, %c0_157, %c0_158] : memref<8x8x128xf32, #tpu.memory_space<vmem>>, vector<1x8x128xf32>
    %472 = vector.shape_cast %471 : vector<1x8x128xf32> to vector<8x128xf32>
    %473 = vector.shape_cast %469 : vector<8x128xf32> to vector<1x8x128xf32>
    tpu.vector_store %arg7[%470, %c0_157, %c0_158], %473 {strides = array<i32>} : memref<8x8x128xf32, #tpu.memory_space<vmem>>, vector<1x8x128xf32>,
    %c5_i32_159 = arith.constant 5 : i32
    %474 = arith.index_cast %c5_i32_159 : i32 to index
    %c0_160 = arith.constant 0 : index
    %c0_161 = arith.constant 0 : index
    %475 = vector.load %arg9[%474, %c0_160, %c0_161] : memref<8x8x384xf32, #tpu.memory_space<vmem>>, vector<1x8x384xf32>
    %476 = vector.shape_cast %475 : vector<1x8x384xf32> to vector<8x384xf32>
    %c0_162 = arith.constant 0 : index
    %c0_163 = arith.constant 0 : index
    %477 = vector.load %arg6[%c0_162, %c0_163] : memref<128x384xf32, #tpu.memory_space<vmem>>, vector<128x384xf32>
    %cst_164 = arith.constant dense<0.000000e+00> : vector<8x384xf32>
    %478 = tpu.matmul %469, %477, %cst_164 {dimension_numbers = #tpu.dot_dimension_numbers<[1], [0], [0], [1], [0, 0, 1, 1], [], []>} : vector<8x128xf32>, vector<128x384xf32>, vector<8x384xf32> -> vector<8x384xf32>
    %479 = vector.extract_strided_slice %476 {offsets = [0, 0], sizes = [8, 128], strides = [1, 1]} : vector<8x384xf32> to vector<8x128xf32>
    %480 = vector.extract_strided_slice %478 {offsets = [0, 0], sizes = [8, 128], strides = [1, 1]} : vector<8x384xf32> to vector<8x128xf32>
    %481 = arith.addf %479, %480 : vector<8x128xf32>
    %482 = arith.negf %481 : vector<8x128xf32>
    %483 = math.exp %482 : vector<8x128xf32>
    %cst_165 = arith.constant 1.000000e+00 : f32
    %484 = vector.broadcast %cst_165 : f32 to vector<8x128xf32>
    %485 = arith.addf %484, %483 : vector<8x128xf32>
    %486 = arith.divf %484, %485 : vector<8x128xf32>
    %487 = vector.extract_strided_slice %476 {offsets = [0, 128], sizes = [8, 128], strides = [1, 1]} : vector<8x384xf32> to vector<8x128xf32>
    %488 = vector.extract_strided_slice %478 {offsets = [0, 128], sizes = [8, 128], strides = [1, 1]} : vector<8x384xf32> to vector<8x128xf32>
    %489 = arith.addf %487, %488 : vector<8x128xf32>
    %490 = arith.negf %489 : vector<8x128xf32>
    %491 = math.exp %490 : vector<8x128xf32>
    %cst_166 = arith.constant 1.000000e+00 : f32
    %492 = vector.broadcast %cst_166 : f32 to vector<8x128xf32>
    %493 = arith.addf %492, %491 : vector<8x128xf32>
    %494 = arith.divf %492, %493 : vector<8x128xf32>
    %495 = vector.extract_strided_slice %476 {offsets = [0, 256], sizes = [8, 128], strides = [1, 1]} : vector<8x384xf32> to vector<8x128xf32>
    %496 = vector.extract_strided_slice %478 {offsets = [0, 256], sizes = [8, 128], strides = [1, 1]} : vector<8x384xf32> to vector<8x128xf32>
    %497 = arith.mulf %486, %496 : vector<8x128xf32>
    %498 = arith.addf %495, %497 : vector<8x128xf32>
    %499 = math.tanh %498 : vector<8x128xf32>
    %cst_167 = arith.constant 1.000000e+00 : f32
    %500 = vector.broadcast %cst_167 : f32 to vector<8x128xf32>
    %501 = arith.subf %500, %494 : vector<8x128xf32>
    %502 = arith.mulf %501, %499 : vector<8x128xf32>
    %503 = arith.mulf %494, %469 : vector<8x128xf32>
    %504 = arith.addf %502, %503 : vector<8x128xf32>
    %505 = arith.index_cast %c5_i32_159 : i32 to index
    %c0_168 = arith.constant 0 : index
    %c0_169 = arith.constant 0 : index
    %506 = vector.load %arg7[%505, %c0_168, %c0_169] : memref<8x8x128xf32, #tpu.memory_space<vmem>>, vector<1x8x128xf32>
    %507 = vector.shape_cast %506 : vector<1x8x128xf32> to vector<8x128xf32>
    %508 = vector.shape_cast %504 : vector<8x128xf32> to vector<1x8x128xf32>
    tpu.vector_store %arg7[%505, %c0_168, %c0_169], %508 {strides = array<i32>} : memref<8x8x128xf32, #tpu.memory_space<vmem>>, vector<1x8x128xf32>,
    %c6_i32_170 = arith.constant 6 : i32
    %509 = arith.index_cast %c6_i32_170 : i32 to index
    %c0_171 = arith.constant 0 : index
    %c0_172 = arith.constant 0 : index
    %510 = vector.load %arg9[%509, %c0_171, %c0_172] : memref<8x8x384xf32, #tpu.memory_space<vmem>>, vector<1x8x384xf32>
    %511 = vector.shape_cast %510 : vector<1x8x384xf32> to vector<8x384xf32>
    %c0_173 = arith.constant 0 : index
    %c0_174 = arith.constant 0 : index
    %512 = vector.load %arg6[%c0_173, %c0_174] : memref<128x384xf32, #tpu.memory_space<vmem>>, vector<128x384xf32>
    %cst_175 = arith.constant dense<0.000000e+00> : vector<8x384xf32>
    %513 = tpu.matmul %504, %512, %cst_175 {dimension_numbers = #tpu.dot_dimension_numbers<[1], [0], [0], [1], [0, 0, 1, 1], [], []>} : vector<8x128xf32>, vector<128x384xf32>, vector<8x384xf32> -> vector<8x384xf32>
    %514 = vector.extract_strided_slice %511 {offsets = [0, 0], sizes = [8, 128], strides = [1, 1]} : vector<8x384xf32> to vector<8x128xf32>
    %515 = vector.extract_strided_slice %513 {offsets = [0, 0], sizes = [8, 128], strides = [1, 1]} : vector<8x384xf32> to vector<8x128xf32>
    %516 = arith.addf %514, %515 : vector<8x128xf32>
    %517 = arith.negf %516 : vector<8x128xf32>
    %518 = math.exp %517 : vector<8x128xf32>
    %cst_176 = arith.constant 1.000000e+00 : f32
    %519 = vector.broadcast %cst_176 : f32 to vector<8x128xf32>
    %520 = arith.addf %519, %518 : vector<8x128xf32>
    %521 = arith.divf %519, %520 : vector<8x128xf32>
    %522 = vector.extract_strided_slice %511 {offsets = [0, 128], sizes = [8, 128], strides = [1, 1]} : vector<8x384xf32> to vector<8x128xf32>
    %523 = vector.extract_strided_slice %513 {offsets = [0, 128], sizes = [8, 128], strides = [1, 1]} : vector<8x384xf32> to vector<8x128xf32>
    %524 = arith.addf %522, %523 : vector<8x128xf32>
    %525 = arith.negf %524 : vector<8x128xf32>
    %526 = math.exp %525 : vector<8x128xf32>
    %cst_177 = arith.constant 1.000000e+00 : f32
    %527 = vector.broadcast %cst_177 : f32 to vector<8x128xf32>
    %528 = arith.addf %527, %526 : vector<8x128xf32>
    %529 = arith.divf %527, %528 : vector<8x128xf32>
    %530 = vector.extract_strided_slice %511 {offsets = [0, 256], sizes = [8, 128], strides = [1, 1]} : vector<8x384xf32> to vector<8x128xf32>
    %531 = vector.extract_strided_slice %513 {offsets = [0, 256], sizes = [8, 128], strides = [1, 1]} : vector<8x384xf32> to vector<8x128xf32>
    %532 = arith.mulf %521, %531 : vector<8x128xf32>
    %533 = arith.addf %530, %532 : vector<8x128xf32>
    %534 = math.tanh %533 : vector<8x128xf32>
    %cst_178 = arith.constant 1.000000e+00 : f32
    %535 = vector.broadcast %cst_178 : f32 to vector<8x128xf32>
    %536 = arith.subf %535, %529 : vector<8x128xf32>
    %537 = arith.mulf %536, %534 : vector<8x128xf32>
    %538 = arith.mulf %529, %504 : vector<8x128xf32>
    %539 = arith.addf %537, %538 : vector<8x128xf32>
    %540 = arith.index_cast %c6_i32_170 : i32 to index
    %c0_179 = arith.constant 0 : index
    %c0_180 = arith.constant 0 : index
    %541 = vector.load %arg7[%540, %c0_179, %c0_180] : memref<8x8x128xf32, #tpu.memory_space<vmem>>, vector<1x8x128xf32>
    %542 = vector.shape_cast %541 : vector<1x8x128xf32> to vector<8x128xf32>
    %543 = vector.shape_cast %539 : vector<8x128xf32> to vector<1x8x128xf32>
    tpu.vector_store %arg7[%540, %c0_179, %c0_180], %543 {strides = array<i32>} : memref<8x8x128xf32, #tpu.memory_space<vmem>>, vector<1x8x128xf32>,
    %c7_i32_181 = arith.constant 7 : i32
    %544 = arith.index_cast %c7_i32_181 : i32 to index
    %c0_182 = arith.constant 0 : index
    %c0_183 = arith.constant 0 : index
    %545 = vector.load %arg9[%544, %c0_182, %c0_183] : memref<8x8x384xf32, #tpu.memory_space<vmem>>, vector<1x8x384xf32>
    %546 = vector.shape_cast %545 : vector<1x8x384xf32> to vector<8x384xf32>
    %c0_184 = arith.constant 0 : index
    %c0_185 = arith.constant 0 : index
    %547 = vector.load %arg6[%c0_184, %c0_185] : memref<128x384xf32, #tpu.memory_space<vmem>>, vector<128x384xf32>
    %cst_186 = arith.constant dense<0.000000e+00> : vector<8x384xf32>
    %548 = tpu.matmul %539, %547, %cst_186 {dimension_numbers = #tpu.dot_dimension_numbers<[1], [0], [0], [1], [0, 0, 1, 1], [], []>} : vector<8x128xf32>, vector<128x384xf32>, vector<8x384xf32> -> vector<8x384xf32>
    %549 = vector.extract_strided_slice %546 {offsets = [0, 0], sizes = [8, 128], strides = [1, 1]} : vector<8x384xf32> to vector<8x128xf32>
    %550 = vector.extract_strided_slice %548 {offsets = [0, 0], sizes = [8, 128], strides = [1, 1]} : vector<8x384xf32> to vector<8x128xf32>
    %551 = arith.addf %549, %550 : vector<8x128xf32>
    %552 = arith.negf %551 : vector<8x128xf32>
    %553 = math.exp %552 : vector<8x128xf32>
    %cst_187 = arith.constant 1.000000e+00 : f32
    %554 = vector.broadcast %cst_187 : f32 to vector<8x128xf32>
    %555 = arith.addf %554, %553 : vector<8x128xf32>
    %556 = arith.divf %554, %555 : vector<8x128xf32>
    %557 = vector.extract_strided_slice %546 {offsets = [0, 128], sizes = [8, 128], strides = [1, 1]} : vector<8x384xf32> to vector<8x128xf32>
    %558 = vector.extract_strided_slice %548 {offsets = [0, 128], sizes = [8, 128], strides = [1, 1]} : vector<8x384xf32> to vector<8x128xf32>
    %559 = arith.addf %557, %558 : vector<8x128xf32>
    %560 = arith.negf %559 : vector<8x128xf32>
    %561 = math.exp %560 : vector<8x128xf32>
    %cst_188 = arith.constant 1.000000e+00 : f32
    %562 = vector.broadcast %cst_188 : f32 to vector<8x128xf32>
    %563 = arith.addf %562, %561 : vector<8x128xf32>
    %564 = arith.divf %562, %563 : vector<8x128xf32>
    %565 = vector.extract_strided_slice %546 {offsets = [0, 256], sizes = [8, 128], strides = [1, 1]} : vector<8x384xf32> to vector<8x128xf32>
    %566 = vector.extract_strided_slice %548 {offsets = [0, 256], sizes = [8, 128], strides = [1, 1]} : vector<8x384xf32> to vector<8x128xf32>
    %567 = arith.mulf %556, %566 : vector<8x128xf32>
    %568 = arith.addf %565, %567 : vector<8x128xf32>
    %569 = math.tanh %568 : vector<8x128xf32>
    %cst_189 = arith.constant 1.000000e+00 : f32
    %570 = vector.broadcast %cst_189 : f32 to vector<8x128xf32>
    %571 = arith.subf %570, %564 : vector<8x128xf32>
    %572 = arith.mulf %571, %569 : vector<8x128xf32>
    %573 = arith.mulf %564, %539 : vector<8x128xf32>
    %574 = arith.addf %572, %573 : vector<8x128xf32>
    %575 = arith.index_cast %c7_i32_181 : i32 to index
    %c0_190 = arith.constant 0 : index
    %c0_191 = arith.constant 0 : index
    %576 = vector.load %arg7[%575, %c0_190, %c0_191] : memref<8x8x128xf32, #tpu.memory_space<vmem>>, vector<1x8x128xf32>
    %577 = vector.shape_cast %576 : vector<1x8x128xf32> to vector<8x128xf32>
    %578 = vector.shape_cast %574 : vector<8x128xf32> to vector<1x8x128xf32>
    tpu.vector_store %arg7[%575, %c0_190, %c0_191], %578 {strides = array<i32>} : memref<8x8x128xf32, #tpu.memory_space<vmem>>, vector<1x8x128xf32>,
    %c8_i32_192 = arith.constant 8 : i32
    %c1_193 = arith.constant 1 : index
    %c0_194 = arith.constant 0 : index
    %c0_195 = arith.constant 0 : index
    %579 = vector.load %arg8[%c1_193, %c0_194, %c0_195] : memref<2x8x128xf32, #tpu.memory_space<vmem>>, vector<1x8x128xf32>
    %580 = vector.shape_cast %579 : vector<1x8x128xf32> to vector<8x128xf32>
    %581 = vector.shape_cast %574 : vector<8x128xf32> to vector<1x8x128xf32>
    tpu.vector_store %arg8[%c1_193, %c0_194, %c0_195], %581 {strides = array<i32>} : memref<2x8x128xf32, #tpu.memory_space<vmem>>, vector<1x8x128xf32>,
    return
  }
  func.func @transform_0(%arg0: i32) -> (i32, i32, i32) {
    %c0_i32 = arith.constant 0 : i32
    %c0_i32_0 = arith.constant 0 : i32
    %c0_i32_1 = arith.constant 0 : i32
    return %c0_i32, %arg0, %c0_i32_0 : i32, i32, i32
  }
  func.func @transform_1(%arg0: i32) -> (i32, i32, i32) {
    %c0_i32 = arith.constant 0 : i32
    %c0_i32_0 = arith.constant 0 : i32
    %c0_i32_1 = arith.constant 0 : i32
    return %c0_i32, %arg0, %c0_i32_0 : i32, i32, i32
  }
  func.func @transform_2(%arg0: i32) -> (i32, i32) {
    %c0_i32 = arith.constant 0 : i32
    %c0_i32_0 = arith.constant 0 : i32
    %c0_i32_1 = arith.constant 0 : i32
    return %c0_i32, %c0_i32_0 : i32, i32
  }
  func.func @transform_3(%arg0: i32) -> (i32, i32) {
    %c0_i32 = arith.constant 0 : i32
    %c0_i32_0 = arith.constant 0 : i32
    %c0_i32_1 = arith.constant 0 : i32
    return %c0_i32, %c0_i32_0 : i32, i32
  }
  func.func @transform_4(%arg0: i32) -> (i32, i32) {
    %c0_i32 = arith.constant 0 : i32
    %c0_i32_0 = arith.constant 0 : i32
    %c0_i32_1 = arith.constant 0 : i32
    return %c0_i32, %c0_i32_0 : i32, i32
  }
  func.func @transform_5(%arg0: i32) -> (i32, i32) {
    %c0_i32 = arith.constant 0 : i32
    %c0_i32_0 = arith.constant 0 : i32
    %c0_i32_1 = arith.constant 0 : i32
    return %c0_i32, %c0_i32_0 : i32, i32
  }
  func.func @transform_6(%arg0: i32) -> (i32, i32, i32) {
    %c0_i32 = arith.constant 0 : i32
    %c0_i32_0 = arith.constant 0 : i32
    %c0_i32_1 = arith.constant 0 : i32
    return %c0_i32, %arg0, %c0_i32_0 : i32, i32, i32
  }
  func.func @transform_7(%arg0: i32) -> (i32, i32, i32) {
    %c0_i32 = arith.constant 0 : i32
    %c0_i32_0 = arith.constant 0 : i32
    %c0_i32_1 = arith.constant 0 : i32
    return %c0_i32, %arg0, %c0_i32_0 : i32, i32, i32
  }
}

module attributes {stable_mosaic.version = 11 : i64} {
  func.func @mlp_kernel(%arg0: i32, %arg1: memref<64x128xf32, #tpu.memory_space<vmem>>, %arg2: memref<64x4xf32, #tpu.memory_space<vmem>>, %arg3: memref<128x256xf32, #tpu.memory_space<vmem>>, %arg4: memref<4x256xf32, #tpu.memory_space<vmem>>, %arg5: memref<1x256xf32, #tpu.memory_space<vmem>>, %arg6: memref<256x128xf32, #tpu.memory_space<vmem>>, %arg7: memref<1x128xf32, #tpu.memory_space<vmem>>, %arg8: memref<64x128xf32, #tpu.memory_space<vmem>>) attributes {dimension_semantics = [#tpu.dimension_semantics<parallel>], iteration_bounds = array<i64: 1>, scalar_prefetch = 0 : i64, scratch_operands = 0 : i64, tpu.core_type = #tpu.core_type<tc>, window_params = [{transform_indices = @transform_0, window_bounds = array<i64: 64, 128>}, {transform_indices = @transform_1, window_bounds = array<i64: 64, 4>}, {pipeline_mode = #tpu.pipeline_mode<synchronous>, transform_indices = @transform_2, window_bounds = array<i64: 128, 256>}, {pipeline_mode = #tpu.pipeline_mode<synchronous>, transform_indices = @transform_3, window_bounds = array<i64: 4, 256>}, {pipeline_mode = #tpu.pipeline_mode<synchronous>, transform_indices = @transform_4, window_bounds = array<i64: 1, 256>}, {pipeline_mode = #tpu.pipeline_mode<synchronous>, transform_indices = @transform_5, window_bounds = array<i64: 256, 128>}, {pipeline_mode = #tpu.pipeline_mode<synchronous>, transform_indices = @transform_6, window_bounds = array<i64: 1, 128>}, {transform_indices = @transform_7, window_bounds = array<i64: 64, 128>}]} {
    %c0 = arith.constant 0 : index
    %c0_0 = arith.constant 0 : index
    %0 = vector.load %arg1[%c0, %c0_0] : memref<64x128xf32, #tpu.memory_space<vmem>>, vector<64x128xf32>
    %c0_1 = arith.constant 0 : index
    %c0_2 = arith.constant 0 : index
    %1 = vector.load %arg3[%c0_1, %c0_2] : memref<128x256xf32, #tpu.memory_space<vmem>>, vector<128x256xf32>
    %cst = arith.constant dense<0.000000e+00> : vector<64x256xf32>
    %2 = tpu.matmul %0, %1, %cst {dimension_numbers = #tpu.dot_dimension_numbers<[1], [0], [0], [1], [0, 0, 1, 1], [], []>} : vector<64x128xf32>, vector<128x256xf32>, vector<64x256xf32> -> vector<64x256xf32>
    %c0_3 = arith.constant 0 : index
    %c0_4 = arith.constant 0 : index
    %3 = vector.load %arg2[%c0_3, %c0_4] : memref<64x4xf32, #tpu.memory_space<vmem>>, vector<64x4xf32>
    %c0_5 = arith.constant 0 : index
    %c0_6 = arith.constant 0 : index
    %4 = vector.load %arg4[%c0_5, %c0_6] : memref<4x256xf32, #tpu.memory_space<vmem>>, vector<4x256xf32>
    %cst_7 = arith.constant dense<0.000000e+00> : vector<64x256xf32>
    %5 = tpu.matmul %3, %4, %cst_7 {dimension_numbers = #tpu.dot_dimension_numbers<[1], [0], [0], [1], [0, 0, 1, 1], [], []>} : vector<64x4xf32>, vector<4x256xf32>, vector<64x256xf32> -> vector<64x256xf32>
    %6 = arith.addf %2, %5 : vector<64x256xf32>
    %c0_8 = arith.constant 0 : index
    %c0_9 = arith.constant 0 : index
    %7 = vector.load %arg5[%c0_8, %c0_9] : memref<1x256xf32, #tpu.memory_space<vmem>>, vector<1x256xf32>
    %8 = vector.broadcast %7 : vector<1x256xf32> to vector<64x256xf32>
    %9 = arith.addf %6, %8 : vector<64x256xf32>
    %cst_10 = arith.constant 0.000000e+00 : f32
    %10 = vector.broadcast %cst_10 : f32 to vector<64x256xf32>
    %11 = arith.maximumf %9, %10 : vector<64x256xf32>
    %c0_11 = arith.constant 0 : index
    %c0_12 = arith.constant 0 : index
    %12 = vector.load %arg6[%c0_11, %c0_12] : memref<256x128xf32, #tpu.memory_space<vmem>>, vector<256x128xf32>
    %cst_13 = arith.constant dense<0.000000e+00> : vector<64x128xf32>
    %13 = tpu.matmul %11, %12, %cst_13 {dimension_numbers = #tpu.dot_dimension_numbers<[1], [0], [0], [1], [0, 0, 1, 1], [], []>} : vector<64x256xf32>, vector<256x128xf32>, vector<64x128xf32> -> vector<64x128xf32>
    %c0_14 = arith.constant 0 : index
    %c0_15 = arith.constant 0 : index
    %14 = vector.load %arg7[%c0_14, %c0_15] : memref<1x128xf32, #tpu.memory_space<vmem>>, vector<1x128xf32>
    %15 = vector.broadcast %14 : vector<1x128xf32> to vector<64x128xf32>
    %16 = arith.addf %13, %15 : vector<64x128xf32>
    %c0_16 = arith.constant 0 : index
    %c0_17 = arith.constant 0 : index
    %17 = vector.load %arg8[%c0_16, %c0_17] : memref<64x128xf32, #tpu.memory_space<vmem>>, vector<64x128xf32>
    tpu.vector_store %arg8[%c0_16, %c0_17], %16 {strides = array<i32>} : memref<64x128xf32, #tpu.memory_space<vmem>>, vector<64x128xf32>,
    return
  }
  func.func @transform_0(%arg0: i32) -> (i32, i32) {
    %c0_i32 = arith.constant 0 : i32
    %c0_i32_0 = arith.constant 0 : i32
    return %arg0, %c0_i32 : i32, i32
  }
  func.func @transform_1(%arg0: i32) -> (i32, i32) {
    %c0_i32 = arith.constant 0 : i32
    %c0_i32_0 = arith.constant 0 : i32
    return %arg0, %c0_i32 : i32, i32
  }
  func.func @transform_2(%arg0: i32) -> (i32, i32) {
    %c0_i32 = arith.constant 0 : i32
    %c0_i32_0 = arith.constant 0 : i32
    %c0_i32_1 = arith.constant 0 : i32
    return %c0_i32, %c0_i32_0 : i32, i32
  }
  func.func @transform_3(%arg0: i32) -> (i32, i32) {
    %c0_i32 = arith.constant 0 : i32
    %c0_i32_0 = arith.constant 0 : i32
    %c0_i32_1 = arith.constant 0 : i32
    return %c0_i32, %c0_i32_0 : i32, i32
  }
  func.func @transform_4(%arg0: i32) -> (i32, i32) {
    %c0_i32 = arith.constant 0 : i32
    %c0_i32_0 = arith.constant 0 : i32
    %c0_i32_1 = arith.constant 0 : i32
    return %c0_i32, %c0_i32_0 : i32, i32
  }
  func.func @transform_5(%arg0: i32) -> (i32, i32) {
    %c0_i32 = arith.constant 0 : i32
    %c0_i32_0 = arith.constant 0 : i32
    %c0_i32_1 = arith.constant 0 : i32
    return %c0_i32, %c0_i32_0 : i32, i32
  }
  func.func @transform_6(%arg0: i32) -> (i32, i32) {
    %c0_i32 = arith.constant 0 : i32
    %c0_i32_0 = arith.constant 0 : i32
    %c0_i32_1 = arith.constant 0 : i32
    return %c0_i32, %c0_i32_0 : i32, i32
  }
  func.func @transform_7(%arg0: i32) -> (i32, i32) {
    %c0_i32 = arith.constant 0 : i32
    %c0_i32_0 = arith.constant 0 : i32
    return %arg0, %c0_i32 : i32, i32
  }
}

</mosaic_0001>

<llo_original>
// kernel: grunet_forward.3
$region0: #{grunet_forward.3}
  #allocation0 [shape = 'u32[]', space=smem, size = 0x4, offset = 0x4, fixed_abs, tag = 'smem constant byte address 0x4 - core index']
  #allocation1 [shape = 'u32[144,128]{1,0:T(1,128)}', space=vmem, size = 0x12000, scoped, tag = 'internal scratch']
  %s0 = inlined_call_operand.hbm [shape: f32[64,128], index: 0, kind: input, shape index: {}]
  %s1 = inlined_call_operand.hbm [shape: f32[64,4], index: 1, kind: input, shape index: {}]
  %s2 = inlined_call_operand.hbm [shape: f32[128,256], index: 2, kind: input, shape index: {}]
  %s3 = inlined_call_operand.hbm [shape: f32[4,256], index: 3, kind: input, shape index: {}]
  %s4 = inlined_call_operand.hbm [shape: f32[1,256], index: 4, kind: input, shape index: {}]
  %s5 = inlined_call_operand.hbm [shape: f32[256,128], index: 5, kind: input, shape index: {}]
  %s6 = inlined_call_operand.hbm [shape: f32[1,128], index: 6, kind: input, shape index: {}]
  %s7 = inlined_call_operand.hbm [shape: f32[64,128], index: 7, kind: output, shape index: {}]
  %s8 = sld [smem:[#allocation0]]
  $region66: #{grunet_forward.3} parent=0
    _
  %s10 = ssub.s32 1, %s8
  %s11 = scalar_select 0, %s10, %s8
  $region1: #{grunet_forward.3} parent=0
    #allocation2 [shape = 'u8[32768]{0}', space=vmem, size = 0x8000, scoped, tag = 'input window, operand 0, single buffered']
    #allocation3 [shape = 's32[1]{0}', space=sflag, size = 0x4, scoped, tag = 'scoped memory for grunet_forward.3']
    #allocation4 [shape = 's32[1]{0}', space=sflag, size = 0x4, scoped, tag = 'scoped memory for grunet_forward.3']
    #allocation5 [shape = 'u8[32768]{0}', space=vmem, size = 0x8000, scoped, tag = 'input window, operand 1, single buffered']
    #allocation6 [shape = 's32[1]{0}', space=sflag, size = 0x4, scoped, tag = 'scoped memory for grunet_forward.3']
    #allocation7 [shape = 'u8[131072]{0}', space=vmem, size = 0x20000, scoped, tag = 'input window, operand 2, single buffered']
    #allocation8 [shape = 'u8[4096]{0}', space=vmem, size = 0x1000, scoped, tag = 'input window, operand 3, single buffered']
    #allocation9 [shape = 's32[1]{0}', space=sflag, size = 0x4, scoped, tag = 'scoped memory for grunet_forward.3']
    #allocation10 [shape = 'u8[1024]{0}', space=vmem, size = 0x400, scoped, tag = 'input window, operand 4, single buffered']
    #allocation11 [shape = 'u8[131072]{0}', space=vmem, size = 0x20000, scoped, tag = 'input window, operand 5, single buffered']
    #allocation12 [shape = 's32[1]{0}', space=sflag, size = 0x4, scoped, tag = 'scoped memory for grunet_forward.3']
    #allocation13 [shape = 'u8[512]{0}', space=vmem, size = 0x400, scoped, tag = 'input window, operand 6, single buffered']
    #allocation14 [shape = 'u8[32768]{0}', space=vmem, size = 0x8000, scoped, tag = 'output window, operand 0, single buffered']
    %12 = vsyncpa [#allocation3], 0
    %13 = vsyncpa [#allocation6], 0
    %14 = vsyncpa [#allocation9], 0
    %15 = vsyncpa [#allocation12], 0
    %16 = vsyncpa [#allocation4], 0
    // Predicated region
    $region2: #{grunet_forward.3} parent=1 // pred_check
      _
    $region3: #{grunet_forward.3} parent=1 // pred_check_branch
      %18 = sbr.rel (0) target = $region5
    $region4: #{grunet_forward.3} parent=1 // pred_region
      %s20 = ssub.s32 1024, 1024
      %21 = vsyncadd [#allocation3], %s20
      %s22 = sshll.u32 [#allocation2], 4
      %s23 = int_to_ptr.vmem [resolvable:$true] %s22
      %28 = dma.hbm_to_vmem [thread:$0]  %s0, 1024, %s23, [#allocation3], 128, 128, 8
    $region5: #{grunet_forward.3} parent=1 // pred_fallthru
      _
    // Predicated region
    $region6: #{grunet_forward.3} parent=1 // pred_check
      _
    $region7: #{grunet_forward.3} parent=1 // pred_check_branch
      %30 = sbr.rel (0) target = $region9
    $region8: #{grunet_forward.3} parent=1 // pred_region
      %s32 = ssub.s32 1024, 1024
      %33 = vsyncadd [#allocation6], %s32
      %s34 = sshll.u32 [#allocation5], 4
      %s35 = int_to_ptr.vmem [resolvable:$true] %s34
      %40 = dma.hbm_to_vmem [thread:$0]  %s1, 1024, %s35, [#allocation6], 128, 128, 8
    $region9: #{grunet_forward.3} parent=1 // pred_fallthru
      _
    // Predicated region
    $region10: #{grunet_forward.3} parent=1 // pred_check
      _
    $region11: #{grunet_forward.3} parent=1 // pred_check_branch
      %42 = sbr.rel (0) target = $region13
    $region12: #{grunet_forward.3} parent=1 // pred_region
      %s44 = ssub.s32 4096, 4096
      %45 = vsyncadd [#allocation6], %s44
      %s46 = sshll.u32 [#allocation7], 4
      %s47 = int_to_ptr.vmem [resolvable:$true] %s46
      %52 = dma.hbm_to_vmem [thread:$0]  %s2, 4096, %s47, [#allocation6], 256, 256, 16
    $region13: #{grunet_forward.3} parent=1 // pred_fallthru
      _
    // Predicated region
    $region14: #{grunet_forward.3} parent=1 // pred_check
      _
    $region15: #{grunet_forward.3} parent=1 // pred_check_branch
      %54 = sbr.rel (0) target = $region17
    $region16: #{grunet_forward.3} parent=1 // pred_region
      %s56 = ssub.s32 128, 128
      %57 = vsyncadd [#allocation9], %s56
      %s59 = sshll.u32 [#allocation8], 4
      %s60 = int_to_ptr.vmem [resolvable:$true] %s59
      %62 = dma.hbm_to_vmem [thread:$0]  %s3, 128, %s60, [#allocation9]
    $region17: #{grunet_forward.3} parent=1 // pred_fallthru
      _
    // Predicated region
    $region18: #{grunet_forward.3} parent=1 // pred_check
      _
    $region19: #{grunet_forward.3} parent=1 // pred_check_branch
      %64 = sbr.rel (0) target = $region21
    $region20: #{grunet_forward.3} parent=1 // pred_region
      %s66 = ssub.s32 32, 32
      %67 = vsyncadd [#allocation9], %s66
      %s69 = sshll.u32 [#allocation10], 4
      %s70 = int_to_ptr.vmem [resolvable:$true] %s69
      %72 = dma.hbm_to_vmem [thread:$0]  %s4, 32, %s70, [#allocation9]
    $region21: #{grunet_forward.3} parent=1 // pred_fallthru
      _
    // Predicated region
    $region22: #{grunet_forward.3} parent=1 // pred_check
      _
    $region23: #{grunet_forward.3} parent=1 // pred_check_branch
      %74 = sbr.rel (0) target = $region25
    $region24: #{grunet_forward.3} parent=1 // pred_region
      %s76 = ssub.s32 4096, 4096
      %77 = vsyncadd [#allocation12], %s76
      %s78 = sshll.u32 [#allocation11], 4
      %s79 = int_to_ptr.vmem [resolvable:$true] %s78
      %84 = dma.hbm_to_vmem [thread:$0]  %s5, 4096, %s79, [#allocation12], 128, 128, 8
    $region25: #{grunet_forward.3} parent=1 // pred_fallthru
      _
    // Predicated region
    $region26: #{grunet_forward.3} parent=1 // pred_check
      _
    $region27: #{grunet_forward.3} parent=1 // pred_check_branch
      %86 = sbr.rel (0) target = $region29
    $region28: #{grunet_forward.3} parent=1 // pred_region
      %s88 = ssub.s32 16, 16
      %89 = vsyncadd [#allocation12], %s88
      %s91 = sshll.u32 [#allocation13], 4
      %s92 = int_to_ptr.vmem [resolvable:$true] %s91
      %94 = dma.hbm_to_vmem [thread:$0]  %s6, 16, %s92, [#allocation12]
    $region29: #{grunet_forward.3} parent=1 // pred_fallthru
      _
    // Predicated region
    $region30: #{grunet_forward.3} parent=1 // pred_check
      _
    $region31: #{grunet_forward.3} parent=1 // pred_check_branch
      %96 = sbr.rel (0) target = $region33
    $region32: #{grunet_forward.3} parent=1 // pred_region
      %97 = dma.done [#allocation3], 1024
    $region33: #{grunet_forward.3} parent=1 // pred_fallthru
      _
    // Predicated region
    $region34: #{grunet_forward.3} parent=1 // pred_check
      _
    $region35: #{grunet_forward.3} parent=1 // pred_check_branch
      %99 = sbr.rel (0) target = $region37
    $region36: #{grunet_forward.3} parent=1 // pred_region
      %100 = dma.done [#allocation6], 1024
    $region37: #{grunet_forward.3} parent=1 // pred_fallthru
      _
    // Predicated region
    $region38: #{grunet_forward.3} parent=1 // pred_check
      _
    $region39: #{grunet_forward.3} parent=1 // pred_check_branch
      %102 = sbr.rel (0) target = $region41
    $region40: #{grunet_forward.3} parent=1 // pred_region
      %103 = dma.done [#allocation6], 4096
    $region41: #{grunet_forward.3} parent=1 // pred_fallthru
      _
    // Predicated region
    $region42: #{grunet_forward.3} parent=1 // pred_check
      _
    $region43: #{grunet_forward.3} parent=1 // pred_check_branch
      %105 = sbr.rel (0) target = $region45
    $region44: #{grunet_forward.3} parent=1 // pred_region
      %106 = dma.done [#allocation9], 128
    $region45: #{grunet_forward.3} parent=1 // pred_fallthru
      _
    // Predicated region
    $region46: #{grunet_forward.3} parent=1 // pred_check
      _
    $region47: #{grunet_forward.3} parent=1 // pred_check_branch
      %108 = sbr.rel (0) target = $region49
    $region48: #{grunet_forward.3} parent=1 // pred_region
      %109 = dma.done [#allocation9], 32
    $region49: #{grunet_forward.3} parent=1 // pred_fallthru
      _
    // Predicated region
    $region50: #{grunet_forward.3} parent=1 // pred_check
      _
    $region51: #{grunet_forward.3} parent=1 // pred_check_branch
      %111 = sbr.rel (0) target = $region53
    $region52: #{grunet_forward.3} parent=1 // pred_region
      %112 = dma.done [#allocation12], 4096
    $region53: #{grunet_forward.3} parent=1 // pred_fallthru
      _
    // Predicated region
    $region54: #{grunet_forward.3} parent=1 // pred_check
      _
    $region55: #{grunet_forward.3} parent=1 // pred_check_branch
      %114 = sbr.rel (0) target = $region57
    $region56: #{grunet_forward.3} parent=1 // pred_region
      %115 = dma.done [#allocation12], 16
    $region57: #{grunet_forward.3} parent=1 // pred_fallthru
      _
    %v116 = vld [vmem:[#allocation2] sm:$0xff]
    %v117 = vld [vmem:[#allocation2 + $0x8] sm:$0xff]
    %v118 = vld [vmem:[#allocation2 + $0x10] sm:$0xff]
    %v119 = vld [vmem:[#allocation2 + $0x18] sm:$0xff]
    %v120 = vld [vmem:[#allocation2 + $0x20] sm:$0xff]
    %v121 = vld [vmem:[#allocation2 + $0x28] sm:$0xff]
    %v122 = vld [vmem:[#allocation2 + $0x30] sm:$0xff]
    %v123 = vld [vmem:[#allocation2 + $0x38] sm:$0xff]
    %v124 = vld [vmem:[#allocation7] sm:$0xff]
    %v125 = vld [vmem:[#allocation7 + $0x8] sm:$0xff]
    %v126 = vld [vmem:[#allocation7 + $0x10] sm:$0xff]
    %v127 = vld [vmem:[#allocation7 + $0x18] sm:$0xff]
    %v128 = vld [vmem:[#allocation7 + $0x20] sm:$0xff]
    %v129 = vld [vmem:[#allocation7 + $0x28] sm:$0xff]
    %v130 = vld [vmem:[#allocation7 + $0x30] sm:$0xff]
    %v131 = vld [vmem:[#allocation7 + $0x38] sm:$0xff]
    %v132 = vld [vmem:[#allocation7 + $0x40] sm:$0xff]
    %v133 = vld [vmem:[#allocation7 + $0x48] sm:$0xff]
    %v134 = vld [vmem:[#allocation7 + $0x50] sm:$0xff]
    %v135 = vld [vmem:[#allocation7 + $0x58] sm:$0xff]
    %v136 = vld [vmem:[#allocation7 + $0x60] sm:$0xff]
    %v137 = vld [vmem:[#allocation7 + $0x68] sm:$0xff]
    %v138 = vld [vmem:[#allocation7 + $0x70] sm:$0xff]
    %v139 = vld [vmem:[#allocation7 + $0x78] sm:$0xff]
    %v140 = vld [vmem:[#allocation7 + $0x80] sm:$0xff]
    %v141 = vld [vmem:[#allocation7 + $0x88] sm:$0xff]
    %v142 = vld [vmem:[#allocation7 + $0x90] sm:$0xff]
    %v143 = vld [vmem:[#allocation7 + $0x98] sm:$0xff]
    %v144 = vld [vmem:[#allocation7 + $0xa0] sm:$0xff]
    %v145 = vld [vmem:[#allocation7 + $0xa8] sm:$0xff]
    %v146 = vld [vmem:[#allocation7 + $0xb0] sm:$0xff]
    %v147 = vld [vmem:[#allocation7 + $0xb8] sm:$0xff]
    %v148 = vld [vmem:[#allocation7 + $0xc0] sm:$0xff]
    %v149 = vld [vmem:[#allocation7 + $0xc8] sm:$0xff]
    %v150 = vld [vmem:[#allocation7 + $0xd0] sm:$0xff]
    %v151 = vld [vmem:[#allocation7 + $0xd8] sm:$0xff]
    %v152 = vld [vmem:[#allocation7 + $0xe0] sm:$0xff]
    %v153 = vld [vmem:[#allocation7 + $0xe8] sm:$0xff]
    %v154 = vld [vmem:[#allocation7 + $0xf0] sm:$0xff]
    %v155 = vld [vmem:[#allocation7 + $0xf8] sm:$0xff]
    %v156 = vld [vmem:[#allocation5] sm:$0xff]
    %v157 = vld [vmem:[#allocation5 + $0x8] sm:$0xff]
    %v158 = vld [vmem:[#allocation5 + $0x10] sm:$0xff]
    %v159 = vld [vmem:[#allocation5 + $0x18] sm:$0xff]
    %v160 = vld [vmem:[#allocation5 + $0x20] sm:$0xff]
    %v161 = vld [vmem:[#allocation5 + $0x28] sm:$0xff]
    %v162 = vld [vmem:[#allocation5 + $0x30] sm:$0xff]
    %v163 = vld [vmem:[#allocation5 + $0x38] sm:$0xff]
    %v164 = vld [vmem:[#allocation8] sm:$0xff]
    %v166 = vcombine.high %v164, %v164
    %vm167 = vcmask 31744
    %v169 = vsel %vm167, %v156, 0
    %v172 = vsel %vm167, %v157, 0
    %v175 = vsel %vm167, %v158, 0
    %v178 = vsel %vm167, %v159, 0
    %v181 = vsel %vm167, %v160, 0
    %v184 = vsel %vm167, %v161, 0
    %v187 = vsel %vm167, %v162, 0
    %v190 = vsel %vm167, %v163, 0
    %vm192 = vcmask 1043456
    %v193 = vsel %vm192, %v164, 0
    %v195 = vsel %vm192, %v166, 0
    %197 = vmatprep.subr.mxu0 %v195
    %198 = vmatpush1.msra.mxu0 %v193
    %199 = vmatprep.subr.mxu0 0.0
    %200 = vmatpush1.msra.mxu0 0.0
    %201 = vmatprep.subr.mxu0 0.0
    %202 = vmatpush1.msra.mxu0 0.0
    %203 = vmatprep.subr.mxu0 0.0
    %204 = vmatpush1.msra.mxu0 0.0
    %205 = vmatprep.subr.mxu0 0.0
    %206 = vmatpush1.msra.mxu0 0.0
    %207 = vmatprep.subr.mxu0 0.0
    %208 = vmatpush1.msra.mxu0 0.0
    %209 = vmatprep.subr.mxu0 0.0
    %210 = vmatpush1.msra.mxu0 0.0
    %211 = vmatprep.subr.mxu0 0.0
    %212 = vmatpush1.msra.mxu0 0.0
    %213 = vmatprep.subr.mxu0 0.0
    %214 = vmatpush1.msra.mxu0 0.0
    %215 = vmatprep.subr.mxu0 0.0
    %216 = vmatpush1.msra.mxu0 0.0
    %217 = vmatprep.subr.mxu0 0.0
    %218 = vmatpush1.msra.mxu0 0.0
    %219 = vmatprep.subr.mxu0 0.0
    %220 = vmatpush1.msra.mxu0 0.0
    %221 = vmatprep.subr.mxu0 0.0
    %222 = vmatpush1.msra.mxu0 0.0
    %223 = vmatprep.subr.mxu0 0.0
    %224 = vmatpush1.msra.mxu0 0.0
    %225 = vmatprep.subr.mxu0 0.0
    %226 = vmatpush1.msra.mxu0 0.0
    %227 = vmatprep.subr.mxu0 0.0
    %228 = vmatpush1.msra.mxu0 0.0
    %229 = vmatprep.subr.mxu0 0.0
    %230 = vmatpush1.msra.mxu0 0.0
    %231 = vmatprep.subr.mxu0 0.0
    %232 = vmatpush1.msra.mxu0 0.0
    %233 = vmatprep.subr.mxu0 0.0
    %234 = vmatpush1.msra.mxu0 0.0
    %235 = vmatprep.subr.mxu0 0.0
    %236 = vmatpush1.msra.mxu0 0.0
    %237 = vmatprep.subr.mxu0 0.0
    %238 = vmatpush1.msra.mxu0 0.0
    %239 = vmatprep.subr.mxu0 0.0
    %240 = vmatpush1.msra.mxu0 0.0
    %241 = vmatprep.subr.mxu0 0.0
    %242 = vmatpush1.msra.mxu0 0.0
    %243 = vmatprep.subr.mxu0 0.0
    %244 = vmatpush1.msra.mxu0 0.0
    %245 = vmatprep.subr.mxu0 0.0
    %246 = vmatpush1.msra.mxu0 0.0
    %247 = vmatprep.subr.mxu0 0.0
    %248 = vmatpush1.msra.mxu0 0.0
    %249 = vmatprep.subr.mxu0 0.0
    %250 = vmatpush1.msra.mxu0 0.0
    %251 = vmatprep.subr.mxu0 0.0
    %252 = vmatpush1.msra.mxu0 0.0
    %253 = vmatprep.subr.mxu0 0.0
    %254 = vmatpush1.msra.mxu0 0.0
    %255 = vmatprep.subr.mxu0 0.0
    %256 = vmatpush1.msra.mxu0 0.0
    %257 = vmatprep.subr.mxu0 0.0
    %258 = vmatpush1.msra.mxu0 0.0
    %259 = vmatprep.subr.mxu0 0.0
    %260 = vmatpush1.msra.mxu0 0.0
    %261 = vmatprep.mubr.f32.mxu0 0.0
    %262 = vmatmul.mubr.f32.gmra.mrb[0].mxu0 %v169
    %v263 = vpop.f32.mrb[0].mxu0
    %v264 = vadd.f32 0.0, %v263
    %v265 = vpop.f32.mrb[0].mxu0
    %v266 = vadd.f32 0.0, %v265
    %267 = vmatprep.mubr.f32.mxu0 0.0
    %268 = vmatmul.mubr.f32.gmra.mrb[0].mxu0 %v172
    %v269 = vpop.f32.mrb[0].mxu0
    %v270 = vadd.f32 0.0, %v269
    %v271 = vpop.f32.mrb[0].mxu0
    %v272 = vadd.f32 0.0, %v271
    %273 = vmatprep.mubr.f32.mxu0 0.0
    %274 = vmatmul.mubr.f32.gmra.mrb[0].mxu0 %v175
    %v275 = vpop.f32.mrb[0].mxu0
    %v276 = vadd.f32 0.0, %v275
    %v277 = vpop.f32.mrb[0].mxu0
    %v278 = vadd.f32 0.0, %v277
    %279 = vmatprep.mubr.f32.mxu0 0.0
    %280 = vmatmul.mubr.f32.gmra.mrb[0].mxu0 %v178
    %v281 = vpop.f32.mrb[0].mxu0
    %v282 = vadd.f32 0.0, %v281
    %v283 = vpop.f32.mrb[0].mxu0
    %v284 = vadd.f32 0.0, %v283
    %285 = vmatprep.mubr.f32.mxu0 0.0
    %286 = vmatmul.mubr.f32.gmra.mrb[0].mxu0 %v181
    %v287 = vpop.f32.mrb[0].mxu0
    %v288 = vadd.f32 0.0, %v287
    %v289 = vpop.f32.mrb[0].mxu0
    %v290 = vadd.f32 0.0, %v289
    %291 = vmatprep.mubr.f32.mxu0 0.0
    %292 = vmatmul.mubr.f32.gmra.mrb[0].mxu0 %v184
    %v293 = vpop.f32.mrb[0].mxu0
    %v294 = vadd.f32 0.0, %v293
    %v295 = vpop.f32.mrb[0].mxu0
    %v296 = vadd.f32 0.0, %v295
    %297 = vmatprep.mubr.f32.mxu0 0.0
    %298 = vmatmul.mubr.f32.gmra.mrb[0].mxu0 %v187
    %v299 = vpop.f32.mrb[0].mxu0
    %v300 = vadd.f32 0.0, %v299
    %v301 = vpop.f32.mrb[0].mxu0
    %v302 = vadd.f32 0.0, %v301
    %303 = vmatprep.mubr.f32.mxu0 0.0
    %304 = vmatmul.mubr.f32.gmra.mrb[0].mxu0 %v190
    %v305 = vpop.f32.mrb[0].mxu0
    %v306 = vadd.f32 0.0, %v305
    %v307 = vpop.f32.mrb[0].mxu0
    %v308 = vadd.f32 0.0, %v307
    %309 = vdwg.mxu0
    %310 = vmatprep.subr.mxu0 %v125
    %311 = vmatpush1.msra.mxu0 %v124
    %312 = vmatprep.subr.mxu0 %v127
    %313 = vmatpush1.msra.mxu0 %v126
    %314 = vmatprep.subr.mxu0 %v129
    %315 = vmatpush1.msra.mxu0 %v128
    %316 = vmatprep.subr.mxu0 %v131
    %317 = vmatpush1.msra.mxu0 %v130
    %318 = vmatprep.subr.mxu0 %v133
    %319 = vmatpush1.msra.mxu0 %v132
    %320 = vmatprep.subr.mxu0 %v135
    %321 = vmatpush1.msra.mxu0 %v134
    %322 = vmatprep.subr.mxu0 %v137
    %323 = vmatpush1.msra.mxu0 %v136
    %324 = vmatprep.subr.mxu0 %v139
    %325 = vmatpush1.msra.mxu0 %v138
    %326 = vmatprep.subr.mxu0 %v141
    %327 = vmatpush1.msra.mxu0 %v140
    %328 = vmatprep.subr.mxu0 %v143
    %329 = vmatpush1.msra.mxu0 %v142
    %330 = vmatprep.subr.mxu0 %v145
    %331 = vmatpush1.msra.mxu0 %v144
    %332 = vmatprep.subr.mxu0 %v147
    %333 = vmatpush1.msra.mxu0 %v146
    %334 = vmatprep.subr.mxu0 %v149
    %335 = vmatpush1.msra.mxu0 %v148
    %336 = vmatprep.subr.mxu0 %v151
    %337 = vmatpush1.msra.mxu0 %v150
    %338 = vmatprep.subr.mxu0 %v153
    %339 = vmatpush1.msra.mxu0 %v152
    %340 = vmatprep.subr.mxu0 %v155
    %341 = vmatpush1.msra.mxu0 %v154
    %342 = vmatprep.subr.mxu0 0.0
    %343 = vmatpush1.msra.mxu0 0.0
    %344 = vmatprep.subr.mxu0 0.0
    %345 = vmatpush1.msra.mxu0 0.0
    %346 = vmatprep.subr.mxu0 0.0
    %347 = vmatpush1.msra.mxu0 0.0
    %348 = vmatprep.subr.mxu0 0.0
    %349 = vmatpush1.msra.mxu0 0.0
    %350 = vmatprep.subr.mxu0 0.0
    %351 = vmatpush1.msra.mxu0 0.0
    %352 = vmatprep.subr.mxu0 0.0
    %353 = vmatpush1.msra.mxu0 0.0
    %354 = vmatprep.subr.mxu0 0.0
    %355 = vmatpush1.msra.mxu0 0.0
    %356 = vmatprep.subr.mxu0 0.0
    %357 = vmatpush1.msra.mxu0 0.0
    %358 = vmatprep.subr.mxu0 0.0
    %359 = vmatpush1.msra.mxu0 0.0
    %360 = vmatprep.subr.mxu0 0.0
    %361 = vmatpush1.msra.mxu0 0.0
    %362 = vmatprep.subr.mxu0 0.0
    %363 = vmatpush1.msra.mxu0 0.0
    %364 = vmatprep.subr.mxu0 0.0
    %365 = vmatpush1.msra.mxu0 0.0
    %366 = vmatprep.subr.mxu0 0.0
    %367 = vmatpush1.msra.mxu0 0.0
    %368 = vmatprep.subr.mxu0 0.0
    %369 = vmatpush1.msra.mxu0 0.0
    %370 = vmatprep.subr.mxu0 0.0
    %371 = vmatpush1.msra.mxu0 0.0
    %372 = vmatprep.subr.mxu0 0.0
    %373 = vmatpush1.msra.mxu0 0.0
    %374 = vmatprep.mubr.f32.mxu0 0.0
    %375 = vmatmul.mubr.f32.gmra.mrb[0].mxu0 %v116
    %v376 = vpop.f32.mrb[0].mxu0
    %v377 = vadd.f32 %v264, %v376
    %v378 = vpop.f32.mrb[0].mxu0
    %v379 = vadd.f32 %v266, %v378
    %380 = vmatprep.mubr.f32.mxu0 0.0
    %381 = vmatmul.mubr.f32.gmra.mrb[0].mxu0 %v117
    %v382 = vpop.f32.mrb[0].mxu0
    %v383 = vadd.f32 %v270, %v382
    %v384 = vpop.f32.mrb[0].mxu0
    %v385 = vadd.f32 %v272, %v384
    %386 = vmatprep.mubr.f32.mxu0 0.0
    %387 = vmatmul.mubr.f32.gmra.mrb[0].mxu0 %v118
    %v388 = vpop.f32.mrb[0].mxu0
    %v389 = vadd.f32 %v276, %v388
    %v390 = vpop.f32.mrb[0].mxu0
    %v391 = vadd.f32 %v278, %v390
    %392 = vmatprep.mubr.f32.mxu0 0.0
    %393 = vmatmul.mubr.f32.gmra.mrb[0].mxu0 %v119
    %v394 = vpop.f32.mrb[0].mxu0
    %v395 = vadd.f32 %v282, %v394
    %v396 = vpop.f32.mrb[0].mxu0
    %v397 = vadd.f32 %v284, %v396
    %398 = vmatprep.mubr.f32.mxu0 0.0
    %399 = vmatmul.mubr.f32.gmra.mrb[0].mxu0 %v120
    %v400 = vpop.f32.mrb[0].mxu0
    %v401 = vadd.f32 %v288, %v400
    %v402 = vpop.f32.mrb[0].mxu0
    %v403 = vadd.f32 %v290, %v402
    %404 = vmatprep.mubr.f32.mxu0 0.0
    %405 = vmatmul.mubr.f32.gmra.mrb[0].mxu0 %v121
    %v406 = vpop.f32.mrb[0].mxu0
    %v407 = vadd.f32 %v294, %v406
    %v408 = vpop.f32.mrb[0].mxu0
    %v409 = vadd.f32 %v296, %v408
    %410 = vmatprep.mubr.f32.mxu0 0.0
    %411 = vmatmul.mubr.f32.gmra.mrb[0].mxu0 %v122
    %v412 = vpop.f32.mrb[0].mxu0
    %v413 = vadd.f32 %v300, %v412
    %v414 = vpop.f32.mrb[0].mxu0
    %v415 = vadd.f32 %v302, %v414
    %416 = vmatprep.mubr.f32.mxu0 0.0
    %417 = vmatmul.mubr.f32.gmra.mrb[0].mxu0 %v123
    %v418 = vpop.f32.mrb[0].mxu0
    %v419 = vadd.f32 %v306, %v418
    %v420 = vpop.f32.mrb[0].mxu0
    %v421 = vadd.f32 %v308, %v420
    %422 = vdwg.mxu0
    %v423 = vld [vmem:[#allocation10] sm:$0x3]
    %v425 = vlaneseq
    %v426 = vshrl.u32 %v425, 7
    %v427 = vsub.s32 0, %v426
    %v428 = vrot.slane %v423, %v427
    %v429 = vlaneseq
    %v430 = vshrl.u32 %v429, 7
    %v431 = vsub.s32 1, %v430
    %v432 = vrot.slane %v423, %v431
    %v435 = vadd.f32 %v377, %v428
    %v436 = vadd.f32 %v379, %v432
    %v437 = vadd.f32 %v383, %v428
    %v438 = vadd.f32 %v385, %v432
    %v439 = vadd.f32 %v389, %v428
    %v440 = vadd.f32 %v391, %v432
    %v441 = vadd.f32 %v395, %v428
    %v442 = vadd.f32 %v397, %v432
    %v443 = vadd.f32 %v401, %v428
    %v444 = vadd.f32 %v403, %v432
    %v445 = vadd.f32 %v407, %v428
    %v446 = vadd.f32 %v409, %v432
    %v447 = vadd.f32 %v413, %v428
    %v448 = vadd.f32 %v415, %v432
    %v449 = vadd.f32 %v419, %v428
    %v450 = vadd.f32 %v421, %v432
    %v451 = vmax.f32 %v435, 0.0
    %v452 = vmax.f32 %v436, 0.0
    %v453 = vmax.f32 %v437, 0.0
    %v454 = vmax.f32 %v438, 0.0
    %v455 = vmax.f32 %v439, 0.0
    %v456 = vmax.f32 %v440, 0.0
    %v457 = vmax.f32 %v441, 0.0
    %v458 = vmax.f32 %v442, 0.0
    %v459 = vmax.f32 %v443, 0.0
    %v460 = vmax.f32 %v444, 0.0
    %v461 = vmax.f32 %v445, 0.0
    %v462 = vmax.f32 %v446, 0.0
    %v463 = vmax.f32 %v447, 0.0
    %v464 = vmax.f32 %v448, 0.0
    %v465 = vmax.f32 %v449, 0.0
    %v466 = vmax.f32 %v450, 0.0
    %v467 = vld [vmem:[#allocation11] sm:$0xff]
    %v468 = vld [vmem:[#allocation11 + $0x8] sm:$0xff]
    %v469 = vld [vmem:[#allocation11 + $0x10] sm:$0xff]
    %v470 = vld [vmem:[#allocation11 + $0x18] sm:$0xff]
    %v471 = vld [vmem:[#allocation11 + $0x20] sm:$0xff]
    %v472 = vld [vmem:[#allocation11 + $0x28] sm:$0xff]
    %v473 = vld [vmem:[#allocation11 + $0x30] sm:$0xff]
    %v474 = vld [vmem:[#allocation11 + $0x38] sm:$0xff]
    %v475 = vld [vmem:[#allocation11 + $0x40] sm:$0xff]
    %v476 = vld [vmem:[#allocation11 + $0x48] sm:$0xff]
    %v477 = vld [vmem:[#allocation11 + $0x50] sm:$0xff]
    %v478 = vld [vmem:[#allocation11 + $0x58] sm:$0xff]
    %v479 = vld [vmem:[#allocation11 + $0x60] sm:$0xff]
    %v480 = vld [vmem:[#allocation11 + $0x68] sm:$0xff]
    %v481 = vld [vmem:[#allocation11 + $0x70] sm:$0xff]
    %v482 = vld [vmem:[#allocation11 + $0x78] sm:$0xff]
    %v483 = vld [vmem:[#allocation11 + $0x80] sm:$0xff]
    %v484 = vld [vmem:[#allocation11 + $0x88] sm:$0xff]
    %v485 = vld [vmem:[#allocation11 + $0x90] sm:$0xff]
    %v486 = vld [vmem:[#allocation11 + $0x98] sm:$0xff]
    %v487 = vld [vmem:[#allocation11 + $0xa0] sm:$0xff]
    %v488 = vld [vmem:[#allocation11 + $0xa8] sm:$0xff]
    %v489 = vld [vmem:[#allocation11 + $0xb0] sm:$0xff]
    %v490 = vld [vmem:[#allocation11 + $0xb8] sm:$0xff]
    %v491 = vld [vmem:[#allocation11 + $0xc0] sm:$0xff]
    %v492 = vld [vmem:[#allocation11 + $0xc8] sm:$0xff]
    %v493 = vld [vmem:[#allocation11 + $0xd0] sm:$0xff]
    %v494 = vld [vmem:[#allocation11 + $0xd8] sm:$0xff]
    %v495 = vld [vmem:[#allocation11 + $0xe0] sm:$0xff]
    %v496 = vld [vmem:[#allocation11 + $0xe8] sm:$0xff]
    %v497 = vld [vmem:[#allocation11 + $0xf0] sm:$0xff]
    %v498 = vld [vmem:[#allocation11 + $0xf8] sm:$0xff]
    %v499 = vld [vmem:[#allocation13] sm:$0x1]
    %v501 = vlaneseq
    %v502 = vshrl.u32 %v501, 7
    %v503 = vsub.s32 0, %v502
    %v504 = vrot.slane %v499, %v503
    %506 = vmatprep.subr.mxu0 0.0
    %507 = vmatpush1.msra.mxu0 %v467
    %508 = vmatprep.subr.mxu0 0.0
    %509 = vmatpush1.msra.mxu0 %v468
    %510 = vmatprep.subr.mxu0 0.0
    %511 = vmatpush1.msra.mxu0 %v469
    %512 = vmatprep.subr.mxu0 0.0
    %513 = vmatpush1.msra.mxu0 %v470
    %514 = vmatprep.subr.mxu0 0.0
    %515 = vmatpush1.msra.mxu0 %v471
    %516 = vmatprep.subr.mxu0 0.0
    %517 = vmatpush1.msra.mxu0 %v472
    %518 = vmatprep.subr.mxu0 0.0
    %519 = vmatpush1.msra.mxu0 %v473
    %520 = vmatprep.subr.mxu0 0.0
    %521 = vmatpush1.msra.mxu0 %v474
    %522 = vmatprep.subr.mxu0 0.0
    %523 = vmatpush1.msra.mxu0 %v475
    %524 = vmatprep.subr.mxu0 0.0
    %525 = vmatpush1.msra.mxu0 %v476
    %526 = vmatprep.subr.mxu0 0.0
    %527 = vmatpush1.msra.mxu0 %v477
    %528 = vmatprep.subr.mxu0 0.0
    %529 = vmatpush1.msra.mxu0 %v478
    %530 = vmatprep.subr.mxu0 0.0
    %531 = vmatpush1.msra.mxu0 %v479
    %532 = vmatprep.subr.mxu0 0.0
    %533 = vmatpush1.msra.mxu0 %v480
    %534 = vmatprep.subr.mxu0 0.0
    %535 = vmatpush1.msra.mxu0 %v481
    %536 = vmatprep.subr.mxu0 0.0
    %537 = vmatpush1.msra.mxu0 %v482
    %538 = vmatprep.subr.mxu0 0.0
    %539 = vmatpush1.msra.mxu0 %v483
    %540 = vmatprep.subr.mxu0 0.0
    %541 = vmatpush1.msra.mxu0 %v484
    %542 = vmatprep.subr.mxu0 0.0
    %543 = vmatpush1.msra.mxu0 %v485
    %544 = vmatprep.subr.mxu0 0.0
    %545 = vmatpush1.msra.mxu0 %v486
    %546 = vmatprep.subr.mxu0 0.0
    %547 = vmatpush1.msra.mxu0 %v487
    %548 = vmatprep.subr.mxu0 0.0
    %549 = vmatpush1.msra.mxu0 %v488
    %550 = vmatprep.subr.mxu0 0.0
    %551 = vmatpush1.msra.mxu0 %v489
    %552 = vmatprep.subr.mxu0 0.0
    %553 = vmatpush1.msra.mxu0 %v490
    %554 = vmatprep.subr.mxu0 0.0
    %555 = vmatpush1.msra.mxu0 %v491
    %556 = vmatprep.subr.mxu0 0.0
    %557 = vmatpush1.msra.mxu0 %v492
    %558 = vmatprep.subr.mxu0 0.0
    %559 = vmatpush1.msra.mxu0 %v493
    %560 = vmatprep.subr.mxu0 0.0
    %561 = vmatpush1.msra.mxu0 %v494
    %562 = vmatprep.subr.mxu0 0.0
    %563 = vmatpush1.msra.mxu0 %v495
    %564 = vmatprep.subr.mxu0 0.0
    %565 = vmatpush1.msra.mxu0 %v496
    %566 = vmatprep.subr.mxu0 0.0
    %567 = vmatpush1.msra.mxu0 %v497
    %568 = vmatprep.subr.mxu0 0.0
    %569 = vmatpush1.msra.mxu0 %v498
    %570 = vmatprep.mubr.f32.mxu0 %v452
    %571 = vmatmul.mubr.f32.gmra.mrb[0].mxu0 %v451
    %v572 = vpop.f32.mrb[0].mxu0
    %v573 = vadd.f32 %v504, %v572
    %v574 = vpop.f32.mrb[0].mxu0
    %575 = vmatprep.mubr.f32.mxu0 %v454
    %576 = vmatmul.mubr.f32.gmra.mrb[0].mxu0 %v453
    %v577 = vpop.f32.mrb[0].mxu0
    %v578 = vadd.f32 %v504, %v577
    %v579 = vpop.f32.mrb[0].mxu0
    %580 = vmatprep.mubr.f32.mxu0 %v456
    %581 = vmatmul.mubr.f32.gmra.mrb[0].mxu0 %v455
    %v582 = vpop.f32.mrb[0].mxu0
    %v583 = vadd.f32 %v504, %v582
    %v584 = vpop.f32.mrb[0].mxu0
    %585 = vmatprep.mubr.f32.mxu0 %v458
    %586 = vmatmul.mubr.f32.gmra.mrb[0].mxu0 %v457
    %v587 = vpop.f32.mrb[0].mxu0
    %v588 = vadd.f32 %v504, %v587
    %v589 = vpop.f32.mrb[0].mxu0
    %590 = vmatprep.mubr.f32.mxu0 %v460
    %591 = vmatmul.mubr.f32.gmra.mrb[0].mxu0 %v459
    %v592 = vpop.f32.mrb[0].mxu0
    %v593 = vadd.f32 %v504, %v592
    %v594 = vpop.f32.mrb[0].mxu0
    %595 = vmatprep.mubr.f32.mxu0 %v462
    %596 = vmatmul.mubr.f32.gmra.mrb[0].mxu0 %v461
    %v597 = vpop.f32.mrb[0].mxu0
    %v598 = vadd.f32 %v504, %v597
    %v599 = vpop.f32.mrb[0].mxu0
    %600 = vmatprep.mubr.f32.mxu0 %v464
    %601 = vmatmul.mubr.f32.gmra.mrb[0].mxu0 %v463
    %v602 = vpop.f32.mrb[0].mxu0
    %v603 = vadd.f32 %v504, %v602
    %v604 = vpop.f32.mrb[0].mxu0
    %605 = vmatprep.mubr.f32.mxu0 %v466
    %606 = vmatmul.mubr.f32.gmra.mrb[0].mxu0 %v465
    %v607 = vpop.f32.mrb[0].mxu0
    %v608 = vadd.f32 %v504, %v607
    %v609 = vpop.f32.mrb[0].mxu0
    %610 = vdwg.mxu0
    %611 = vst [vmem:[#allocation14] sm:$0xff] %v573
    %612 = vst [vmem:[#allocation14 + $0x8] sm:$0xff] %v578
    %613 = vst [vmem:[#allocation14 + $0x10] sm:$0xff] %v583
    %614 = vst [vmem:[#allocation14 + $0x18] sm:$0xff] %v588
    %615 = vst [vmem:[#allocation14 + $0x20] sm:$0xff] %v593
    %616 = vst [vmem:[#allocation14 + $0x28] sm:$0xff] %v598
    %617 = vst [vmem:[#allocation14 + $0x30] sm:$0xff] %v603
    %618 = vst [vmem:[#allocation14 + $0x38] sm:$0xff] %v608
    // Predicated region
    $region58: #{grunet_forward.3} parent=1 // pred_check
      _
    $region59: #{grunet_forward.3} parent=1 // pred_check_branch
      %620 = sbr.rel (0) target = $region61
    $region60: #{grunet_forward.3} parent=1 // pred_region
      %s622 = ssub.s32 1024, 1024
      %623 = vsyncadd [#allocation4], %s622
      %s624 = sshll.u32 [#allocation14], 4
      %s625 = int_to_ptr.vmem [resolvable:$true] %s624
      %630 = dma.vmem_to_hbm [thread:$0]  %s625, 1024, %s7, [#allocation4], 128, 128, 8
    $region61: #{grunet_forward.3} parent=1 // pred_fallthru
      _
    // Predicated region
    $region62: #{grunet_forward.3} parent=1 // pred_check
      _
    $region63: #{grunet_forward.3} parent=1 // pred_check_branch
      %632 = sbr.rel (0) target = $region65
    $region64: #{grunet_forward.3} parent=1 // pred_region
      %633 = dma.done [#allocation4], 1024
    $region65: #{grunet_forward.3} parent=1 // pred_fallthru
      _
    %634 = vsyncpa [#allocation3], 1
    %635 = vsyncpa [#allocation6], 1
    %636 = vsyncpa [#allocation9], 1
    %637 = vsyncpa [#allocation12], 1
    %638 = vsyncpa [#allocation4], 1

// kernel: grunet_forward.2
$region0: #{grunet_forward.2}
  #allocation0 [shape = 'u32[]', space=smem, size = 0x4, offset = 0x4, fixed_abs, tag = 'smem constant byte address 0x4 - core index']
  #allocation1 [shape = 'u32[144,128]{1,0:T(1,128)}', space=vmem, size = 0x12000, scoped, tag = 'internal scratch']
  #allocation2 [shape = 'f32[8,8,384]{2,1,0:T(8,128)}', space=vmem, size = 0x18000, scoped, tag = 'scratch operand']
  %s0 = inlined_call_operand.hbm [shape: f32[8,8,4], index: 0, kind: input, shape index: {}]
  %s1 = inlined_call_operand.hbm [shape: f32[2,8,128], index: 1, kind: input, shape index: {}]
  %s2 = inlined_call_operand.hbm [shape: f32[4,384], index: 2, kind: input, shape index: {}]
  %s3 = inlined_call_operand.hbm [shape: f32[128,384], index: 3, kind: input, shape index: {}]
  %s4 = inlined_call_operand.hbm [shape: f32[128,384], index: 4, kind: input, shape index: {}]
  %s5 = inlined_call_operand.hbm [shape: f32[128,384], index: 5, kind: input, shape index: {}]
  %s6 = inlined_call_operand.hbm [shape: f32[8,8,128], index: 6, kind: output, shape index: {0}]
  %s7 = inlined_call_operand.hbm [shape: f32[2,8,128], index: 7, kind: output, shape index: {1}]
  %8 = xla_tuple %s6, %s7
  %s9 = sld [smem:[#allocation0]]
  $region66: #{grunet_forward.2} parent=0
    _
  %s11 = ssub.s32 1, %s9
  %s12 = scalar_select 0, %s11, %s9
  $region1: #{grunet_forward.2} parent=0
    #allocation3 [shape = 'u8[32768]{0}', space=vmem, size = 0x8000, scoped, tag = 'input window, operand 0, single buffered']
    #allocation4 [shape = 's32[1]{0}', space=sflag, size = 0x4, scoped, tag = 'scoped memory for grunet_forward.2']
    #allocation5 [shape = 's32[1]{0}', space=sflag, size = 0x4, scoped, tag = 'scoped memory for grunet_forward.2']
    #allocation6 [shape = 'u8[8192]{0}', space=vmem, size = 0x2000, scoped, tag = 'input window, operand 1, single buffered']
    #allocation7 [shape = 's32[1]{0}', space=sflag, size = 0x4, scoped, tag = 'scoped memory for grunet_forward.2']
    #allocation8 [shape = 'u8[6144]{0}', space=vmem, size = 0x1800, scoped, tag = 'input window, operand 2, single buffered']
    #allocation9 [shape = 'u8[196608]{0}', space=vmem, size = 0x30000, scoped, tag = 'input window, operand 3, single buffered']
    #allocation10 [shape = 's32[1]{0}', space=sflag, size = 0x4, scoped, tag = 'scoped memory for grunet_forward.2']
    #allocation11 [shape = 'u8[196608]{0}', space=vmem, size = 0x30000, scoped, tag = 'input window, operand 4, single buffered']
    #allocation12 [shape = 'u8[196608]{0}', space=vmem, size = 0x30000, scoped, tag = 'input window, operand 5, single buffered']
    #allocation13 [shape = 's32[1]{0}', space=sflag, size = 0x4, scoped, tag = 'scoped memory for grunet_forward.2']
    #allocation14 [shape = 'u8[32768]{0}', space=vmem, size = 0x8000, scoped, tag = 'output window, operand 0, single buffered']
    #allocation15 [shape = 'u8[8192]{0}', space=vmem, size = 0x2000, scoped, tag = 'output window, operand 1, single buffered']
    #allocation16 [shape = 's32[1]{0}', space=sflag, size = 0x4, scoped, tag = 'scoped memory for grunet_forward.2']
    %13 = vsyncpa [#allocation4], 0
    %14 = vsyncpa [#allocation7], 0
    %15 = vsyncpa [#allocation10], 0
    %16 = vsyncpa [#allocation13], 0
    %17 = vsyncpa [#allocation5], 0
    %18 = vsyncpa [#allocation16], 0
    // Predicated region
    $region2: #{grunet_forward.2} parent=1 // pred_check
      _
    $region3: #{grunet_forward.2} parent=1 // pred_check_branch
      %20 = sbr.rel (0) target = $region5
    $region4: #{grunet_forward.2} parent=1 // pred_region
      %s22 = ssub.s32 1024, 1024
      %23 = vsyncadd [#allocation4], %s22
      %s24 = sshll.u32 [#allocation3], 4
      %s25 = int_to_ptr.vmem [resolvable:$true] %s24
      %30 = dma.hbm_to_vmem [thread:$0]  %s0, 1024, %s25, [#allocation4], 128, 128, 8
    $region5: #{grunet_forward.2} parent=1 // pred_fallthru
      _
    // Predicated region
    $region6: #{grunet_forward.2} parent=1 // pred_check
      _
    $region7: #{grunet_forward.2} parent=1 // pred_check_branch
      %32 = sbr.rel (0) target = $region9
    $region8: #{grunet_forward.2} parent=1 // pred_region
      %s34 = ssub.s32 256, 256
      %35 = vsyncadd [#allocation7], %s34
      %s36 = sshll.u32 [#allocation6], 4
      %s37 = int_to_ptr.vmem [resolvable:$true] %s36
      %42 = dma.hbm_to_vmem [thread:$0]  %s1, 256, %s37, [#allocation7], 128, 128, 8
    $region9: #{grunet_forward.2} parent=1 // pred_fallthru
      _
    // Predicated region
    $region10: #{grunet_forward.2} parent=1 // pred_check
      _
    $region11: #{grunet_forward.2} parent=1 // pred_check_branch
      %44 = sbr.rel (0) target = $region13
    $region12: #{grunet_forward.2} parent=1 // pred_region
      %s46 = ssub.s32 192, 192
      %47 = vsyncadd [#allocation7], %s46
      %s49 = sshll.u32 [#allocation8], 4
      %s50 = int_to_ptr.vmem [resolvable:$true] %s49
      %52 = dma.hbm_to_vmem [thread:$0]  %s2, 192, %s50, [#allocation7]
    $region13: #{grunet_forward.2} parent=1 // pred_fallthru
      _
    // Predicated region
    $region14: #{grunet_forward.2} parent=1 // pred_check
      _
    $region15: #{grunet_forward.2} parent=1 // pred_check_branch
      %54 = sbr.rel (0) target = $region17
    $region16: #{grunet_forward.2} parent=1 // pred_region
      %s56 = ssub.s32 6144, 6144
      %57 = vsyncadd [#allocation10], %s56
      %s58 = sshll.u32 [#allocation9], 4
      %s59 = int_to_ptr.vmem [resolvable:$true] %s58
      %64 = dma.hbm_to_vmem [thread:$0]  %s3, 6144, %s59, [#allocation10], 384, 384, 24
    $region17: #{grunet_forward.2} parent=1 // pred_fallthru
      _
    // Predicated region
    $region18: #{grunet_forward.2} parent=1 // pred_check
      _
    $region19: #{grunet_forward.2} parent=1 // pred_check_branch
      %66 = sbr.rel (0) target = $region21
    $region20: #{grunet_forward.2} parent=1 // pred_region
      %s68 = ssub.s32 6144, 6144
      %69 = vsyncadd [#allocation10], %s68
      %s70 = sshll.u32 [#allocation11], 4
      %s71 = int_to_ptr.vmem [resolvable:$true] %s70
      %76 = dma.hbm_to_vmem [thread:$0]  %s4, 6144, %s71, [#allocation10], 384, 384, 24
    $region21: #{grunet_forward.2} parent=1 // pred_fallthru
      _
    // Predicated region
    $region22: #{grunet_forward.2} parent=1 // pred_check
      _
    $region23: #{grunet_forward.2} parent=1 // pred_check_branch
      %78 = sbr.rel (0) target = $region25
    $region24: #{grunet_forward.2} parent=1 // pred_region
      %s80 = ssub.s32 6144, 6144
      %81 = vsyncadd [#allocation13], %s80
      %s82 = sshll.u32 [#allocation12], 4
      %s83 = int_to_ptr.vmem [resolvable:$true] %s82
      %88 = dma.hbm_to_vmem [thread:$0]  %s5, 6144, %s83, [#allocation13], 384, 384, 24
    $region25: #{grunet_forward.2} parent=1 // pred_fallthru
      _
    // Predicated region
    $region26: #{grunet_forward.2} parent=1 // pred_check
      _
    $region27: #{grunet_forward.2} parent=1 // pred_check_branch
      %90 = sbr.rel (0) target = $region29
    $region28: #{grunet_forward.2} parent=1 // pred_region
      %91 = dma.done [#allocation4], 1024
    $region29: #{grunet_forward.2} parent=1 // pred_fallthru
      _
    // Predicated region
    $region30: #{grunet_forward.2} parent=1 // pred_check
      _
    $region31: #{grunet_forward.2} parent=1 // pred_check_branch
      %93 = sbr.rel (0) target = $region33
    $region32: #{grunet_forward.2} parent=1 // pred_region
      %94 = dma.done [#allocation7], 256
    $region33: #{grunet_forward.2} parent=1 // pred_fallthru
      _
    // Predicated region
    $region34: #{grunet_forward.2} parent=1 // pred_check
      _
    $region35: #{grunet_forward.2} parent=1 // pred_check_branch
      %96 = sbr.rel (0) target = $region37
    $region36: #{grunet_forward.2} parent=1 // pred_region
      %97 = dma.done [#allocation7], 192
    $region37: #{grunet_forward.2} parent=1 // pred_fallthru
      _
    // Predicated region
    $region38: #{grunet_forward.2} parent=1 // pred_check
      _
    $region39: #{grunet_forward.2} parent=1 // pred_check_branch
      %99 = sbr.rel (0) target = $region41
    $region40: #{grunet_forward.2} parent=1 // pred_region
      %100 = dma.done [#allocation10], 6144
    $region41: #{grunet_forward.2} parent=1 // pred_fallthru
      _
    // Predicated region
    $region42: #{grunet_forward.2} parent=1 // pred_check
      _
    $region43: #{grunet_forward.2} parent=1 // pred_check_branch
      %102 = sbr.rel (0) target = $region45
    $region44: #{grunet_forward.2} parent=1 // pred_region
      %103 = dma.done [#allocation10], 6144
    $region45: #{grunet_forward.2} parent=1 // pred_fallthru
      _
    // Predicated region
    $region46: #{grunet_forward.2} parent=1 // pred_check
      _
    $region47: #{grunet_forward.2} parent=1 // pred_check_branch
      %105 = sbr.rel (0) target = $region49
    $region48: #{grunet_forward.2} parent=1 // pred_region
      %106 = dma.done [#allocation13], 6144
    $region49: #{grunet_forward.2} parent=1 // pred_fallthru
      _
    %v107 = vld [vmem:[#allocation3] sm:$0xff]
    %v108 = vld [vmem:[#allocation3 + $0x8] sm:$0xff]
    %v109 = vld [vmem:[#allocation3 + $0x10] sm:$0xff]
    %v110 = vld [vmem:[#allocation3 + $0x18] sm:$0xff]
    %v111 = vld [vmem:[#allocation3 + $0x20] sm:$0xff]
    %v112 = vld [vmem:[#allocation3 + $0x28] sm:$0xff]
    %v113 = vld [vmem:[#allocation3 + $0x30] sm:$0xff]
    %v114 = vld [vmem:[#allocation3 + $0x38] sm:$0xff]
    %v115 = vld [vmem:[#allocation8] sm:$0xff]
    %v116 = vld [vmem:[#allocation8 + $0x8] sm:$0xf]
    %v119 = vcombine.high %v115, %v115
    %vm120 = vcmask 31744
    %v122 = vsel %vm120, %v107, 0
    %v125 = vsel %vm120, %v108, 0
    %v128 = vsel %vm120, %v109, 0
    %v131 = vsel %vm120, %v110, 0
    %v134 = vsel %vm120, %v111, 0
    %v137 = vsel %vm120, %v112, 0
    %v140 = vsel %vm120, %v113, 0
    %v143 = vsel %vm120, %v114, 0
    %vm145 = vcmask 1043456
    %v146 = vsel %vm145, %v115, 0
    %v148 = vsel %vm145, %v119, 0
    %v150 = vsel %vm145, %v116, 0
    %152 = vmatprep.subr.mxu0 %v148
    %153 = vmatpush1.msra.mxu0 %v146
    %154 = vmatprep.subr.mxu0 0.0
    %155 = vmatpush1.msra.mxu0 0.0
    %156 = vmatprep.subr.mxu0 0.0
    %157 = vmatpush1.msra.mxu0 0.0
    %158 = vmatprep.subr.mxu0 0.0
    %159 = vmatpush1.msra.mxu0 0.0
    %160 = vmatprep.subr.mxu0 0.0
    %161 = vmatpush1.msra.mxu0 0.0
    %162 = vmatprep.subr.mxu0 0.0
    %163 = vmatpush1.msra.mxu0 0.0
    %164 = vmatprep.subr.mxu0 0.0
    %165 = vmatpush1.msra.mxu0 0.0
    %166 = vmatprep.subr.mxu0 0.0
    %167 = vmatpush1.msra.mxu0 0.0
    %168 = vmatprep.subr.mxu0 0.0
    %169 = vmatpush1.msra.mxu0 0.0
    %170 = vmatprep.subr.mxu0 0.0
    %171 = vmatpush1.msra.mxu0 0.0
    %172 = vmatprep.subr.mxu0 0.0
    %173 = vmatpush1.msra.mxu0 0.0
    %174 = vmatprep.subr.mxu0 0.0
    %175 = vmatpush1.msra.mxu0 0.0
    %176 = vmatprep.subr.mxu0 0.0
    %177 = vmatpush1.msra.mxu0 0.0
    %178 = vmatprep.subr.mxu0 0.0
    %179 = vmatpush1.msra.mxu0 0.0
    %180 = vmatprep.subr.mxu0 0.0
    %181 = vmatpush1.msra.mxu0 0.0
    %182 = vmatprep.subr.mxu0 0.0
    %183 = vmatpush1.msra.mxu0 0.0
    %184 = vmatprep.subr.mxu0 0.0
    %185 = vmatpush1.msra.mxu0 0.0
    %186 = vmatprep.subr.mxu0 0.0
    %187 = vmatpush1.msra.mxu0 0.0
    %188 = vmatprep.subr.mxu0 0.0
    %189 = vmatpush1.msra.mxu0 0.0
    %190 = vmatprep.subr.mxu0 0.0
    %191 = vmatpush1.msra.mxu0 0.0
    %192 = vmatprep.subr.mxu0 0.0
    %193 = vmatpush1.msra.mxu0 0.0
    %194 = vmatprep.subr.mxu0 0.0
    %195 = vmatpush1.msra.mxu0 0.0
    %196 = vmatprep.subr.mxu0 0.0
    %197 = vmatpush1.msra.mxu0 0.0
    %198 = vmatprep.subr.mxu0 0.0
    %199 = vmatpush1.msra.mxu0 0.0
    %200 = vmatprep.subr.mxu0 0.0
    %201 = vmatpush1.msra.mxu0 0.0
    %202 = vmatprep.subr.mxu0 0.0
    %203 = vmatpush1.msra.mxu0 0.0
    %204 = vmatprep.subr.mxu0 0.0
    %205 = vmatpush1.msra.mxu0 0.0
    %206 = vmatprep.subr.mxu0 0.0
    %207 = vmatpush1.msra.mxu0 0.0
    %208 = vmatprep.subr.mxu0 0.0
    %209 = vmatpush1.msra.mxu0 0.0
    %210 = vmatprep.subr.mxu0 0.0
    %211 = vmatpush1.msra.mxu0 0.0
    %212 = vmatprep.subr.mxu0 0.0
    %213 = vmatpush1.msra.mxu0 0.0
    %214 = vmatprep.subr.mxu0 0.0
    %215 = vmatpush1.msra.mxu0 0.0
    %216 = vmatprep.mubr.f32.mxu0 0.0
    %217 = vmatmul.mubr.f32.gmra.mrb[0].mxu0 %v122
    %v218 = vpop.f32.mrb[0].mxu0
    %v219 = vadd.f32 0.0, %v218
    %v220 = vpop.f32.mrb[0].mxu0
    %v221 = vadd.f32 0.0, %v220
    %222 = vmatprep.mubr.f32.mxu0 0.0
    %223 = vmatmul.mubr.f32.gmra.mrb[0].mxu0 %v125
    %v224 = vpop.f32.mrb[0].mxu0
    %v225 = vadd.f32 0.0, %v224
    %v226 = vpop.f32.mrb[0].mxu0
    %v227 = vadd.f32 0.0, %v226
    %228 = vmatprep.mubr.f32.mxu0 0.0
    %229 = vmatmul.mubr.f32.gmra.mrb[0].mxu0 %v128
    %v230 = vpop.f32.mrb[0].mxu0
    %v231 = vadd.f32 0.0, %v230
    %v232 = vpop.f32.mrb[0].mxu0
    %v233 = vadd.f32 0.0, %v232
    %234 = vmatprep.mubr.f32.mxu0 0.0
    %235 = vmatmul.mubr.f32.gmra.mrb[0].mxu0 %v131
    %v236 = vpop.f32.mrb[0].mxu0
    %v237 = vadd.f32 0.0, %v236
    %v238 = vpop.f32.mrb[0].mxu0
    %v239 = vadd.f32 0.0, %v238
    %240 = vmatprep.mubr.f32.mxu0 0.0
    %241 = vmatmul.mubr.f32.gmra.mrb[0].mxu0 %v134
    %v242 = vpop.f32.mrb[0].mxu0
    %v243 = vadd.f32 0.0, %v242
    %v244 = vpop.f32.mrb[0].mxu0
    %v245 = vadd.f32 0.0, %v244
    %246 = vmatprep.mubr.f32.mxu0 0.0
    %247 = vmatmul.mubr.f32.gmra.mrb[0].mxu0 %v137
    %v248 = vpop.f32.mrb[0].mxu0
    %v249 = vadd.f32 0.0, %v248
    %v250 = vpop.f32.mrb[0].mxu0
    %v251 = vadd.f32 0.0, %v250
    %252 = vmatprep.mubr.f32.mxu0 0.0
    %253 = vmatmul.mubr.f32.gmra.mrb[0].mxu0 %v140
    %v254 = vpop.f32.mrb[0].mxu0
    %v255 = vadd.f32 0.0, %v254
    %v256 = vpop.f32.mrb[0].mxu0
    %v257 = vadd.f32 0.0, %v256
    %258 = vmatprep.mubr.f32.mxu0 0.0
    %259 = vmatmul.mubr.f32.gmra.mrb[0].mxu0 %v143
    %v260 = vpop.f32.mrb[0].mxu0
    %v261 = vadd.f32 0.0, %v260
    %v262 = vpop.f32.mrb[0].mxu0
    %v263 = vadd.f32 0.0, %v262
    %264 = vdwg.mxu0
    %265 = vmatprep.subr.mxu0 0.0
    %266 = vmatpush1.msra.mxu0 %v150
    %267 = vmatprep.subr.mxu0 0.0
    %268 = vmatpush1.msra.mxu0 0.0
    %269 = vmatprep.subr.mxu0 0.0
    %270 = vmatpush1.msra.mxu0 0.0
    %271 = vmatprep.subr.mxu0 0.0
    %272 = vmatpush1.msra.mxu0 0.0
    %273 = vmatprep.subr.mxu0 0.0
    %274 = vmatpush1.msra.mxu0 0.0
    %275 = vmatprep.subr.mxu0 0.0
    %276 = vmatpush1.msra.mxu0 0.0
    %277 = vmatprep.subr.mxu0 0.0
    %278 = vmatpush1.msra.mxu0 0.0
    %279 = vmatprep.subr.mxu0 0.0
    %280 = vmatpush1.msra.mxu0 0.0
    %281 = vmatprep.subr.mxu0 0.0
    %282 = vmatpush1.msra.mxu0 0.0
    %283 = vmatprep.subr.mxu0 0.0
    %284 = vmatpush1.msra.mxu0 0.0
    %285 = vmatprep.subr.mxu0 0.0
    %286 = vmatpush1.msra.mxu0 0.0
    %287 = vmatprep.subr.mxu0 0.0
    %288 = vmatpush1.msra.mxu0 0.0
    %289 = vmatprep.subr.mxu0 0.0
    %290 = vmatpush1.msra.mxu0 0.0
    %291 = vmatprep.subr.mxu0 0.0
    %292 = vmatpush1.msra.mxu0 0.0
    %293 = vmatprep.subr.mxu0 0.0
    %294 = vmatpush1.msra.mxu0 0.0
    %295 = vmatprep.subr.mxu0 0.0
    %296 = vmatpush1.msra.mxu0 0.0
    %297 = vmatprep.subr.mxu0 0.0
    %298 = vmatpush1.msra.mxu0 0.0
    %299 = vmatprep.subr.mxu0 0.0
    %300 = vmatpush1.msra.mxu0 0.0
    %301 = vmatprep.subr.mxu0 0.0
    %302 = vmatpush1.msra.mxu0 0.0
    %303 = vmatprep.subr.mxu0 0.0
    %304 = vmatpush1.msra.mxu0 0.0
    %305 = vmatprep.subr.mxu0 0.0
    %306 = vmatpush1.msra.mxu0 0.0
    %307 = vmatprep.subr.mxu0 0.0
    %308 = vmatpush1.msra.mxu0 0.0
    %309 = vmatprep.subr.mxu0 0.0
    %310 = vmatpush1.msra.mxu0 0.0
    %311 = vmatprep.subr.mxu0 0.0
    %312 = vmatpush1.msra.mxu0 0.0
    %313 = vmatprep.subr.mxu0 0.0
    %314 = vmatpush1.msra.mxu0 0.0
    %315 = vmatprep.subr.mxu0 0.0
    %316 = vmatpush1.msra.mxu0 0.0
    %317 = vmatprep.subr.mxu0 0.0
    %318 = vmatpush1.msra.mxu0 0.0
    %319 = vmatprep.subr.mxu0 0.0
    %320 = vmatpush1.msra.mxu0 0.0
    %321 = vmatprep.subr.mxu0 0.0
    %322 = vmatpush1.msra.mxu0 0.0
    %323 = vmatprep.subr.mxu0 0.0
    %324 = vmatpush1.msra.mxu0 0.0
    %325 = vmatprep.subr.mxu0 0.0
    %326 = vmatpush1.msra.mxu0 0.0
    %327 = vmatprep.subr.mxu0 0.0
    %328 = vmatpush1.msra.mxu0 0.0
    %329 = vmatprep.mubr.f32.mxu0 0.0
    %330 = vmatmul.mubr.f32.gmra.mrb[0].mxu0 %v122
    %v331 = vpop.f32.mrb[0].mxu0
    %v332 = vadd.f32 0.0, %v331
    %v333 = vpop.f32.mrb[0].mxu0
    %334 = vmatprep.mubr.f32.mxu0 0.0
    %335 = vmatmul.mubr.f32.gmra.mrb[0].mxu0 %v125
    %v336 = vpop.f32.mrb[0].mxu0
    %v337 = vadd.f32 0.0, %v336
    %v338 = vpop.f32.mrb[0].mxu0
    %339 = vmatprep.mubr.f32.mxu0 0.0
    %340 = vmatmul.mubr.f32.gmra.mrb[0].mxu0 %v128
    %v341 = vpop.f32.mrb[0].mxu0
    %v342 = vadd.f32 0.0, %v341
    %v343 = vpop.f32.mrb[0].mxu0
    %344 = vmatprep.mubr.f32.mxu0 0.0
    %345 = vmatmul.mubr.f32.gmra.mrb[0].mxu0 %v131
    %v346 = vpop.f32.mrb[0].mxu0
    %v347 = vadd.f32 0.0, %v346
    %v348 = vpop.f32.mrb[0].mxu0
    %349 = vmatprep.mubr.f32.mxu0 0.0
    %350 = vmatmul.mubr.f32.gmra.mrb[0].mxu0 %v134
    %v351 = vpop.f32.mrb[0].mxu0
    %v352 = vadd.f32 0.0, %v351
    %v353 = vpop.f32.mrb[0].mxu0
    %354 = vmatprep.mubr.f32.mxu0 0.0
    %355 = vmatmul.mubr.f32.gmra.mrb[0].mxu0 %v137
    %v356 = vpop.f32.mrb[0].mxu0
    %v357 = vadd.f32 0.0, %v356
    %v358 = vpop.f32.mrb[0].mxu0
    %359 = vmatprep.mubr.f32.mxu0 0.0
    %360 = vmatmul.mubr.f32.gmra.mrb[0].mxu0 %v140
    %v361 = vpop.f32.mrb[0].mxu0
    %v362 = vadd.f32 0.0, %v361
    %v363 = vpop.f32.mrb[0].mxu0
    %364 = vmatprep.mubr.f32.mxu0 0.0
    %365 = vmatmul.mubr.f32.gmra.mrb[0].mxu0 %v143
    %v366 = vpop.f32.mrb[0].mxu0
    %v367 = vadd.f32 0.0, %v366
    %v368 = vpop.f32.mrb[0].mxu0
    %369 = vdwg.mxu0
    %370 = vst [vmem:[#allocation2] sm:$0xff] %v219
    %371 = vst [vmem:[#allocation2 + $0x8] sm:$0xff] %v221
    %372 = vst [vmem:[#allocation2 + $0x10] sm:$0xff] %v332
    %373 = vst [vmem:[#allocation2 + $0x18] sm:$0xff] %v225
    %374 = vst [vmem:[#allocation2 + $0x20] sm:$0xff] %v227
    %375 = vst [vmem:[#allocation2 + $0x28] sm:$0xff] %v337
    %376 = vst [vmem:[#allocation2 + $0x30] sm:$0xff] %v231
    %377 = vst [vmem:[#allocation2 + $0x38] sm:$0xff] %v233
    %378 = vst [vmem:[#allocation2 + $0x40] sm:$0xff] %v342
    %379 = vst [vmem:[#allocation2 + $0x48] sm:$0xff] %v237
    %380 = vst [vmem:[#allocation2 + $0x50] sm:$0xff] %v239
    %381 = vst [vmem:[#allocation2 + $0x58] sm:$0xff] %v347
    %382 = vst [vmem:[#allocation2 + $0x60] sm:$0xff] %v243
    %383 = vst [vmem:[#allocation2 + $0x68] sm:$0xff] %v245
    %384 = vst [vmem:[#allocation2 + $0x70] sm:$0xff] %v352
    %385 = vst [vmem:[#allocation2 + $0x78] sm:$0xff] %v249
    %386 = vst [vmem:[#allocation2 + $0x80] sm:$0xff] %v251
    %387 = vst [vmem:[#allocation2 + $0x88] sm:$0xff] %v357
    %388 = vst [vmem:[#allocation2 + $0x90] sm:$0xff] %v255
    %389 = vst [vmem:[#allocation2 + $0x98] sm:$0xff] %v257
    %390 = vst [vmem:[#allocation2 + $0xa0] sm:$0xff] %v362
    %391 = vst [vmem:[#allocation2 + $0xa8] sm:$0xff] %v261
    %392 = vst [vmem:[#allocation2 + $0xb0] sm:$0xff] %v263
    %393 = vst [vmem:[#allocation2 + $0xb8] sm:$0xff] %v367
    %v394 = vld [vmem:[#allocation6] sm:$0xff]
    %v395 = vld [vmem:[#allocation2] sm:$0xff]
    %v396 = vld [vmem:[#allocation2 + $0x8] sm:$0xff]
    %v397 = vld [vmem:[#allocation2 + $0x10] sm:$0xff]
    %v398 = vld [vmem:[#allocation9] sm:$0xff]
    %v399 = vld [vmem:[#allocation9 + $0x8] sm:$0xff]
    %v400 = vld [vmem:[#allocation9 + $0x10] sm:$0xff]
    %v401 = vld [vmem:[#allocation9 + $0x18] sm:$0xff]
    %v402 = vld [vmem:[#allocation9 + $0x20] sm:$0xff]
    %v403 = vld [vmem:[#allocation9 + $0x28] sm:$0xff]
    %v404 = vld [vmem:[#allocation9 + $0x30] sm:$0xff]
    %v405 = vld [vmem:[#allocation9 + $0x38] sm:$0xff]
    %v406 = vld [vmem:[#allocation9 + $0x40] sm:$0xff]
    %v407 = vld [vmem:[#allocation9 + $0x48] sm:$0xff]
    %v408 = vld [vmem:[#allocation9 + $0x50] sm:$0xff]
    %v409 = vld [vmem:[#allocation9 + $0x58] sm:$0xff]
    %v410 = vld [vmem:[#allocation9 + $0x60] sm:$0xff]
    %v411 = vld [vmem:[#allocation9 + $0x68] sm:$0xff]
    %v412 = vld [vmem:[#allocation9 + $0x70] sm:$0xff]
    %v413 = vld [vmem:[#allocation9 + $0x78] sm:$0xff]
    %v414 = vld [vmem:[#allocation9 + $0x80] sm:$0xff]
    %v415 = vld [vmem:[#allocation9 + $0x88] sm:$0xff]
    %v416 = vld [vmem:[#allocation9 + $0x90] sm:$0xff]
    %v417 = vld [vmem:[#allocation9 + $0x98] sm:$0xff]
    %v418 = vld [vmem:[#allocation9 + $0xa0] sm:$0xff]
    %v419 = vld [vmem:[#allocation9 + $0xa8] sm:$0xff]
    %v420 = vld [vmem:[#allocation9 + $0xb0] sm:$0xff]
    %v421 = vld [vmem:[#allocation9 + $0xb8] sm:$0xff]
    %v422 = vld [vmem:[#allocation9 + $0xc0] sm:$0xff]
    %v423 = vld [vmem:[#allocation9 + $0xc8] sm:$0xff]
    %v424 = vld [vmem:[#allocation9 + $0xd0] sm:$0xff]
    %v425 = vld [vmem:[#allocation9 + $0xd8] sm:$0xff]
    %v426 = vld [vmem:[#allocation9 + $0xe0] sm:$0xff]
    %v427 = vld [vmem:[#allocation9 + $0xe8] sm:$0xff]
    %v428 = vld [vmem:[#allocation9 + $0xf0] sm:$0xff]
    %v429 = vld [vmem:[#allocation9 + $0xf8] sm:$0xff]
    %v430 = vld [vmem:[#allocation9 + $0x100] sm:$0xff]
    %v431 = vld [vmem:[#allocation9 + $0x108] sm:$0xff]
    %v432 = vld [vmem:[#allocation9 + $0x110] sm:$0xff]
    %v433 = vld [vmem:[#allocation9 + $0x118] sm:$0xff]
    %v434 = vld [vmem:[#allocation9 + $0x120] sm:$0xff]
    %v435 = vld [vmem:[#allocation9 + $0x128] sm:$0xff]
    %v436 = vld [vmem:[#allocation9 + $0x130] sm:$0xff]
    %v437 = vld [vmem:[#allocation9 + $0x138] sm:$0xff]
    %v438 = vld [vmem:[#allocation9 + $0x140] sm:$0xff]
    %v439 = vld [vmem:[#allocation9 + $0x148] sm:$0xff]
    %v440 = vld [vmem:[#allocation9 + $0x150] sm:$0xff]
    %v441 = vld [vmem:[#allocation9 + $0x158] sm:$0xff]
    %v442 = vld [vmem:[#allocation9 + $0x160] sm:$0xff]
    %v443 = vld [vmem:[#allocation9 + $0x168] sm:$0xff]
    %v444 = vld [vmem:[#allocation9 + $0x170] sm:$0xff]
    %v445 = vld [vmem:[#allocation9 + $0x178] sm:$0xff]
    %446 = vmatprep.subr.mxu0 %v399
    %447 = vmatpush1.msra.mxu0 %v398
    %448 = vmatprep.subr.mxu0 %v402
    %449 = vmatpush1.msra.mxu0 %v401
    %450 = vmatprep.subr.mxu0 %v405
    %451 = vmatpush1.msra.mxu0 %v404
    %452 = vmatprep.subr.mxu0 %v408
    %453 = vmatpush1.msra.mxu0 %v407
    %454 = vmatprep.subr.mxu0 %v411
    %455 = vmatpush1.msra.mxu0 %v410
    %456 = vmatprep.subr.mxu0 %v414
    %457 = vmatpush1.msra.mxu0 %v413
    %458 = vmatprep.subr.mxu0 %v417
    %459 = vmatpush1.msra.mxu0 %v416
    %460 = vmatprep.subr.mxu0 %v420
    %461 = vmatpush1.msra.mxu0 %v419
    %462 = vmatprep.subr.mxu0 %v423
    %463 = vmatpush1.msra.mxu0 %v422
    %464 = vmatprep.subr.mxu0 %v426
    %465 = vmatpush1.msra.mxu0 %v425
    %466 = vmatprep.subr.mxu0 %v429
    %467 = vmatpush1.msra.mxu0 %v428
    %468 = vmatprep.subr.mxu0 %v432
    %469 = vmatpush1.msra.mxu0 %v431
    %470 = vmatprep.subr.mxu0 %v435
    %471 = vmatpush1.msra.mxu0 %v434
    %472 = vmatprep.subr.mxu0 %v438
    %473 = vmatpush1.msra.mxu0 %v437
    %474 = vmatprep.subr.mxu0 %v441
    %475 = vmatpush1.msra.mxu0 %v440
    %476 = vmatprep.subr.mxu0 %v444
    %477 = vmatpush1.msra.mxu0 %v443
    %478 = vmatprep.subr.mxu0 0.0
    %479 = vmatpush1.msra.mxu0 0.0
    %480 = vmatprep.subr.mxu0 0.0
    %481 = vmatpush1.msra.mxu0 0.0
    %482 = vmatprep.subr.mxu0 0.0
    %483 = vmatpush1.msra.mxu0 0.0
    %484 = vmatprep.subr.mxu0 0.0
    %485 = vmatpush1.msra.mxu0 0.0
    %486 = vmatprep.subr.mxu0 0.0
    %487 = vmatpush1.msra.mxu0 0.0
    %488 = vmatprep.subr.mxu0 0.0
    %489 = vmatpush1.msra.mxu0 0.0
    %490 = vmatprep.subr.mxu0 0.0
    %491 = vmatpush1.msra.mxu0 0.0
    %492 = vmatprep.subr.mxu0 0.0
    %493 = vmatpush1.msra.mxu0 0.0
    %494 = vmatprep.subr.mxu0 0.0
    %495 = vmatpush1.msra.mxu0 0.0
    %496 = vmatprep.subr.mxu0 0.0
    %497 = vmatpush1.msra.mxu0 0.0
    %498 = vmatprep.subr.mxu0 0.0
    %499 = vmatpush1.msra.mxu0 0.0
    %500 = vmatprep.subr.mxu0 0.0
    %501 = vmatpush1.msra.mxu0 0.0
    %502 = vmatprep.subr.mxu0 0.0
    %503 = vmatpush1.msra.mxu0 0.0
    %504 = vmatprep.subr.mxu0 0.0
    %505 = vmatpush1.msra.mxu0 0.0
    %506 = vmatprep.subr.mxu0 0.0
    %507 = vmatpush1.msra.mxu0 0.0
    %508 = vmatprep.subr.mxu0 0.0
    %509 = vmatpush1.msra.mxu0 0.0
    %510 = vmatprep.mubr.f32.mxu0 0.0
    %511 = vmatmul.mubr.f32.gmra.mrb[0].mxu0 %v394
    %v512 = vpop.f32.mrb[0].mxu0
    %v513 = vadd.f32 0.0, %v512
    %v514 = vpop.f32.mrb[0].mxu0
    %v515 = vadd.f32 0.0, %v514
    %516 = vdwg.mxu0
    %517 = vmatprep.subr.mxu0 0.0
    %518 = vmatpush1.msra.mxu0 %v400
    %519 = vmatprep.subr.mxu0 0.0
    %520 = vmatpush1.msra.mxu0 %v403
    %521 = vmatprep.subr.mxu0 0.0
    %522 = vmatpush1.msra.mxu0 %v406
    %523 = vmatprep.subr.mxu0 0.0
    %524 = vmatpush1.msra.mxu0 %v409
    %525 = vmatprep.subr.mxu0 0.0
    %526 = vmatpush1.msra.mxu0 %v412
    %527 = vmatprep.subr.mxu0 0.0
    %528 = vmatpush1.msra.mxu0 %v415
    %529 = vmatprep.subr.mxu0 0.0
    %530 = vmatpush1.msra.mxu0 %v418
    %531 = vmatprep.subr.mxu0 0.0
    %532 = vmatpush1.msra.mxu0 %v421
    %533 = vmatprep.subr.mxu0 0.0
    %534 = vmatpush1.msra.mxu0 %v424
    %535 = vmatprep.subr.mxu0 0.0
    %536 = vmatpush1.msra.mxu0 %v427
    %537 = vmatprep.subr.mxu0 0.0
    %538 = vmatpush1.msra.mxu0 %v430
    %539 = vmatprep.subr.mxu0 0.0
    %540 = vmatpush1.msra.mxu0 %v433
    %541 = vmatprep.subr.mxu0 0.0
    %542 = vmatpush1.msra.mxu0 %v436
    %543 = vmatprep.subr.mxu0 0.0
    %544 = vmatpush1.msra.mxu0 %v439
    %545 = vmatprep.subr.mxu0 0.0
    %546 = vmatpush1.msra.mxu0 %v442
    %547 = vmatprep.subr.mxu0 0.0
    %548 = vmatpush1.msra.mxu0 %v445
    %549 = vmatprep.subr.mxu0 0.0
    %550 = vmatpush1.msra.mxu0 0.0
    %551 = vmatprep.subr.mxu0 0.0
    %552 = vmatpush1.msra.mxu0 0.0
    %553 = vmatprep.subr.mxu0 0.0
    %554 = vmatpush1.msra.mxu0 0.0
    %555 = vmatprep.subr.mxu0 0.0
    %556 = vmatpush1.msra.mxu0 0.0
    %557 = vmatprep.subr.mxu0 0.0
    %558 = vmatpush1.msra.mxu0 0.0
    %559 = vmatprep.subr.mxu0 0.0
    %560 = vmatpush1.msra.mxu0 0.0
    %561 = vmatprep.subr.mxu0 0.0
    %562 = vmatpush1.msra.mxu0 0.0
    %563 = vmatprep.subr.mxu0 0.0
    %564 = vmatpush1.msra.mxu0 0.0
    %565 = vmatprep.subr.mxu0 0.0
    %566 = vmatpush1.msra.mxu0 0.0
    %567 = vmatprep.subr.mxu0 0.0
    %568 = vmatpush1.msra.mxu0 0.0
    %569 = vmatprep.subr.mxu0 0.0
    %570 = vmatpush1.msra.mxu0 0.0
    %571 = vmatprep.subr.mxu0 0.0
    %572 = vmatpush1.msra.mxu0 0.0
    %573 = vmatprep.subr.mxu0 0.0
    %574 = vmatpush1.msra.mxu0 0.0
    %575 = vmatprep.subr.mxu0 0.0
    %576 = vmatpush1.msra.mxu0 0.0
    %577 = vmatprep.subr.mxu0 0.0
    %578 = vmatpush1.msra.mxu0 0.0
    %579 = vmatprep.subr.mxu0 0.0
    %580 = vmatpush1.msra.mxu0 0.0
    %581 = vmatprep.mubr.f32.mxu0 0.0
    %582 = vmatmul.mubr.f32.gmra.mrb[0].mxu0 %v394
    %v583 = vpop.f32.mrb[0].mxu0
    %v584 = vadd.f32 0.0, %v583
    %v585 = vpop.f32.mrb[0].mxu0
    %586 = vdwg.mxu0
    %v587 = vadd.f32 %v395, %v513
    %v588 = vxor.u32 %v587, 2147483648
    %v589 = vmul.f32 %v588, 1.442695
    %v590 = vpow.pop %v589
    %v591 = vadd.f32 %v590, 1.0
    %v592 = vrcp.pop %v591
    %v593 = vmul.f32 1.0, %v592
    %v594 = vadd.f32 %v396, %v515
    %v595 = vxor.u32 %v594, 2147483648
    %v596 = vmul.f32 %v595, 1.442695
    %v597 = vpow.pop %v596
    %v598 = vadd.f32 %v597, 1.0
    %v599 = vrcp.pop %v598
    %v600 = vmul.f32 1.0, %v599
    %v601 = vmul.f32 %v593, %v584
    %v602 = vadd.f32 %v397, %v601
    %v603 = vtanh.pop %v602
    %v604 = vsub.f32 1.0, %v600
    %v605 = vmul.f32 %v604, %v603
    %v606 = vmul.f32 %v600, %v394
    %v607 = vadd.f32 %v605, %v606
    %608 = vst [vmem:[#allocation14] sm:$0xff] %v607
    %s609 = scalar_lea.vmem [#allocation2], 24
    %v610 = vld [vmem:[%s609] sm:$0xff]
    %v611 = vld [vmem:[%s609 + $0x8] sm:$0xff]
    %v612 = vld [vmem:[%s609 + $0x10] sm:$0xff]
    %v613 = vld [vmem:[#allocation9] sm:$0xff]
    %v614 = vld [vmem:[#allocation9 + $0x8] sm:$0xff]
    %v615 = vld [vmem:[#allocation9 + $0x10] sm:$0xff]
    %v616 = vld [vmem:[#allocation9 + $0x18] sm:$0xff]
    %v617 = vld [vmem:[#allocation9 + $0x20] sm:$0xff]
    %v618 = vld [vmem:[#allocation9 + $0x28] sm:$0xff]
    %v619 = vld [vmem:[#allocation9 + $0x30] sm:$0xff]
    %v620 = vld [vmem:[#allocation9 + $0x38] sm:$0xff]
    %v621 = vld [vmem:[#allocation9 + $0x40] sm:$0xff]
    %v622 = vld [vmem:[#allocation9 + $0x48] sm:$0xff]
    %v623 = vld [vmem:[#allocation9 + $0x50] sm:$0xff]
    %v624 = vld [vmem:[#allocation9 + $0x58] sm:$0xff]
    %v625 = vld [vmem:[#allocation9 + $0x60] sm:$0xff]
    %v626 = vld [vmem:[#allocation9 + $0x68] sm:$0xff]
    %v627 = vld [vmem:[#allocation9 + $0x70] sm:$0xff]
    %v628 = vld [vmem:[#allocation9 + $0x78] sm:$0xff]
    %v629 = vld [vmem:[#allocation9 + $0x80] sm:$0xff]
    %v630 = vld [vmem:[#allocation9 + $0x88] sm:$0xff]
    %v631 = vld [vmem:[#allocation9 + $0x90] sm:$0xff]
    %v632 = vld [vmem:[#allocation9 + $0x98] sm:$0xff]
    %v633 = vld [vmem:[#allocation9 + $0xa0] sm:$0xff]
    %v634 = vld [vmem:[#allocation9 + $0xa8] sm:$0xff]
    %v635 = vld [vmem:[#allocation9 + $0xb0] sm:$0xff]
    %v636 = vld [vmem:[#allocation9 + $0xb8] sm:$0xff]
    %v637 = vld [vmem:[#allocation9 + $0xc0] sm:$0xff]
    %v638 = vld [vmem:[#allocation9 + $0xc8] sm:$0xff]
    %v639 = vld [vmem:[#allocation9 + $0xd0] sm:$0xff]
    %v640 = vld [vmem:[#allocation9 + $0xd8] sm:$0xff]
    %v641 = vld [vmem:[#allocation9 + $0xe0] sm:$0xff]
    %v642 = vld [vmem:[#allocation9 + $0xe8] sm:$0xff]
    %v643 = vld [vmem:[#allocation9 + $0xf0] sm:$0xff]
    %v644 = vld [vmem:[#allocation9 + $0xf8] sm:$0xff]
    %v645 = vld [vmem:[#allocation9 + $0x100] sm:$0xff]
    %v646 = vld [vmem:[#allocation9 + $0x108] sm:$0xff]
    %v647 = vld [vmem:[#allocation9 + $0x110] sm:$0xff]
    %v648 = vld [vmem:[#allocation9 + $0x118] sm:$0xff]
    %v649 = vld [vmem:[#allocation9 + $0x120] sm:$0xff]
    %v650 = vld [vmem:[#allocation9 + $0x128] sm:$0xff]
    %v651 = vld [vmem:[#allocation9 + $0x130] sm:$0xff]
    %v652 = vld [vmem:[#allocation9 + $0x138] sm:$0xff]
    %v653 = vld [vmem:[#allocation9 + $0x140] sm:$0xff]
    %v654 = vld [vmem:[#allocation9 + $0x148] sm:$0xff]
    %v655 = vld [vmem:[#allocation9 + $0x150] sm:$0xff]
    %v656 = vld [vmem:[#allocation9 + $0x158] sm:$0xff]
    %v657 = vld [vmem:[#allocation9 + $0x160] sm:$0xff]
    %v658 = vld [vmem:[#allocation9 + $0x168] sm:$0xff]
    %v659 = vld [vmem:[#allocation9 + $0x170] sm:$0xff]
    %v660 = vld [vmem:[#allocation9 + $0x178] sm:$0xff]
    %661 = vmatprep.subr.mxu0 %v614
    %662 = vmatpush1.msra.mxu0 %v613
    %663 = vmatprep.subr.mxu0 %v617
    %664 = vmatpush1.msra.mxu0 %v616
    %665 = vmatprep.subr.mxu0 %v620
    %666 = vmatpush1.msra.mxu0 %v619
    %667 = vmatprep.subr.mxu0 %v623
    %668 = vmatpush1.msra.mxu0 %v622
    %669 = vmatprep.subr.mxu0 %v626
    %670 = vmatpush1.msra.mxu0 %v625
    %671 = vmatprep.subr.mxu0 %v629
    %672 = vmatpush1.msra.mxu0 %v628
    %673 = vmatprep.subr.mxu0 %v632
    %674 = vmatpush1.msra.mxu0 %v631
    %675 = vmatprep.subr.mxu0 %v635
    %676 = vmatpush1.msra.mxu0 %v634
    %677 = vmatprep.subr.mxu0 %v638
    %678 = vmatpush1.msra.mxu0 %v637
    %679 = vmatprep.subr.mxu0 %v641
    %680 = vmatpush1.msra.mxu0 %v640
    %681 = vmatprep.subr.mxu0 %v644
    %682 = vmatpush1.msra.mxu0 %v643
    %683 = vmatprep.subr.mxu0 %v647
    %684 = vmatpush1.msra.mxu0 %v646
    %685 = vmatprep.subr.mxu0 %v650
    %686 = vmatpush1.msra.mxu0 %v649
    %687 = vmatprep.subr.mxu0 %v653
    %688 = vmatpush1.msra.mxu0 %v652
    %689 = vmatprep.subr.mxu0 %v656
    %690 = vmatpush1.msra.mxu0 %v655
    %691 = vmatprep.subr.mxu0 %v659
    %692 = vmatpush1.msra.mxu0 %v658
    %693 = vmatprep.subr.mxu0 0.0
    %694 = vmatpush1.msra.mxu0 0.0
    %695 = vmatprep.subr.mxu0 0.0
    %696 = vmatpush1.msra.mxu0 0.0
    %697 = vmatprep.subr.mxu0 0.0
    %698 = vmatpush1.msra.mxu0 0.0
    %699 = vmatprep.subr.mxu0 0.0
    %700 = vmatpush1.msra.mxu0 0.0
    %701 = vmatprep.subr.mxu0 0.0
    %702 = vmatpush1.msra.mxu0 0.0
    %703 = vmatprep.subr.mxu0 0.0
    %704 = vmatpush1.msra.mxu0 0.0
    %705 = vmatprep.subr.mxu0 0.0
    %706 = vmatpush1.msra.mxu0 0.0
    %707 = vmatprep.subr.mxu0 0.0
    %708 = vmatpush1.msra.mxu0 0.0
    %709 = vmatprep.subr.mxu0 0.0
    %710 = vmatpush1.msra.mxu0 0.0
    %711 = vmatprep.subr.mxu0 0.0
    %712 = vmatpush1.msra.mxu0 0.0
    %713 = vmatprep.subr.mxu0 0.0
    %714 = vmatpush1.msra.mxu0 0.0
    %715 = vmatprep.subr.mxu0 0.0
    %716 = vmatpush1.msra.mxu0 0.0
    %717 = vmatprep.subr.mxu0 0.0
    %718 = vmatpush1.msra.mxu0 0.0
    %719 = vmatprep.subr.mxu0 0.0
    %720 = vmatpush1.msra.mxu0 0.0
    %721 = vmatprep.subr.mxu0 0.0
    %722 = vmatpush1.msra.mxu0 0.0
    %723 = vmatprep.subr.mxu0 0.0
    %724 = vmatpush1.msra.mxu0 0.0
    %725 = vmatprep.mubr.f32.mxu0 0.0
    %726 = vmatmul.mubr.f32.gmra.mrb[0].mxu0 %v607
    %v727 = vpop.f32.mrb[0].mxu0
    %v728 = vadd.f32 0.0, %v727
    %v729 = vpop.f32.mrb[0].mxu0
    %v730 = vadd.f32 0.0, %v729
    %731 = vdwg.mxu0
    %732 = vmatprep.subr.mxu0 0.0
    %733 = vmatpush1.msra.mxu0 %v615
    %734 = vmatprep.subr.mxu0 0.0
    %735 = vmatpush1.msra.mxu0 %v618
    %736 = vmatprep.subr.mxu0 0.0
    %737 = vmatpush1.msra.mxu0 %v621
    %738 = vmatprep.subr.mxu0 0.0
    %739 = vmatpush1.msra.mxu0 %v624
    %740 = vmatprep.subr.mxu0 0.0
    %741 = vmatpush1.msra.mxu0 %v627
    %742 = vmatprep.subr.mxu0 0.0
    %743 = vmatpush1.msra.mxu0 %v630
    %744 = vmatprep.subr.mxu0 0.0
    %745 = vmatpush1.msra.mxu0 %v633
    %746 = vmatprep.subr.mxu0 0.0
    %747 = vmatpush1.msra.mxu0 %v636
    %748 = vmatprep.subr.mxu0 0.0
    %749 = vmatpush1.msra.mxu0 %v639
    %750 = vmatprep.subr.mxu0 0.0
    %751 = vmatpush1.msra.mxu0 %v642
    %752 = vmatprep.subr.mxu0 0.0
    %753 = vmatpush1.msra.mxu0 %v645
    %754 = vmatprep.subr.mxu0 0.0
    %755 = vmatpush1.msra.mxu0 %v648
    %756 = vmatprep.subr.mxu0 0.0
    %757 = vmatpush1.msra.mxu0 %v651
    %758 = vmatprep.subr.mxu0 0.0
    %759 = vmatpush1.msra.mxu0 %v654
    %760 = vmatprep.subr.mxu0 0.0
    %761 = vmatpush1.msra.mxu0 %v657
    %762 = vmatprep.subr.mxu0 0.0
    %763 = vmatpush1.msra.mxu0 %v660
    %764 = vmatprep.subr.mxu0 0.0
    %765 = vmatpush1.msra.mxu0 0.0
    %766 = vmatprep.subr.mxu0 0.0
    %767 = vmatpush1.msra.mxu0 0.0
    %768 = vmatprep.subr.mxu0 0.0
    %769 = vmatpush1.msra.mxu0 0.0
    %770 = vmatprep.subr.mxu0 0.0
    %771 = vmatpush1.msra.mxu0 0.0
    %772 = vmatprep.subr.mxu0 0.0
    %773 = vmatpush1.msra.mxu0 0.0
    %774 = vmatprep.subr.mxu0 0.0
    %775 = vmatpush1.msra.mxu0 0.0
    %776 = vmatprep.subr.mxu0 0.0
    %777 = vmatpush1.msra.mxu0 0.0
    %778 = vmatprep.subr.mxu0 0.0
    %779 = vmatpush1.msra.mxu0 0.0
    %780 = vmatprep.subr.mxu0 0.0
    %781 = vmatpush1.msra.mxu0 0.0
    %782 = vmatprep.subr.mxu0 0.0
    %783 = vmatpush1.msra.mxu0 0.0
    %784 = vmatprep.subr.mxu0 0.0
    %785 = vmatpush1.msra.mxu0 0.0
    %786 = vmatprep.subr.mxu0 0.0
    %787 = vmatpush1.msra.mxu0 0.0
    %788 = vmatprep.subr.mxu0 0.0
    %789 = vmatpush1.msra.mxu0 0.0
    %790 = vmatprep.subr.mxu0 0.0
    %791 = vmatpush1.msra.mxu0 0.0
    %792 = vmatprep.subr.mxu0 0.0
    %793 = vmatpush1.msra.mxu0 0.0
    %794 = vmatprep.subr.mxu0 0.0
    %795 = vmatpush1.msra.mxu0 0.0
    %796 = vmatprep.mubr.f32.mxu0 0.0
    %797 = vmatmul.mubr.f32.gmra.mrb[0].mxu0 %v607
    %v798 = vpop.f32.mrb[0].mxu0
    %v799 = vadd.f32 0.0, %v798
    %v800 = vpop.f32.mrb[0].mxu0
    %801 = vdwg.mxu0
    %v802 = vadd.f32 %v610, %v728
    %v803 = vxor.u32 %v802, 2147483648
    %v804 = vmul.f32 %v803, 1.442695
    %v805 = vpow.pop %v804
    %v806 = vadd.f32 %v805, 1.0
    %v807 = vrcp.pop %v806
    %v808 = vmul.f32 1.0, %v807
    %v809 = vadd.f32 %v611, %v730
    %v810 = vxor.u32 %v809, 2147483648
    %v811 = vmul.f32 %v810, 1.442695
    %v812 = vpow.pop %v811
    %v813 = vadd.f32 %v812, 1.0
    %v814 = vrcp.pop %v813
    %v815 = vmul.f32 1.0, %v814
    %v816 = vmul.f32 %v808, %v799
    %v817 = vadd.f32 %v612, %v816
    %v818 = vtanh.pop %v817
    %v819 = vsub.f32 1.0, %v815
    %v820 = vmul.f32 %v819, %v818
    %v821 = vmul.f32 %v815, %v607
    %v822 = vadd.f32 %v820, %v821
    %s823 = scalar_lea.vmem [#allocation14], 8
    %824 = vst [vmem:[%s823] sm:$0xff] %v822
    %s825 = scalar_lea.vmem [#allocation2], 48
    %v826 = vld [vmem:[%s825] sm:$0xff]
    %v827 = vld [vmem:[%s825 + $0x8] sm:$0xff]
    %v828 = vld [vmem:[%s825 + $0x10] sm:$0xff]
    %v829 = vld [vmem:[#allocation9] sm:$0xff]
    %v830 = vld [vmem:[#allocation9 + $0x8] sm:$0xff]
    %v831 = vld [vmem:[#allocation9 + $0x10] sm:$0xff]
    %v832 = vld [vmem:[#allocation9 + $0x18] sm:$0xff]
    %v833 = vld [vmem:[#allocation9 + $0x20] sm:$0xff]
    %v834 = vld [vmem:[#allocation9 + $0x28] sm:$0xff]
    %v835 = vld [vmem:[#allocation9 + $0x30] sm:$0xff]
    %v836 = vld [vmem:[#allocation9 + $0x38] sm:$0xff]
    %v837 = vld [vmem:[#allocation9 + $0x40] sm:$0xff]
    %v838 = vld [vmem:[#allocation9 + $0x48] sm:$0xff]
    %v839 = vld [vmem:[#allocation9 + $0x50] sm:$0xff]
    %v840 = vld [vmem:[#allocation9 + $0x58] sm:$0xff]
    %v841 = vld [vmem:[#allocation9 + $0x60] sm:$0xff]
    %v842 = vld [vmem:[#allocation9 + $0x68] sm:$0xff]
    %v843 = vld [vmem:[#allocation9 + $0x70] sm:$0xff]
    %v844 = vld [vmem:[#allocation9 + $0x78] sm:$0xff]
    %v845 = vld [vmem:[#allocation9 + $0x80] sm:$0xff]
    %v846 = vld [vmem:[#allocation9 + $0x88] sm:$0xff]
    %v847 = vld [vmem:[#allocation9 + $0x90] sm:$0xff]
    %v848 = vld [vmem:[#allocation9 + $0x98] sm:$0xff]
    %v849 = vld [vmem:[#allocation9 + $0xa0] sm:$0xff]
    %v850 = vld [vmem:[#allocation9 + $0xa8] sm:$0xff]
    %v851 = vld [vmem:[#allocation9 + $0xb0] sm:$0xff]
    %v852 = vld [vmem:[#allocation9 + $0xb8] sm:$0xff]
    %v853 = vld [vmem:[#allocation9 + $0xc0] sm:$0xff]
    %v854 = vld [vmem:[#allocation9 + $0xc8] sm:$0xff]
    %v855 = vld [vmem:[#allocation9 + $0xd0] sm:$0xff]
    %v856 = vld [vmem:[#allocation9 + $0xd8] sm:$0xff]
    %v857 = vld [vmem:[#allocation9 + $0xe0] sm:$0xff]
    %v858 = vld [vmem:[#allocation9 + $0xe8] sm:$0xff]
    %v859 = vld [vmem:[#allocation9 + $0xf0] sm:$0xff]
    %v860 = vld [vmem:[#allocation9 + $0xf8] sm:$0xff]
    %v861 = vld [vmem:[#allocation9 + $0x100] sm:$0xff]
    %v862 = vld [vmem:[#allocation9 + $0x108] sm:$0xff]
    %v863 = vld [vmem:[#allocation9 + $0x110] sm:$0xff]
    %v864 = vld [vmem:[#allocation9 + $0x118] sm:$0xff]
    %v865 = vld [vmem:[#allocation9 + $0x120] sm:$0xff]
    %v866 = vld [vmem:[#allocation9 + $0x128] sm:$0xff]
    %v867 = vld [vmem:[#allocation9 + $0x130] sm:$0xff]
    %v868 = vld [vmem:[#allocation9 + $0x138] sm:$0xff]
    %v869 = vld [vmem:[#allocation9 + $0x140] sm:$0xff]
    %v870 = vld [vmem:[#allocation9 + $0x148] sm:$0xff]
    %v871 = vld [vmem:[#allocation9 + $0x150] sm:$0xff]
    %v872 = vld [vmem:[#allocation9 + $0x158] sm:$0xff]
    %v873 = vld [vmem:[#allocation9 + $0x160] sm:$0xff]
    %v874 = vld [vmem:[#allocation9 + $0x168] sm:$0xff]
    %v875 = vld [vmem:[#allocation9 + $0x170] sm:$0xff]
    %v876 = vld [vmem:[#allocation9 + $0x178] sm:$0xff]
    %877 = vmatprep.subr.mxu0 %v830
    %878 = vmatpush1.msra.mxu0 %v829
    %879 = vmatprep.subr.mxu0 %v833
    %880 = vmatpush1.msra.mxu0 %v832
    %881 = vmatprep.subr.mxu0 %v836
    %882 = vmatpush1.msra.mxu0 %v835
    %883 = vmatprep.subr.mxu0 %v839
    %884 = vmatpush1.msra.mxu0 %v838
    %885 = vmatprep.subr.mxu0 %v842
    %886 = vmatpush1.msra.mxu0 %v841
    %887 = vmatprep.subr.mxu0 %v845
    %888 = vmatpush1.msra.mxu0 %v844
    %889 = vmatprep.subr.mxu0 %v848
    %890 = vmatpush1.msra.mxu0 %v847
    %891 = vmatprep.subr.mxu0 %v851
    %892 = vmatpush1.msra.mxu0 %v850
    %893 = vmatprep.subr.mxu0 %v854
    %894 = vmatpush1.msra.mxu0 %v853
    %895 = vmatprep.subr.mxu0 %v857
    %896 = vmatpush1.msra.mxu0 %v856
    %897 = vmatprep.subr.mxu0 %v860
    %898 = vmatpush1.msra.mxu0 %v859
    %899 = vmatprep.subr.mxu0 %v863
    %900 = vmatpush1.msra.mxu0 %v862
    %901 = vmatprep.subr.mxu0 %v866
    %902 = vmatpush1.msra.mxu0 %v865
    %903 = vmatprep.subr.mxu0 %v869
    %904 = vmatpush1.msra.mxu0 %v868
    %905 = vmatprep.subr.mxu0 %v872
    %906 = vmatpush1.msra.mxu0 %v871
    %907 = vmatprep.subr.mxu0 %v875
    %908 = vmatpush1.msra.mxu0 %v874
    %909 = vmatprep.subr.mxu0 0.0
    %910 = vmatpush1.msra.mxu0 0.0
    %911 = vmatprep.subr.mxu0 0.0
    %912 = vmatpush1.msra.mxu0 0.0
    %913 = vmatprep.subr.mxu0 0.0
    %914 = vmatpush1.msra.mxu0 0.0
    %915 = vmatprep.subr.mxu0 0.0
    %916 = vmatpush1.msra.mxu0 0.0
    %917 = vmatprep.subr.mxu0 0.0
    %918 = vmatpush1.msra.mxu0 0.0
    %919 = vmatprep.subr.mxu0 0.0
    %920 = vmatpush1.msra.mxu0 0.0
    %921 = vmatprep.subr.mxu0 0.0
    %922 = vmatpush1.msra.mxu0 0.0
    %923 = vmatprep.subr.mxu0 0.0
    %924 = vmatpush1.msra.mxu0 0.0
    %925 = vmatprep.subr.mxu0 0.0
    %926 = vmatpush1.msra.mxu0 0.0
    %927 = vmatprep.subr.mxu0 0.0
    %928 = vmatpush1.msra.mxu0 0.0
    %929 = vmatprep.subr.mxu0 0.0
    %930 = vmatpush1.msra.mxu0 0.0
    %931 = vmatprep.subr.mxu0 0.0
    %932 = vmatpush1.msra.mxu0 0.0
    %933 = vmatprep.subr.mxu0 0.0
    %934 = vmatpush1.msra.mxu0 0.0
    %935 = vmatprep.subr.mxu0 0.0
    %936 = vmatpush1.msra.mxu0 0.0
    %937 = vmatprep.subr.mxu0 0.0
    %938 = vmatpush1.msra.mxu0 0.0
    %939 = vmatprep.subr.mxu0 0.0
    %940 = vmatpush1.msra.mxu0 0.0
    %941 = vmatprep.mubr.f32.mxu0 0.0
    %942 = vmatmul.mubr.f32.gmra.mrb[0].mxu0 %v822
    %v943 = vpop.f32.mrb[0].mxu0
    %v944 = vadd.f32 0.0, %v943
    %v945 = vpop.f32.mrb[0].mxu0
    %v946 = vadd.f32 0.0, %v945
    %947 = vdwg.mxu0
    %948 = vmatprep.subr.mxu0 0.0
    %949 = vmatpush1.msra.mxu0 %v831
    %950 = vmatprep.subr.mxu0 0.0
    %951 = vmatpush1.msra.mxu0 %v834
    %952 = vmatprep.subr.mxu0 0.0
    %953 = vmatpush1.msra.mxu0 %v837
    %954 = vmatprep.subr.mxu0 0.0
    %955 = vmatpush1.msra.mxu0 %v840
    %956 = vmatprep.subr.mxu0 0.0
    %957 = vmatpush1.msra.mxu0 %v843
    %958 = vmatprep.subr.mxu0 0.0
    %959 = vmatpush1.msra.mxu0 %v846
    %960 = vmatprep.subr.mxu0 0.0
    %961 = vmatpush1.msra.mxu0 %v849
    %962 = vmatprep.subr.mxu0 0.0
    %963 = vmatpush1.msra.mxu0 %v852
    %964 = vmatprep.subr.mxu0 0.0
    %965 = vmatpush1.msra.mxu0 %v855
    %966 = vmatprep.subr.mxu0 0.0
    %967 = vmatpush1.msra.mxu0 %v858
    %968 = vmatprep.subr.mxu0 0.0
    %969 = vmatpush1.msra.mxu0 %v861
    %970 = vmatprep.subr.mxu0 0.0
    %971 = vmatpush1.msra.mxu0 %v864
    %972 = vmatprep.subr.mxu0 0.0
    %973 = vmatpush1.msra.mxu0 %v867
    %974 = vmatprep.subr.mxu0 0.0
    %975 = vmatpush1.msra.mxu0 %v870
    %976 = vmatprep.subr.mxu0 0.0
    %977 = vmatpush1.msra.mxu0 %v873
    %978 = vmatprep.subr.mxu0 0.0
    %979 = vmatpush1.msra.mxu0 %v876
    %980 = vmatprep.subr.mxu0 0.0
    %981 = vmatpush1.msra.mxu0 0.0
    %982 = vmatprep.subr.mxu0 0.0
    %983 = vmatpush1.msra.mxu0 0.0
    %984 = vmatprep.subr.mxu0 0.0
    %985 = vmatpush1.msra.mxu0 0.0
    %986 = vmatprep.subr.mxu0 0.0
    %987 = vmatpush1.msra.mxu0 0.0
    %988 = vmatprep.subr.mxu0 0.0
    %989 = vmatpush1.msra.mxu0 0.0
    %990 = vmatprep.subr.mxu0 0.0
    %991 = vmatpush1.msra.mxu0 0.0
    %992 = vmatprep.subr.mxu0 0.0
    %993 = vmatpush1.msra.mxu0 0.0
    %994 = vmatprep.subr.mxu0 0.0
    %995 = vmatpush1.msra.mxu0 0.0
    %996 = vmatprep.subr.mxu0 0.0
    %997 = vmatpush1.msra.mxu0 0.0
    %998 = vmatprep.subr.mxu0 0.0
    %999 = vmatpush1.msra.mxu0 0.0
    %1000 = vmatprep.subr.mxu0 0.0
    %1001 = vmatpush1.msra.mxu0 0.0
    %1002 = vmatprep.subr.mxu0 0.0
    %1003 = vmatpush1.msra.mxu0 0.0
    %1004 = vmatprep.subr.mxu0 0.0
    %1005 = vmatpush1.msra.mxu0 0.0
    %1006 = vmatprep.subr.mxu0 0.0
    %1007 = vmatpush1.msra.mxu0 0.0
    %1008 = vmatprep.subr.mxu0 0.0
    %1009 = vmatpush1.msra.mxu0 0.0
    %1010 = vmatprep.subr.mxu0 0.0
    %1011 = vmatpush1.msra.mxu0 0.0
    %1012 = vmatprep.mubr.f32.mxu0 0.0
    %1013 = vmatmul.mubr.f32.gmra.mrb[0].mxu0 %v822
    %v1014 = vpop.f32.mrb[0].mxu0
    %v1015 = vadd.f32 0.0, %v1014
    %v1016 = vpop.f32.mrb[0].mxu0
    %1017 = vdwg.mxu0
    %v1018 = vadd.f32 %v826, %v944
    %v1019 = vxor.u32 %v1018, 2147483648
    %v1020 = vmul.f32 %v1019, 1.442695
    %v1021 = vpow.pop %v1020
    %v1022 = vadd.f32 %v1021, 1.0
    %v1023 = vrcp.pop %v1022
    %v1024 = vmul.f32 1.0, %v1023
    %v1025 = vadd.f32 %v827, %v946
    %v1026 = vxor.u32 %v1025, 2147483648
    %v1027 = vmul.f32 %v1026, 1.442695
    %v1028 = vpow.pop %v1027
    %v1029 = vadd.f32 %v1028, 1.0
    %v1030 = vrcp.pop %v1029
    %v1031 = vmul.f32 1.0, %v1030
    %v1032 = vmul.f32 %v1024, %v1015
    %v1033 = vadd.f32 %v828, %v1032
    %v1034 = vtanh.pop %v1033
    %v1035 = vsub.f32 1.0, %v1031
    %v1036 = vmul.f32 %v1035, %v1034
    %v1037 = vmul.f32 %v1031, %v822
    %v1038 = vadd.f32 %v1036, %v1037
    %s1039 = scalar_lea.vmem [#allocation14], 16
    %1040 = vst [vmem:[%s1039] sm:$0xff] %v1038
    %s1041 = scalar_lea.vmem [#allocation2], 72
    %v1042 = vld [vmem:[%s1041] sm:$0xff]
    %v1043 = vld [vmem:[%s1041 + $0x8] sm:$0xff]
    %v1044 = vld [vmem:[%s1041 + $0x10] sm:$0xff]
    %v1045 = vld [vmem:[#allocation9] sm:$0xff]
    %v1046 = vld [vmem:[#allocation9 + $0x8] sm:$0xff]
    %v1047 = vld [vmem:[#allocation9 + $0x10] sm:$0xff]
    %v1048 = vld [vmem:[#allocation9 + $0x18] sm:$0xff]
    %v1049 = vld [vmem:[#allocation9 + $0x20] sm:$0xff]
    %v1050 = vld [vmem:[#allocation9 + $0x28] sm:$0xff]
    %v1051 = vld [vmem:[#allocation9 + $0x30] sm:$0xff]
    %v1052 = vld [vmem:[#allocation9 + $0x38] sm:$0xff]
    %v1053 = vld [vmem:[#allocation9 + $0x40] sm:$0xff]
    %v1054 = vld [vmem:[#allocation9 + $0x48] sm:$0xff]
    %v1055 = vld [vmem:[#allocation9 + $0x50] sm:$0xff]
    %v1056 = vld [vmem:[#allocation9 + $0x58] sm:$0xff]
    %v1057 = vld [vmem:[#allocation9 + $0x60] sm:$0xff]
    %v1058 = vld [vmem:[#allocation9 + $0x68] sm:$0xff]
    %v1059 = vld [vmem:[#allocation9 + $0x70] sm:$0xff]
    %v1060 = vld [vmem:[#allocation9 + $0x78] sm:$0xff]
    %v1061 = vld [vmem:[#allocation9 + $0x80] sm:$0xff]
    %v1062 = vld [vmem:[#allocation9 + $0x88] sm:$0xff]
    %v1063 = vld [vmem:[#allocation9 + $0x90] sm:$0xff]
    %v1064 = vld [vmem:[#allocation9 + $0x98] sm:$0xff]
    %v1065 = vld [vmem:[#allocation9 + $0xa0] sm:$0xff]
    %v1066 = vld [vmem:[#allocation9 + $0xa8] sm:$0xff]
    %v1067 = vld [vmem:[#allocation9 + $0xb0] sm:$0xff]
    %v1068 = vld [vmem:[#allocation9 + $0xb8] sm:$0xff]
    %v1069 = vld [vmem:[#allocation9 + $0xc0] sm:$0xff]
    %v1070 = vld [vmem:[#allocation9 + $0xc8] sm:$0xff]
    %v1071 = vld [vmem:[#allocation9 + $0xd0] sm:$0xff]
    %v1072 = vld [vmem:[#allocation9 + $0xd8] sm:$0xff]
    %v1073 = vld [vmem:[#allocation9 + $0xe0] sm:$0xff]
    %v1074 = vld [vmem:[#allocation9 + $0xe8] sm:$0xff]
    %v1075 = vld [vmem:[#allocation9 + $0xf0] sm:$0xff]
    %v1076 = vld [vmem:[#allocation9 + $0xf8] sm:$0xff]
    %v1077 = vld [vmem:[#allocation9 + $0x100] sm:$0xff]
    %v1078 = vld [vmem:[#allocation9 + $0x108] sm:$0xff]
    %v1079 = vld [vmem:[#allocation9 + $0x110] sm:$0xff]
    %v1080 = vld [vmem:[#allocation9 + $0x118] sm:$0xff]
    %v1081 = vld [vmem:[#allocation9 + $0x120] sm:$0xff]
    %v1082 = vld [vmem:[#allocation9 + $0x128] sm:$0xff]
    %v1083 = vld [vmem:[#allocation9 + $0x130] sm:$0xff]
    %v1084 = vld [vmem:[#allocation9 + $0x138] sm:$0xff]
    %v1085 = vld [vmem:[#allocation9 + $0x140] sm:$0xff]
    %v1086 = vld [vmem:[#allocation9 + $0x148] sm:$0xff]
    %v1087 = vld [vmem:[#allocation9 + $0x150] sm:$0xff]
    %v1088 = vld [vmem:[#allocation9 + $0x158] sm:$0xff]
    %v1089 = vld [vmem:[#allocation9 + $0x160] sm:$0xff]
    %v1090 = vld [vmem:[#allocation9 + $0x168] sm:$0xff]
    %v1091 = vld [vmem:[#allocation9 + $0x170] sm:$0xff]
    %v1092 = vld [vmem:[#allocation9 + $0x178] sm:$0xff]
    %1093 = vmatprep.subr.mxu0 %v1046
    %1094 = vmatpush1.msra.mxu0 %v1045
    %1095 = vmatprep.subr.mxu0 %v1049
    %1096 = vmatpush1.msra.mxu0 %v1048
    %1097 = vmatprep.subr.mxu0 %v1052
    %1098 = vmatpush1.msra.mxu0 %v1051
    %1099 = vmatprep.subr.mxu0 %v1055
    %1100 = vmatpush1.msra.mxu0 %v1054
    %1101 = vmatprep.subr.mxu0 %v1058
    %1102 = vmatpush1.msra.mxu0 %v1057
    %1103 = vmatprep.subr.mxu0 %v1061
    %1104 = vmatpush1.msra.mxu0 %v1060
    %1105 = vmatprep.subr.mxu0 %v1064
    %1106 = vmatpush1.msra.mxu0 %v1063
    %1107 = vmatprep.subr.mxu0 %v1067
    %1108 = vmatpush1.msra.mxu0 %v1066
    %1109 = vmatprep.subr.mxu0 %v1070
    %1110 = vmatpush1.msra.mxu0 %v1069
    %1111 = vmatprep.subr.mxu0 %v1073
    %1112 = vmatpush1.msra.mxu0 %v1072
    %1113 = vmatprep.subr.mxu0 %v1076
    %1114 = vmatpush1.msra.mxu0 %v1075
    %1115 = vmatprep.subr.mxu0 %v1079
    %1116 = vmatpush1.msra.mxu0 %v1078
    %1117 = vmatprep.subr.mxu0 %v1082
    %1118 = vmatpush1.msra.mxu0 %v1081
    %1119 = vmatprep.subr.mxu0 %v1085
    %1120 = vmatpush1.msra.mxu0 %v1084
    %1121 = vmatprep.subr.mxu0 %v1088
    %1122 = vmatpush1.msra.mxu0 %v1087
    %1123 = vmatprep.subr.mxu0 %v1091
    %1124 = vmatpush1.msra.mxu0 %v1090
    %1125 = vmatprep.subr.mxu0 0.0
    %1126 = vmatpush1.msra.mxu0 0.0
    %1127 = vmatprep.subr.mxu0 0.0
    %1128 = vmatpush1.msra.mxu0 0.0
    %1129 = vmatprep.subr.mxu0 0.0
    %1130 = vmatpush1.msra.mxu0 0.0
    %1131 = vmatprep.subr.mxu0 0.0
    %1132 = vmatpush1.msra.mxu0 0.0
    %1133 = vmatprep.subr.mxu0 0.0
    %1134 = vmatpush1.msra.mxu0 0.0
    %1135 = vmatprep.subr.mxu0 0.0
    %1136 = vmatpush1.msra.mxu0 0.0
    %1137 = vmatprep.subr.mxu0 0.0
    %1138 = vmatpush1.msra.mxu0 0.0
    %1139 = vmatprep.subr.mxu0 0.0
    %1140 = vmatpush1.msra.mxu0 0.0
    %1141 = vmatprep.subr.mxu0 0.0
    %1142 = vmatpush1.msra.mxu0 0.0
    %1143 = vmatprep.subr.mxu0 0.0
    %1144 = vmatpush1.msra.mxu0 0.0
    %1145 = vmatprep.subr.mxu0 0.0
    %1146 = vmatpush1.msra.mxu0 0.0
    %1147 = vmatprep.subr.mxu0 0.0
    %1148 = vmatpush1.msra.mxu0 0.0
    %1149 = vmatprep.subr.mxu0 0.0
    %1150 = vmatpush1.msra.mxu0 0.0
    %1151 = vmatprep.subr.mxu0 0.0
    %1152 = vmatpush1.msra.mxu0 0.0
    %1153 = vmatprep.subr.mxu0 0.0
    %1154 = vmatpush1.msra.mxu0 0.0
    %1155 = vmatprep.subr.mxu0 0.0
    %1156 = vmatpush1.msra.mxu0 0.0
    %1157 = vmatprep.mubr.f32.mxu0 0.0
    %1158 = vmatmul.mubr.f32.gmra.mrb[0].mxu0 %v1038
    %v1159 = vpop.f32.mrb[0].mxu0
    %v1160 = vadd.f32 0.0, %v1159
    %v1161 = vpop.f32.mrb[0].mxu0
    %v1162 = vadd.f32 0.0, %v1161
    %1163 = vdwg.mxu0
    %1164 = vmatprep.subr.mxu0 0.0
    %1165 = vmatpush1.msra.mxu0 %v1047
    %1166 = vmatprep.subr.mxu0 0.0
    %1167 = vmatpush1.msra.mxu0 %v1050
    %1168 = vmatprep.subr.mxu0 0.0
    %1169 = vmatpush1.msra.mxu0 %v1053
    %1170 = vmatprep.subr.mxu0 0.0
    %1171 = vmatpush1.msra.mxu0 %v1056
    %1172 = vmatprep.subr.mxu0 0.0
    %1173 = vmatpush1.msra.mxu0 %v1059
    %1174 = vmatprep.subr.mxu0 0.0
    %1175 = vmatpush1.msra.mxu0 %v1062
    %1176 = vmatprep.subr.mxu0 0.0
    %1177 = vmatpush1.msra.mxu0 %v1065
    %1178 = vmatprep.subr.mxu0 0.0
    %1179 = vmatpush1.msra.mxu0 %v1068
    %1180 = vmatprep.subr.mxu0 0.0
    %1181 = vmatpush1.msra.mxu0 %v1071
    %1182 = vmatprep.subr.mxu0 0.0
    %1183 = vmatpush1.msra.mxu0 %v1074
    %1184 = vmatprep.subr.mxu0 0.0
    %1185 = vmatpush1.msra.mxu0 %v1077
    %1186 = vmatprep.subr.mxu0 0.0
    %1187 = vmatpush1.msra.mxu0 %v1080
    %1188 = vmatprep.subr.mxu0 0.0
    %1189 = vmatpush1.msra.mxu0 %v1083
    %1190 = vmatprep.subr.mxu0 0.0
    %1191 = vmatpush1.msra.mxu0 %v1086
    %1192 = vmatprep.subr.mxu0 0.0
    %1193 = vmatpush1.msra.mxu0 %v1089
    %1194 = vmatprep.subr.mxu0 0.0
    %1195 = vmatpush1.msra.mxu0 %v1092
    %1196 = vmatprep.subr.mxu0 0.0
    %1197 = vmatpush1.msra.mxu0 0.0
    %1198 = vmatprep.subr.mxu0 0.0
    %1199 = vmatpush1.msra.mxu0 0.0
    %1200 = vmatprep.subr.mxu0 0.0
    %1201 = vmatpush1.msra.mxu0 0.0
    %1202 = vmatprep.subr.mxu0 0.0
    %1203 = vmatpush1.msra.mxu0 0.0
    %1204 = vmatprep.subr.mxu0 0.0
    %1205 = vmatpush1.msra.mxu0 0.0
    %1206 = vmatprep.subr.mxu0 0.0
    %1207 = vmatpush1.msra.mxu0 0.0
    %1208 = vmatprep.subr.mxu0 0.0
    %1209 = vmatpush1.msra.mxu0 0.0
    %1210 = vmatprep.subr.mxu0 0.0
    %1211 = vmatpush1.msra.mxu0 0.0
    %1212 = vmatprep.subr.mxu0 0.0
    %1213 = vmatpush1.msra.mxu0 0.0
    %1214 = vmatprep.subr.mxu0 0.0
    %1215 = vmatpush1.msra.mxu0 0.0
    %1216 = vmatprep.subr.mxu0 0.0
    %1217 = vmatpush1.msra.mxu0 0.0
    %1218 = vmatprep.subr.mxu0 0.0
    %1219 = vmatpush1.msra.mxu0 0.0
    %1220 = vmatprep.subr.mxu0 0.0
    %1221 = vmatpush1.msra.mxu0 0.0
    %1222 = vmatprep.subr.mxu0 0.0
    %1223 = vmatpush1.msra.mxu0 0.0
    %1224 = vmatprep.subr.mxu0 0.0
    %1225 = vmatpush1.msra.mxu0 0.0
    %1226 = vmatprep.subr.mxu0 0.0
    %1227 = vmatpush1.msra.mxu0 0.0
    %1228 = vmatprep.mubr.f32.mxu0 0.0
    %1229 = vmatmul.mubr.f32.gmra.mrb[0].mxu0 %v1038
    %v1230 = vpop.f32.mrb[0].mxu0
    %v1231 = vadd.f32 0.0, %v1230
    %v1232 = vpop.f32.mrb[0].mxu0
    %1233 = vdwg.mxu0
    %v1234 = vadd.f32 %v1042, %v1160
    %v1235 = vxor.u32 %v1234, 2147483648
    %v1236 = vmul.f32 %v1235, 1.442695
    %v1237 = vpow.pop %v1236
    %v1238 = vadd.f32 %v1237, 1.0
    %v1239 = vrcp.pop %v1238
    %v1240 = vmul.f32 1.0, %v1239
    %v1241 = vadd.f32 %v1043, %v1162
    %v1242 = vxor.u32 %v1241, 2147483648
    %v1243 = vmul.f32 %v1242, 1.442695
    %v1244 = vpow.pop %v1243
    %v1245 = vadd.f32 %v1244, 1.0
    %v1246 = vrcp.pop %v1245
    %v1247 = vmul.f32 1.0, %v1246
    %v1248 = vmul.f32 %v1240, %v1231
    %v1249 = vadd.f32 %v1044, %v1248
    %v1250 = vtanh.pop %v1249
    %v1251 = vsub.f32 1.0, %v1247
    %v1252 = vmul.f32 %v1251, %v1250
    %v1253 = vmul.f32 %v1247, %v1038
    %v1254 = vadd.f32 %v1252, %v1253
    %s1255 = scalar_lea.vmem [#allocation14], 24
    %1256 = vst [vmem:[%s1255] sm:$0xff] %v1254
    %s1257 = scalar_lea.vmem [#allocation2], 96
    %v1258 = vld [vmem:[%s1257] sm:$0xff]
    %v1259 = vld [vmem:[%s1257 + $0x8] sm:$0xff]
    %v1260 = vld [vmem:[%s1257 + $0x10] sm:$0xff]
    %v1261 = vld [vmem:[#allocation9] sm:$0xff]
    %v1262 = vld [vmem:[#allocation9 + $0x8] sm:$0xff]
    %v1263 = vld [vmem:[#allocation9 + $0x10] sm:$0xff]
    %v1264 = vld [vmem:[#allocation9 + $0x18] sm:$0xff]
    %v1265 = vld [vmem:[#allocation9 + $0x20] sm:$0xff]
    %v1266 = vld [vmem:[#allocation9 + $0x28] sm:$0xff]
    %v1267 = vld [vmem:[#allocation9 + $0x30] sm:$0xff]
    %v1268 = vld [vmem:[#allocation9 + $0x38] sm:$0xff]
    %v1269 = vld [vmem:[#allocation9 + $0x40] sm:$0xff]
    %v1270 = vld [vmem:[#allocation9 + $0x48] sm:$0xff]
    %v1271 = vld [vmem:[#allocation9 + $0x50] sm:$0xff]
    %v1272 = vld [vmem:[#allocation9 + $0x58] sm:$0xff]
    %v1273 = vld [vmem:[#allocation9 + $0x60] sm:$0xff]
    %v1274 = vld [vmem:[#allocation9 + $0x68] sm:$0xff]
    %v1275 = vld [vmem:[#allocation9 + $0x70] sm:$0xff]
    %v1276 = vld [vmem:[#allocation9 + $0x78] sm:$0xff]
    %v1277 = vld [vmem:[#allocation9 + $0x80] sm:$0xff]
    %v1278 = vld [vmem:[#allocation9 + $0x88] sm:$0xff]
    %v1279 = vld [vmem:[#allocation9 + $0x90] sm:$0xff]
    %v1280 = vld [vmem:[#allocation9 + $0x98] sm:$0xff]
    %v1281 = vld [vmem:[#allocation9 + $0xa0] sm:$0xff]
    %v1282 = vld [vmem:[#allocation9 + $0xa8] sm:$0xff]
    %v1283 = vld [vmem:[#allocation9 + $0xb0] sm:$0xff]
    %v1284 = vld [vmem:[#allocation9 + $0xb8] sm:$0xff]
    %v1285 = vld [vmem:[#allocation9 + $0xc0] sm:$0xff]
    %v1286 = vld [vmem:[#allocation9 + $0xc8] sm:$0xff]
    %v1287 = vld [vmem:[#allocation9 + $0xd0] sm:$0xff]
    %v1288 = vld [vmem:[#allocation9 + $0xd8] sm:$0xff]
    %v1289 = vld [vmem:[#allocation9 + $0xe0] sm:$0xff]
    %v1290 = vld [vmem:[#allocation9 + $0xe8] sm:$0xff]
    %v1291 = vld [vmem:[#allocation9 + $0xf0] sm:$0xff]
    %v1292 = vld [vmem:[#allocation9 + $0xf8] sm:$0xff]
    %v1293 = vld [vmem:[#allocation9 + $0x100] sm:$0xff]
    %v1294 = vld [vmem:[#allocation9 + $0x108] sm:$0xff]
    %v1295 = vld [vmem:[#allocation9 + $0x110] sm:$0xff]
    %v1296 = vld [vmem:[#allocation9 + $0x118] sm:$0xff]
    %v1297 = vld [vmem:[#allocation9 + $0x120] sm:$0xff]
    %v1298 = vld [vmem:[#allocation9 + $0x128] sm:$0xff]
    %v1299 = vld [vmem:[#allocation9 + $0x130] sm:$0xff]
    %v1300 = vld [vmem:[#allocation9 + $0x138] sm:$0xff]
    %v1301 = vld [vmem:[#allocation9 + $0x140] sm:$0xff]
    %v1302 = vld [vmem:[#allocation9 + $0x148] sm:$0xff]
    %v1303 = vld [vmem:[#allocation9 + $0x150] sm:$0xff]
    %v1304 = vld [vmem:[#allocation9 + $0x158] sm:$0xff]
    %v1305 = vld [vmem:[#allocation9 + $0x160] sm:$0xff]
    %v1306 = vld [vmem:[#allocation9 + $0x168] sm:$0xff]
    %v1307 = vld [vmem:[#allocation9 + $0x170] sm:$0xff]
    %v1308 = vld [vmem:[#allocation9 + $0x178] sm:$0xff]
    %1309 = vmatprep.subr.mxu0 %v1262
    %1310 = vmatpush1.msra.mxu0 %v1261
    %1311 = vmatprep.subr.mxu0 %v1265
    %1312 = vmatpush1.msra.mxu0 %v1264
    %1313 = vmatprep.subr.mxu0 %v1268
    %1314 = vmatpush1.msra.mxu0 %v1267
    %1315 = vmatprep.subr.mxu0 %v1271
    %1316 = vmatpush1.msra.mxu0 %v1270
    %1317 = vmatprep.subr.mxu0 %v1274
    %1318 = vmatpush1.msra.mxu0 %v1273
    %1319 = vmatprep.subr.mxu0 %v1277
    %1320 = vmatpush1.msra.mxu0 %v1276
    %1321 = vmatprep.subr.mxu0 %v1280
    %1322 = vmatpush1.msra.mxu0 %v1279
    %1323 = vmatprep.subr.mxu0 %v1283
    %1324 = vmatpush1.msra.mxu0 %v1282
    %1325 = vmatprep.subr.mxu0 %v1286
    %1326 = vmatpush1.msra.mxu0 %v1285
    %1327 = vmatprep.subr.mxu0 %v1289
    %1328 = vmatpush1.msra.mxu0 %v1288
    %1329 = vmatprep.subr.mxu0 %v1292
    %1330 = vmatpush1.msra.mxu0 %v1291
    %1331 = vmatprep.subr.mxu0 %v1295
    %1332 = vmatpush1.msra.mxu0 %v1294
    %1333 = vmatprep.subr.mxu0 %v1298
    %1334 = vmatpush1.msra.mxu0 %v1297
    %1335 = vmatprep.subr.mxu0 %v1301
    %1336 = vmatpush1.msra.mxu0 %v1300
    %1337 = vmatprep.subr.mxu0 %v1304
    %1338 = vmatpush1.msra.mxu0 %v1303
    %1339 = vmatprep.subr.mxu0 %v1307
    %1340 = vmatpush1.msra.mxu0 %v1306
    %1341 = vmatprep.subr.mxu0 0.0
    %1342 = vmatpush1.msra.mxu0 0.0
    %1343 = vmatprep.subr.mxu0 0.0
    %1344 = vmatpush1.msra.mxu0 0.0
    %1345 = vmatprep.subr.mxu0 0.0
    %1346 = vmatpush1.msra.mxu0 0.0
    %1347 = vmatprep.subr.mxu0 0.0
    %1348 = vmatpush1.msra.mxu0 0.0
    %1349 = vmatprep.subr.mxu0 0.0
    %1350 = vmatpush1.msra.mxu0 0.0
    %1351 = vmatprep.subr.mxu0 0.0
    %1352 = vmatpush1.msra.mxu0 0.0
    %1353 = vmatprep.subr.mxu0 0.0
    %1354 = vmatpush1.msra.mxu0 0.0
    %1355 = vmatprep.subr.mxu0 0.0
    %1356 = vmatpush1.msra.mxu0 0.0
    %1357 = vmatprep.subr.mxu0 0.0
    %1358 = vmatpush1.msra.mxu0 0.0
    %1359 = vmatprep.subr.mxu0 0.0
    %1360 = vmatpush1.msra.mxu0 0.0
    %1361 = vmatprep.subr.mxu0 0.0
    %1362 = vmatpush1.msra.mxu0 0.0
    %1363 = vmatprep.subr.mxu0 0.0
    %1364 = vmatpush1.msra.mxu0 0.0
    %1365 = vmatprep.subr.mxu0 0.0
    %1366 = vmatpush1.msra.mxu0 0.0
    %1367 = vmatprep.subr.mxu0 0.0
    %1368 = vmatpush1.msra.mxu0 0.0
    %1369 = vmatprep.subr.mxu0 0.0
    %1370 = vmatpush1.msra.mxu0 0.0
    %1371 = vmatprep.subr.mxu0 0.0
    %1372 = vmatpush1.msra.mxu0 0.0
    %1373 = vmatprep.mubr.f32.mxu0 0.0
    %1374 = vmatmul.mubr.f32.gmra.mrb[0].mxu0 %v1254
    %v1375 = vpop.f32.mrb[0].mxu0
    %v1376 = vadd.f32 0.0, %v1375
    %v1377 = vpop.f32.mrb[0].mxu0
    %v1378 = vadd.f32 0.0, %v1377
    %1379 = vdwg.mxu0
    %1380 = vmatprep.subr.mxu0 0.0
    %1381 = vmatpush1.msra.mxu0 %v1263
    %1382 = vmatprep.subr.mxu0 0.0
    %1383 = vmatpush1.msra.mxu0 %v1266
    %1384 = vmatprep.subr.mxu0 0.0
    %1385 = vmatpush1.msra.mxu0 %v1269
    %1386 = vmatprep.subr.mxu0 0.0
    %1387 = vmatpush1.msra.mxu0 %v1272
    %1388 = vmatprep.subr.mxu0 0.0
    %1389 = vmatpush1.msra.mxu0 %v1275
    %1390 = vmatprep.subr.mxu0 0.0
    %1391 = vmatpush1.msra.mxu0 %v1278
    %1392 = vmatprep.subr.mxu0 0.0
    %1393 = vmatpush1.msra.mxu0 %v1281
    %1394 = vmatprep.subr.mxu0 0.0
    %1395 = vmatpush1.msra.mxu0 %v1284
    %1396 = vmatprep.subr.mxu0 0.0
    %1397 = vmatpush1.msra.mxu0 %v1287
    %1398 = vmatprep.subr.mxu0 0.0
    %1399 = vmatpush1.msra.mxu0 %v1290
    %1400 = vmatprep.subr.mxu0 0.0
    %1401 = vmatpush1.msra.mxu0 %v1293
    %1402 = vmatprep.subr.mxu0 0.0
    %1403 = vmatpush1.msra.mxu0 %v1296
    %1404 = vmatprep.subr.mxu0 0.0
    %1405 = vmatpush1.msra.mxu0 %v1299
    %1406 = vmatprep.subr.mxu0 0.0
    %1407 = vmatpush1.msra.mxu0 %v1302
    %1408 = vmatprep.subr.mxu0 0.0
    %1409 = vmatpush1.msra.mxu0 %v1305
    %1410 = vmatprep.subr.mxu0 0.0
    %1411 = vmatpush1.msra.mxu0 %v1308
    %1412 = vmatprep.subr.mxu0 0.0
    %1413 = vmatpush1.msra.mxu0 0.0
    %1414 = vmatprep.subr.mxu0 0.0
    %1415 = vmatpush1.msra.mxu0 0.0
    %1416 = vmatprep.subr.mxu0 0.0
    %1417 = vmatpush1.msra.mxu0 0.0
    %1418 = vmatprep.subr.mxu0 0.0
    %1419 = vmatpush1.msra.mxu0 0.0
    %1420 = vmatprep.subr.mxu0 0.0
    %1421 = vmatpush1.msra.mxu0 0.0
    %1422 = vmatprep.subr.mxu0 0.0
    %1423 = vmatpush1.msra.mxu0 0.0
    %1424 = vmatprep.subr.mxu0 0.0
    %1425 = vmatpush1.msra.mxu0 0.0
    %1426 = vmatprep.subr.mxu0 0.0
    %1427 = vmatpush1.msra.mxu0 0.0
    %1428 = vmatprep.subr.mxu0 0.0
    %1429 = vmatpush1.msra.mxu0 0.0
    %1430 = vmatprep.subr.mxu0 0.0
    %1431 = vmatpush1.msra.mxu0 0.0
    %1432 = vmatprep.subr.mxu0 0.0
    %1433 = vmatpush1.msra.mxu0 0.0
    %1434 = vmatprep.subr.mxu0 0.0
    %1435 = vmatpush1.msra.mxu0 0.0
    %1436 = vmatprep.subr.mxu0 0.0
    %1437 = vmatpush1.msra.mxu0 0.0
    %1438 = vmatprep.subr.mxu0 0.0
    %1439 = vmatpush1.msra.mxu0 0.0
    %1440 = vmatprep.subr.mxu0 0.0
    %1441 = vmatpush1.msra.mxu0 0.0
    %1442 = vmatprep.subr.mxu0 0.0
    %1443 = vmatpush1.msra.mxu0 0.0
    %1444 = vmatprep.mubr.f32.mxu0 0.0
    %1445 = vmatmul.mubr.f32.gmra.mrb[0].mxu0 %v1254
    %v1446 = vpop.f32.mrb[0].mxu0
    %v1447 = vadd.f32 0.0, %v1446
    %v1448 = vpop.f32.mrb[0].mxu0
    %1449 = vdwg.mxu0
    %v1450 = vadd.f32 %v1258, %v1376
    %v1451 = vxor.u32 %v1450, 2147483648
    %v1452 = vmul.f32 %v1451, 1.442695
    %v1453 = vpow.pop %v1452
    %v1454 = vadd.f32 %v1453, 1.0
    %v1455 = vrcp.pop %v1454
    %v1456 = vmul.f32 1.0, %v1455
    %v1457 = vadd.f32 %v1259, %v1378
    %v1458 = vxor.u32 %v1457, 2147483648
    %v1459 = vmul.f32 %v1458, 1.442695
    %v1460 = vpow.pop %v1459
    %v1461 = vadd.f32 %v1460, 1.0
    %v1462 = vrcp.pop %v1461
    %v1463 = vmul.f32 1.0, %v1462
    %v1464 = vmul.f32 %v1456, %v1447
    %v1465 = vadd.f32 %v1260, %v1464
    %v1466 = vtanh.pop %v1465
    %v1467 = vsub.f32 1.0, %v1463
    %v1468 = vmul.f32 %v1467, %v1466
    %v1469 = vmul.f32 %v1463, %v1254
    %v1470 = vadd.f32 %v1468, %v1469
    %s1471 = scalar_lea.vmem [#allocation14], 32
    %1472 = vst [vmem:[%s1471] sm:$0xff] %v1470
    %s1473 = scalar_lea.vmem [#allocation2], 120
    %v1474 = vld [vmem:[%s1473] sm:$0xff]
    %v1475 = vld [vmem:[%s1473 + $0x8] sm:$0xff]
    %v1476 = vld [vmem:[%s1473 + $0x10] sm:$0xff]
    %v1477 = vld [vmem:[#allocation9] sm:$0xff]
    %v1478 = vld [vmem:[#allocation9 + $0x8] sm:$0xff]
    %v1479 = vld [vmem:[#allocation9 + $0x10] sm:$0xff]
    %v1480 = vld [vmem:[#allocation9 + $0x18] sm:$0xff]
    %v1481 = vld [vmem:[#allocation9 + $0x20] sm:$0xff]
    %v1482 = vld [vmem:[#allocation9 + $0x28] sm:$0xff]
    %v1483 = vld [vmem:[#allocation9 + $0x30] sm:$0xff]
    %v1484 = vld [vmem:[#allocation9 + $0x38] sm:$0xff]
    %v1485 = vld [vmem:[#allocation9 + $0x40] sm:$0xff]
    %v1486 = vld [vmem:[#allocation9 + $0x48] sm:$0xff]
    %v1487 = vld [vmem:[#allocation9 + $0x50] sm:$0xff]
    %v1488 = vld [vmem:[#allocation9 + $0x58] sm:$0xff]
    %v1489 = vld [vmem:[#allocation9 + $0x60] sm:$0xff]
    %v1490 = vld [vmem:[#allocation9 + $0x68] sm:$0xff]
    %v1491 = vld [vmem:[#allocation9 + $0x70] sm:$0xff]
    %v1492 = vld [vmem:[#allocation9 + $0x78] sm:$0xff]
    %v1493 = vld [vmem:[#allocation9 + $0x80] sm:$0xff]
    %v1494 = vld [vmem:[#allocation9 + $0x88] sm:$0xff]
    %v1495 = vld [vmem:[#allocation9 + $0x90] sm:$0xff]
    %v1496 = vld [vmem:[#allocation9 + $0x98] sm:$0xff]
    %v1497 = vld [vmem:[#allocation9 + $0xa0] sm:$0xff]
    %v1498 = vld [vmem:[#allocation9 + $0xa8] sm:$0xff]
    %v1499 = vld [vmem:[#allocation9 + $0xb0] sm:$0xff]
    %v1500 = vld [vmem:[#allocation9 + $0xb8] sm:$0xff]
    %v1501 = vld [vmem:[#allocation9 + $0xc0] sm:$0xff]
    %v1502 = vld [vmem:[#allocation9 + $0xc8] sm:$0xff]
    %v1503 = vld [vmem:[#allocation9 + $0xd0] sm:$0xff]
    %v1504 = vld [vmem:[#allocation9 + $0xd8] sm:$0xff]
    %v1505 = vld [vmem:[#allocation9 + $0xe0] sm:$0xff]
    %v1506 = vld [vmem:[#allocation9 + $0xe8] sm:$0xff]
    %v1507 = vld [vmem:[#allocation9 + $0xf0] sm:$0xff]
    %v1508 = vld [vmem:[#allocation9 + $0xf8] sm:$0xff]
    %v1509 = vld [vmem:[#allocation9 + $0x100] sm:$0xff]
    %v1510 = vld [vmem:[#allocation9 + $0x108] sm:$0xff]
    %v1511 = vld [vmem:[#allocation9 + $0x110] sm:$0xff]
    %v1512 = vld [vmem:[#allocation9 + $0x118] sm:$0xff]
    %v1513 = vld [vmem:[#allocation9 + $0x120] sm:$0xff]
    %v1514 = vld [vmem:[#allocation9 + $0x128] sm:$0xff]
    %v1515 = vld [vmem:[#allocation9 + $0x130] sm:$0xff]
    %v1516 = vld [vmem:[#allocation9 + $0x138] sm:$0xff]
    %v1517 = vld [vmem:[#allocation9 + $0x140] sm:$0xff]
    %v1518 = vld [vmem:[#allocation9 + $0x148] sm:$0xff]
    %v1519 = vld [vmem:[#allocation9 + $0x150] sm:$0xff]
    %v1520 = vld [vmem:[#allocation9 + $0x158] sm:$0xff]
    %v1521 = vld [vmem:[#allocation9 + $0x160] sm:$0xff]
    %v1522 = vld [vmem:[#allocation9 + $0x168] sm:$0xff]
    %v1523 = vld [vmem:[#allocation9 + $0x170] sm:$0xff]
    %v1524 = vld [vmem:[#allocation9 + $0x178] sm:$0xff]
    %1525 = vmatprep.subr.mxu0 %v1478
    %1526 = vmatpush1.msra.mxu0 %v1477
    %1527 = vmatprep.subr.mxu0 %v1481
    %1528 = vmatpush1.msra.mxu0 %v1480
    %1529 = vmatprep.subr.mxu0 %v1484
    %1530 = vmatpush1.msra.mxu0 %v1483
    %1531 = vmatprep.subr.mxu0 %v1487
    %1532 = vmatpush1.msra.mxu0 %v1486
    %1533 = vmatprep.subr.mxu0 %v1490
    %1534 = vmatpush1.msra.mxu0 %v1489
    %1535 = vmatprep.subr.mxu0 %v1493
    %1536 = vmatpush1.msra.mxu0 %v1492
    %1537 = vmatprep.subr.mxu0 %v1496
    %1538 = vmatpush1.msra.mxu0 %v1495
    %1539 = vmatprep.subr.mxu0 %v1499
    %1540 = vmatpush1.msra.mxu0 %v1498
    %1541 = vmatprep.subr.mxu0 %v1502
    %1542 = vmatpush1.msra.mxu0 %v1501
    %1543 = vmatprep.subr.mxu0 %v1505
    %1544 = vmatpush1.msra.mxu0 %v1504
    %1545 = vmatprep.subr.mxu0 %v1508
    %1546 = vmatpush1.msra.mxu0 %v1507
    %1547 = vmatprep.subr.mxu0 %v1511
    %1548 = vmatpush1.msra.mxu0 %v1510
    %1549 = vmatprep.subr.mxu0 %v1514
    %1550 = vmatpush1.msra.mxu0 %v1513
    %1551 = vmatprep.subr.mxu0 %v1517
    %1552 = vmatpush1.msra.mxu0 %v1516
    %1553 = vmatprep.subr.mxu0 %v1520
    %1554 = vmatpush1.msra.mxu0 %v1519
    %1555 = vmatprep.subr.mxu0 %v1523
    %1556 = vmatpush1.msra.mxu0 %v1522
    %1557 = vmatprep.subr.mxu0 0.0
    %1558 = vmatpush1.msra.mxu0 0.0
    %1559 = vmatprep.subr.mxu0 0.0
    %1560 = vmatpush1.msra.mxu0 0.0
    %1561 = vmatprep.subr.mxu0 0.0
    %1562 = vmatpush1.msra.mxu0 0.0
    %1563 = vmatprep.subr.mxu0 0.0
    %1564 = vmatpush1.msra.mxu0 0.0
    %1565 = vmatprep.subr.mxu0 0.0
    %1566 = vmatpush1.msra.mxu0 0.0
    %1567 = vmatprep.subr.mxu0 0.0
    %1568 = vmatpush1.msra.mxu0 0.0
    %1569 = vmatprep.subr.mxu0 0.0
    %1570 = vmatpush1.msra.mxu0 0.0
    %1571 = vmatprep.subr.mxu0 0.0
    %1572 = vmatpush1.msra.mxu0 0.0
    %1573 = vmatprep.subr.mxu0 0.0
    %1574 = vmatpush1.msra.mxu0 0.0
    %1575 = vmatprep.subr.mxu0 0.0
    %1576 = vmatpush1.msra.mxu0 0.0
    %1577 = vmatprep.subr.mxu0 0.0
    %1578 = vmatpush1.msra.mxu0 0.0
    %1579 = vmatprep.subr.mxu0 0.0
    %1580 = vmatpush1.msra.mxu0 0.0
    %1581 = vmatprep.subr.mxu0 0.0
    %1582 = vmatpush1.msra.mxu0 0.0
    %1583 = vmatprep.subr.mxu0 0.0
    %1584 = vmatpush1.msra.mxu0 0.0
    %1585 = vmatprep.subr.mxu0 0.0
    %1586 = vmatpush1.msra.mxu0 0.0
    %1587 = vmatprep.subr.mxu0 0.0
    %1588 = vmatpush1.msra.mxu0 0.0
    %1589 = vmatprep.mubr.f32.mxu0 0.0
    %1590 = vmatmul.mubr.f32.gmra.mrb[0].mxu0 %v1470
    %v1591 = vpop.f32.mrb[0].mxu0
    %v1592 = vadd.f32 0.0, %v1591
    %v1593 = vpop.f32.mrb[0].mxu0
    %v1594 = vadd.f32 0.0, %v1593
    %1595 = vdwg.mxu0
    %1596 = vmatprep.subr.mxu0 0.0
    %1597 = vmatpush1.msra.mxu0 %v1479
    %1598 = vmatprep.subr.mxu0 0.0
    %1599 = vmatpush1.msra.mxu0 %v1482
    %1600 = vmatprep.subr.mxu0 0.0
    %1601 = vmatpush1.msra.mxu0 %v1485
    %1602 = vmatprep.subr.mxu0 0.0
    %1603 = vmatpush1.msra.mxu0 %v1488
    %1604 = vmatprep.subr.mxu0 0.0
    %1605 = vmatpush1.msra.mxu0 %v1491
    %1606 = vmatprep.subr.mxu0 0.0
    %1607 = vmatpush1.msra.mxu0 %v1494
    %1608 = vmatprep.subr.mxu0 0.0
    %1609 = vmatpush1.msra.mxu0 %v1497
    %1610 = vmatprep.subr.mxu0 0.0
    %1611 = vmatpush1.msra.mxu0 %v1500
    %1612 = vmatprep.subr.mxu0 0.0
    %1613 = vmatpush1.msra.mxu0 %v1503
    %1614 = vmatprep.subr.mxu0 0.0
    %1615 = vmatpush1.msra.mxu0 %v1506
    %1616 = vmatprep.subr.mxu0 0.0
    %1617 = vmatpush1.msra.mxu0 %v1509
    %1618 = vmatprep.subr.mxu0 0.0
    %1619 = vmatpush1.msra.mxu0 %v1512
    %1620 = vmatprep.subr.mxu0 0.0
    %1621 = vmatpush1.msra.mxu0 %v1515
    %1622 = vmatprep.subr.mxu0 0.0
    %1623 = vmatpush1.msra.mxu0 %v1518
    %1624 = vmatprep.subr.mxu0 0.0
    %1625 = vmatpush1.msra.mxu0 %v1521
    %1626 = vmatprep.subr.mxu0 0.0
    %1627 = vmatpush1.msra.mxu0 %v1524
    %1628 = vmatprep.subr.mxu0 0.0
    %1629 = vmatpush1.msra.mxu0 0.0
    %1630 = vmatprep.subr.mxu0 0.0
    %1631 = vmatpush1.msra.mxu0 0.0
    %1632 = vmatprep.subr.mxu0 0.0
    %1633 = vmatpush1.msra.mxu0 0.0
    %1634 = vmatprep.subr.mxu0 0.0
    %1635 = vmatpush1.msra.mxu0 0.0
    %1636 = vmatprep.subr.mxu0 0.0
    %1637 = vmatpush1.msra.mxu0 0.0
    %1638 = vmatprep.subr.mxu0 0.0
    %1639 = vmatpush1.msra.mxu0 0.0
    %1640 = vmatprep.subr.mxu0 0.0
    %1641 = vmatpush1.msra.mxu0 0.0
    %1642 = vmatprep.subr.mxu0 0.0
    %1643 = vmatpush1.msra.mxu0 0.0
    %1644 = vmatprep.subr.mxu0 0.0
    %1645 = vmatpush1.msra.mxu0 0.0
    %1646 = vmatprep.subr.mxu0 0.0
    %1647 = vmatpush1.msra.mxu0 0.0
    %1648 = vmatprep.subr.mxu0 0.0
    %1649 = vmatpush1.msra.mxu0 0.0
    %1650 = vmatprep.subr.mxu0 0.0
    %1651 = vmatpush1.msra.mxu0 0.0
    %1652 = vmatprep.subr.mxu0 0.0
    %1653 = vmatpush1.msra.mxu0 0.0
    %1654 = vmatprep.subr.mxu0 0.0
    %1655 = vmatpush1.msra.mxu0 0.0
    %1656 = vmatprep.subr.mxu0 0.0
    %1657 = vmatpush1.msra.mxu0 0.0
    %1658 = vmatprep.subr.mxu0 0.0
    %1659 = vmatpush1.msra.mxu0 0.0
    %1660 = vmatprep.mubr.f32.mxu0 0.0
    %1661 = vmatmul.mubr.f32.gmra.mrb[0].mxu0 %v1470
    %v1662 = vpop.f32.mrb[0].mxu0
    %v1663 = vadd.f32 0.0, %v1662
    %v1664 = vpop.f32.mrb[0].mxu0
    %1665 = vdwg.mxu0
    %v1666 = vadd.f32 %v1474, %v1592
    %v1667 = vxor.u32 %v1666, 2147483648
    %v1668 = vmul.f32 %v1667, 1.442695
    %v1669 = vpow.pop %v1668
    %v1670 = vadd.f32 %v1669, 1.0
    %v1671 = vrcp.pop %v1670
    %v1672 = vmul.f32 1.0, %v1671
    %v1673 = vadd.f32 %v1475, %v1594
    %v1674 = vxor.u32 %v1673, 2147483648
    %v1675 = vmul.f32 %v1674, 1.442695
    %v1676 = vpow.pop %v1675
    %v1677 = vadd.f32 %v1676, 1.0
    %v1678 = vrcp.pop %v1677
    %v1679 = vmul.f32 1.0, %v1678
    %v1680 = vmul.f32 %v1672, %v1663
    %v1681 = vadd.f32 %v1476, %v1680
    %v1682 = vtanh.pop %v1681
    %v1683 = vsub.f32 1.0, %v1679
    %v1684 = vmul.f32 %v1683, %v1682
    %v1685 = vmul.f32 %v1679, %v1470
    %v1686 = vadd.f32 %v1684, %v1685
    %s1687 = scalar_lea.vmem [#allocation14], 40
    %1688 = vst [vmem:[%s1687] sm:$0xff] %v1686
    %s1689 = scalar_lea.vmem [#allocation2], 144
    %v1690 = vld [vmem:[%s1689] sm:$0xff]
    %v1691 = vld [vmem:[%s1689 + $0x8] sm:$0xff]
    %v1692 = vld [vmem:[%s1689 + $0x10] sm:$0xff]
    %v1693 = vld [vmem:[#allocation9] sm:$0xff]
    %v1694 = vld [vmem:[#allocation9 + $0x8] sm:$0xff]
    %v1695 = vld [vmem:[#allocation9 + $0x10] sm:$0xff]
    %v1696 = vld [vmem:[#allocation9 + $0x18] sm:$0xff]
    %v1697 = vld [vmem:[#allocation9 + $0x20] sm:$0xff]
    %v1698 = vld [vmem:[#allocation9 + $0x28] sm:$0xff]
    %v1699 = vld [vmem:[#allocation9 + $0x30] sm:$0xff]
    %v1700 = vld [vmem:[#allocation9 + $0x38] sm:$0xff]
    %v1701 = vld [vmem:[#allocation9 + $0x40] sm:$0xff]
    %v1702 = vld [vmem:[#allocation9 + $0x48] sm:$0xff]
    %v1703 = vld [vmem:[#allocation9 + $0x50] sm:$0xff]
    %v1704 = vld [vmem:[#allocation9 + $0x58] sm:$0xff]
    %v1705 = vld [vmem:[#allocation9 + $0x60] sm:$0xff]
    %v1706 = vld [vmem:[#allocation9 + $0x68] sm:$0xff]
    %v1707 = vld [vmem:[#allocation9 + $0x70] sm:$0xff]
    %v1708 = vld [vmem:[#allocation9 + $0x78] sm:$0xff]
    %v1709 = vld [vmem:[#allocation9 + $0x80] sm:$0xff]
    %v1710 = vld [vmem:[#allocation9 + $0x88] sm:$0xff]
    %v1711 = vld [vmem:[#allocation9 + $0x90] sm:$0xff]
    %v1712 = vld [vmem:[#allocation9 + $0x98] sm:$0xff]
    %v1713 = vld [vmem:[#allocation9 + $0xa0] sm:$0xff]
    %v1714 = vld [vmem:[#allocation9 + $0xa8] sm:$0xff]
    %v1715 = vld [vmem:[#allocation9 + $0xb0] sm:$0xff]
    %v1716 = vld [vmem:[#allocation9 + $0xb8] sm:$0xff]
    %v1717 = vld [vmem:[#allocation9 + $0xc0] sm:$0xff]
    %v1718 = vld [vmem:[#allocation9 + $0xc8] sm:$0xff]
    %v1719 = vld [vmem:[#allocation9 + $0xd0] sm:$0xff]
    %v1720 = vld [vmem:[#allocation9 + $0xd8] sm:$0xff]
    %v1721 = vld [vmem:[#allocation9 + $0xe0] sm:$0xff]
    %v1722 = vld [vmem:[#allocation9 + $0xe8] sm:$0xff]
    %v1723 = vld [vmem:[#allocation9 + $0xf0] sm:$0xff]
    %v1724 = vld [vmem:[#allocation9 + $0xf8] sm:$0xff]
    %v1725 = vld [vmem:[#allocation9 + $0x100] sm:$0xff]
    %v1726 = vld [vmem:[#allocation9 + $0x108] sm:$0xff]
    %v1727 = vld [vmem:[#allocation9 + $0x110] sm:$0xff]
    %v1728 = vld [vmem:[#allocation9 + $0x118] sm:$0xff]
    %v1729 = vld [vmem:[#allocation9 + $0x120] sm:$0xff]
    %v1730 = vld [vmem:[#allocation9 + $0x128] sm:$0xff]
    %v1731 = vld [vmem:[#allocation9 + $0x130] sm:$0xff]
    %v1732 = vld [vmem:[#allocation9 + $0x138] sm:$0xff]
    %v1733 = vld [vmem:[#allocation9 + $0x140] sm:$0xff]
    %v1734 = vld [vmem:[#allocation9 + $0x148] sm:$0xff]
    %v1735 = vld [vmem:[#allocation9 + $0x150] sm:$0xff]
    %v1736 = vld [vmem:[#allocation9 + $0x158] sm:$0xff]
    %v1737 = vld [vmem:[#allocation9 + $0x160] sm:$0xff]
    %v1738 = vld [vmem:[#allocation9 + $0x168] sm:$0xff]
    %v1739 = vld [vmem:[#allocation9 + $0x170] sm:$0xff]
    %v1740 = vld [vmem:[#allocation9 + $0x178] sm:$0xff]
    %1741 = vmatprep.subr.mxu0 %v1694
    %1742 = vmatpush1.msra.mxu0 %v1693
    %1743 = vmatprep.subr.mxu0 %v1697
    %1744 = vmatpush1.msra.mxu0 %v1696
    %1745 = vmatprep.subr.mxu0 %v1700
    %1746 = vmatpush1.msra.mxu0 %v1699
    %1747 = vmatprep.subr.mxu0 %v1703
    %1748 = vmatpush1.msra.mxu0 %v1702
    %1749 = vmatprep.subr.mxu0 %v1706
    %1750 = vmatpush1.msra.mxu0 %v1705
    %1751 = vmatprep.subr.mxu0 %v1709
    %1752 = vmatpush1.msra.mxu0 %v1708
    %1753 = vmatprep.subr.mxu0 %v1712
    %1754 = vmatpush1.msra.mxu0 %v1711
    %1755 = vmatprep.subr.mxu0 %v1715
    %1756 = vmatpush1.msra.mxu0 %v1714
    %1757 = vmatprep.subr.mxu0 %v1718
    %1758 = vmatpush1.msra.mxu0 %v1717
    %1759 = vmatprep.subr.mxu0 %v1721
    %1760 = vmatpush1.msra.mxu0 %v1720
    %1761 = vmatprep.subr.mxu0 %v1724
    %1762 = vmatpush1.msra.mxu0 %v1723
    %1763 = vmatprep.subr.mxu0 %v1727
    %1764 = vmatpush1.msra.mxu0 %v1726
    %1765 = vmatprep.subr.mxu0 %v1730
    %1766 = vmatpush1.msra.mxu0 %v1729
    %1767 = vmatprep.subr.mxu0 %v1733
    %1768 = vmatpush1.msra.mxu0 %v1732
    %1769 = vmatprep.subr.mxu0 %v1736
    %1770 = vmatpush1.msra.mxu0 %v1735
    %1771 = vmatprep.subr.mxu0 %v1739
    %1772 = vmatpush1.msra.mxu0 %v1738
    %1773 = vmatprep.subr.mxu0 0.0
    %1774 = vmatpush1.msra.mxu0 0.0
    %1775 = vmatprep.subr.mxu0 0.0
    %1776 = vmatpush1.msra.mxu0 0.0
    %1777 = vmatprep.subr.mxu0 0.0
    %1778 = vmatpush1.msra.mxu0 0.0
    %1779 = vmatprep.subr.mxu0 0.0
    %1780 = vmatpush1.msra.mxu0 0.0
    %1781 = vmatprep.subr.mxu0 0.0
    %1782 = vmatpush1.msra.mxu0 0.0
    %1783 = vmatprep.subr.mxu0 0.0
    %1784 = vmatpush1.msra.mxu0 0.0
    %1785 = vmatprep.subr.mxu0 0.0
    %1786 = vmatpush1.msra.mxu0 0.0
    %1787 = vmatprep.subr.mxu0 0.0
    %1788 = vmatpush1.msra.mxu0 0.0
    %1789 = vmatprep.subr.mxu0 0.0
    %1790 = vmatpush1.msra.mxu0 0.0
    %1791 = vmatprep.subr.mxu0 0.0
    %1792 = vmatpush1.msra.mxu0 0.0
    %1793 = vmatprep.subr.mxu0 0.0
    %1794 = vmatpush1.msra.mxu0 0.0
    %1795 = vmatprep.subr.mxu0 0.0
    %1796 = vmatpush1.msra.mxu0 0.0
    %1797 = vmatprep.subr.mxu0 0.0
    %1798 = vmatpush1.msra.mxu0 0.0
    %1799 = vmatprep.subr.mxu0 0.0
    %1800 = vmatpush1.msra.mxu0 0.0
    %1801 = vmatprep.subr.mxu0 0.0
    %1802 = vmatpush1.msra.mxu0 0.0
    %1803 = vmatprep.subr.mxu0 0.0
    %1804 = vmatpush1.msra.mxu0 0.0
    %1805 = vmatprep.mubr.f32.mxu0 0.0
    %1806 = vmatmul.mubr.f32.gmra.mrb[0].mxu0 %v1686
    %v1807 = vpop.f32.mrb[0].mxu0
    %v1808 = vadd.f32 0.0, %v1807
    %v1809 = vpop.f32.mrb[0].mxu0
    %v1810 = vadd.f32 0.0, %v1809
    %1811 = vdwg.mxu0
    %1812 = vmatprep.subr.mxu0 0.0
    %1813 = vmatpush1.msra.mxu0 %v1695
    %1814 = vmatprep.subr.mxu0 0.0
    %1815 = vmatpush1.msra.mxu0 %v1698
    %1816 = vmatprep.subr.mxu0 0.0
    %1817 = vmatpush1.msra.mxu0 %v1701
    %1818 = vmatprep.subr.mxu0 0.0
    %1819 = vmatpush1.msra.mxu0 %v1704
    %1820 = vmatprep.subr.mxu0 0.0
    %1821 = vmatpush1.msra.mxu0 %v1707
    %1822 = vmatprep.subr.mxu0 0.0
    %1823 = vmatpush1.msra.mxu0 %v1710
    %1824 = vmatprep.subr.mxu0 0.0
    %1825 = vmatpush1.msra.mxu0 %v1713
    %1826 = vmatprep.subr.mxu0 0.0
    %1827 = vmatpush1.msra.mxu0 %v1716
    %1828 = vmatprep.subr.mxu0 0.0
    %1829 = vmatpush1.msra.mxu0 %v1719
    %1830 = vmatprep.subr.mxu0 0.0
    %1831 = vmatpush1.msra.mxu0 %v1722
    %1832 = vmatprep.subr.mxu0 0.0
    %1833 = vmatpush1.msra.mxu0 %v1725
    %1834 = vmatprep.subr.mxu0 0.0
    %1835 = vmatpush1.msra.mxu0 %v1728
    %1836 = vmatprep.subr.mxu0 0.0
    %1837 = vmatpush1.msra.mxu0 %v1731
    %1838 = vmatprep.subr.mxu0 0.0
    %1839 = vmatpush1.msra.mxu0 %v1734
    %1840 = vmatprep.subr.mxu0 0.0
    %1841 = vmatpush1.msra.mxu0 %v1737
    %1842 = vmatprep.subr.mxu0 0.0
    %1843 = vmatpush1.msra.mxu0 %v1740
    %1844 = vmatprep.subr.mxu0 0.0
    %1845 = vmatpush1.msra.mxu0 0.0
    %1846 = vmatprep.subr.mxu0 0.0
    %1847 = vmatpush1.msra.mxu0 0.0
    %1848 = vmatprep.subr.mxu0 0.0
    %1849 = vmatpush1.msra.mxu0 0.0
    %1850 = vmatprep.subr.mxu0 0.0
    %1851 = vmatpush1.msra.mxu0 0.0
    %1852 = vmatprep.subr.mxu0 0.0
    %1853 = vmatpush1.msra.mxu0 0.0
    %1854 = vmatprep.subr.mxu0 0.0
    %1855 = vmatpush1.msra.mxu0 0.0
    %1856 = vmatprep.subr.mxu0 0.0
    %1857 = vmatpush1.msra.mxu0 0.0
    %1858 = vmatprep.subr.mxu0 0.0
    %1859 = vmatpush1.msra.mxu0 0.0
    %1860 = vmatprep.subr.mxu0 0.0
    %1861 = vmatpush1.msra.mxu0 0.0
    %1862 = vmatprep.subr.mxu0 0.0
    %1863 = vmatpush1.msra.mxu0 0.0
    %1864 = vmatprep.subr.mxu0 0.0
    %1865 = vmatpush1.msra.mxu0 0.0
    %1866 = vmatprep.subr.mxu0 0.0
    %1867 = vmatpush1.msra.mxu0 0.0
    %1868 = vmatprep.subr.mxu0 0.0
    %1869 = vmatpush1.msra.mxu0 0.0
    %1870 = vmatprep.subr.mxu0 0.0
    %1871 = vmatpush1.msra.mxu0 0.0
    %1872 = vmatprep.subr.mxu0 0.0
    %1873 = vmatpush1.msra.mxu0 0.0
    %1874 = vmatprep.subr.mxu0 0.0
    %1875 = vmatpush1.msra.mxu0 0.0
    %1876 = vmatprep.mubr.f32.mxu0 0.0
    %1877 = vmatmul.mubr.f32.gmra.mrb[0].mxu0 %v1686
    %v1878 = vpop.f32.mrb[0].mxu0
    %v1879 = vadd.f32 0.0, %v1878
    %v1880 = vpop.f32.mrb[0].mxu0
    %1881 = vdwg.mxu0
    %v1882 = vadd.f32 %v1690, %v1808
    %v1883 = vxor.u32 %v1882, 2147483648
    %v1884 = vmul.f32 %v1883, 1.442695
    %v1885 = vpow.pop %v1884
    %v1886 = vadd.f32 %v1885, 1.0
    %v1887 = vrcp.pop %v1886
    %v1888 = vmul.f32 1.0, %v1887
    %v1889 = vadd.f32 %v1691, %v1810
    %v1890 = vxor.u32 %v1889, 2147483648
    %v1891 = vmul.f32 %v1890, 1.442695
    %v1892 = vpow.pop %v1891
    %v1893 = vadd.f32 %v1892, 1.0
    %v1894 = vrcp.pop %v1893
    %v1895 = vmul.f32 1.0, %v1894
    %v1896 = vmul.f32 %v1888, %v1879
    %v1897 = vadd.f32 %v1692, %v1896
    %v1898 = vtanh.pop %v1897
    %v1899 = vsub.f32 1.0, %v1895
    %v1900 = vmul.f32 %v1899, %v1898
    %v1901 = vmul.f32 %v1895, %v1686
    %v1902 = vadd.f32 %v1900, %v1901
    %s1903 = scalar_lea.vmem [#allocation14], 48
    %1904 = vst [vmem:[%s1903] sm:$0xff] %v1902
    %s1905 = scalar_lea.vmem [#allocation2], 168
    %v1906 = vld [vmem:[%s1905] sm:$0xff]
    %v1907 = vld [vmem:[%s1905 + $0x8] sm:$0xff]
    %v1908 = vld [vmem:[%s1905 + $0x10] sm:$0xff]
    %v1909 = vld [vmem:[#allocation9] sm:$0xff]
    %v1910 = vld [vmem:[#allocation9 + $0x8] sm:$0xff]
    %v1911 = vld [vmem:[#allocation9 + $0x10] sm:$0xff]
    %v1912 = vld [vmem:[#allocation9 + $0x18] sm:$0xff]
    %v1913 = vld [vmem:[#allocation9 + $0x20] sm:$0xff]
    %v1914 = vld [vmem:[#allocation9 + $0x28] sm:$0xff]
    %v1915 = vld [vmem:[#allocation9 + $0x30] sm:$0xff]
    %v1916 = vld [vmem:[#allocation9 + $0x38] sm:$0xff]
    %v1917 = vld [vmem:[#allocation9 + $0x40] sm:$0xff]
    %v1918 = vld [vmem:[#allocation9 + $0x48] sm:$0xff]
    %v1919 = vld [vmem:[#allocation9 + $0x50] sm:$0xff]
    %v1920 = vld [vmem:[#allocation9 + $0x58] sm:$0xff]
    %v1921 = vld [vmem:[#allocation9 + $0x60] sm:$0xff]
    %v1922 = vld [vmem:[#allocation9 + $0x68] sm:$0xff]
    %v1923 = vld [vmem:[#allocation9 + $0x70] sm:$0xff]
    %v1924 = vld [vmem:[#allocation9 + $0x78] sm:$0xff]
    %v1925 = vld [vmem:[#allocation9 + $0x80] sm:$0xff]
    %v1926 = vld [vmem:[#allocation9 + $0x88] sm:$0xff]
    %v1927 = vld [vmem:[#allocation9 + $0x90] sm:$0xff]
    %v1928 = vld [vmem:[#allocation9 + $0x98] sm:$0xff]
    %v1929 = vld [vmem:[#allocation9 + $0xa0] sm:$0xff]
    %v1930 = vld [vmem:[#allocation9 + $0xa8] sm:$0xff]
    %v1931 = vld [vmem:[#allocation9 + $0xb0] sm:$0xff]
    %v1932 = vld [vmem:[#allocation9 + $0xb8] sm:$0xff]
    %v1933 = vld [vmem:[#allocation9 + $0xc0] sm:$0xff]
    %v1934 = vld [vmem:[#allocation9 + $0xc8] sm:$0xff]
    %v1935 = vld [vmem:[#allocation9 + $0xd0] sm:$0xff]
    %v1936 = vld [vmem:[#allocation9 + $0xd8] sm:$0xff]
    %v1937 = vld [vmem:[#allocation9 + $0xe0] sm:$0xff]
    %v1938 = vld [vmem:[#allocation9 + $0xe8] sm:$0xff]
    %v1939 = vld [vmem:[#allocation9 + $0xf0] sm:$0xff]
    %v1940 = vld [vmem:[#allocation9 + $0xf8] sm:$0xff]
    %v1941 = vld [vmem:[#allocation9 + $0x100] sm:$0xff]
    %v1942 = vld [vmem:[#allocation9 + $0x108] sm:$0xff]
    %v1943 = vld [vmem:[#allocation9 + $0x110] sm:$0xff]
    %v1944 = vld [vmem:[#allocation9 + $0x118] sm:$0xff]
    %v1945 = vld [vmem:[#allocation9 + $0x120] sm:$0xff]
    %v1946 = vld [vmem:[#allocation9 + $0x128] sm:$0xff]
    %v1947 = vld [vmem:[#allocation9 + $0x130] sm:$0xff]
    %v1948 = vld [vmem:[#allocation9 + $0x138] sm:$0xff]
    %v1949 = vld [vmem:[#allocation9 + $0x140] sm:$0xff]
    %v1950 = vld [vmem:[#allocation9 + $0x148] sm:$0xff]
    %v1951 = vld [vmem:[#allocation9 + $0x150] sm:$0xff]
    %v1952 = vld [vmem:[#allocation9 + $0x158] sm:$0xff]
    %v1953 = vld [vmem:[#allocation9 + $0x160] sm:$0xff]
    %v1954 = vld [vmem:[#allocation9 + $0x168] sm:$0xff]
    %v1955 = vld [vmem:[#allocation9 + $0x170] sm:$0xff]
    %v1956 = vld [vmem:[#allocation9 + $0x178] sm:$0xff]
    %1957 = vmatprep.subr.mxu0 %v1910
    %1958 = vmatpush1.msra.mxu0 %v1909
    %1959 = vmatprep.subr.mxu0 %v1913
    %1960 = vmatpush1.msra.mxu0 %v1912
    %1961 = vmatprep.subr.mxu0 %v1916
    %1962 = vmatpush1.msra.mxu0 %v1915
    %1963 = vmatprep.subr.mxu0 %v1919
    %1964 = vmatpush1.msra.mxu0 %v1918
    %1965 = vmatprep.subr.mxu0 %v1922
    %1966 = vmatpush1.msra.mxu0 %v1921
    %1967 = vmatprep.subr.mxu0 %v1925
    %1968 = vmatpush1.msra.mxu0 %v1924
    %1969 = vmatprep.subr.mxu0 %v1928
    %1970 = vmatpush1.msra.mxu0 %v1927
    %1971 = vmatprep.subr.mxu0 %v1931
    %1972 = vmatpush1.msra.mxu0 %v1930
    %1973 = vmatprep.subr.mxu0 %v1934
    %1974 = vmatpush1.msra.mxu0 %v1933
    %1975 = vmatprep.subr.mxu0 %v1937
    %1976 = vmatpush1.msra.mxu0 %v1936
    %1977 = vmatprep.subr.mxu0 %v1940
    %1978 = vmatpush1.msra.mxu0 %v1939
    %1979 = vmatprep.subr.mxu0 %v1943
    %1980 = vmatpush1.msra.mxu0 %v1942
    %1981 = vmatprep.subr.mxu0 %v1946
    %1982 = vmatpush1.msra.mxu0 %v1945
    %1983 = vmatprep.subr.mxu0 %v1949
    %1984 = vmatpush1.msra.mxu0 %v1948
    %1985 = vmatprep.subr.mxu0 %v1952
    %1986 = vmatpush1.msra.mxu0 %v1951
    %1987 = vmatprep.subr.mxu0 %v1955
    %1988 = vmatpush1.msra.mxu0 %v1954
    %1989 = vmatprep.subr.mxu0 0.0
    %1990 = vmatpush1.msra.mxu0 0.0
    %1991 = vmatprep.subr.mxu0 0.0
    %1992 = vmatpush1.msra.mxu0 0.0
    %1993 = vmatprep.subr.mxu0 0.0
    %1994 = vmatpush1.msra.mxu0 0.0
    %1995 = vmatprep.subr.mxu0 0.0
    %1996 = vmatpush1.msra.mxu0 0.0
    %1997 = vmatprep.subr.mxu0 0.0
    %1998 = vmatpush1.msra.mxu0 0.0
    %1999 = vmatprep.subr.mxu0 0.0
    %2000 = vmatpush1.msra.mxu0 0.0
    %2001 = vmatprep.subr.mxu0 0.0
    %2002 = vmatpush1.msra.mxu0 0.0
    %2003 = vmatprep.subr.mxu0 0.0
    %2004 = vmatpush1.msra.mxu0 0.0
    %2005 = vmatprep.subr.mxu0 0.0
    %2006 = vmatpush1.msra.mxu0 0.0
    %2007 = vmatprep.subr.mxu0 0.0
    %2008 = vmatpush1.msra.mxu0 0.0
    %2009 = vmatprep.subr.mxu0 0.0
    %2010 = vmatpush1.msra.mxu0 0.0
    %2011 = vmatprep.subr.mxu0 0.0
    %2012 = vmatpush1.msra.mxu0 0.0
    %2013 = vmatprep.subr.mxu0 0.0
    %2014 = vmatpush1.msra.mxu0 0.0
    %2015 = vmatprep.subr.mxu0 0.0
    %2016 = vmatpush1.msra.mxu0 0.0
    %2017 = vmatprep.subr.mxu0 0.0
    %2018 = vmatpush1.msra.mxu0 0.0
    %2019 = vmatprep.subr.mxu0 0.0
    %2020 = vmatpush1.msra.mxu0 0.0
    %2021 = vmatprep.mubr.f32.mxu0 0.0
    %2022 = vmatmul.mubr.f32.gmra.mrb[0].mxu0 %v1902
    %v2023 = vpop.f32.mrb[0].mxu0
    %v2024 = vadd.f32 0.0, %v2023
    %v2025 = vpop.f32.mrb[0].mxu0
    %v2026 = vadd.f32 0.0, %v2025
    %2027 = vdwg.mxu0
    %2028 = vmatprep.subr.mxu0 0.0
    %2029 = vmatpush1.msra.mxu0 %v1911
    %2030 = vmatprep.subr.mxu0 0.0
    %2031 = vmatpush1.msra.mxu0 %v1914
    %2032 = vmatprep.subr.mxu0 0.0
    %2033 = vmatpush1.msra.mxu0 %v1917
    %2034 = vmatprep.subr.mxu0 0.0
    %2035 = vmatpush1.msra.mxu0 %v1920
    %2036 = vmatprep.subr.mxu0 0.0
    %2037 = vmatpush1.msra.mxu0 %v1923
    %2038 = vmatprep.subr.mxu0 0.0
    %2039 = vmatpush1.msra.mxu0 %v1926
    %2040 = vmatprep.subr.mxu0 0.0
    %2041 = vmatpush1.msra.mxu0 %v1929
    %2042 = vmatprep.subr.mxu0 0.0
    %2043 = vmatpush1.msra.mxu0 %v1932
    %2044 = vmatprep.subr.mxu0 0.0
    %2045 = vmatpush1.msra.mxu0 %v1935
    %2046 = vmatprep.subr.mxu0 0.0
    %2047 = vmatpush1.msra.mxu0 %v1938
    %2048 = vmatprep.subr.mxu0 0.0
    %2049 = vmatpush1.msra.mxu0 %v1941
    %2050 = vmatprep.subr.mxu0 0.0
    %2051 = vmatpush1.msra.mxu0 %v1944
    %2052 = vmatprep.subr.mxu0 0.0
    %2053 = vmatpush1.msra.mxu0 %v1947
    %2054 = vmatprep.subr.mxu0 0.0
    %2055 = vmatpush1.msra.mxu0 %v1950
    %2056 = vmatprep.subr.mxu0 0.0
    %2057 = vmatpush1.msra.mxu0 %v1953
    %2058 = vmatprep.subr.mxu0 0.0
    %2059 = vmatpush1.msra.mxu0 %v1956
    %2060 = vmatprep.subr.mxu0 0.0
    %2061 = vmatpush1.msra.mxu0 0.0
    %2062 = vmatprep.subr.mxu0 0.0
    %2063 = vmatpush1.msra.mxu0 0.0
    %2064 = vmatprep.subr.mxu0 0.0
    %2065 = vmatpush1.msra.mxu0 0.0
    %2066 = vmatprep.subr.mxu0 0.0
    %2067 = vmatpush1.msra.mxu0 0.0
    %2068 = vmatprep.subr.mxu0 0.0
    %2069 = vmatpush1.msra.mxu0 0.0
    %2070 = vmatprep.subr.mxu0 0.0
    %2071 = vmatpush1.msra.mxu0 0.0
    %2072 = vmatprep.subr.mxu0 0.0
    %2073 = vmatpush1.msra.mxu0 0.0
    %2074 = vmatprep.subr.mxu0 0.0
    %2075 = vmatpush1.msra.mxu0 0.0
    %2076 = vmatprep.subr.mxu0 0.0
    %2077 = vmatpush1.msra.mxu0 0.0
    %2078 = vmatprep.subr.mxu0 0.0
    %2079 = vmatpush1.msra.mxu0 0.0
    %2080 = vmatprep.subr.mxu0 0.0
    %2081 = vmatpush1.msra.mxu0 0.0
    %2082 = vmatprep.subr.mxu0 0.0
    %2083 = vmatpush1.msra.mxu0 0.0
    %2084 = vmatprep.subr.mxu0 0.0
    %2085 = vmatpush1.msra.mxu0 0.0
    %2086 = vmatprep.subr.mxu0 0.0
    %2087 = vmatpush1.msra.mxu0 0.0
    %2088 = vmatprep.subr.mxu0 0.0
    %2089 = vmatpush1.msra.mxu0 0.0
    %2090 = vmatprep.subr.mxu0 0.0
    %2091 = vmatpush1.msra.mxu0 0.0
    %2092 = vmatprep.mubr.f32.mxu0 0.0
    %2093 = vmatmul.mubr.f32.gmra.mrb[0].mxu0 %v1902
    %v2094 = vpop.f32.mrb[0].mxu0
    %v2095 = vadd.f32 0.0, %v2094
    %v2096 = vpop.f32.mrb[0].mxu0
    %2097 = vdwg.mxu0
    %v2098 = vadd.f32 %v1906, %v2024
    %v2099 = vxor.u32 %v2098, 2147483648
    %v2100 = vmul.f32 %v2099, 1.442695
    %v2101 = vpow.pop %v2100
    %v2102 = vadd.f32 %v2101, 1.0
    %v2103 = vrcp.pop %v2102
    %v2104 = vmul.f32 1.0, %v2103
    %v2105 = vadd.f32 %v1907, %v2026
    %v2106 = vxor.u32 %v2105, 2147483648
    %v2107 = vmul.f32 %v2106, 1.442695
    %v2108 = vpow.pop %v2107
    %v2109 = vadd.f32 %v2108, 1.0
    %v2110 = vrcp.pop %v2109
    %v2111 = vmul.f32 1.0, %v2110
    %v2112 = vmul.f32 %v2104, %v2095
    %v2113 = vadd.f32 %v1908, %v2112
    %v2114 = vtanh.pop %v2113
    %v2115 = vsub.f32 1.0, %v2111
    %v2116 = vmul.f32 %v2115, %v2114
    %v2117 = vmul.f32 %v2111, %v1902
    %v2118 = vadd.f32 %v2116, %v2117
    %s2119 = scalar_lea.vmem [#allocation14], 56
    %2120 = vst [vmem:[%s2119] sm:$0xff] %v2118
    %2121 = vst [vmem:[#allocation15] sm:$0xff] %v2118
    %v2122 = vld [vmem:[#allocation14] sm:$0xff]
    %v2123 = vld [vmem:[#allocation14 + $0x8] sm:$0xff]
    %v2124 = vld [vmem:[#allocation14 + $0x10] sm:$0xff]
    %v2125 = vld [vmem:[#allocation14 + $0x18] sm:$0xff]
    %v2126 = vld [vmem:[#allocation14 + $0x20] sm:$0xff]
    %v2127 = vld [vmem:[#allocation14 + $0x28] sm:$0xff]
    %v2128 = vld [vmem:[#allocation14 + $0x30] sm:$0xff]
    %v2129 = vld [vmem:[#allocation14 + $0x38] sm:$0xff]
    %v2130 = vld [vmem:[#allocation11] sm:$0xff]
    %v2131 = vld [vmem:[#allocation11 + $0x8] sm:$0xff]
    %v2132 = vld [vmem:[#allocation11 + $0x10] sm:$0xff]
    %v2133 = vld [vmem:[#allocation11 + $0x18] sm:$0xff]
    %v2134 = vld [vmem:[#allocation11 + $0x20] sm:$0xff]
    %v2135 = vld [vmem:[#allocation11 + $0x28] sm:$0xff]
    %v2136 = vld [vmem:[#allocation11 + $0x30] sm:$0xff]
    %v2137 = vld [vmem:[#allocation11 + $0x38] sm:$0xff]
    %v2138 = vld [vmem:[#allocation11 + $0x40] sm:$0xff]
    %v2139 = vld [vmem:[#allocation11 + $0x48] sm:$0xff]
    %v2140 = vld [vmem:[#allocation11 + $0x50] sm:$0xff]
    %v2141 = vld [vmem:[#allocation11 + $0x58] sm:$0xff]
    %v2142 = vld [vmem:[#allocation11 + $0x60] sm:$0xff]
    %v2143 = vld [vmem:[#allocation11 + $0x68] sm:$0xff]
    %v2144 = vld [vmem:[#allocation11 + $0x70] sm:$0xff]
    %v2145 = vld [vmem:[#allocation11 + $0x78] sm:$0xff]
    %v2146 = vld [vmem:[#allocation11 + $0x80] sm:$0xff]
    %v2147 = vld [vmem:[#allocation11 + $0x88] sm:$0xff]
    %v2148 = vld [vmem:[#allocation11 + $0x90] sm:$0xff]
    %v2149 = vld [vmem:[#allocation11 + $0x98] sm:$0xff]
    %v2150 = vld [vmem:[#allocation11 + $0xa0] sm:$0xff]
    %v2151 = vld [vmem:[#allocation11 + $0xa8] sm:$0xff]
    %v2152 = vld [vmem:[#allocation11 + $0xb0] sm:$0xff]
    %v2153 = vld [vmem:[#allocation11 + $0xb8] sm:$0xff]
    %v2154 = vld [vmem:[#allocation11 + $0xc0] sm:$0xff]
    %v2155 = vld [vmem:[#allocation11 + $0xc8] sm:$0xff]
    %v2156 = vld [vmem:[#allocation11 + $0xd0] sm:$0xff]
    %v2157 = vld [vmem:[#allocation11 + $0xd8] sm:$0xff]
    %v2158 = vld [vmem:[#allocation11 + $0xe0] sm:$0xff]
    %v2159 = vld [vmem:[#allocation11 + $0xe8] sm:$0xff]
    %v2160 = vld [vmem:[#allocation11 + $0xf0] sm:$0xff]
    %v2161 = vld [vmem:[#allocation11 + $0xf8] sm:$0xff]
    %v2162 = vld [vmem:[#allocation11 + $0x100] sm:$0xff]
    %v2163 = vld [vmem:[#allocation11 + $0x108] sm:$0xff]
    %v2164 = vld [vmem:[#allocation11 + $0x110] sm:$0xff]
    %v2165 = vld [vmem:[#allocation11 + $0x118] sm:$0xff]
    %v2166 = vld [vmem:[#allocation11 + $0x120] sm:$0xff]
    %v2167 = vld [vmem:[#allocation11 + $0x128] sm:$0xff]
    %v2168 = vld [vmem:[#allocation11 + $0x130] sm:$0xff]
    %v2169 = vld [vmem:[#allocation11 + $0x138] sm:$0xff]
    %v2170 = vld [vmem:[#allocation11 + $0x140] sm:$0xff]
    %v2171 = vld [vmem:[#allocation11 + $0x148] sm:$0xff]
    %v2172 = vld [vmem:[#allocation11 + $0x150] sm:$0xff]
    %v2173 = vld [vmem:[#allocation11 + $0x158] sm:$0xff]
    %v2174 = vld [vmem:[#allocation11 + $0x160] sm:$0xff]
    %v2175 = vld [vmem:[#allocation11 + $0x168] sm:$0xff]
    %v2176 = vld [vmem:[#allocation11 + $0x170] sm:$0xff]
    %v2177 = vld [vmem:[#allocation11 + $0x178] sm:$0xff]
    %2178 = vmatprep.subr.mxu0 %v2131
    %2179 = vmatpush1.msra.mxu0 %v2130
    %2180 = vmatprep.subr.mxu0 %v2134
    %2181 = vmatpush1.msra.mxu0 %v2133
    %2182 = vmatprep.subr.mxu0 %v2137
    %2183 = vmatpush1.msra.mxu0 %v2136
    %2184 = vmatprep.subr.mxu0 %v2140
    %2185 = vmatpush1.msra.mxu0 %v2139
    %2186 = vmatprep.subr.mxu0 %v2143
    %2187 = vmatpush1.msra.mxu0 %v2142
    %2188 = vmatprep.subr.mxu0 %v2146
    %2189 = vmatpush1.msra.mxu0 %v2145
    %2190 = vmatprep.subr.mxu0 %v2149
    %2191 = vmatpush1.msra.mxu0 %v2148
    %2192 = vmatprep.subr.mxu0 %v2152
    %2193 = vmatpush1.msra.mxu0 %v2151
    %2194 = vmatprep.subr.mxu0 %v2155
    %2195 = vmatpush1.msra.mxu0 %v2154
    %2196 = vmatprep.subr.mxu0 %v2158
    %2197 = vmatpush1.msra.mxu0 %v2157
    %2198 = vmatprep.subr.mxu0 %v2161
    %2199 = vmatpush1.msra.mxu0 %v2160
    %2200 = vmatprep.subr.mxu0 %v2164
    %2201 = vmatpush1.msra.mxu0 %v2163
    %2202 = vmatprep.subr.mxu0 %v2167
    %2203 = vmatpush1.msra.mxu0 %v2166
    %2204 = vmatprep.subr.mxu0 %v2170
    %2205 = vmatpush1.msra.mxu0 %v2169
    %2206 = vmatprep.subr.mxu0 %v2173
    %2207 = vmatpush1.msra.mxu0 %v2172
    %2208 = vmatprep.subr.mxu0 %v2176
    %2209 = vmatpush1.msra.mxu0 %v2175
    %2210 = vmatprep.subr.mxu0 0.0
    %2211 = vmatpush1.msra.mxu0 0.0
    %2212 = vmatprep.subr.mxu0 0.0
    %2213 = vmatpush1.msra.mxu0 0.0
    %2214 = vmatprep.subr.mxu0 0.0
    %2215 = vmatpush1.msra.mxu0 0.0
    %2216 = vmatprep.subr.mxu0 0.0
    %2217 = vmatpush1.msra.mxu0 0.0
    %2218 = vmatprep.subr.mxu0 0.0
    %2219 = vmatpush1.msra.mxu0 0.0
    %2220 = vmatprep.subr.mxu0 0.0
    %2221 = vmatpush1.msra.mxu0 0.0
    %2222 = vmatprep.subr.mxu0 0.0
    %2223 = vmatpush1.msra.mxu0 0.0
    %2224 = vmatprep.subr.mxu0 0.0
    %2225 = vmatpush1.msra.mxu0 0.0
    %2226 = vmatprep.subr.mxu0 0.0
    %2227 = vmatpush1.msra.mxu0 0.0
    %2228 = vmatprep.subr.mxu0 0.0
    %2229 = vmatpush1.msra.mxu0 0.0
    %2230 = vmatprep.subr.mxu0 0.0
    %2231 = vmatpush1.msra.mxu0 0.0
    %2232 = vmatprep.subr.mxu0 0.0
    %2233 = vmatpush1.msra.mxu0 0.0
    %2234 = vmatprep.subr.mxu0 0.0
    %2235 = vmatpush1.msra.mxu0 0.0
    %2236 = vmatprep.subr.mxu0 0.0
    %2237 = vmatpush1.msra.mxu0 0.0
    %2238 = vmatprep.subr.mxu0 0.0
    %2239 = vmatpush1.msra.mxu0 0.0
    %2240 = vmatprep.subr.mxu0 0.0
    %2241 = vmatpush1.msra.mxu0 0.0
    %2242 = vmatprep.mubr.f32.mxu0 0.0
    %2243 = vmatmul.mubr.f32.gmra.mrb[0].mxu0 %v2122
    %v2244 = vpop.f32.mrb[0].mxu0
    %v2245 = vadd.f32 0.0, %v2244
    %v2246 = vpop.f32.mrb[0].mxu0
    %v2247 = vadd.f32 0.0, %v2246
    %2248 = vmatprep.mubr.f32.mxu0 0.0
    %2249 = vmatmul.mubr.f32.gmra.mrb[0].mxu0 %v2123
    %v2250 = vpop.f32.mrb[0].mxu0
    %v2251 = vadd.f32 0.0, %v2250
    %v2252 = vpop.f32.mrb[0].mxu0
    %v2253 = vadd.f32 0.0, %v2252
    %2254 = vmatprep.mubr.f32.mxu0 0.0
    %2255 = vmatmul.mubr.f32.gmra.mrb[0].mxu0 %v2124
    %v2256 = vpop.f32.mrb[0].mxu0
    %v2257 = vadd.f32 0.0, %v2256
    %v2258 = vpop.f32.mrb[0].mxu0
    %v2259 = vadd.f32 0.0, %v2258
    %2260 = vmatprep.mubr.f32.mxu0 0.0
    %2261 = vmatmul.mubr.f32.gmra.mrb[0].mxu0 %v2125
    %v2262 = vpop.f32.mrb[0].mxu0
    %v2263 = vadd.f32 0.0, %v2262
    %v2264 = vpop.f32.mrb[0].mxu0
    %v2265 = vadd.f32 0.0, %v2264
    %2266 = vmatprep.mubr.f32.mxu0 0.0
    %2267 = vmatmul.mubr.f32.gmra.mrb[0].mxu0 %v2126
    %v2268 = vpop.f32.mrb[0].mxu0
    %v2269 = vadd.f32 0.0, %v2268
    %v2270 = vpop.f32.mrb[0].mxu0
    %v2271 = vadd.f32 0.0, %v2270
    %2272 = vmatprep.mubr.f32.mxu0 0.0
    %2273 = vmatmul.mubr.f32.gmra.mrb[0].mxu0 %v2127
    %v2274 = vpop.f32.mrb[0].mxu0
    %v2275 = vadd.f32 0.0, %v2274
    %v2276 = vpop.f32.mrb[0].mxu0
    %v2277 = vadd.f32 0.0, %v2276
    %2278 = vmatprep.mubr.f32.mxu0 0.0
    %2279 = vmatmul.mubr.f32.gmra.mrb[0].mxu0 %v2128
    %v2280 = vpop.f32.mrb[0].mxu0
    %v2281 = vadd.f32 0.0, %v2280
    %v2282 = vpop.f32.mrb[0].mxu0
    %v2283 = vadd.f32 0.0, %v2282
    %2284 = vmatprep.mubr.f32.mxu0 0.0
    %2285 = vmatmul.mubr.f32.gmra.mrb[0].mxu0 %v2129
    %v2286 = vpop.f32.mrb[0].mxu0
    %v2287 = vadd.f32 0.0, %v2286
    %v2288 = vpop.f32.mrb[0].mxu0
    %v2289 = vadd.f32 0.0, %v2288
    %2290 = vdwg.mxu0
    %2291 = vmatprep.subr.mxu0 0.0
    %2292 = vmatpush1.msra.mxu0 %v2132
    %2293 = vmatprep.subr.mxu0 0.0
    %2294 = vmatpush1.msra.mxu0 %v2135
    %2295 = vmatprep.subr.mxu0 0.0
    %2296 = vmatpush1.msra.mxu0 %v2138
    %2297 = vmatprep.subr.mxu0 0.0
    %2298 = vmatpush1.msra.mxu0 %v2141
    %2299 = vmatprep.subr.mxu0 0.0
    %2300 = vmatpush1.msra.mxu0 %v2144
    %2301 = vmatprep.subr.mxu0 0.0
    %2302 = vmatpush1.msra.mxu0 %v2147
    %2303 = vmatprep.subr.mxu0 0.0
    %2304 = vmatpush1.msra.mxu0 %v2150
    %2305 = vmatprep.subr.mxu0 0.0
    %2306 = vmatpush1.msra.mxu0 %v2153
    %2307 = vmatprep.subr.mxu0 0.0
    %2308 = vmatpush1.msra.mxu0 %v2156
    %2309 = vmatprep.subr.mxu0 0.0
    %2310 = vmatpush1.msra.mxu0 %v2159
    %2311 = vmatprep.subr.mxu0 0.0
    %2312 = vmatpush1.msra.mxu0 %v2162
    %2313 = vmatprep.subr.mxu0 0.0
    %2314 = vmatpush1.msra.mxu0 %v2165
    %2315 = vmatprep.subr.mxu0 0.0
    %2316 = vmatpush1.msra.mxu0 %v2168
    %2317 = vmatprep.subr.mxu0 0.0
    %2318 = vmatpush1.msra.mxu0 %v2171
    %2319 = vmatprep.subr.mxu0 0.0
    %2320 = vmatpush1.msra.mxu0 %v2174
    %2321 = vmatprep.subr.mxu0 0.0
    %2322 = vmatpush1.msra.mxu0 %v2177
    %2323 = vmatprep.subr.mxu0 0.0
    %2324 = vmatpush1.msra.mxu0 0.0
    %2325 = vmatprep.subr.mxu0 0.0
    %2326 = vmatpush1.msra.mxu0 0.0
    %2327 = vmatprep.subr.mxu0 0.0
    %2328 = vmatpush1.msra.mxu0 0.0
    %2329 = vmatprep.subr.mxu0 0.0
    %2330 = vmatpush1.msra.mxu0 0.0
    %2331 = vmatprep.subr.mxu0 0.0
    %2332 = vmatpush1.msra.mxu0 0.0
    %2333 = vmatprep.subr.mxu0 0.0
    %2334 = vmatpush1.msra.mxu0 0.0
    %2335 = vmatprep.subr.mxu0 0.0
    %2336 = vmatpush1.msra.mxu0 0.0
    %2337 = vmatprep.subr.mxu0 0.0
    %2338 = vmatpush1.msra.mxu0 0.0
    %2339 = vmatprep.subr.mxu0 0.0
    %2340 = vmatpush1.msra.mxu0 0.0
    %2341 = vmatprep.subr.mxu0 0.0
    %2342 = vmatpush1.msra.mxu0 0.0
    %2343 = vmatprep.subr.mxu0 0.0
    %2344 = vmatpush1.msra.mxu0 0.0
    %2345 = vmatprep.subr.mxu0 0.0
    %2346 = vmatpush1.msra.mxu0 0.0
    %2347 = vmatprep.subr.mxu0 0.0
    %2348 = vmatpush1.msra.mxu0 0.0
    %2349 = vmatprep.subr.mxu0 0.0
    %2350 = vmatpush1.msra.mxu0 0.0
    %2351 = vmatprep.subr.mxu0 0.0
    %2352 = vmatpush1.msra.mxu0 0.0
    %2353 = vmatprep.subr.mxu0 0.0
    %2354 = vmatpush1.msra.mxu0 0.0
    %2355 = vmatprep.mubr.f32.mxu0 0.0
    %2356 = vmatmul.mubr.f32.gmra.mrb[0].mxu0 %v2122
    %v2357 = vpop.f32.mrb[0].mxu0
    %v2358 = vadd.f32 0.0, %v2357
    %v2359 = vpop.f32.mrb[0].mxu0
    %2360 = vmatprep.mubr.f32.mxu0 0.0
    %2361 = vmatmul.mubr.f32.gmra.mrb[0].mxu0 %v2123
    %v2362 = vpop.f32.mrb[0].mxu0
    %v2363 = vadd.f32 0.0, %v2362
    %v2364 = vpop.f32.mrb[0].mxu0
    %2365 = vmatprep.mubr.f32.mxu0 0.0
    %2366 = vmatmul.mubr.f32.gmra.mrb[0].mxu0 %v2124
    %v2367 = vpop.f32.mrb[0].mxu0
    %v2368 = vadd.f32 0.0, %v2367
    %v2369 = vpop.f32.mrb[0].mxu0
    %2370 = vmatprep.mubr.f32.mxu0 0.0
    %2371 = vmatmul.mubr.f32.gmra.mrb[0].mxu0 %v2125
    %v2372 = vpop.f32.mrb[0].mxu0
    %v2373 = vadd.f32 0.0, %v2372
    %v2374 = vpop.f32.mrb[0].mxu0
    %2375 = vmatprep.mubr.f32.mxu0 0.0
    %2376 = vmatmul.mubr.f32.gmra.mrb[0].mxu0 %v2126
    %v2377 = vpop.f32.mrb[0].mxu0
    %v2378 = vadd.f32 0.0, %v2377
    %v2379 = vpop.f32.mrb[0].mxu0
    %2380 = vmatprep.mubr.f32.mxu0 0.0
    %2381 = vmatmul.mubr.f32.gmra.mrb[0].mxu0 %v2127
    %v2382 = vpop.f32.mrb[0].mxu0
    %v2383 = vadd.f32 0.0, %v2382
    %v2384 = vpop.f32.mrb[0].mxu0
    %2385 = vmatprep.mubr.f32.mxu0 0.0
    %2386 = vmatmul.mubr.f32.gmra.mrb[0].mxu0 %v2128
    %v2387 = vpop.f32.mrb[0].mxu0
    %v2388 = vadd.f32 0.0, %v2387
    %v2389 = vpop.f32.mrb[0].mxu0
    %2390 = vmatprep.mubr.f32.mxu0 0.0
    %2391 = vmatmul.mubr.f32.gmra.mrb[0].mxu0 %v2129
    %v2392 = vpop.f32.mrb[0].mxu0
    %v2393 = vadd.f32 0.0, %v2392
    %v2394 = vpop.f32.mrb[0].mxu0
    %2395 = vdwg.mxu0
    %2396 = vst [vmem:[#allocation2] sm:$0xff] %v2245
    %2397 = vst [vmem:[#allocation2 + $0x8] sm:$0xff] %v2247
    %2398 = vst [vmem:[#allocation2 + $0x10] sm:$0xff] %v2358
    %2399 = vst [vmem:[#allocation2 + $0x18] sm:$0xff] %v2251
    %2400 = vst [vmem:[#allocation2 + $0x20] sm:$0xff] %v2253
    %2401 = vst [vmem:[#allocation2 + $0x28] sm:$0xff] %v2363
    %2402 = vst [vmem:[#allocation2 + $0x30] sm:$0xff] %v2257
    %2403 = vst [vmem:[#allocation2 + $0x38] sm:$0xff] %v2259
    %2404 = vst [vmem:[#allocation2 + $0x40] sm:$0xff] %v2368
    %2405 = vst [vmem:[#allocation2 + $0x48] sm:$0xff] %v2263
    %2406 = vst [vmem:[#allocation2 + $0x50] sm:$0xff] %v2265
    %2407 = vst [vmem:[#allocation2 + $0x58] sm:$0xff] %v2373
    %2408 = vst [vmem:[#allocation2 + $0x60] sm:$0xff] %v2269
    %2409 = vst [vmem:[#allocation2 + $0x68] sm:$0xff] %v2271
    %2410 = vst [vmem:[#allocation2 + $0x70] sm:$0xff] %v2378
    %2411 = vst [vmem:[#allocation2 + $0x78] sm:$0xff] %v2275
    %2412 = vst [vmem:[#allocation2 + $0x80] sm:$0xff] %v2277
    %2413 = vst [vmem:[#allocation2 + $0x88] sm:$0xff] %v2383
    %2414 = vst [vmem:[#allocation2 + $0x90] sm:$0xff] %v2281
    %2415 = vst [vmem:[#allocation2 + $0x98] sm:$0xff] %v2283
    %2416 = vst [vmem:[#allocation2 + $0xa0] sm:$0xff] %v2388
    %2417 = vst [vmem:[#allocation2 + $0xa8] sm:$0xff] %v2287
    %2418 = vst [vmem:[#allocation2 + $0xb0] sm:$0xff] %v2289
    %2419 = vst [vmem:[#allocation2 + $0xb8] sm:$0xff] %v2393
    %s2420 = scalar_lea.vmem [#allocation6], 8
    %v2421 = vld [vmem:[%s2420] sm:$0xff]
    %v2422 = vld [vmem:[#allocation2] sm:$0xff]
    %v2423 = vld [vmem:[#allocation2 + $0x8] sm:$0xff]
    %v2424 = vld [vmem:[#allocation2 + $0x10] sm:$0xff]
    %v2425 = vld [vmem:[#allocation12] sm:$0xff]
    %v2426 = vld [vmem:[#allocation12 + $0x8] sm:$0xff]
    %v2427 = vld [vmem:[#allocation12 + $0x10] sm:$0xff]
    %v2428 = vld [vmem:[#allocation12 + $0x18] sm:$0xff]
    %v2429 = vld [vmem:[#allocation12 + $0x20] sm:$0xff]
    %v2430 = vld [vmem:[#allocation12 + $0x28] sm:$0xff]
    %v2431 = vld [vmem:[#allocation12 + $0x30] sm:$0xff]
    %v2432 = vld [vmem:[#allocation12 + $0x38] sm:$0xff]
    %v2433 = vld [vmem:[#allocation12 + $0x40] sm:$0xff]
    %v2434 = vld [vmem:[#allocation12 + $0x48] sm:$0xff]
    %v2435 = vld [vmem:[#allocation12 + $0x50] sm:$0xff]
    %v2436 = vld [vmem:[#allocation12 + $0x58] sm:$0xff]
    %v2437 = vld [vmem:[#allocation12 + $0x60] sm:$0xff]
    %v2438 = vld [vmem:[#allocation12 + $0x68] sm:$0xff]
    %v2439 = vld [vmem:[#allocation12 + $0x70] sm:$0xff]
    %v2440 = vld [vmem:[#allocation12 + $0x78] sm:$0xff]
    %v2441 = vld [vmem:[#allocation12 + $0x80] sm:$0xff]
    %v2442 = vld [vmem:[#allocation12 + $0x88] sm:$0xff]
    %v2443 = vld [vmem:[#allocation12 + $0x90] sm:$0xff]
    %v2444 = vld [vmem:[#allocation12 + $0x98] sm:$0xff]
    %v2445 = vld [vmem:[#allocation12 + $0xa0] sm:$0xff]
    %v2446 = vld [vmem:[#allocation12 + $0xa8] sm:$0xff]
    %v2447 = vld [vmem:[#allocation12 + $0xb0] sm:$0xff]
    %v2448 = vld [vmem:[#allocation12 + $0xb8] sm:$0xff]
    %v2449 = vld [vmem:[#allocation12 + $0xc0] sm:$0xff]
    %v2450 = vld [vmem:[#allocation12 + $0xc8] sm:$0xff]
    %v2451 = vld [vmem:[#allocation12 + $0xd0] sm:$0xff]
    %v2452 = vld [vmem:[#allocation12 + $0xd8] sm:$0xff]
    %v2453 = vld [vmem:[#allocation12 + $0xe0] sm:$0xff]
    %v2454 = vld [vmem:[#allocation12 + $0xe8] sm:$0xff]
    %v2455 = vld [vmem:[#allocation12 + $0xf0] sm:$0xff]
    %v2456 = vld [vmem:[#allocation12 + $0xf8] sm:$0xff]
    %v2457 = vld [vmem:[#allocation12 + $0x100] sm:$0xff]
    %v2458 = vld [vmem:[#allocation12 + $0x108] sm:$0xff]
    %v2459 = vld [vmem:[#allocation12 + $0x110] sm:$0xff]
    %v2460 = vld [vmem:[#allocation12 + $0x118] sm:$0xff]
    %v2461 = vld [vmem:[#allocation12 + $0x120] sm:$0xff]
    %v2462 = vld [vmem:[#allocation12 + $0x128] sm:$0xff]
    %v2463 = vld [vmem:[#allocation12 + $0x130] sm:$0xff]
    %v2464 = vld [vmem:[#allocation12 + $0x138] sm:$0xff]
    %v2465 = vld [vmem:[#allocation12 + $0x140] sm:$0xff]
    %v2466 = vld [vmem:[#allocation12 + $0x148] sm:$0xff]
    %v2467 = vld [vmem:[#allocation12 + $0x150] sm:$0xff]
    %v2468 = vld [vmem:[#allocation12 + $0x158] sm:$0xff]
    %v2469 = vld [vmem:[#allocation12 + $0x160] sm:$0xff]
    %v2470 = vld [vmem:[#allocation12 + $0x168] sm:$0xff]
    %v2471 = vld [vmem:[#allocation12 + $0x170] sm:$0xff]
    %v2472 = vld [vmem:[#allocation12 + $0x178] sm:$0xff]
    %2473 = vmatprep.subr.mxu0 %v2426
    %2474 = vmatpush1.msra.mxu0 %v2425
    %2475 = vmatprep.subr.mxu0 %v2429
    %2476 = vmatpush1.msra.mxu0 %v2428
    %2477 = vmatprep.subr.mxu0 %v2432
    %2478 = vmatpush1.msra.mxu0 %v2431
    %2479 = vmatprep.subr.mxu0 %v2435
    %2480 = vmatpush1.msra.mxu0 %v2434
    %2481 = vmatprep.subr.mxu0 %v2438
    %2482 = vmatpush1.msra.mxu0 %v2437
    %2483 = vmatprep.subr.mxu0 %v2441
    %2484 = vmatpush1.msra.mxu0 %v2440
    %2485 = vmatprep.subr.mxu0 %v2444
    %2486 = vmatpush1.msra.mxu0 %v2443
    %2487 = vmatprep.subr.mxu0 %v2447
    %2488 = vmatpush1.msra.mxu0 %v2446
    %2489 = vmatprep.subr.mxu0 %v2450
    %2490 = vmatpush1.msra.mxu0 %v2449
    %2491 = vmatprep.subr.mxu0 %v2453
    %2492 = vmatpush1.msra.mxu0 %v2452
    %2493 = vmatprep.subr.mxu0 %v2456
    %2494 = vmatpush1.msra.mxu0 %v2455
    %2495 = vmatprep.subr.mxu0 %v2459
    %2496 = vmatpush1.msra.mxu0 %v2458
    %2497 = vmatprep.subr.mxu0 %v2462
    %2498 = vmatpush1.msra.mxu0 %v2461
    %2499 = vmatprep.subr.mxu0 %v2465
    %2500 = vmatpush1.msra.mxu0 %v2464
    %2501 = vmatprep.subr.mxu0 %v2468
    %2502 = vmatpush1.msra.mxu0 %v2467
    %2503 = vmatprep.subr.mxu0 %v2471
    %2504 = vmatpush1.msra.mxu0 %v2470
    %2505 = vmatprep.subr.mxu0 0.0
    %2506 = vmatpush1.msra.mxu0 0.0
    %2507 = vmatprep.subr.mxu0 0.0
    %2508 = vmatpush1.msra.mxu0 0.0
    %2509 = vmatprep.subr.mxu0 0.0
    %2510 = vmatpush1.msra.mxu0 0.0
    %2511 = vmatprep.subr.mxu0 0.0
    %2512 = vmatpush1.msra.mxu0 0.0
    %2513 = vmatprep.subr.mxu0 0.0
    %2514 = vmatpush1.msra.mxu0 0.0
    %2515 = vmatprep.subr.mxu0 0.0
    %2516 = vmatpush1.msra.mxu0 0.0
    %2517 = vmatprep.subr.mxu0 0.0
    %2518 = vmatpush1.msra.mxu0 0.0
    %2519 = vmatprep.subr.mxu0 0.0
    %2520 = vmatpush1.msra.mxu0 0.0
    %2521 = vmatprep.subr.mxu0 0.0
    %2522 = vmatpush1.msra.mxu0 0.0
    %2523 = vmatprep.subr.mxu0 0.0
    %2524 = vmatpush1.msra.mxu0 0.0
    %2525 = vmatprep.subr.mxu0 0.0
    %2526 = vmatpush1.msra.mxu0 0.0
    %2527 = vmatprep.subr.mxu0 0.0
    %2528 = vmatpush1.msra.mxu0 0.0
    %2529 = vmatprep.subr.mxu0 0.0
    %2530 = vmatpush1.msra.mxu0 0.0
    %2531 = vmatprep.subr.mxu0 0.0
    %2532 = vmatpush1.msra.mxu0 0.0
    %2533 = vmatprep.subr.mxu0 0.0
    %2534 = vmatpush1.msra.mxu0 0.0
    %2535 = vmatprep.subr.mxu0 0.0
    %2536 = vmatpush1.msra.mxu0 0.0
    %2537 = vmatprep.mubr.f32.mxu0 0.0
    %2538 = vmatmul.mubr.f32.gmra.mrb[0].mxu0 %v2421
    %v2539 = vpop.f32.mrb[0].mxu0
    %v2540 = vadd.f32 0.0, %v2539
    %v2541 = vpop.f32.mrb[0].mxu0
    %v2542 = vadd.f32 0.0, %v2541
    %2543 = vdwg.mxu0
    %2544 = vmatprep.subr.mxu0 0.0
    %2545 = vmatpush1.msra.mxu0 %v2427
    %2546 = vmatprep.subr.mxu0 0.0
    %2547 = vmatpush1.msra.mxu0 %v2430
    %2548 = vmatprep.subr.mxu0 0.0
    %2549 = vmatpush1.msra.mxu0 %v2433
    %2550 = vmatprep.subr.mxu0 0.0
    %2551 = vmatpush1.msra.mxu0 %v2436
    %2552 = vmatprep.subr.mxu0 0.0
    %2553 = vmatpush1.msra.mxu0 %v2439
    %2554 = vmatprep.subr.mxu0 0.0
    %2555 = vmatpush1.msra.mxu0 %v2442
    %2556 = vmatprep.subr.mxu0 0.0
    %2557 = vmatpush1.msra.mxu0 %v2445
    %2558 = vmatprep.subr.mxu0 0.0
    %2559 = vmatpush1.msra.mxu0 %v2448
    %2560 = vmatprep.subr.mxu0 0.0
    %2561 = vmatpush1.msra.mxu0 %v2451
    %2562 = vmatprep.subr.mxu0 0.0
    %2563 = vmatpush1.msra.mxu0 %v2454
    %2564 = vmatprep.subr.mxu0 0.0
    %2565 = vmatpush1.msra.mxu0 %v2457
    %2566 = vmatprep.subr.mxu0 0.0
    %2567 = vmatpush1.msra.mxu0 %v2460
    %2568 = vmatprep.subr.mxu0 0.0
    %2569 = vmatpush1.msra.mxu0 %v2463
    %2570 = vmatprep.subr.mxu0 0.0
    %2571 = vmatpush1.msra.mxu0 %v2466
    %2572 = vmatprep.subr.mxu0 0.0
    %2573 = vmatpush1.msra.mxu0 %v2469
    %2574 = vmatprep.subr.mxu0 0.0
    %2575 = vmatpush1.msra.mxu0 %v2472
    %2576 = vmatprep.subr.mxu0 0.0
    %2577 = vmatpush1.msra.mxu0 0.0
    %2578 = vmatprep.subr.mxu0 0.0
    %2579 = vmatpush1.msra.mxu0 0.0
    %2580 = vmatprep.subr.mxu0 0.0
    %2581 = vmatpush1.msra.mxu0 0.0
    %2582 = vmatprep.subr.mxu0 0.0
    %2583 = vmatpush1.msra.mxu0 0.0
    %2584 = vmatprep.subr.mxu0 0.0
    %2585 = vmatpush1.msra.mxu0 0.0
    %2586 = vmatprep.subr.mxu0 0.0
    %2587 = vmatpush1.msra.mxu0 0.0
    %2588 = vmatprep.subr.mxu0 0.0
    %2589 = vmatpush1.msra.mxu0 0.0
    %2590 = vmatprep.subr.mxu0 0.0
    %2591 = vmatpush1.msra.mxu0 0.0
    %2592 = vmatprep.subr.mxu0 0.0
    %2593 = vmatpush1.msra.mxu0 0.0
    %2594 = vmatprep.subr.mxu0 0.0
    %2595 = vmatpush1.msra.mxu0 0.0
    %2596 = vmatprep.subr.mxu0 0.0
    %2597 = vmatpush1.msra.mxu0 0.0
    %2598 = vmatprep.subr.mxu0 0.0
    %2599 = vmatpush1.msra.mxu0 0.0
    %2600 = vmatprep.subr.mxu0 0.0
    %2601 = vmatpush1.msra.mxu0 0.0
    %2602 = vmatprep.subr.mxu0 0.0
    %2603 = vmatpush1.msra.mxu0 0.0
    %2604 = vmatprep.subr.mxu0 0.0
    %2605 = vmatpush1.msra.mxu0 0.0
    %2606 = vmatprep.subr.mxu0 0.0
    %2607 = vmatpush1.msra.mxu0 0.0
    %2608 = vmatprep.mubr.f32.mxu0 0.0
    %2609 = vmatmul.mubr.f32.gmra.mrb[0].mxu0 %v2421
    %v2610 = vpop.f32.mrb[0].mxu0
    %v2611 = vadd.f32 0.0, %v2610
    %v2612 = vpop.f32.mrb[0].mxu0
    %2613 = vdwg.mxu0
    %v2614 = vadd.f32 %v2422, %v2540
    %v2615 = vxor.u32 %v2614, 2147483648
    %v2616 = vmul.f32 %v2615, 1.442695
    %v2617 = vpow.pop %v2616
    %v2618 = vadd.f32 %v2617, 1.0
    %v2619 = vrcp.pop %v2618
    %v2620 = vmul.f32 1.0, %v2619
    %v2621 = vadd.f32 %v2423, %v2542
    %v2622 = vxor.u32 %v2621, 2147483648
    %v2623 = vmul.f32 %v2622, 1.442695
    %v2624 = vpow.pop %v2623
    %v2625 = vadd.f32 %v2624, 1.0
    %v2626 = vrcp.pop %v2625
    %v2627 = vmul.f32 1.0, %v2626
    %v2628 = vmul.f32 %v2620, %v2611
    %v2629 = vadd.f32 %v2424, %v2628
    %v2630 = vtanh.pop %v2629
    %v2631 = vsub.f32 1.0, %v2627
    %v2632 = vmul.f32 %v2631, %v2630
    %v2633 = vmul.f32 %v2627, %v2421
    %v2634 = vadd.f32 %v2632, %v2633
    %2635 = vst [vmem:[#allocation14] sm:$0xff] %v2634
    %v2636 = vld [vmem:[%s609] sm:$0xff]
    %v2637 = vld [vmem:[%s609 + $0x8] sm:$0xff]
    %v2638 = vld [vmem:[%s609 + $0x10] sm:$0xff]
    %v2639 = vld [vmem:[#allocation12] sm:$0xff]
    %v2640 = vld [vmem:[#allocation12 + $0x8] sm:$0xff]
    %v2641 = vld [vmem:[#allocation12 + $0x10] sm:$0xff]
    %v2642 = vld [vmem:[#allocation12 + $0x18] sm:$0xff]
    %v2643 = vld [vmem:[#allocation12 + $0x20] sm:$0xff]
    %v2644 = vld [vmem:[#allocation12 + $0x28] sm:$0xff]
    %v2645 = vld [vmem:[#allocation12 + $0x30] sm:$0xff]
    %v2646 = vld [vmem:[#allocation12 + $0x38] sm:$0xff]
    %v2647 = vld [vmem:[#allocation12 + $0x40] sm:$0xff]
    %v2648 = vld [vmem:[#allocation12 + $0x48] sm:$0xff]
    %v2649 = vld [vmem:[#allocation12 + $0x50] sm:$0xff]
    %v2650 = vld [vmem:[#allocation12 + $0x58] sm:$0xff]
    %v2651 = vld [vmem:[#allocation12 + $0x60] sm:$0xff]
    %v2652 = vld [vmem:[#allocation12 + $0x68] sm:$0xff]
    %v2653 = vld [vmem:[#allocation12 + $0x70] sm:$0xff]
    %v2654 = vld [vmem:[#allocation12 + $0x78] sm:$0xff]
    %v2655 = vld [vmem:[#allocation12 + $0x80] sm:$0xff]
    %v2656 = vld [vmem:[#allocation12 + $0x88] sm:$0xff]
    %v2657 = vld [vmem:[#allocation12 + $0x90] sm:$0xff]
    %v2658 = vld [vmem:[#allocation12 + $0x98] sm:$0xff]
    %v2659 = vld [vmem:[#allocation12 + $0xa0] sm:$0xff]
    %v2660 = vld [vmem:[#allocation12 + $0xa8] sm:$0xff]
    %v2661 = vld [vmem:[#allocation12 + $0xb0] sm:$0xff]
    %v2662 = vld [vmem:[#allocation12 + $0xb8] sm:$0xff]
    %v2663 = vld [vmem:[#allocation12 + $0xc0] sm:$0xff]
    %v2664 = vld [vmem:[#allocation12 + $0xc8] sm:$0xff]
    %v2665 = vld [vmem:[#allocation12 + $0xd0] sm:$0xff]
    %v2666 = vld [vmem:[#allocation12 + $0xd8] sm:$0xff]
    %v2667 = vld [vmem:[#allocation12 + $0xe0] sm:$0xff]
    %v2668 = vld [vmem:[#allocation12 + $0xe8] sm:$0xff]
    %v2669 = vld [vmem:[#allocation12 + $0xf0] sm:$0xff]
    %v2670 = vld [vmem:[#allocation12 + $0xf8] sm:$0xff]
    %v2671 = vld [vmem:[#allocation12 + $0x100] sm:$0xff]
    %v2672 = vld [vmem:[#allocation12 + $0x108] sm:$0xff]
    %v2673 = vld [vmem:[#allocation12 + $0x110] sm:$0xff]
    %v2674 = vld [vmem:[#allocation12 + $0x118] sm:$0xff]
    %v2675 = vld [vmem:[#allocation12 + $0x120] sm:$0xff]
    %v2676 = vld [vmem:[#allocation12 + $0x128] sm:$0xff]
    %v2677 = vld [vmem:[#allocation12 + $0x130] sm:$0xff]
    %v2678 = vld [vmem:[#allocation12 + $0x138] sm:$0xff]
    %v2679 = vld [vmem:[#allocation12 + $0x140] sm:$0xff]
    %v2680 = vld [vmem:[#allocation12 + $0x148] sm:$0xff]
    %v2681 = vld [vmem:[#allocation12 + $0x150] sm:$0xff]
    %v2682 = vld [vmem:[#allocation12 + $0x158] sm:$0xff]
    %v2683 = vld [vmem:[#allocation12 + $0x160] sm:$0xff]
    %v2684 = vld [vmem:[#allocation12 + $0x168] sm:$0xff]
    %v2685 = vld [vmem:[#allocation12 + $0x170] sm:$0xff]
    %v2686 = vld [vmem:[#allocation12 + $0x178] sm:$0xff]
    %2687 = vmatprep.subr.mxu0 %v2640
    %2688 = vmatpush1.msra.mxu0 %v2639
    %2689 = vmatprep.subr.mxu0 %v2643
    %2690 = vmatpush1.msra.mxu0 %v2642
    %2691 = vmatprep.subr.mxu0 %v2646
    %2692 = vmatpush1.msra.mxu0 %v2645
    %2693 = vmatprep.subr.mxu0 %v2649
    %2694 = vmatpush1.msra.mxu0 %v2648
    %2695 = vmatprep.subr.mxu0 %v2652
    %2696 = vmatpush1.msra.mxu0 %v2651
    %2697 = vmatprep.subr.mxu0 %v2655
    %2698 = vmatpush1.msra.mxu0 %v2654
    %2699 = vmatprep.subr.mxu0 %v2658
    %2700 = vmatpush1.msra.mxu0 %v2657
    %2701 = vmatprep.subr.mxu0 %v2661
    %2702 = vmatpush1.msra.mxu0 %v2660
    %2703 = vmatprep.subr.mxu0 %v2664
    %2704 = vmatpush1.msra.mxu0 %v2663
    %2705 = vmatprep.subr.mxu0 %v2667
    %2706 = vmatpush1.msra.mxu0 %v2666
    %2707 = vmatprep.subr.mxu0 %v2670
    %2708 = vmatpush1.msra.mxu0 %v2669
    %2709 = vmatprep.subr.mxu0 %v2673
    %2710 = vmatpush1.msra.mxu0 %v2672
    %2711 = vmatprep.subr.mxu0 %v2676
    %2712 = vmatpush1.msra.mxu0 %v2675
    %2713 = vmatprep.subr.mxu0 %v2679
    %2714 = vmatpush1.msra.mxu0 %v2678
    %2715 = vmatprep.subr.mxu0 %v2682
    %2716 = vmatpush1.msra.mxu0 %v2681
    %2717 = vmatprep.subr.mxu0 %v2685
    %2718 = vmatpush1.msra.mxu0 %v2684
    %2719 = vmatprep.subr.mxu0 0.0
    %2720 = vmatpush1.msra.mxu0 0.0
    %2721 = vmatprep.subr.mxu0 0.0
    %2722 = vmatpush1.msra.mxu0 0.0
    %2723 = vmatprep.subr.mxu0 0.0
    %2724 = vmatpush1.msra.mxu0 0.0
    %2725 = vmatprep.subr.mxu0 0.0
    %2726 = vmatpush1.msra.mxu0 0.0
    %2727 = vmatprep.subr.mxu0 0.0
    %2728 = vmatpush1.msra.mxu0 0.0
    %2729 = vmatprep.subr.mxu0 0.0
    %2730 = vmatpush1.msra.mxu0 0.0
    %2731 = vmatprep.subr.mxu0 0.0
    %2732 = vmatpush1.msra.mxu0 0.0
    %2733 = vmatprep.subr.mxu0 0.0
    %2734 = vmatpush1.msra.mxu0 0.0
    %2735 = vmatprep.subr.mxu0 0.0
    %2736 = vmatpush1.msra.mxu0 0.0
    %2737 = vmatprep.subr.mxu0 0.0
    %2738 = vmatpush1.msra.mxu0 0.0
    %2739 = vmatprep.subr.mxu0 0.0
    %2740 = vmatpush1.msra.mxu0 0.0
    %2741 = vmatprep.subr.mxu0 0.0
    %2742 = vmatpush1.msra.mxu0 0.0
    %2743 = vmatprep.subr.mxu0 0.0
    %2744 = vmatpush1.msra.mxu0 0.0
    %2745 = vmatprep.subr.mxu0 0.0
    %2746 = vmatpush1.msra.mxu0 0.0
    %2747 = vmatprep.subr.mxu0 0.0
    %2748 = vmatpush1.msra.mxu0 0.0
    %2749 = vmatprep.subr.mxu0 0.0
    %2750 = vmatpush1.msra.mxu0 0.0
    %2751 = vmatprep.mubr.f32.mxu0 0.0
    %2752 = vmatmul.mubr.f32.gmra.mrb[0].mxu0 %v2634
    %v2753 = vpop.f32.mrb[0].mxu0
    %v2754 = vadd.f32 0.0, %v2753
    %v2755 = vpop.f32.mrb[0].mxu0
    %v2756 = vadd.f32 0.0, %v2755
    %2757 = vdwg.mxu0
    %2758 = vmatprep.subr.mxu0 0.0
    %2759 = vmatpush1.msra.mxu0 %v2641
    %2760 = vmatprep.subr.mxu0 0.0
    %2761 = vmatpush1.msra.mxu0 %v2644
    %2762 = vmatprep.subr.mxu0 0.0
    %2763 = vmatpush1.msra.mxu0 %v2647
    %2764 = vmatprep.subr.mxu0 0.0
    %2765 = vmatpush1.msra.mxu0 %v2650
    %2766 = vmatprep.subr.mxu0 0.0
    %2767 = vmatpush1.msra.mxu0 %v2653
    %2768 = vmatprep.subr.mxu0 0.0
    %2769 = vmatpush1.msra.mxu0 %v2656
    %2770 = vmatprep.subr.mxu0 0.0
    %2771 = vmatpush1.msra.mxu0 %v2659
    %2772 = vmatprep.subr.mxu0 0.0
    %2773 = vmatpush1.msra.mxu0 %v2662
    %2774 = vmatprep.subr.mxu0 0.0
    %2775 = vmatpush1.msra.mxu0 %v2665
    %2776 = vmatprep.subr.mxu0 0.0
    %2777 = vmatpush1.msra.mxu0 %v2668
    %2778 = vmatprep.subr.mxu0 0.0
    %2779 = vmatpush1.msra.mxu0 %v2671
    %2780 = vmatprep.subr.mxu0 0.0
    %2781 = vmatpush1.msra.mxu0 %v2674
    %2782 = vmatprep.subr.mxu0 0.0
    %2783 = vmatpush1.msra.mxu0 %v2677
    %2784 = vmatprep.subr.mxu0 0.0
    %2785 = vmatpush1.msra.mxu0 %v2680
    %2786 = vmatprep.subr.mxu0 0.0
    %2787 = vmatpush1.msra.mxu0 %v2683
    %2788 = vmatprep.subr.mxu0 0.0
    %2789 = vmatpush1.msra.mxu0 %v2686
    %2790 = vmatprep.subr.mxu0 0.0
    %2791 = vmatpush1.msra.mxu0 0.0
    %2792 = vmatprep.subr.mxu0 0.0
    %2793 = vmatpush1.msra.mxu0 0.0
    %2794 = vmatprep.subr.mxu0 0.0
    %2795 = vmatpush1.msra.mxu0 0.0
    %2796 = vmatprep.subr.mxu0 0.0
    %2797 = vmatpush1.msra.mxu0 0.0
    %2798 = vmatprep.subr.mxu0 0.0
    %2799 = vmatpush1.msra.mxu0 0.0
    %2800 = vmatprep.subr.mxu0 0.0
    %2801 = vmatpush1.msra.mxu0 0.0
    %2802 = vmatprep.subr.mxu0 0.0
    %2803 = vmatpush1.msra.mxu0 0.0
    %2804 = vmatprep.subr.mxu0 0.0
    %2805 = vmatpush1.msra.mxu0 0.0
    %2806 = vmatprep.subr.mxu0 0.0
    %2807 = vmatpush1.msra.mxu0 0.0
    %2808 = vmatprep.subr.mxu0 0.0
    %2809 = vmatpush1.msra.mxu0 0.0
    %2810 = vmatprep.subr.mxu0 0.0
    %2811 = vmatpush1.msra.mxu0 0.0
    %2812 = vmatprep.subr.mxu0 0.0
    %2813 = vmatpush1.msra.mxu0 0.0
    %2814 = vmatprep.subr.mxu0 0.0
    %2815 = vmatpush1.msra.mxu0 0.0
    %2816 = vmatprep.subr.mxu0 0.0
    %2817 = vmatpush1.msra.mxu0 0.0
    %2818 = vmatprep.subr.mxu0 0.0
    %2819 = vmatpush1.msra.mxu0 0.0
    %2820 = vmatprep.subr.mxu0 0.0
    %2821 = vmatpush1.msra.mxu0 0.0
    %2822 = vmatprep.mubr.f32.mxu0 0.0
    %2823 = vmatmul.mubr.f32.gmra.mrb[0].mxu0 %v2634
    %v2824 = vpop.f32.mrb[0].mxu0
    %v2825 = vadd.f32 0.0, %v2824
    %v2826 = vpop.f32.mrb[0].mxu0
    %2827 = vdwg.mxu0
    %v2828 = vadd.f32 %v2636, %v2754
    %v2829 = vxor.u32 %v2828, 2147483648
    %v2830 = vmul.f32 %v2829, 1.442695
    %v2831 = vpow.pop %v2830
    %v2832 = vadd.f32 %v2831, 1.0
    %v2833 = vrcp.pop %v2832
    %v2834 = vmul.f32 1.0, %v2833
    %v2835 = vadd.f32 %v2637, %v2756
    %v2836 = vxor.u32 %v2835, 2147483648
    %v2837 = vmul.f32 %v2836, 1.442695
    %v2838 = vpow.pop %v2837
    %v2839 = vadd.f32 %v2838, 1.0
    %v2840 = vrcp.pop %v2839
    %v2841 = vmul.f32 1.0, %v2840
    %v2842 = vmul.f32 %v2834, %v2825
    %v2843 = vadd.f32 %v2638, %v2842
    %v2844 = vtanh.pop %v2843
    %v2845 = vsub.f32 1.0, %v2841
    %v2846 = vmul.f32 %v2845, %v2844
    %v2847 = vmul.f32 %v2841, %v2634
    %v2848 = vadd.f32 %v2846, %v2847
    %2849 = vst [vmem:[%s823] sm:$0xff] %v2848
    %v2850 = vld [vmem:[%s825] sm:$0xff]
    %v2851 = vld [vmem:[%s825 + $0x8] sm:$0xff]
    %v2852 = vld [vmem:[%s825 + $0x10] sm:$0xff]
    %v2853 = vld [vmem:[#allocation12] sm:$0xff]
    %v2854 = vld [vmem:[#allocation12 + $0x8] sm:$0xff]
    %v2855 = vld [vmem:[#allocation12 + $0x10] sm:$0xff]
    %v2856 = vld [vmem:[#allocation12 + $0x18] sm:$0xff]
    %v2857 = vld [vmem:[#allocation12 + $0x20] sm:$0xff]
    %v2858 = vld [vmem:[#allocation12 + $0x28] sm:$0xff]
    %v2859 = vld [vmem:[#allocation12 + $0x30] sm:$0xff]
    %v2860 = vld [vmem:[#allocation12 + $0x38] sm:$0xff]
    %v2861 = vld [vmem:[#allocation12 + $0x40] sm:$0xff]
    %v2862 = vld [vmem:[#allocation12 + $0x48] sm:$0xff]
    %v2863 = vld [vmem:[#allocation12 + $0x50] sm:$0xff]
    %v2864 = vld [vmem:[#allocation12 + $0x58] sm:$0xff]
    %v2865 = vld [vmem:[#allocation12 + $0x60] sm:$0xff]
    %v2866 = vld [vmem:[#allocation12 + $0x68] sm:$0xff]
    %v2867 = vld [vmem:[#allocation12 + $0x70] sm:$0xff]
    %v2868 = vld [vmem:[#allocation12 + $0x78] sm:$0xff]
    %v2869 = vld [vmem:[#allocation12 + $0x80] sm:$0xff]
    %v2870 = vld [vmem:[#allocation12 + $0x88] sm:$0xff]
    %v2871 = vld [vmem:[#allocation12 + $0x90] sm:$0xff]
    %v2872 = vld [vmem:[#allocation12 + $0x98] sm:$0xff]
    %v2873 = vld [vmem:[#allocation12 + $0xa0] sm:$0xff]
    %v2874 = vld [vmem:[#allocation12 + $0xa8] sm:$0xff]
    %v2875 = vld [vmem:[#allocation12 + $0xb0] sm:$0xff]
    %v2876 = vld [vmem:[#allocation12 + $0xb8] sm:$0xff]
    %v2877 = vld [vmem:[#allocation12 + $0xc0] sm:$0xff]
    %v2878 = vld [vmem:[#allocation12 + $0xc8] sm:$0xff]
    %v2879 = vld [vmem:[#allocation12 + $0xd0] sm:$0xff]
    %v2880 = vld [vmem:[#allocation12 + $0xd8] sm:$0xff]
    %v2881 = vld [vmem:[#allocation12 + $0xe0] sm:$0xff]
    %v2882 = vld [vmem:[#allocation12 + $0xe8] sm:$0xff]
    %v2883 = vld [vmem:[#allocation12 + $0xf0] sm:$0xff]
    %v2884 = vld [vmem:[#allocation12 + $0xf8] sm:$0xff]
    %v2885 = vld [vmem:[#allocation12 + $0x100] sm:$0xff]
    %v2886 = vld [vmem:[#allocation12 + $0x108] sm:$0xff]
    %v2887 = vld [vmem:[#allocation12 + $0x110] sm:$0xff]
    %v2888 = vld [vmem:[#allocation12 + $0x118] sm:$0xff]
    %v2889 = vld [vmem:[#allocation12 + $0x120] sm:$0xff]
    %v2890 = vld [vmem:[#allocation12 + $0x128] sm:$0xff]
    %v2891 = vld [vmem:[#allocation12 + $0x130] sm:$0xff]
    %v2892 = vld [vmem:[#allocation12 + $0x138] sm:$0xff]
    %v2893 = vld [vmem:[#allocation12 + $0x140] sm:$0xff]
    %v2894 = vld [vmem:[#allocation12 + $0x148] sm:$0xff]
    %v2895 = vld [vmem:[#allocation12 + $0x150] sm:$0xff]
    %v2896 = vld [vmem:[#allocation12 + $0x158] sm:$0xff]
    %v2897 = vld [vmem:[#allocation12 + $0x160] sm:$0xff]
    %v2898 = vld [vmem:[#allocation12 + $0x168] sm:$0xff]
    %v2899 = vld [vmem:[#allocation12 + $0x170] sm:$0xff]
    %v2900 = vld [vmem:[#allocation12 + $0x178] sm:$0xff]
    %2901 = vmatprep.subr.mxu0 %v2854
    %2902 = vmatpush1.msra.mxu0 %v2853
    %2903 = vmatprep.subr.mxu0 %v2857
    %2904 = vmatpush1.msra.mxu0 %v2856
    %2905 = vmatprep.subr.mxu0 %v2860
    %2906 = vmatpush1.msra.mxu0 %v2859
    %2907 = vmatprep.subr.mxu0 %v2863
    %2908 = vmatpush1.msra.mxu0 %v2862
    %2909 = vmatprep.subr.mxu0 %v2866
    %2910 = vmatpush1.msra.mxu0 %v2865
    %2911 = vmatprep.subr.mxu0 %v2869
    %2912 = vmatpush1.msra.mxu0 %v2868
    %2913 = vmatprep.subr.mxu0 %v2872
    %2914 = vmatpush1.msra.mxu0 %v2871
    %2915 = vmatprep.subr.mxu0 %v2875
    %2916 = vmatpush1.msra.mxu0 %v2874
    %2917 = vmatprep.subr.mxu0 %v2878
    %2918 = vmatpush1.msra.mxu0 %v2877
    %2919 = vmatprep.subr.mxu0 %v2881
    %2920 = vmatpush1.msra.mxu0 %v2880
    %2921 = vmatprep.subr.mxu0 %v2884
    %2922 = vmatpush1.msra.mxu0 %v2883
    %2923 = vmatprep.subr.mxu0 %v2887
    %2924 = vmatpush1.msra.mxu0 %v2886
    %2925 = vmatprep.subr.mxu0 %v2890
    %2926 = vmatpush1.msra.mxu0 %v2889
    %2927 = vmatprep.subr.mxu0 %v2893
    %2928 = vmatpush1.msra.mxu0 %v2892
    %2929 = vmatprep.subr.mxu0 %v2896
    %2930 = vmatpush1.msra.mxu0 %v2895
    %2931 = vmatprep.subr.mxu0 %v2899
    %2932 = vmatpush1.msra.mxu0 %v2898
    %2933 = vmatprep.subr.mxu0 0.0
    %2934 = vmatpush1.msra.mxu0 0.0
    %2935 = vmatprep.subr.mxu0 0.0
    %2936 = vmatpush1.msra.mxu0 0.0
    %2937 = vmatprep.subr.mxu0 0.0
    %2938 = vmatpush1.msra.mxu0 0.0
    %2939 = vmatprep.subr.mxu0 0.0
    %2940 = vmatpush1.msra.mxu0 0.0
    %2941 = vmatprep.subr.mxu0 0.0
    %2942 = vmatpush1.msra.mxu0 0.0
    %2943 = vmatprep.subr.mxu0 0.0
    %2944 = vmatpush1.msra.mxu0 0.0
    %2945 = vmatprep.subr.mxu0 0.0
    %2946 = vmatpush1.msra.mxu0 0.0
    %2947 = vmatprep.subr.mxu0 0.0
    %2948 = vmatpush1.msra.mxu0 0.0
    %2949 = vmatprep.subr.mxu0 0.0
    %2950 = vmatpush1.msra.mxu0 0.0
    %2951 = vmatprep.subr.mxu0 0.0
    %2952 = vmatpush1.msra.mxu0 0.0
    %2953 = vmatprep.subr.mxu0 0.0
    %2954 = vmatpush1.msra.mxu0 0.0
    %2955 = vmatprep.subr.mxu0 0.0
    %2956 = vmatpush1.msra.mxu0 0.0
    %2957 = vmatprep.subr.mxu0 0.0
    %2958 = vmatpush1.msra.mxu0 0.0
    %2959 = vmatprep.subr.mxu0 0.0
    %2960 = vmatpush1.msra.mxu0 0.0
    %2961 = vmatprep.subr.mxu0 0.0
    %2962 = vmatpush1.msra.mxu0 0.0
    %2963 = vmatprep.subr.mxu0 0.0
    %2964 = vmatpush1.msra.mxu0 0.0
    %2965 = vmatprep.mubr.f32.mxu0 0.0
    %2966 = vmatmul.mubr.f32.gmra.mrb[0].mxu0 %v2848
    %v2967 = vpop.f32.mrb[0].mxu0
    %v2968 = vadd.f32 0.0, %v2967
    %v2969 = vpop.f32.mrb[0].mxu0
    %v2970 = vadd.f32 0.0, %v2969
    %2971 = vdwg.mxu0
    %2972 = vmatprep.subr.mxu0 0.0
    %2973 = vmatpush1.msra.mxu0 %v2855
    %2974 = vmatprep.subr.mxu0 0.0
    %2975 = vmatpush1.msra.mxu0 %v2858
    %2976 = vmatprep.subr.mxu0 0.0
    %2977 = vmatpush1.msra.mxu0 %v2861
    %2978 = vmatprep.subr.mxu0 0.0
    %2979 = vmatpush1.msra.mxu0 %v2864
    %2980 = vmatprep.subr.mxu0 0.0
    %2981 = vmatpush1.msra.mxu0 %v2867
    %2982 = vmatprep.subr.mxu0 0.0
    %2983 = vmatpush1.msra.mxu0 %v2870
    %2984 = vmatprep.subr.mxu0 0.0
    %2985 = vmatpush1.msra.mxu0 %v2873
    %2986 = vmatprep.subr.mxu0 0.0
    %2987 = vmatpush1.msra.mxu0 %v2876
    %2988 = vmatprep.subr.mxu0 0.0
    %2989 = vmatpush1.msra.mxu0 %v2879
    %2990 = vmatprep.subr.mxu0 0.0
    %2991 = vmatpush1.msra.mxu0 %v2882
    %2992 = vmatprep.subr.mxu0 0.0
    %2993 = vmatpush1.msra.mxu0 %v2885
    %2994 = vmatprep.subr.mxu0 0.0
    %2995 = vmatpush1.msra.mxu0 %v2888
    %2996 = vmatprep.subr.mxu0 0.0
    %2997 = vmatpush1.msra.mxu0 %v2891
    %2998 = vmatprep.subr.mxu0 0.0
    %2999 = vmatpush1.msra.mxu0 %v2894
    %3000 = vmatprep.subr.mxu0 0.0
    %3001 = vmatpush1.msra.mxu0 %v2897
    %3002 = vmatprep.subr.mxu0 0.0
    %3003 = vmatpush1.msra.mxu0 %v2900
    %3004 = vmatprep.subr.mxu0 0.0
    %3005 = vmatpush1.msra.mxu0 0.0
    %3006 = vmatprep.subr.mxu0 0.0
    %3007 = vmatpush1.msra.mxu0 0.0
    %3008 = vmatprep.subr.mxu0 0.0
    %3009 = vmatpush1.msra.mxu0 0.0
    %3010 = vmatprep.subr.mxu0 0.0
    %3011 = vmatpush1.msra.mxu0 0.0
    %3012 = vmatprep.subr.mxu0 0.0
    %3013 = vmatpush1.msra.mxu0 0.0
    %3014 = vmatprep.subr.mxu0 0.0
    %3015 = vmatpush1.msra.mxu0 0.0
    %3016 = vmatprep.subr.mxu0 0.0
    %3017 = vmatpush1.msra.mxu0 0.0
    %3018 = vmatprep.subr.mxu0 0.0
    %3019 = vmatpush1.msra.mxu0 0.0
    %3020 = vmatprep.subr.mxu0 0.0
    %3021 = vmatpush1.msra.mxu0 0.0
    %3022 = vmatprep.subr.mxu0 0.0
    %3023 = vmatpush1.msra.mxu0 0.0
    %3024 = vmatprep.subr.mxu0 0.0
    %3025 = vmatpush1.msra.mxu0 0.0
    %3026 = vmatprep.subr.mxu0 0.0
    %3027 = vmatpush1.msra.mxu0 0.0
    %3028 = vmatprep.subr.mxu0 0.0
    %3029 = vmatpush1.msra.mxu0 0.0
    %3030 = vmatprep.subr.mxu0 0.0
    %3031 = vmatpush1.msra.mxu0 0.0
    %3032 = vmatprep.subr.mxu0 0.0
    %3033 = vmatpush1.msra.mxu0 0.0
    %3034 = vmatprep.subr.mxu0 0.0
    %3035 = vmatpush1.msra.mxu0 0.0
    %3036 = vmatprep.mubr.f32.mxu0 0.0
    %3037 = vmatmul.mubr.f32.gmra.mrb[0].mxu0 %v2848
    %v3038 = vpop.f32.mrb[0].mxu0
    %v3039 = vadd.f32 0.0, %v3038
    %v3040 = vpop.f32.mrb[0].mxu0
    %3041 = vdwg.mxu0
    %v3042 = vadd.f32 %v2850, %v2968
    %v3043 = vxor.u32 %v3042, 2147483648
    %v3044 = vmul.f32 %v3043, 1.442695
    %v3045 = vpow.pop %v3044
    %v3046 = vadd.f32 %v3045, 1.0
    %v3047 = vrcp.pop %v3046
    %v3048 = vmul.f32 1.0, %v3047
    %v3049 = vadd.f32 %v2851, %v2970
    %v3050 = vxor.u32 %v3049, 2147483648
    %v3051 = vmul.f32 %v3050, 1.442695
    %v3052 = vpow.pop %v3051
    %v3053 = vadd.f32 %v3052, 1.0
    %v3054 = vrcp.pop %v3053
    %v3055 = vmul.f32 1.0, %v3054
    %v3056 = vmul.f32 %v3048, %v3039
    %v3057 = vadd.f32 %v2852, %v3056
    %v3058 = vtanh.pop %v3057
    %v3059 = vsub.f32 1.0, %v3055
    %v3060 = vmul.f32 %v3059, %v3058
    %v3061 = vmul.f32 %v3055, %v2848
    %v3062 = vadd.f32 %v3060, %v3061
    %3063 = vst [vmem:[%s1039] sm:$0xff] %v3062
    %v3064 = vld [vmem:[%s1041] sm:$0xff]
    %v3065 = vld [vmem:[%s1041 + $0x8] sm:$0xff]
    %v3066 = vld [vmem:[%s1041 + $0x10] sm:$0xff]
    %v3067 = vld [vmem:[#allocation12] sm:$0xff]
    %v3068 = vld [vmem:[#allocation12 + $0x8] sm:$0xff]
    %v3069 = vld [vmem:[#allocation12 + $0x10] sm:$0xff]
    %v3070 = vld [vmem:[#allocation12 + $0x18] sm:$0xff]
    %v3071 = vld [vmem:[#allocation12 + $0x20] sm:$0xff]
    %v3072 = vld [vmem:[#allocation12 + $0x28] sm:$0xff]
    %v3073 = vld [vmem:[#allocation12 + $0x30] sm:$0xff]
    %v3074 = vld [vmem:[#allocation12 + $0x38] sm:$0xff]
    %v3075 = vld [vmem:[#allocation12 + $0x40] sm:$0xff]
    %v3076 = vld [vmem:[#allocation12 + $0x48] sm:$0xff]
    %v3077 = vld [vmem:[#allocation12 + $0x50] sm:$0xff]
    %v3078 = vld [vmem:[#allocation12 + $0x58] sm:$0xff]
    %v3079 = vld [vmem:[#allocation12 + $0x60] sm:$0xff]
    %v3080 = vld [vmem:[#allocation12 + $0x68] sm:$0xff]
    %v3081 = vld [vmem:[#allocation12 + $0x70] sm:$0xff]
    %v3082 = vld [vmem:[#allocation12 + $0x78] sm:$0xff]
    %v3083 = vld [vmem:[#allocation12 + $0x80] sm:$0xff]
    %v3084 = vld [vmem:[#allocation12 + $0x88] sm:$0xff]
    %v3085 = vld [vmem:[#allocation12 + $0x90] sm:$0xff]
    %v3086 = vld [vmem:[#allocation12 + $0x98] sm:$0xff]
    %v3087 = vld [vmem:[#allocation12 + $0xa0] sm:$0xff]
    %v3088 = vld [vmem:[#allocation12 + $0xa8] sm:$0xff]
    %v3089 = vld [vmem:[#allocation12 + $0xb0] sm:$0xff]
    %v3090 = vld [vmem:[#allocation12 + $0xb8] sm:$0xff]
    %v3091 = vld [vmem:[#allocation12 + $0xc0] sm:$0xff]
    %v3092 = vld [vmem:[#allocation12 + $0xc8] sm:$0xff]
    %v3093 = vld [vmem:[#allocation12 + $0xd0] sm:$0xff]
    %v3094 = vld [vmem:[#allocation12 + $0xd8] sm:$0xff]
    %v3095 = vld [vmem:[#allocation12 + $0xe0] sm:$0xff]
    %v3096 = vld [vmem:[#allocation12 + $0xe8] sm:$0xff]
    %v3097 = vld [vmem:[#allocation12 + $0xf0] sm:$0xff]
    %v3098 = vld [vmem:[#allocation12 + $0xf8] sm:$0xff]
    %v3099 = vld [vmem:[#allocation12 + $0x100] sm:$0xff]
    %v3100 = vld [vmem:[#allocation12 + $0x108] sm:$0xff]
    %v3101 = vld [vmem:[#allocation12 + $0x110] sm:$0xff]
    %v3102 = vld [vmem:[#allocation12 + $0x118] sm:$0xff]
    %v3103 = vld [vmem:[#allocation12 + $0x120] sm:$0xff]
    %v3104 = vld [vmem:[#allocation12 + $0x128] sm:$0xff]
    %v3105 = vld [vmem:[#allocation12 + $0x130] sm:$0xff]
    %v3106 = vld [vmem:[#allocation12 + $0x138] sm:$0xff]
    %v3107 = vld [vmem:[#allocation12 + $0x140] sm:$0xff]
    %v3108 = vld [vmem:[#allocation12 + $0x148] sm:$0xff]
    %v3109 = vld [vmem:[#allocation12 + $0x150] sm:$0xff]
    %v3110 = vld [vmem:[#allocation12 + $0x158] sm:$0xff]
    %v3111 = vld [vmem:[#allocation12 + $0x160] sm:$0xff]
    %v3112 = vld [vmem:[#allocation12 + $0x168] sm:$0xff]
    %v3113 = vld [vmem:[#allocation12 + $0x170] sm:$0xff]
    %v3114 = vld [vmem:[#allocation12 + $0x178] sm:$0xff]
    %3115 = vmatprep.subr.mxu0 %v3068
    %3116 = vmatpush1.msra.mxu0 %v3067
    %3117 = vmatprep.subr.mxu0 %v3071
    %3118 = vmatpush1.msra.mxu0 %v3070
    %3119 = vmatprep.subr.mxu0 %v3074
    %3120 = vmatpush1.msra.mxu0 %v3073
    %3121 = vmatprep.subr.mxu0 %v3077
    %3122 = vmatpush1.msra.mxu0 %v3076
    %3123 = vmatprep.subr.mxu0 %v3080
    %3124 = vmatpush1.msra.mxu0 %v3079
    %3125 = vmatprep.subr.mxu0 %v3083
    %3126 = vmatpush1.msra.mxu0 %v3082
    %3127 = vmatprep.subr.mxu0 %v3086
    %3128 = vmatpush1.msra.mxu0 %v3085
    %3129 = vmatprep.subr.mxu0 %v3089
    %3130 = vmatpush1.msra.mxu0 %v3088
    %3131 = vmatprep.subr.mxu0 %v3092
    %3132 = vmatpush1.msra.mxu0 %v3091
    %3133 = vmatprep.subr.mxu0 %v3095
    %3134 = vmatpush1.msra.mxu0 %v3094
    %3135 = vmatprep.subr.mxu0 %v3098
    %3136 = vmatpush1.msra.mxu0 %v3097
    %3137 = vmatprep.subr.mxu0 %v3101
    %3138 = vmatpush1.msra.mxu0 %v3100
    %3139 = vmatprep.subr.mxu0 %v3104
    %3140 = vmatpush1.msra.mxu0 %v3103
    %3141 = vmatprep.subr.mxu0 %v3107
    %3142 = vmatpush1.msra.mxu0 %v3106
    %3143 = vmatprep.subr.mxu0 %v3110
    %3144 = vmatpush1.msra.mxu0 %v3109
    %3145 = vmatprep.subr.mxu0 %v3113
    %3146 = vmatpush1.msra.mxu0 %v3112
    %3147 = vmatprep.subr.mxu0 0.0
    %3148 = vmatpush1.msra.mxu0 0.0
    %3149 = vmatprep.subr.mxu0 0.0
    %3150 = vmatpush1.msra.mxu0 0.0
    %3151 = vmatprep.subr.mxu0 0.0
    %3152 = vmatpush1.msra.mxu0 0.0
    %3153 = vmatprep.subr.mxu0 0.0
    %3154 = vmatpush1.msra.mxu0 0.0
    %3155 = vmatprep.subr.mxu0 0.0
    %3156 = vmatpush1.msra.mxu0 0.0
    %3157 = vmatprep.subr.mxu0 0.0
    %3158 = vmatpush1.msra.mxu0 0.0
    %3159 = vmatprep.subr.mxu0 0.0
    %3160 = vmatpush1.msra.mxu0 0.0
    %3161 = vmatprep.subr.mxu0 0.0
    %3162 = vmatpush1.msra.mxu0 0.0
    %3163 = vmatprep.subr.mxu0 0.0
    %3164 = vmatpush1.msra.mxu0 0.0
    %3165 = vmatprep.subr.mxu0 0.0
    %3166 = vmatpush1.msra.mxu0 0.0
    %3167 = vmatprep.subr.mxu0 0.0
    %3168 = vmatpush1.msra.mxu0 0.0
    %3169 = vmatprep.subr.mxu0 0.0
    %3170 = vmatpush1.msra.mxu0 0.0
    %3171 = vmatprep.subr.mxu0 0.0
    %3172 = vmatpush1.msra.mxu0 0.0
    %3173 = vmatprep.subr.mxu0 0.0
    %3174 = vmatpush1.msra.mxu0 0.0
    %3175 = vmatprep.subr.mxu0 0.0
    %3176 = vmatpush1.msra.mxu0 0.0
    %3177 = vmatprep.subr.mxu0 0.0
    %3178 = vmatpush1.msra.mxu0 0.0
    %3179 = vmatprep.mubr.f32.mxu0 0.0
    %3180 = vmatmul.mubr.f32.gmra.mrb[0].mxu0 %v3062
    %v3181 = vpop.f32.mrb[0].mxu0
    %v3182 = vadd.f32 0.0, %v3181
    %v3183 = vpop.f32.mrb[0].mxu0
    %v3184 = vadd.f32 0.0, %v3183
    %3185 = vdwg.mxu0
    %3186 = vmatprep.subr.mxu0 0.0
    %3187 = vmatpush1.msra.mxu0 %v3069
    %3188 = vmatprep.subr.mxu0 0.0
    %3189 = vmatpush1.msra.mxu0 %v3072
    %3190 = vmatprep.subr.mxu0 0.0
    %3191 = vmatpush1.msra.mxu0 %v3075
    %3192 = vmatprep.subr.mxu0 0.0
    %3193 = vmatpush1.msra.mxu0 %v3078
    %3194 = vmatprep.subr.mxu0 0.0
    %3195 = vmatpush1.msra.mxu0 %v3081
    %3196 = vmatprep.subr.mxu0 0.0
    %3197 = vmatpush1.msra.mxu0 %v3084
    %3198 = vmatprep.subr.mxu0 0.0
    %3199 = vmatpush1.msra.mxu0 %v3087
    %3200 = vmatprep.subr.mxu0 0.0
    %3201 = vmatpush1.msra.mxu0 %v3090
    %3202 = vmatprep.subr.mxu0 0.0
    %3203 = vmatpush1.msra.mxu0 %v3093
    %3204 = vmatprep.subr.mxu0 0.0
    %3205 = vmatpush1.msra.mxu0 %v3096
    %3206 = vmatprep.subr.mxu0 0.0
    %3207 = vmatpush1.msra.mxu0 %v3099
    %3208 = vmatprep.subr.mxu0 0.0
    %3209 = vmatpush1.msra.mxu0 %v3102
    %3210 = vmatprep.subr.mxu0 0.0
    %3211 = vmatpush1.msra.mxu0 %v3105
    %3212 = vmatprep.subr.mxu0 0.0
    %3213 = vmatpush1.msra.mxu0 %v3108
    %3214 = vmatprep.subr.mxu0 0.0
    %3215 = vmatpush1.msra.mxu0 %v3111
    %3216 = vmatprep.subr.mxu0 0.0
    %3217 = vmatpush1.msra.mxu0 %v3114
    %3218 = vmatprep.subr.mxu0 0.0
    %3219 = vmatpush1.msra.mxu0 0.0
    %3220 = vmatprep.subr.mxu0 0.0
    %3221 = vmatpush1.msra.mxu0 0.0
    %3222 = vmatprep.subr.mxu0 0.0
    %3223 = vmatpush1.msra.mxu0 0.0
    %3224 = vmatprep.subr.mxu0 0.0
    %3225 = vmatpush1.msra.mxu0 0.0
    %3226 = vmatprep.subr.mxu0 0.0
    %3227 = vmatpush1.msra.mxu0 0.0
    %3228 = vmatprep.subr.mxu0 0.0
    %3229 = vmatpush1.msra.mxu0 0.0
    %3230 = vmatprep.subr.mxu0 0.0
    %3231 = vmatpush1.msra.mxu0 0.0
    %3232 = vmatprep.subr.mxu0 0.0
    %3233 = vmatpush1.msra.mxu0 0.0
    %3234 = vmatprep.subr.mxu0 0.0
    %3235 = vmatpush1.msra.mxu0 0.0
    %3236 = vmatprep.subr.mxu0 0.0
    %3237 = vmatpush1.msra.mxu0 0.0
    %3238 = vmatprep.subr.mxu0 0.0
    %3239 = vmatpush1.msra.mxu0 0.0
    %3240 = vmatprep.subr.mxu0 0.0
    %3241 = vmatpush1.msra.mxu0 0.0
    %3242 = vmatprep.subr.mxu0 0.0
    %3243 = vmatpush1.msra.mxu0 0.0
    %3244 = vmatprep.subr.mxu0 0.0
    %3245 = vmatpush1.msra.mxu0 0.0
    %3246 = vmatprep.subr.mxu0 0.0
    %3247 = vmatpush1.msra.mxu0 0.0
    %3248 = vmatprep.subr.mxu0 0.0
    %3249 = vmatpush1.msra.mxu0 0.0
    %3250 = vmatprep.mubr.f32.mxu0 0.0
    %3251 = vmatmul.mubr.f32.gmra.mrb[0].mxu0 %v3062
    %v3252 = vpop.f32.mrb[0].mxu0
    %v3253 = vadd.f32 0.0, %v3252
    %v3254 = vpop.f32.mrb[0].mxu0
    %3255 = vdwg.mxu0
    %v3256 = vadd.f32 %v3064, %v3182
    %v3257 = vxor.u32 %v3256, 2147483648
    %v3258 = vmul.f32 %v3257, 1.442695
    %v3259 = vpow.pop %v3258
    %v3260 = vadd.f32 %v3259, 1.0
    %v3261 = vrcp.pop %v3260
    %v3262 = vmul.f32 1.0, %v3261
    %v3263 = vadd.f32 %v3065, %v3184
    %v3264 = vxor.u32 %v3263, 2147483648
    %v3265 = vmul.f32 %v3264, 1.442695
    %v3266 = vpow.pop %v3265
    %v3267 = vadd.f32 %v3266, 1.0
    %v3268 = vrcp.pop %v3267
    %v3269 = vmul.f32 1.0, %v3268
    %v3270 = vmul.f32 %v3262, %v3253
    %v3271 = vadd.f32 %v3066, %v3270
    %v3272 = vtanh.pop %v3271
    %v3273 = vsub.f32 1.0, %v3269
    %v3274 = vmul.f32 %v3273, %v3272
    %v3275 = vmul.f32 %v3269, %v3062
    %v3276 = vadd.f32 %v3274, %v3275
    %3277 = vst [vmem:[%s1255] sm:$0xff] %v3276
    %v3278 = vld [vmem:[%s1257] sm:$0xff]
    %v3279 = vld [vmem:[%s1257 + $0x8] sm:$0xff]
    %v3280 = vld [vmem:[%s1257 + $0x10] sm:$0xff]
    %v3281 = vld [vmem:[#allocation12] sm:$0xff]
    %v3282 = vld [vmem:[#allocation12 + $0x8] sm:$0xff]
    %v3283 = vld [vmem:[#allocation12 + $0x10] sm:$0xff]
    %v3284 = vld [vmem:[#allocation12 + $0x18] sm:$0xff]
    %v3285 = vld [vmem:[#allocation12 + $0x20] sm:$0xff]
    %v3286 = vld [vmem:[#allocation12 + $0x28] sm:$0xff]
    %v3287 = vld [vmem:[#allocation12 + $0x30] sm:$0xff]
    %v3288 = vld [vmem:[#allocation12 + $0x38] sm:$0xff]
    %v3289 = vld [vmem:[#allocation12 + $0x40] sm:$0xff]
    %v3290 = vld [vmem:[#allocation12 + $0x48] sm:$0xff]
    %v3291 = vld [vmem:[#allocation12 + $0x50] sm:$0xff]
    %v3292 = vld [vmem:[#allocation12 + $0x58] sm:$0xff]
    %v3293 = vld [vmem:[#allocation12 + $0x60] sm:$0xff]
    %v3294 = vld [vmem:[#allocation12 + $0x68] sm:$0xff]
    %v3295 = vld [vmem:[#allocation12 + $0x70] sm:$0xff]
    %v3296 = vld [vmem:[#allocation12 + $0x78] sm:$0xff]
    %v3297 = vld [vmem:[#allocation12 + $0x80] sm:$0xff]
    %v3298 = vld [vmem:[#allocation12 + $0x88] sm:$0xff]
    %v3299 = vld [vmem:[#allocation12 + $0x90] sm:$0xff]
    %v3300 = vld [vmem:[#allocation12 + $0x98] sm:$0xff]
    %v3301 = vld [vmem:[#allocation12 + $0xa0] sm:$0xff]
    %v3302 = vld [vmem:[#allocation12 + $0xa8] sm:$0xff]
    %v3303 = vld [vmem:[#allocation12 + $0xb0] sm:$0xff]
    %v3304 = vld [vmem:[#allocation12 + $0xb8] sm:$0xff]
    %v3305 = vld [vmem:[#allocation12 + $0xc0] sm:$0xff]
    %v3306 = vld [vmem:[#allocation12 + $0xc8] sm:$0xff]
    %v3307 = vld [vmem:[#allocation12 + $0xd0] sm:$0xff]
    %v3308 = vld [vmem:[#allocation12 + $0xd8] sm:$0xff]
    %v3309 = vld [vmem:[#allocation12 + $0xe0] sm:$0xff]
    %v3310 = vld [vmem:[#allocation12 + $0xe8] sm:$0xff]
    %v3311 = vld [vmem:[#allocation12 + $0xf0] sm:$0xff]
    %v3312 = vld [vmem:[#allocation12 + $0xf8] sm:$0xff]
    %v3313 = vld [vmem:[#allocation12 + $0x100] sm:$0xff]
    %v3314 = vld [vmem:[#allocation12 + $0x108] sm:$0xff]
    %v3315 = vld [vmem:[#allocation12 + $0x110] sm:$0xff]
    %v3316 = vld [vmem:[#allocation12 + $0x118] sm:$0xff]
    %v3317 = vld [vmem:[#allocation12 + $0x120] sm:$0xff]
    %v3318 = vld [vmem:[#allocation12 + $0x128] sm:$0xff]
    %v3319 = vld [vmem:[#allocation12 + $0x130] sm:$0xff]
    %v3320 = vld [vmem:[#allocation12 + $0x138] sm:$0xff]
    %v3321 = vld [vmem:[#allocation12 + $0x140] sm:$0xff]
    %v3322 = vld [vmem:[#allocation12 + $0x148] sm:$0xff]
    %v3323 = vld [vmem:[#allocation12 + $0x150] sm:$0xff]
    %v3324 = vld [vmem:[#allocation12 + $0x158] sm:$0xff]
    %v3325 = vld [vmem:[#allocation12 + $0x160] sm:$0xff]
    %v3326 = vld [vmem:[#allocation12 + $0x168] sm:$0xff]
    %v3327 = vld [vmem:[#allocation12 + $0x170] sm:$0xff]
    %v3328 = vld [vmem:[#allocation12 + $0x178] sm:$0xff]
    %3329 = vmatprep.subr.mxu0 %v3282
    %3330 = vmatpush1.msra.mxu0 %v3281
    %3331 = vmatprep.subr.mxu0 %v3285
    %3332 = vmatpush1.msra.mxu0 %v3284
    %3333 = vmatprep.subr.mxu0 %v3288
    %3334 = vmatpush1.msra.mxu0 %v3287
    %3335 = vmatprep.subr.mxu0 %v3291
    %3336 = vmatpush1.msra.mxu0 %v3290
    %3337 = vmatprep.subr.mxu0 %v3294
    %3338 = vmatpush1.msra.mxu0 %v3293
    %3339 = vmatprep.subr.mxu0 %v3297
    %3340 = vmatpush1.msra.mxu0 %v3296
    %3341 = vmatprep.subr.mxu0 %v3300
    %3342 = vmatpush1.msra.mxu0 %v3299
    %3343 = vmatprep.subr.mxu0 %v3303
    %3344 = vmatpush1.msra.mxu0 %v3302
    %3345 = vmatprep.subr.mxu0 %v3306
    %3346 = vmatpush1.msra.mxu0 %v3305
    %3347 = vmatprep.subr.mxu0 %v3309
    %3348 = vmatpush1.msra.mxu0 %v3308
    %3349 = vmatprep.subr.mxu0 %v3312
    %3350 = vmatpush1.msra.mxu0 %v3311
    %3351 = vmatprep.subr.mxu0 %v3315
    %3352 = vmatpush1.msra.mxu0 %v3314
    %3353 = vmatprep.subr.mxu0 %v3318
    %3354 = vmatpush1.msra.mxu0 %v3317
    %3355 = vmatprep.subr.mxu0 %v3321
    %3356 = vmatpush1.msra.mxu0 %v3320
    %3357 = vmatprep.subr.mxu0 %v3324
    %3358 = vmatpush1.msra.mxu0 %v3323
    %3359 = vmatprep.subr.mxu0 %v3327
    %3360 = vmatpush1.msra.mxu0 %v3326
    %3361 = vmatprep.subr.mxu0 0.0
    %3362 = vmatpush1.msra.mxu0 0.0
    %3363 = vmatprep.subr.mxu0 0.0
    %3364 = vmatpush1.msra.mxu0 0.0
    %3365 = vmatprep.subr.mxu0 0.0
    %3366 = vmatpush1.msra.mxu0 0.0
    %3367 = vmatprep.subr.mxu0 0.0
    %3368 = vmatpush1.msra.mxu0 0.0
    %3369 = vmatprep.subr.mxu0 0.0
    %3370 = vmatpush1.msra.mxu0 0.0
    %3371 = vmatprep.subr.mxu0 0.0
    %3372 = vmatpush1.msra.mxu0 0.0
    %3373 = vmatprep.subr.mxu0 0.0
    %3374 = vmatpush1.msra.mxu0 0.0
    %3375 = vmatprep.subr.mxu0 0.0
    %3376 = vmatpush1.msra.mxu0 0.0
    %3377 = vmatprep.subr.mxu0 0.0
    %3378 = vmatpush1.msra.mxu0 0.0
    %3379 = vmatprep.subr.mxu0 0.0
    %3380 = vmatpush1.msra.mxu0 0.0
    %3381 = vmatprep.subr.mxu0 0.0
    %3382 = vmatpush1.msra.mxu0 0.0
    %3383 = vmatprep.subr.mxu0 0.0
    %3384 = vmatpush1.msra.mxu0 0.0
    %3385 = vmatprep.subr.mxu0 0.0
    %3386 = vmatpush1.msra.mxu0 0.0
    %3387 = vmatprep.subr.mxu0 0.0
    %3388 = vmatpush1.msra.mxu0 0.0
    %3389 = vmatprep.subr.mxu0 0.0
    %3390 = vmatpush1.msra.mxu0 0.0
    %3391 = vmatprep.subr.mxu0 0.0
    %3392 = vmatpush1.msra.mxu0 0.0
    %3393 = vmatprep.mubr.f32.mxu0 0.0
    %3394 = vmatmul.mubr.f32.gmra.mrb[0].mxu0 %v3276
    %v3395 = vpop.f32.mrb[0].mxu0
    %v3396 = vadd.f32 0.0, %v3395
    %v3397 = vpop.f32.mrb[0].mxu0
    %v3398 = vadd.f32 0.0, %v3397
    %3399 = vdwg.mxu0
    %3400 = vmatprep.subr.mxu0 0.0
    %3401 = vmatpush1.msra.mxu0 %v3283
    %3402 = vmatprep.subr.mxu0 0.0
    %3403 = vmatpush1.msra.mxu0 %v3286
    %3404 = vmatprep.subr.mxu0 0.0
    %3405 = vmatpush1.msra.mxu0 %v3289
    %3406 = vmatprep.subr.mxu0 0.0
    %3407 = vmatpush1.msra.mxu0 %v3292
    %3408 = vmatprep.subr.mxu0 0.0
    %3409 = vmatpush1.msra.mxu0 %v3295
    %3410 = vmatprep.subr.mxu0 0.0
    %3411 = vmatpush1.msra.mxu0 %v3298
    %3412 = vmatprep.subr.mxu0 0.0
    %3413 = vmatpush1.msra.mxu0 %v3301
    %3414 = vmatprep.subr.mxu0 0.0
    %3415 = vmatpush1.msra.mxu0 %v3304
    %3416 = vmatprep.subr.mxu0 0.0
    %3417 = vmatpush1.msra.mxu0 %v3307
    %3418 = vmatprep.subr.mxu0 0.0
    %3419 = vmatpush1.msra.mxu0 %v3310
    %3420 = vmatprep.subr.mxu0 0.0
    %3421 = vmatpush1.msra.mxu0 %v3313
    %3422 = vmatprep.subr.mxu0 0.0
    %3423 = vmatpush1.msra.mxu0 %v3316
    %3424 = vmatprep.subr.mxu0 0.0
    %3425 = vmatpush1.msra.mxu0 %v3319
    %3426 = vmatprep.subr.mxu0 0.0
    %3427 = vmatpush1.msra.mxu0 %v3322
    %3428 = vmatprep.subr.mxu0 0.0
    %3429 = vmatpush1.msra.mxu0 %v3325
    %3430 = vmatprep.subr.mxu0 0.0
    %3431 = vmatpush1.msra.mxu0 %v3328
    %3432 = vmatprep.subr.mxu0 0.0
    %3433 = vmatpush1.msra.mxu0 0.0
    %3434 = vmatprep.subr.mxu0 0.0
    %3435 = vmatpush1.msra.mxu0 0.0
    %3436 = vmatprep.subr.mxu0 0.0
    %3437 = vmatpush1.msra.mxu0 0.0
    %3438 = vmatprep.subr.mxu0 0.0
    %3439 = vmatpush1.msra.mxu0 0.0
    %3440 = vmatprep.subr.mxu0 0.0
    %3441 = vmatpush1.msra.mxu0 0.0
    %3442 = vmatprep.subr.mxu0 0.0
    %3443 = vmatpush1.msra.mxu0 0.0
    %3444 = vmatprep.subr.mxu0 0.0
    %3445 = vmatpush1.msra.mxu0 0.0
    %3446 = vmatprep.subr.mxu0 0.0
    %3447 = vmatpush1.msra.mxu0 0.0
    %3448 = vmatprep.subr.mxu0 0.0
    %3449 = vmatpush1.msra.mxu0 0.0
    %3450 = vmatprep.subr.mxu0 0.0
    %3451 = vmatpush1.msra.mxu0 0.0
    %3452 = vmatprep.subr.mxu0 0.0
    %3453 = vmatpush1.msra.mxu0 0.0
    %3454 = vmatprep.subr.mxu0 0.0
    %3455 = vmatpush1.msra.mxu0 0.0
    %3456 = vmatprep.subr.mxu0 0.0
    %3457 = vmatpush1.msra.mxu0 0.0
    %3458 = vmatprep.subr.mxu0 0.0
    %3459 = vmatpush1.msra.mxu0 0.0
    %3460 = vmatprep.subr.mxu0 0.0
    %3461 = vmatpush1.msra.mxu0 0.0
    %3462 = vmatprep.subr.mxu0 0.0
    %3463 = vmatpush1.msra.mxu0 0.0
    %3464 = vmatprep.mubr.f32.mxu0 0.0
    %3465 = vmatmul.mubr.f32.gmra.mrb[0].mxu0 %v3276
    %v3466 = vpop.f32.mrb[0].mxu0
    %v3467 = vadd.f32 0.0, %v3466
    %v3468 = vpop.f32.mrb[0].mxu0
    %3469 = vdwg.mxu0
    %v3470 = vadd.f32 %v3278, %v3396
    %v3471 = vxor.u32 %v3470, 2147483648
    %v3472 = vmul.f32 %v3471, 1.442695
    %v3473 = vpow.pop %v3472
    %v3474 = vadd.f32 %v3473, 1.0
    %v3475 = vrcp.pop %v3474
    %v3476 = vmul.f32 1.0, %v3475
    %v3477 = vadd.f32 %v3279, %v3398
    %v3478 = vxor.u32 %v3477, 2147483648
    %v3479 = vmul.f32 %v3478, 1.442695
    %v3480 = vpow.pop %v3479
    %v3481 = vadd.f32 %v3480, 1.0
    %v3482 = vrcp.pop %v3481
    %v3483 = vmul.f32 1.0, %v3482
    %v3484 = vmul.f32 %v3476, %v3467
    %v3485 = vadd.f32 %v3280, %v3484
    %v3486 = vtanh.pop %v3485
    %v3487 = vsub.f32 1.0, %v3483
    %v3488 = vmul.f32 %v3487, %v3486
    %v3489 = vmul.f32 %v3483, %v3276
    %v3490 = vadd.f32 %v3488, %v3489
    %3491 = vst [vmem:[%s1471] sm:$0xff] %v3490
    %v3492 = vld [vmem:[%s1473] sm:$0xff]
    %v3493 = vld [vmem:[%s1473 + $0x8] sm:$0xff]
    %v3494 = vld [vmem:[%s1473 + $0x10] sm:$0xff]
    %v3495 = vld [vmem:[#allocation12] sm:$0xff]
    %v3496 = vld [vmem:[#allocation12 + $0x8] sm:$0xff]
    %v3497 = vld [vmem:[#allocation12 + $0x10] sm:$0xff]
    %v3498 = vld [vmem:[#allocation12 + $0x18] sm:$0xff]
    %v3499 = vld [vmem:[#allocation12 + $0x20] sm:$0xff]
    %v3500 = vld [vmem:[#allocation12 + $0x28] sm:$0xff]
    %v3501 = vld [vmem:[#allocation12 + $0x30] sm:$0xff]
    %v3502 = vld [vmem:[#allocation12 + $0x38] sm:$0xff]
    %v3503 = vld [vmem:[#allocation12 + $0x40] sm:$0xff]
    %v3504 = vld [vmem:[#allocation12 + $0x48] sm:$0xff]
    %v3505 = vld [vmem:[#allocation12 + $0x50] sm:$0xff]
    %v3506 = vld [vmem:[#allocation12 + $0x58] sm:$0xff]
    %v3507 = vld [vmem:[#allocation12 + $0x60] sm:$0xff]
    %v3508 = vld [vmem:[#allocation12 + $0x68] sm:$0xff]
    %v3509 = vld [vmem:[#allocation12 + $0x70] sm:$0xff]
    %v3510 = vld [vmem:[#allocation12 + $0x78] sm:$0xff]
    %v3511 = vld [vmem:[#allocation12 + $0x80] sm:$0xff]
    %v3512 = vld [vmem:[#allocation12 + $0x88] sm:$0xff]
    %v3513 = vld [vmem:[#allocation12 + $0x90] sm:$0xff]
    %v3514 = vld [vmem:[#allocation12 + $0x98] sm:$0xff]
    %v3515 = vld [vmem:[#allocation12 + $0xa0] sm:$0xff]
    %v3516 = vld [vmem:[#allocation12 + $0xa8] sm:$0xff]
    %v3517 = vld [vmem:[#allocation12 + $0xb0] sm:$0xff]
    %v3518 = vld [vmem:[#allocation12 + $0xb8] sm:$0xff]
    %v3519 = vld [vmem:[#allocation12 + $0xc0] sm:$0xff]
    %v3520 = vld [vmem:[#allocation12 + $0xc8] sm:$0xff]
    %v3521 = vld [vmem:[#allocation12 + $0xd0] sm:$0xff]
    %v3522 = vld [vmem:[#allocation12 + $0xd8] sm:$0xff]
    %v3523 = vld [vmem:[#allocation12 + $0xe0] sm:$0xff]
    %v3524 = vld [vmem:[#allocation12 + $0xe8] sm:$0xff]
    %v3525 = vld [vmem:[#allocation12 + $0xf0] sm:$0xff]
    %v3526 = vld [vmem:[#allocation12 + $0xf8] sm:$0xff]
    %v3527 = vld [vmem:[#allocation12 + $0x100] sm:$0xff]
    %v3528 = vld [vmem:[#allocation12 + $0x108] sm:$0xff]
    %v3529 = vld [vmem:[#allocation12 + $0x110] sm:$0xff]
    %v3530 = vld [vmem:[#allocation12 + $0x118] sm:$0xff]
    %v3531 = vld [vmem:[#allocation12 + $0x120] sm:$0xff]
    %v3532 = vld [vmem:[#allocation12 + $0x128] sm:$0xff]
    %v3533 = vld [vmem:[#allocation12 + $0x130] sm:$0xff]
    %v3534 = vld [vmem:[#allocation12 + $0x138] sm:$0xff]
    %v3535 = vld [vmem:[#allocation12 + $0x140] sm:$0xff]
    %v3536 = vld [vmem:[#allocation12 + $0x148] sm:$0xff]
    %v3537 = vld [vmem:[#allocation12 + $0x150] sm:$0xff]
    %v3538 = vld [vmem:[#allocation12 + $0x158] sm:$0xff]
    %v3539 = vld [vmem:[#allocation12 + $0x160] sm:$0xff]
    %v3540 = vld [vmem:[#allocation12 + $0x168] sm:$0xff]
    %v3541 = vld [vmem:[#allocation12 + $0x170] sm:$0xff]
    %v3542 = vld [vmem:[#allocation12 + $0x178] sm:$0xff]
    %3543 = vmatprep.subr.mxu0 %v3496
    %3544 = vmatpush1.msra.mxu0 %v3495
    %3545 = vmatprep.subr.mxu0 %v3499
    %3546 = vmatpush1.msra.mxu0 %v3498
    %3547 = vmatprep.subr.mxu0 %v3502
    %3548 = vmatpush1.msra.mxu0 %v3501
    %3549 = vmatprep.subr.mxu0 %v3505
    %3550 = vmatpush1.msra.mxu0 %v3504
    %3551 = vmatprep.subr.mxu0 %v3508
    %3552 = vmatpush1.msra.mxu0 %v3507
    %3553 = vmatprep.subr.mxu0 %v3511
    %3554 = vmatpush1.msra.mxu0 %v3510
    %3555 = vmatprep.subr.mxu0 %v3514
    %3556 = vmatpush1.msra.mxu0 %v3513
    %3557 = vmatprep.subr.mxu0 %v3517
    %3558 = vmatpush1.msra.mxu0 %v3516
    %3559 = vmatprep.subr.mxu0 %v3520
    %3560 = vmatpush1.msra.mxu0 %v3519
    %3561 = vmatprep.subr.mxu0 %v3523
    %3562 = vmatpush1.msra.mxu0 %v3522
    %3563 = vmatprep.subr.mxu0 %v3526
    %3564 = vmatpush1.msra.mxu0 %v3525
    %3565 = vmatprep.subr.mxu0 %v3529
    %3566 = vmatpush1.msra.mxu0 %v3528
    %3567 = vmatprep.subr.mxu0 %v3532
    %3568 = vmatpush1.msra.mxu0 %v3531
    %3569 = vmatprep.subr.mxu0 %v3535
    %3570 = vmatpush1.msra.mxu0 %v3534
    %3571 = vmatprep.subr.mxu0 %v3538
    %3572 = vmatpush1.msra.mxu0 %v3537
    %3573 = vmatprep.subr.mxu0 %v3541
    %3574 = vmatpush1.msra.mxu0 %v3540
    %3575 = vmatprep.subr.mxu0 0.0
    %3576 = vmatpush1.msra.mxu0 0.0
    %3577 = vmatprep.subr.mxu0 0.0
    %3578 = vmatpush1.msra.mxu0 0.0
    %3579 = vmatprep.subr.mxu0 0.0
    %3580 = vmatpush1.msra.mxu0 0.0
    %3581 = vmatprep.subr.mxu0 0.0
    %3582 = vmatpush1.msra.mxu0 0.0
    %3583 = vmatprep.subr.mxu0 0.0
    %3584 = vmatpush1.msra.mxu0 0.0
    %3585 = vmatprep.subr.mxu0 0.0
    %3586 = vmatpush1.msra.mxu0 0.0
    %3587 = vmatprep.subr.mxu0 0.0
    %3588 = vmatpush1.msra.mxu0 0.0
    %3589 = vmatprep.subr.mxu0 0.0
    %3590 = vmatpush1.msra.mxu0 0.0
    %3591 = vmatprep.subr.mxu0 0.0
    %3592 = vmatpush1.msra.mxu0 0.0
    %3593 = vmatprep.subr.mxu0 0.0
    %3594 = vmatpush1.msra.mxu0 0.0
    %3595 = vmatprep.subr.mxu0 0.0
    %3596 = vmatpush1.msra.mxu0 0.0
    %3597 = vmatprep.subr.mxu0 0.0
    %3598 = vmatpush1.msra.mxu0 0.0
    %3599 = vmatprep.subr.mxu0 0.0
    %3600 = vmatpush1.msra.mxu0 0.0
    %3601 = vmatprep.subr.mxu0 0.0
    %3602 = vmatpush1.msra.mxu0 0.0
    %3603 = vmatprep.subr.mxu0 0.0
    %3604 = vmatpush1.msra.mxu0 0.0
    %3605 = vmatprep.subr.mxu0 0.0
    %3606 = vmatpush1.msra.mxu0 0.0
    %3607 = vmatprep.mubr.f32.mxu0 0.0
    %3608 = vmatmul.mubr.f32.gmra.mrb[0].mxu0 %v3490
    %v3609 = vpop.f32.mrb[0].mxu0
    %v3610 = vadd.f32 0.0, %v3609
    %v3611 = vpop.f32.mrb[0].mxu0
    %v3612 = vadd.f32 0.0, %v3611
    %3613 = vdwg.mxu0
    %3614 = vmatprep.subr.mxu0 0.0
    %3615 = vmatpush1.msra.mxu0 %v3497
    %3616 = vmatprep.subr.mxu0 0.0
    %3617 = vmatpush1.msra.mxu0 %v3500
    %3618 = vmatprep.subr.mxu0 0.0
    %3619 = vmatpush1.msra.mxu0 %v3503
    %3620 = vmatprep.subr.mxu0 0.0
    %3621 = vmatpush1.msra.mxu0 %v3506
    %3622 = vmatprep.subr.mxu0 0.0
    %3623 = vmatpush1.msra.mxu0 %v3509
    %3624 = vmatprep.subr.mxu0 0.0
    %3625 = vmatpush1.msra.mxu0 %v3512
    %3626 = vmatprep.subr.mxu0 0.0
    %3627 = vmatpush1.msra.mxu0 %v3515
    %3628 = vmatprep.subr.mxu0 0.0
    %3629 = vmatpush1.msra.mxu0 %v3518
    %3630 = vmatprep.subr.mxu0 0.0
    %3631 = vmatpush1.msra.mxu0 %v3521
    %3632 = vmatprep.subr.mxu0 0.0
    %3633 = vmatpush1.msra.mxu0 %v3524
    %3634 = vmatprep.subr.mxu0 0.0
    %3635 = vmatpush1.msra.mxu0 %v3527
    %3636 = vmatprep.subr.mxu0 0.0
    %3637 = vmatpush1.msra.mxu0 %v3530
    %3638 = vmatprep.subr.mxu0 0.0
    %3639 = vmatpush1.msra.mxu0 %v3533
    %3640 = vmatprep.subr.mxu0 0.0
    %3641 = vmatpush1.msra.mxu0 %v3536
    %3642 = vmatprep.subr.mxu0 0.0
    %3643 = vmatpush1.msra.mxu0 %v3539
    %3644 = vmatprep.subr.mxu0 0.0
    %3645 = vmatpush1.msra.mxu0 %v3542
    %3646 = vmatprep.subr.mxu0 0.0
    %3647 = vmatpush1.msra.mxu0 0.0
    %3648 = vmatprep.subr.mxu0 0.0
    %3649 = vmatpush1.msra.mxu0 0.0
    %3650 = vmatprep.subr.mxu0 0.0
    %3651 = vmatpush1.msra.mxu0 0.0
    %3652 = vmatprep.subr.mxu0 0.0
    %3653 = vmatpush1.msra.mxu0 0.0
    %3654 = vmatprep.subr.mxu0 0.0
    %3655 = vmatpush1.msra.mxu0 0.0
    %3656 = vmatprep.subr.mxu0 0.0
    %3657 = vmatpush1.msra.mxu0 0.0
    %3658 = vmatprep.subr.mxu0 0.0
    %3659 = vmatpush1.msra.mxu0 0.0
    %3660 = vmatprep.subr.mxu0 0.0
    %3661 = vmatpush1.msra.mxu0 0.0
    %3662 = vmatprep.subr.mxu0 0.0
    %3663 = vmatpush1.msra.mxu0 0.0
    %3664 = vmatprep.subr.mxu0 0.0
    %3665 = vmatpush1.msra.mxu0 0.0
    %3666 = vmatprep.subr.mxu0 0.0
    %3667 = vmatpush1.msra.mxu0 0.0
    %3668 = vmatprep.subr.mxu0 0.0
    %3669 = vmatpush1.msra.mxu0 0.0
    %3670 = vmatprep.subr.mxu0 0.0
    %3671 = vmatpush1.msra.mxu0 0.0
    %3672 = vmatprep.subr.mxu0 0.0
    %3673 = vmatpush1.msra.mxu0 0.0
    %3674 = vmatprep.subr.mxu0 0.0
    %3675 = vmatpush1.msra.mxu0 0.0
    %3676 = vmatprep.subr.mxu0 0.0
    %3677 = vmatpush1.msra.mxu0 0.0
    %3678 = vmatprep.mubr.f32.mxu0 0.0
    %3679 = vmatmul.mubr.f32.gmra.mrb[0].mxu0 %v3490
    %v3680 = vpop.f32.mrb[0].mxu0
    %v3681 = vadd.f32 0.0, %v3680
    %v3682 = vpop.f32.mrb[0].mxu0
    %3683 = vdwg.mxu0
    %v3684 = vadd.f32 %v3492, %v3610
    %v3685 = vxor.u32 %v3684, 2147483648
    %v3686 = vmul.f32 %v3685, 1.442695
    %v3687 = vpow.pop %v3686
    %v3688 = vadd.f32 %v3687, 1.0
    %v3689 = vrcp.pop %v3688
    %v3690 = vmul.f32 1.0, %v3689
    %v3691 = vadd.f32 %v3493, %v3612
    %v3692 = vxor.u32 %v3691, 2147483648
    %v3693 = vmul.f32 %v3692, 1.442695
    %v3694 = vpow.pop %v3693
    %v3695 = vadd.f32 %v3694, 1.0
    %v3696 = vrcp.pop %v3695
    %v3697 = vmul.f32 1.0, %v3696
    %v3698 = vmul.f32 %v3690, %v3681
    %v3699 = vadd.f32 %v3494, %v3698
    %v3700 = vtanh.pop %v3699
    %v3701 = vsub.f32 1.0, %v3697
    %v3702 = vmul.f32 %v3701, %v3700
    %v3703 = vmul.f32 %v3697, %v3490
    %v3704 = vadd.f32 %v3702, %v3703
    %3705 = vst [vmem:[%s1687] sm:$0xff] %v3704
    %v3706 = vld [vmem:[%s1689] sm:$0xff]
    %v3707 = vld [vmem:[%s1689 + $0x8] sm:$0xff]
    %v3708 = vld [vmem:[%s1689 + $0x10] sm:$0xff]
    %v3709 = vld [vmem:[#allocation12] sm:$0xff]
    %v3710 = vld [vmem:[#allocation12 + $0x8] sm:$0xff]
    %v3711 = vld [vmem:[#allocation12 + $0x10] sm:$0xff]
    %v3712 = vld [vmem:[#allocation12 + $0x18] sm:$0xff]
    %v3713 = vld [vmem:[#allocation12 + $0x20] sm:$0xff]
    %v3714 = vld [vmem:[#allocation12 + $0x28] sm:$0xff]
    %v3715 = vld [vmem:[#allocation12 + $0x30] sm:$0xff]
    %v3716 = vld [vmem:[#allocation12 + $0x38] sm:$0xff]
    %v3717 = vld [vmem:[#allocation12 + $0x40] sm:$0xff]
    %v3718 = vld [vmem:[#allocation12 + $0x48] sm:$0xff]
    %v3719 = vld [vmem:[#allocation12 + $0x50] sm:$0xff]
    %v3720 = vld [vmem:[#allocation12 + $0x58] sm:$0xff]
    %v3721 = vld [vmem:[#allocation12 + $0x60] sm:$0xff]
    %v3722 = vld [vmem:[#allocation12 + $0x68] sm:$0xff]
    %v3723 = vld [vmem:[#allocation12 + $0x70] sm:$0xff]
    %v3724 = vld [vmem:[#allocation12 + $0x78] sm:$0xff]
    %v3725 = vld [vmem:[#allocation12 + $0x80] sm:$0xff]
    %v3726 = vld [vmem:[#allocation12 + $0x88] sm:$0xff]
    %v3727 = vld [vmem:[#allocation12 + $0x90] sm:$0xff]
    %v3728 = vld [vmem:[#allocation12 + $0x98] sm:$0xff]
    %v3729 = vld [vmem:[#allocation12 + $0xa0] sm:$0xff]
    %v3730 = vld [vmem:[#allocation12 + $0xa8] sm:$0xff]
    %v3731 = vld [vmem:[#allocation12 + $0xb0] sm:$0xff]
    %v3732 = vld [vmem:[#allocation12 + $0xb8] sm:$0xff]
    %v3733 = vld [vmem:[#allocation12 + $0xc0] sm:$0xff]
    %v3734 = vld [vmem:[#allocation12 + $0xc8] sm:$0xff]
    %v3735 = vld [vmem:[#allocation12 + $0xd0] sm:$0xff]
    %v3736 = vld [vmem:[#allocation12 + $0xd8] sm:$0xff]
    %v3737 = vld [vmem:[#allocation12 + $0xe0] sm:$0xff]
    %v3738 = vld [vmem:[#allocation12 + $0xe8] sm:$0xff]
    %v3739 = vld [vmem:[#allocation12 + $0xf0] sm:$0xff]
    %v3740 = vld [vmem:[#allocation12 + $0xf8] sm:$0xff]
    %v3741 = vld [vmem:[#allocation12 + $0x100] sm:$0xff]
    %v3742 = vld [vmem:[#allocation12 + $0x108] sm:$0xff]
    %v3743 = vld [vmem:[#allocation12 + $0x110] sm:$0xff]
    %v3744 = vld [vmem:[#allocation12 + $0x118] sm:$0xff]
    %v3745 = vld [vmem:[#allocation12 + $0x120] sm:$0xff]
    %v3746 = vld [vmem:[#allocation12 + $0x128] sm:$0xff]
    %v3747 = vld [vmem:[#allocation12 + $0x130] sm:$0xff]
    %v3748 = vld [vmem:[#allocation12 + $0x138] sm:$0xff]
    %v3749 = vld [vmem:[#allocation12 + $0x140] sm:$0xff]
    %v3750 = vld [vmem:[#allocation12 + $0x148] sm:$0xff]
    %v3751 = vld [vmem:[#allocation12 + $0x150] sm:$0xff]
    %v3752 = vld [vmem:[#allocation12 + $0x158] sm:$0xff]
    %v3753 = vld [vmem:[#allocation12 + $0x160] sm:$0xff]
    %v3754 = vld [vmem:[#allocation12 + $0x168] sm:$0xff]
    %v3755 = vld [vmem:[#allocation12 + $0x170] sm:$0xff]
    %v3756 = vld [vmem:[#allocation12 + $0x178] sm:$0xff]
    %3757 = vmatprep.subr.mxu0 %v3710
    %3758 = vmatpush1.msra.mxu0 %v3709
    %3759 = vmatprep.subr.mxu0 %v3713
    %3760 = vmatpush1.msra.mxu0 %v3712
    %3761 = vmatprep.subr.mxu0 %v3716
    %3762 = vmatpush1.msra.mxu0 %v3715
    %3763 = vmatprep.subr.mxu0 %v3719
    %3764 = vmatpush1.msra.mxu0 %v3718
    %3765 = vmatprep.subr.mxu0 %v3722
    %3766 = vmatpush1.msra.mxu0 %v3721
    %3767 = vmatprep.subr.mxu0 %v3725
    %3768 = vmatpush1.msra.mxu0 %v3724
    %3769 = vmatprep.subr.mxu0 %v3728
    %3770 = vmatpush1.msra.mxu0 %v3727
    %3771 = vmatprep.subr.mxu0 %v3731
    %3772 = vmatpush1.msra.mxu0 %v3730
    %3773 = vmatprep.subr.mxu0 %v3734
    %3774 = vmatpush1.msra.mxu0 %v3733
    %3775 = vmatprep.subr.mxu0 %v3737
    %3776 = vmatpush1.msra.mxu0 %v3736
    %3777 = vmatprep.subr.mxu0 %v3740
    %3778 = vmatpush1.msra.mxu0 %v3739
    %3779 = vmatprep.subr.mxu0 %v3743
    %3780 = vmatpush1.msra.mxu0 %v3742
    %3781 = vmatprep.subr.mxu0 %v3746
    %3782 = vmatpush1.msra.mxu0 %v3745
    %3783 = vmatprep.subr.mxu0 %v3749
    %3784 = vmatpush1.msra.mxu0 %v3748
    %3785 = vmatprep.subr.mxu0 %v3752
    %3786 = vmatpush1.msra.mxu0 %v3751
    %3787 = vmatprep.subr.mxu0 %v3755
    %3788 = vmatpush1.msra.mxu0 %v3754
    %3789 = vmatprep.subr.mxu0 0.0
    %3790 = vmatpush1.msra.mxu0 0.0
    %3791 = vmatprep.subr.mxu0 0.0
    %3792 = vmatpush1.msra.mxu0 0.0
    %3793 = vmatprep.subr.mxu0 0.0
    %3794 = vmatpush1.msra.mxu0 0.0
    %3795 = vmatprep.subr.mxu0 0.0
    %3796 = vmatpush1.msra.mxu0 0.0
    %3797 = vmatprep.subr.mxu0 0.0
    %3798 = vmatpush1.msra.mxu0 0.0
    %3799 = vmatprep.subr.mxu0 0.0
    %3800 = vmatpush1.msra.mxu0 0.0
    %3801 = vmatprep.subr.mxu0 0.0
    %3802 = vmatpush1.msra.mxu0 0.0
    %3803 = vmatprep.subr.mxu0 0.0
    %3804 = vmatpush1.msra.mxu0 0.0
    %3805 = vmatprep.subr.mxu0 0.0
    %3806 = vmatpush1.msra.mxu0 0.0
    %3807 = vmatprep.subr.mxu0 0.0
    %3808 = vmatpush1.msra.mxu0 0.0
    %3809 = vmatprep.subr.mxu0 0.0
    %3810 = vmatpush1.msra.mxu0 0.0
    %3811 = vmatprep.subr.mxu0 0.0
    %3812 = vmatpush1.msra.mxu0 0.0
    %3813 = vmatprep.subr.mxu0 0.0
    %3814 = vmatpush1.msra.mxu0 0.0
    %3815 = vmatprep.subr.mxu0 0.0
    %3816 = vmatpush1.msra.mxu0 0.0
    %3817 = vmatprep.subr.mxu0 0.0
    %3818 = vmatpush1.msra.mxu0 0.0
    %3819 = vmatprep.subr.mxu0 0.0
    %3820 = vmatpush1.msra.mxu0 0.0
    %3821 = vmatprep.mubr.f32.mxu0 0.0
    %3822 = vmatmul.mubr.f32.gmra.mrb[0].mxu0 %v3704
    %v3823 = vpop.f32.mrb[0].mxu0
    %v3824 = vadd.f32 0.0, %v3823
    %v3825 = vpop.f32.mrb[0].mxu0
    %v3826 = vadd.f32 0.0, %v3825
    %3827 = vdwg.mxu0
    %3828 = vmatprep.subr.mxu0 0.0
    %3829 = vmatpush1.msra.mxu0 %v3711
    %3830 = vmatprep.subr.mxu0 0.0
    %3831 = vmatpush1.msra.mxu0 %v3714
    %3832 = vmatprep.subr.mxu0 0.0
    %3833 = vmatpush1.msra.mxu0 %v3717
    %3834 = vmatprep.subr.mxu0 0.0
    %3835 = vmatpush1.msra.mxu0 %v3720
    %3836 = vmatprep.subr.mxu0 0.0
    %3837 = vmatpush1.msra.mxu0 %v3723
    %3838 = vmatprep.subr.mxu0 0.0
    %3839 = vmatpush1.msra.mxu0 %v3726
    %3840 = vmatprep.subr.mxu0 0.0
    %3841 = vmatpush1.msra.mxu0 %v3729
    %3842 = vmatprep.subr.mxu0 0.0
    %3843 = vmatpush1.msra.mxu0 %v3732
    %3844 = vmatprep.subr.mxu0 0.0
    %3845 = vmatpush1.msra.mxu0 %v3735
    %3846 = vmatprep.subr.mxu0 0.0
    %3847 = vmatpush1.msra.mxu0 %v3738
    %3848 = vmatprep.subr.mxu0 0.0
    %3849 = vmatpush1.msra.mxu0 %v3741
    %3850 = vmatprep.subr.mxu0 0.0
    %3851 = vmatpush1.msra.mxu0 %v3744
    %3852 = vmatprep.subr.mxu0 0.0
    %3853 = vmatpush1.msra.mxu0 %v3747
    %3854 = vmatprep.subr.mxu0 0.0
    %3855 = vmatpush1.msra.mxu0 %v3750
    %3856 = vmatprep.subr.mxu0 0.0
    %3857 = vmatpush1.msra.mxu0 %v3753
    %3858 = vmatprep.subr.mxu0 0.0
    %3859 = vmatpush1.msra.mxu0 %v3756
    %3860 = vmatprep.subr.mxu0 0.0
    %3861 = vmatpush1.msra.mxu0 0.0
    %3862 = vmatprep.subr.mxu0 0.0
    %3863 = vmatpush1.msra.mxu0 0.0
    %3864 = vmatprep.subr.mxu0 0.0
    %3865 = vmatpush1.msra.mxu0 0.0
    %3866 = vmatprep.subr.mxu0 0.0
    %3867 = vmatpush1.msra.mxu0 0.0
    %3868 = vmatprep.subr.mxu0 0.0
    %3869 = vmatpush1.msra.mxu0 0.0
    %3870 = vmatprep.subr.mxu0 0.0
    %3871 = vmatpush1.msra.mxu0 0.0
    %3872 = vmatprep.subr.mxu0 0.0
    %3873 = vmatpush1.msra.mxu0 0.0
    %3874 = vmatprep.subr.mxu0 0.0
    %3875 = vmatpush1.msra.mxu0 0.0
    %3876 = vmatprep.subr.mxu0 0.0
    %3877 = vmatpush1.msra.mxu0 0.0
    %3878 = vmatprep.subr.mxu0 0.0
    %3879 = vmatpush1.msra.mxu0 0.0
    %3880 = vmatprep.subr.mxu0 0.0
    %3881 = vmatpush1.msra.mxu0 0.0
    %3882 = vmatprep.subr.mxu0 0.0
    %3883 = vmatpush1.msra.mxu0 0.0
    %3884 = vmatprep.subr.mxu0 0.0
    %3885 = vmatpush1.msra.mxu0 0.0
    %3886 = vmatprep.subr.mxu0 0.0
    %3887 = vmatpush1.msra.mxu0 0.0
    %3888 = vmatprep.subr.mxu0 0.0
    %3889 = vmatpush1.msra.mxu0 0.0
    %3890 = vmatprep.subr.mxu0 0.0
    %3891 = vmatpush1.msra.mxu0 0.0
    %3892 = vmatprep.mubr.f32.mxu0 0.0
    %3893 = vmatmul.mubr.f32.gmra.mrb[0].mxu0 %v3704
    %v3894 = vpop.f32.mrb[0].mxu0
    %v3895 = vadd.f32 0.0, %v3894
    %v3896 = vpop.f32.mrb[0].mxu0
    %3897 = vdwg.mxu0
    %v3898 = vadd.f32 %v3706, %v3824
    %v3899 = vxor.u32 %v3898, 2147483648
    %v3900 = vmul.f32 %v3899, 1.442695
    %v3901 = vpow.pop %v3900
    %v3902 = vadd.f32 %v3901, 1.0
    %v3903 = vrcp.pop %v3902
    %v3904 = vmul.f32 1.0, %v3903
    %v3905 = vadd.f32 %v3707, %v3826
    %v3906 = vxor.u32 %v3905, 2147483648
    %v3907 = vmul.f32 %v3906, 1.442695
    %v3908 = vpow.pop %v3907
    %v3909 = vadd.f32 %v3908, 1.0
    %v3910 = vrcp.pop %v3909
    %v3911 = vmul.f32 1.0, %v3910
    %v3912 = vmul.f32 %v3904, %v3895
    %v3913 = vadd.f32 %v3708, %v3912
    %v3914 = vtanh.pop %v3913
    %v3915 = vsub.f32 1.0, %v3911
    %v3916 = vmul.f32 %v3915, %v3914
    %v3917 = vmul.f32 %v3911, %v3704
    %v3918 = vadd.f32 %v3916, %v3917
    %3919 = vst [vmem:[%s1903] sm:$0xff] %v3918
    %v3920 = vld [vmem:[%s1905] sm:$0xff]
    %v3921 = vld [vmem:[%s1905 + $0x8] sm:$0xff]
    %v3922 = vld [vmem:[%s1905 + $0x10] sm:$0xff]
    %v3923 = vld [vmem:[#allocation12] sm:$0xff]
    %v3924 = vld [vmem:[#allocation12 + $0x8] sm:$0xff]
    %v3925 = vld [vmem:[#allocation12 + $0x10] sm:$0xff]
    %v3926 = vld [vmem:[#allocation12 + $0x18] sm:$0xff]
    %v3927 = vld [vmem:[#allocation12 + $0x20] sm:$0xff]
    %v3928 = vld [vmem:[#allocation12 + $0x28] sm:$0xff]
    %v3929 = vld [vmem:[#allocation12 + $0x30] sm:$0xff]
    %v3930 = vld [vmem:[#allocation12 + $0x38] sm:$0xff]
    %v3931 = vld [vmem:[#allocation12 + $0x40] sm:$0xff]
    %v3932 = vld [vmem:[#allocation12 + $0x48] sm:$0xff]
    %v3933 = vld [vmem:[#allocation12 + $0x50] sm:$0xff]
    %v3934 = vld [vmem:[#allocation12 + $0x58] sm:$0xff]
    %v3935 = vld [vmem:[#allocation12 + $0x60] sm:$0xff]
    %v3936 = vld [vmem:[#allocation12 + $0x68] sm:$0xff]
    %v3937 = vld [vmem:[#allocation12 + $0x70] sm:$0xff]
    %v3938 = vld [vmem:[#allocation12 + $0x78] sm:$0xff]
    %v3939 = vld [vmem:[#allocation12 + $0x80] sm:$0xff]
    %v3940 = vld [vmem:[#allocation12 + $0x88] sm:$0xff]
    %v3941 = vld [vmem:[#allocation12 + $0x90] sm:$0xff]
    %v3942 = vld [vmem:[#allocation12 + $0x98] sm:$0xff]
    %v3943 = vld [vmem:[#allocation12 + $0xa0] sm:$0xff]
    %v3944 = vld [vmem:[#allocation12 + $0xa8] sm:$0xff]
    %v3945 = vld [vmem:[#allocation12 + $0xb0] sm:$0xff]
    %v3946 = vld [vmem:[#allocation12 + $0xb8] sm:$0xff]
    %v3947 = vld [vmem:[#allocation12 + $0xc0] sm:$0xff]
    %v3948 = vld [vmem:[#allocation12 + $0xc8] sm:$0xff]
    %v3949 = vld [vmem:[#allocation12 + $0xd0] sm:$0xff]
    %v3950 = vld [vmem:[#allocation12 + $0xd8] sm:$0xff]
    %v3951 = vld [vmem:[#allocation12 + $0xe0] sm:$0xff]
    %v3952 = vld [vmem:[#allocation12 + $0xe8] sm:$0xff]
    %v3953 = vld [vmem:[#allocation12 + $0xf0] sm:$0xff]
    %v3954 = vld [vmem:[#allocation12 + $0xf8] sm:$0xff]
    %v3955 = vld [vmem:[#allocation12 + $0x100] sm:$0xff]
    %v3956 = vld [vmem:[#allocation12 + $0x108] sm:$0xff]
    %v3957 = vld [vmem:[#allocation12 + $0x110] sm:$0xff]
    %v3958 = vld [vmem:[#allocation12 + $0x118] sm:$0xff]
    %v3959 = vld [vmem:[#allocation12 + $0x120] sm:$0xff]
    %v3960 = vld [vmem:[#allocation12 + $0x128] sm:$0xff]
    %v3961 = vld [vmem:[#allocation12 + $0x130] sm:$0xff]
    %v3962 = vld [vmem:[#allocation12 + $0x138] sm:$0xff]
    %v3963 = vld [vmem:[#allocation12 + $0x140] sm:$0xff]
    %v3964 = vld [vmem:[#allocation12 + $0x148] sm:$0xff]
    %v3965 = vld [vmem:[#allocation12 + $0x150] sm:$0xff]
    %v3966 = vld [vmem:[#allocation12 + $0x158] sm:$0xff]
    %v3967 = vld [vmem:[#allocation12 + $0x160] sm:$0xff]
    %v3968 = vld [vmem:[#allocation12 + $0x168] sm:$0xff]
    %v3969 = vld [vmem:[#allocation12 + $0x170] sm:$0xff]
    %v3970 = vld [vmem:[#allocation12 + $0x178] sm:$0xff]
    %3971 = vmatprep.subr.mxu0 %v3924
    %3972 = vmatpush1.msra.mxu0 %v3923
    %3973 = vmatprep.subr.mxu0 %v3927
    %3974 = vmatpush1.msra.mxu0 %v3926
    %3975 = vmatprep.subr.mxu0 %v3930
    %3976 = vmatpush1.msra.mxu0 %v3929
    %3977 = vmatprep.subr.mxu0 %v3933
    %3978 = vmatpush1.msra.mxu0 %v3932
    %3979 = vmatprep.subr.mxu0 %v3936
    %3980 = vmatpush1.msra.mxu0 %v3935
    %3981 = vmatprep.subr.mxu0 %v3939
    %3982 = vmatpush1.msra.mxu0 %v3938
    %3983 = vmatprep.subr.mxu0 %v3942
    %3984 = vmatpush1.msra.mxu0 %v3941
    %3985 = vmatprep.subr.mxu0 %v3945
    %3986 = vmatpush1.msra.mxu0 %v3944
    %3987 = vmatprep.subr.mxu0 %v3948
    %3988 = vmatpush1.msra.mxu0 %v3947
    %3989 = vmatprep.subr.mxu0 %v3951
    %3990 = vmatpush1.msra.mxu0 %v3950
    %3991 = vmatprep.subr.mxu0 %v3954
    %3992 = vmatpush1.msra.mxu0 %v3953
    %3993 = vmatprep.subr.mxu0 %v3957
    %3994 = vmatpush1.msra.mxu0 %v3956
    %3995 = vmatprep.subr.mxu0 %v3960
    %3996 = vmatpush1.msra.mxu0 %v3959
    %3997 = vmatprep.subr.mxu0 %v3963
    %3998 = vmatpush1.msra.mxu0 %v3962
    %3999 = vmatprep.subr.mxu0 %v3966
    %4000 = vmatpush1.msra.mxu0 %v3965
    %4001 = vmatprep.subr.mxu0 %v3969
    %4002 = vmatpush1.msra.mxu0 %v3968
    %4003 = vmatprep.subr.mxu0 0.0
    %4004 = vmatpush1.msra.mxu0 0.0
    %4005 = vmatprep.subr.mxu0 0.0
    %4006 = vmatpush1.msra.mxu0 0.0
    %4007 = vmatprep.subr.mxu0 0.0
    %4008 = vmatpush1.msra.mxu0 0.0
    %4009 = vmatprep.subr.mxu0 0.0
    %4010 = vmatpush1.msra.mxu0 0.0
    %4011 = vmatprep.subr.mxu0 0.0
    %4012 = vmatpush1.msra.mxu0 0.0
    %4013 = vmatprep.subr.mxu0 0.0
    %4014 = vmatpush1.msra.mxu0 0.0
    %4015 = vmatprep.subr.mxu0 0.0
    %4016 = vmatpush1.msra.mxu0 0.0
    %4017 = vmatprep.subr.mxu0 0.0
    %4018 = vmatpush1.msra.mxu0 0.0
    %4019 = vmatprep.subr.mxu0 0.0
    %4020 = vmatpush1.msra.mxu0 0.0
    %4021 = vmatprep.subr.mxu0 0.0
    %4022 = vmatpush1.msra.mxu0 0.0
    %4023 = vmatprep.subr.mxu0 0.0
    %4024 = vmatpush1.msra.mxu0 0.0
    %4025 = vmatprep.subr.mxu0 0.0
    %4026 = vmatpush1.msra.mxu0 0.0
    %4027 = vmatprep.subr.mxu0 0.0
    %4028 = vmatpush1.msra.mxu0 0.0
    %4029 = vmatprep.subr.mxu0 0.0
    %4030 = vmatpush1.msra.mxu0 0.0
    %4031 = vmatprep.subr.mxu0 0.0
    %4032 = vmatpush1.msra.mxu0 0.0
    %4033 = vmatprep.subr.mxu0 0.0
    %4034 = vmatpush1.msra.mxu0 0.0
    %4035 = vmatprep.mubr.f32.mxu0 0.0
    %4036 = vmatmul.mubr.f32.gmra.mrb[0].mxu0 %v3918
    %v4037 = vpop.f32.mrb[0].mxu0
    %v4038 = vadd.f32 0.0, %v4037
    %v4039 = vpop.f32.mrb[0].mxu0
    %v4040 = vadd.f32 0.0, %v4039
    %4041 = vdwg.mxu0
    %4042 = vmatprep.subr.mxu0 0.0
    %4043 = vmatpush1.msra.mxu0 %v3925
    %4044 = vmatprep.subr.mxu0 0.0
    %4045 = vmatpush1.msra.mxu0 %v3928
    %4046 = vmatprep.subr.mxu0 0.0
    %4047 = vmatpush1.msra.mxu0 %v3931
    %4048 = vmatprep.subr.mxu0 0.0
    %4049 = vmatpush1.msra.mxu0 %v3934
    %4050 = vmatprep.subr.mxu0 0.0
    %4051 = vmatpush1.msra.mxu0 %v3937
    %4052 = vmatprep.subr.mxu0 0.0
    %4053 = vmatpush1.msra.mxu0 %v3940
    %4054 = vmatprep.subr.mxu0 0.0
    %4055 = vmatpush1.msra.mxu0 %v3943
    %4056 = vmatprep.subr.mxu0 0.0
    %4057 = vmatpush1.msra.mxu0 %v3946
    %4058 = vmatprep.subr.mxu0 0.0
    %4059 = vmatpush1.msra.mxu0 %v3949
    %4060 = vmatprep.subr.mxu0 0.0
    %4061 = vmatpush1.msra.mxu0 %v3952
    %4062 = vmatprep.subr.mxu0 0.0
    %4063 = vmatpush1.msra.mxu0 %v3955
    %4064 = vmatprep.subr.mxu0 0.0
    %4065 = vmatpush1.msra.mxu0 %v3958
    %4066 = vmatprep.subr.mxu0 0.0
    %4067 = vmatpush1.msra.mxu0 %v3961
    %4068 = vmatprep.subr.mxu0 0.0
    %4069 = vmatpush1.msra.mxu0 %v3964
    %4070 = vmatprep.subr.mxu0 0.0
    %4071 = vmatpush1.msra.mxu0 %v3967
    %4072 = vmatprep.subr.mxu0 0.0
    %4073 = vmatpush1.msra.mxu0 %v3970
    %4074 = vmatprep.subr.mxu0 0.0
    %4075 = vmatpush1.msra.mxu0 0.0
    %4076 = vmatprep.subr.mxu0 0.0
    %4077 = vmatpush1.msra.mxu0 0.0
    %4078 = vmatprep.subr.mxu0 0.0
    %4079 = vmatpush1.msra.mxu0 0.0
    %4080 = vmatprep.subr.mxu0 0.0
    %4081 = vmatpush1.msra.mxu0 0.0
    %4082 = vmatprep.subr.mxu0 0.0
    %4083 = vmatpush1.msra.mxu0 0.0
    %4084 = vmatprep.subr.mxu0 0.0
    %4085 = vmatpush1.msra.mxu0 0.0
    %4086 = vmatprep.subr.mxu0 0.0
    %4087 = vmatpush1.msra.mxu0 0.0
    %4088 = vmatprep.subr.mxu0 0.0
    %4089 = vmatpush1.msra.mxu0 0.0
    %4090 = vmatprep.subr.mxu0 0.0
    %4091 = vmatpush1.msra.mxu0 0.0
    %4092 = vmatprep.subr.mxu0 0.0
    %4093 = vmatpush1.msra.mxu0 0.0
    %4094 = vmatprep.subr.mxu0 0.0
    %4095 = vmatpush1.msra.mxu0 0.0
    %4096 = vmatprep.subr.mxu0 0.0
    %4097 = vmatpush1.msra.mxu0 0.0
    %4098 = vmatprep.subr.mxu0 0.0
    %4099 = vmatpush1.msra.mxu0 0.0
    %4100 = vmatprep.subr.mxu0 0.0
    %4101 = vmatpush1.msra.mxu0 0.0
    %4102 = vmatprep.subr.mxu0 0.0
    %4103 = vmatpush1.msra.mxu0 0.0
    %4104 = vmatprep.subr.mxu0 0.0
    %4105 = vmatpush1.msra.mxu0 0.0
    %4106 = vmatprep.mubr.f32.mxu0 0.0
    %4107 = vmatmul.mubr.f32.gmra.mrb[0].mxu0 %v3918
    %v4108 = vpop.f32.mrb[0].mxu0
    %v4109 = vadd.f32 0.0, %v4108
    %v4110 = vpop.f32.mrb[0].mxu0
    %4111 = vdwg.mxu0
    %v4112 = vadd.f32 %v3920, %v4038
    %v4113 = vxor.u32 %v4112, 2147483648
    %v4114 = vmul.f32 %v4113, 1.442695
    %v4115 = vpow.pop %v4114
    %v4116 = vadd.f32 %v4115, 1.0
    %v4117 = vrcp.pop %v4116
    %v4118 = vmul.f32 1.0, %v4117
    %v4119 = vadd.f32 %v3921, %v4040
    %v4120 = vxor.u32 %v4119, 2147483648
    %v4121 = vmul.f32 %v4120, 1.442695
    %v4122 = vpow.pop %v4121
    %v4123 = vadd.f32 %v4122, 1.0
    %v4124 = vrcp.pop %v4123
    %v4125 = vmul.f32 1.0, %v4124
    %v4126 = vmul.f32 %v4118, %v4109
    %v4127 = vadd.f32 %v3922, %v4126
    %v4128 = vtanh.pop %v4127
    %v4129 = vsub.f32 1.0, %v4125
    %v4130 = vmul.f32 %v4129, %v4128
    %v4131 = vmul.f32 %v4125, %v3918
    %v4132 = vadd.f32 %v4130, %v4131
    %4133 = vst [vmem:[%s2119] sm:$0xff] %v4132
    %s4134 = scalar_lea.vmem [#allocation15], 8
    %4135 = vst [vmem:[%s4134] sm:$0xff] %v4132
    // Predicated region
    $region50: #{grunet_forward.2} parent=1 // pred_check
      _
    $region51: #{grunet_forward.2} parent=1 // pred_check_branch
      %4137 = sbr.rel (0) target = $region53
    $region52: #{grunet_forward.2} parent=1 // pred_region
      %s4139 = ssub.s32 1024, 1024
      %4140 = vsyncadd [#allocation5], %s4139
      %s4141 = sshll.u32 [#allocation14], 4
      %s4142 = int_to_ptr.vmem [resolvable:$true] %s4141
      %4147 = dma.vmem_to_hbm [thread:$0]  %s4142, 1024, %s6, [#allocation5], 128, 128, 8
    $region53: #{grunet_forward.2} parent=1 // pred_fallthru
      _
    // Predicated region
    $region54: #{grunet_forward.2} parent=1 // pred_check
      _
    $region55: #{grunet_forward.2} parent=1 // pred_check_branch
      %4149 = sbr.rel (0) target = $region57
    $region56: #{grunet_forward.2} parent=1 // pred_region
      %s4151 = ssub.s32 256, 256
      %4152 = vsyncadd [#allocation16], %s4151
      %s4153 = sshll.u32 [#allocation15], 4
      %s4154 = int_to_ptr.vmem [resolvable:$true] %s4153
      %4159 = dma.vmem_to_hbm [thread:$0]  %s4154, 256, %s7, [#allocation16], 128, 128, 8
    $region57: #{grunet_forward.2} parent=1 // pred_fallthru
      _
    // Predicated region
    $region58: #{grunet_forward.2} parent=1 // pred_check
      _
    $region59: #{grunet_forward.2} parent=1 // pred_check_branch
      %4161 = sbr.rel (0) target = $region61
    $region60: #{grunet_forward.2} parent=1 // pred_region
      %4162 = dma.done [#allocation5], 1024
    $region61: #{grunet_forward.2} parent=1 // pred_fallthru
      _
    // Predicated region
    $region62: #{grunet_forward.2} parent=1 // pred_check
      _
    $region63: #{grunet_forward.2} parent=1 // pred_check_branch
      %4164 = sbr.rel (0) target = $region65
    $region64: #{grunet_forward.2} parent=1 // pred_region
      %4165 = dma.done [#allocation16], 256
    $region65: #{grunet_forward.2} parent=1 // pred_fallthru
      _
    %4166 = vsyncpa [#allocation4], 1
    %4167 = vsyncpa [#allocation7], 1
    %4168 = vsyncpa [#allocation10], 1
    %4169 = vsyncpa [#allocation13], 1
    %4170 = vsyncpa [#allocation5], 1
    %4171 = vsyncpa [#allocation16], 1

</llo_original>
